<compile_context>
chip_gen: v5e
topology: v5e:2x2
jax: 0.10.0
libtpu: 0.0.40
codegen_flags: <defaults>
</compile_context>

<pallas_src>
import functools

import jax
import jax.numpy as jnp
from jax.experimental import pallas as pl
from jax.experimental.pallas import tpu as pltpu


# ------------------------------ Pallas kernels ------------------------------ #

def _sage_layer1_gate_kernel(x_full_ref, x_tile_ref, adj_ref, invdeg_ref,
                             wl1_ref, wr1_ref, b1_ref, wg_ref, bg_ref,
                             h1_ref, gates_ref, *, num_experts, top_k):
    """Layer-1 SAGEConv for ALL experts (fused) + gating network + top-k mask.

    x_full_ref : (N, Din)        bf16, full-resident (sources for aggregation)
    x_tile_ref : (TILE, Din)     bf16, destination-node rows (root features)
    adj_ref    : (TILE, N)       bf16 binary mask, adj[i, j] = 1 iff edge j->i
    invdeg_ref : (TILE, 1)       f32  1/in-degree (0 for isolated nodes)
    wl1_ref    : (Din, E*H)      bf16 expert lin_l weights, concatenated
    wr1_ref    : (Din, E*H)      bf16 expert lin_r weights, concatenated
    b1_ref     : (1, E*H)        f32  expert lin_l biases, concatenated
    wg_ref     : (Din, E)        bf16 gating weight
    bg_ref     : (1, E)          f32  gating bias
    h1_ref     : (TILE, E*H)     bf16 output: relu'd layer-1 features, all experts
    gates_ref  : (TILE, E)       f32  output: softmax gates, zeroed outside top-k
    """
    # Mean neighbor aggregation, shared by every expert (one MXU call).
    agg1 = jnp.dot(adj_ref[...], x_full_ref[...],
                   preferred_element_type=jnp.float32)            # (TILE, Din) f32
    agg1 = agg1 * invdeg_ref[...]

    x_tile = x_tile_ref[...]                                       # (TILE, Din) bf16

    # All experts' layer-1 linear maps in two lane-dense MXU calls.
    h1 = jnp.dot(agg1.astype(jnp.bfloat16), wl1_ref[...],
                 preferred_element_type=jnp.float32)               # (TILE, E*H)
    h1 = h1 + jnp.dot(x_tile, wr1_ref[...],
                      preferred_element_type=jnp.float32)
    h1 = h1 + b1_ref[...]
    # norm = Identity ; activation = relu ; dropout = identity (eval)
    h1 = jnp.maximum(h1, 0.0)
    h1_ref[...] = h1.astype(h1_ref.dtype)                          # one full-width store

    # Gating network: softmax(x @ Wg + bg) over num_experts.
    glog = jnp.dot(x_tile, wg_ref[...],
                   preferred_element_type=jnp.float32) + bg_ref[...]   # (TILE, E)
    m = jnp.max(glog, axis=-1, keepdims=True)
    ex = jnp.exp(glog - m)
    denom = jnp.sum(ex, axis=-1, keepdims=True)
    g = ex * pl.reciprocal(denom, approx=True)                     # (TILE, E)

    # Top-k mask (rank-based; earlier index wins ties, like torch.topk).
    col_ids = jax.lax.broadcasted_iota(jnp.int32, g.shape, dimension=1)
    gates_masked = jnp.zeros_like(g)
    for ei in range(num_experts):
        ge = g[:, ei:ei + 1]                                       # (TILE, 1)
        rank = jnp.zeros_like(ge)
        for ej in range(num_experts):
            if ej == ei:
                continue
            if ej < ei:
                beats = g[:, ej:ej + 1] >= ge
            else:
                beats = g[:, ej:ej + 1] > ge
            rank = rank + beats.astype(jnp.float32)
        keep_e = rank < float(top_k)                               # (TILE, 1) bool
        gates_masked = jnp.where((col_ids == ei) & keep_e, g, gates_masked)
    gates_ref[...] = gates_masked


def _sage_layer2_combine_kernel(h1_full_ref, h1_tile_ref, adj_ref, invdeg_ref,
                                gates_ref, wl2_ref, wr2_ref, b2_ref, out_ref, *,
                                num_experts, hidden, out_dim):
    """Layer-2 SAGEConv for all experts + gated top-k combination.

    h1_full_ref : (N, E*H)       bf16, full-resident layer-1 features (all experts)
    h1_tile_ref : (TILE, E*H)    bf16, destination-node rows (root features)
    adj_ref     : (TILE, N)      bf16 binary mask
    invdeg_ref  : (TILE, 1)      f32
    gates_ref   : (TILE, E)      f32 masked gate weights
    wl2_ref     : (E, H, Dout)   bf16
    wr2_ref     : (E, H, Dout)   bf16
    b2_ref      : (1, E*Dout)    f32
    out_ref     : (TILE, Dout)   f32
    """
    # Batched mean aggregation for ALL experts at once (one MXU call).
    agg2 = jnp.dot(adj_ref[...], h1_full_ref[...],
                   preferred_element_type=jnp.float32)             # (TILE, E*H)
    agg2 = (agg2 * invdeg_ref[...]).astype(jnp.bfloat16)

    h1_tile = h1_tile_ref[...]                                     # (TILE, E*H) bf16
    gates = gates_ref[...]                                         # (TILE, E)
    tile = h1_tile.shape[0]

    acc = jnp.zeros((tile, out_dim), jnp.float32)
    for e in range(num_experts):                                   # static unroll, E=4
        lo = e * hidden
        lo_o = e * out_dim
        oe = jnp.dot(agg2[:, lo:lo + hidden], wl2_ref[e],
                     preferred_element_type=jnp.float32)           # (TILE, Dout)
        oe = oe + jnp.dot(h1_tile[:, lo:lo + hidden], wr2_ref[e],
                          preferred_element_type=jnp.float32)
        oe = oe + b2_ref[:, lo_o:lo_o + out_dim]
        oe = jnp.maximum(oe, 0.0)          # last_activation=True ; norm=Identity
        acc = acc + gates[:, e:e + 1] * oe
    out_ref[...] = acc                                             # one 128-lane store


# ------------------------------ host wrappers ------------------------------- #

@functools.partial(jax.jit, static_argnames=("num_experts", "top_k", "hidden",
                                              "output_dim", "tile"))
def moe_forward(x, adj, inv_deg, params, *, num_experts, top_k, hidden,
                output_dim, tile=128):
    n, din = x.shape
    if n % tile != 0:
        tile = n                      # fallback: single dst tile (n multiple of 8)
    eh = num_experts * hidden
    grid = (n // tile,)

    # bf16 operands for the MXU, f32 accumulation / biases / elementwise math.
    x_bf = x.astype(jnp.bfloat16)
    adj_bf = adj.astype(jnp.bfloat16)
    wl1 = params["Wl1"].astype(jnp.bfloat16)
    wr1 = params["Wr1"].astype(jnp.bfloat16)
    wg = params["Wg"].astype(jnp.bfloat16)
    wl2 = params["Wl2"].astype(jnp.bfloat16)
    wr2 = params["Wr2"].astype(jnp.bfloat16)

    cparams = pltpu.CompilerParams(dimension_semantics=("parallel",),
                                   vmem_limit_bytes=32 * 1024 * 1024)

    def full2d(a):
        return pl.BlockSpec(a.shape, lambda i: (0, 0))

    # ---- call A: layer-1 for all experts + gating -------------------------- #
    kernel_a = functools.partial(_sage_layer1_gate_kernel,
                                 num_experts=num_experts, top_k=top_k)
    h1, gates = pl.pallas_call(
        kernel_a,
        grid=grid,
        in_specs=[
            full2d(x_bf),                                   # x, full-resident (srcs)
            pl.BlockSpec((tile, din), lambda i: (i, 0)),    # x, dst-node tile (roots)
            pl.BlockSpec((tile, n), lambda i: (i, 0)),      # adj dst tile
            pl.BlockSpec((tile, 1), lambda i: (i, 0)),      # inv_deg tile
            full2d(wl1), full2d(wr1), full2d(params["b1"]),
            full2d(wg), full2d(params["bg"]),
        ],
        out_specs=[
            pl.BlockSpec((tile, eh), lambda i: (i, 0)),
            pl.BlockSpec((tile, num_experts), lambda i: (i, 0)),
        ],
        out_shape=(jax.ShapeDtypeStruct((n, eh), jnp.bfloat16),
                   jax.ShapeDtypeStruct((n, num_experts), jnp.float32)),
        compiler_params=cparams,
    )(x_bf, x_bf, adj_bf, inv_deg, wl1, wr1, params["b1"], wg, params["bg"])

    # ---- call B: layer-2 for all experts + top-k weighted combine ---------- #
    kernel_b = functools.partial(_sage_layer2_combine_kernel,
                                 num_experts=num_experts, hidden=hidden,
                                 out_dim=output_dim)
    out = pl.pallas_call(
        kernel_b,
        grid=grid,
        in_specs=[
            full2d(h1),                                     # h1, full-resident (srcs)
            pl.BlockSpec((tile, eh), lambda i: (i, 0)),     # h1, dst-node tile (roots)
            pl.BlockSpec((tile, n), lambda i: (i, 0)),      # adj dst tile
            pl.BlockSpec((tile, 1), lambda i: (i, 0)),      # inv_deg tile
            pl.BlockSpec((tile, num_experts), lambda i: (i, 0)),
            pl.BlockSpec(wl2.shape, lambda i: (0, 0, 0)),
            pl.BlockSpec(wr2.shape, lambda i: (0, 0, 0)),
            full2d(params["b2"]),
        ],
        out_specs=pl.BlockSpec((tile, output_dim), lambda i: (i, 0)),
        out_shape=jax.ShapeDtypeStruct((n, output_dim), jnp.float32),
        compiler_params=cparams,
    )(h1, h1, adj_bf, inv_deg, gates, wl2, wr2, params["b2"])
    return out


def edge_index_to_adj(edge_index, num_nodes):
    """Binary adjacency adj[dst, src] = 1 (no self-loops; SAGEConv uses root weight)
    plus f32 inverse in-degree (0 where degree is 0)."""
    src, dst = edge_index[0], edge_index[1]
    adj = jnp.zeros((num_nodes, num_nodes), jnp.float32).at[dst, src].set(1.0)
    deg = jnp.sum(adj, axis=1, keepdims=True)
    inv_deg = jnp.where(deg > 0, 1.0 / jnp.maximum(deg, 1.0), 0.0)
    return adj, inv_deg


def init_moe_params(key, input_dim, hidden, output_dim, num_experts):
    ks = jax.random.split(key, 5)

    def glorot(k, shape):
        fan_in, fan_out = shape[-2], shape[-1]
        s = jnp.sqrt(6.0 / (fan_in + fan_out))
        return jax.random.uniform(k, shape, jnp.float32, -s, s)

    e, h, d = num_experts, hidden, output_dim
    return {
        # layer-1 expert weights concatenated along the output axis (lane-dense)
        "Wl1": glorot(ks[0], (input_dim, e * h)),
        "Wr1": glorot(ks[1], (input_dim, e * h)),
        "b1": jnp.zeros((1, e * h), jnp.float32),
        # layer-2 expert weights stacked per expert
        "Wl2": glorot(ks[2], (e, h, d)),
        "Wr2": glorot(ks[3], (e, h, d)),
        "b2": jnp.zeros((1, e * d), jnp.float32),
        # gating network
        "Wg": glorot(ks[4], (input_dim, e)),
        "bg": jnp.zeros((1, e), jnp.float32),
    }


def moe_reference(x, adj, inv_deg, params, *, num_experts, top_k, hidden, output_dim):
    """Pure-JAX reference mirroring the kernel's math (same bf16 operand casts)."""
    f32 = jnp.float32
    xb = x.astype(jnp.bfloat16)
    adjb = adj.astype(jnp.bfloat16)
    agg1 = jnp.dot(adjb, xb, preferred_element_type=f32) * inv_deg
    h1 = (jnp.dot(agg1.astype(jnp.bfloat16), params["Wl1"].astype(jnp.bfloat16),
                  preferred_element_type=f32)
          + jnp.dot(xb, params["Wr1"].astype(jnp.bfloat16), preferred_element_type=f32)
          + params["b1"])
    h1 = jnp.maximum(h1, 0.0).astype(jnp.bfloat16)

    glog = jnp.dot(xb, params["Wg"].astype(jnp.bfloat16),
                   preferred_element_type=f32) + params["bg"]
    g = jax.nn.softmax(glog, axis=-1)
    vals, idx = jax.lax.top_k(g, top_k)
    rows = jnp.arange(g.shape[0])[:, None]
    gates = jnp.zeros_like(g).at[rows, idx].set(vals)

    agg2 = (jnp.dot(adjb, h1, preferred_element_type=f32) * inv_deg).astype(jnp.bfloat16)
    out = jnp.zeros((x.shape[0], output_dim), f32)
    for e in range(num_experts):
        lo, lo_o = e * hidden, e * output_dim
        oe = (jnp.dot(agg2[:, lo:lo + hidden], params["Wl2"][e].astype(jnp.bfloat16),
                      preferred_element_type=f32)
              + jnp.dot(h1[:, lo:lo + hidden], params["Wr2"][e].astype(jnp.bfloat16),
                        preferred_element_type=f32)
              + params["b2"][:, lo_o:lo_o + output_dim])
        oe = jnp.maximum(oe, 0.0)
        out = out + gates[:, e:e + 1] * oe
    return out


# ---------------------------------- main ------------------------------------ #

if __name__ == "__main__":
    N = 256                 # nodes (2 dst tiles of 128 -> exercises the parallel grid)
    INPUT_DIM = 128         # MOE defaults
    HIDDEN = 128
    OUTPUT_DIM = 128
    NUM_EXPERTS = 4
    TOP_K = 2

    key = jax.random.PRNGKey(0)
    k_x, k_p = jax.random.split(key)

    x = jax.random.normal(k_x, (N, INPUT_DIM), jnp.float32)

    # deterministic graph: bidirectional ring + skip-5 edges (in-degree 4 everywhere)
    idx = jnp.arange(N)
    src = jnp.concatenate([idx, (idx + 1) % N, idx, (idx + 5) % N])
    dst = jnp.concatenate([(idx + 1) % N, idx, (idx + 5) % N, idx])
    edge_index = jnp.stack([src, dst], axis=0)
    adj, inv_deg = edge_index_to_adj(edge_index, N)

    params = init_moe_params(k_p, INPUT_DIM, HIDDEN, OUTPUT_DIM, NUM_EXPERTS)

    out = moe_forward(x, adj, inv_deg, params, num_experts=NUM_EXPERTS, top_k=TOP_K,
                      hidden=HIDDEN, output_dim=OUTPUT_DIM)
    out = jax.block_until_ready(out)

    assert out.shape == (N, OUTPUT_DIM), out.shape
    assert bool(jnp.all(jnp.isfinite(out)))

    ref = moe_reference(x, adj, inv_deg, params, num_experts=NUM_EXPERTS, top_k=TOP_K,
                        hidden=HIDDEN, output_dim=OUTPUT_DIM)
    ref = jax.block_until_ready(ref)
    err = float(jnp.max(jnp.abs(out - ref)))
    tol = 5e-2 * (1.0 + float(jnp.max(jnp.abs(ref))))
    assert err < tol, (err, tol)

    print("KERNEL_OK")
</pallas_src>

<mosaic_0001>
module attributes {stable_mosaic.version = 11 : i64} {
  func.func @_sage_layer1_gate_kernel(%arg0: i32, %arg1: memref<256x128xbf16, #tpu.memory_space<vmem>>, %arg2: memref<128x128xbf16, #tpu.memory_space<vmem>>, %arg3: memref<128x256xbf16, #tpu.memory_space<vmem>>, %arg4: memref<128x1xf32, #tpu.memory_space<vmem>>, %arg5: memref<128x512xbf16, #tpu.memory_space<vmem>>, %arg6: memref<128x512xbf16, #tpu.memory_space<vmem>>, %arg7: memref<1x512xf32, #tpu.memory_space<vmem>>, %arg8: memref<128x4xbf16, #tpu.memory_space<vmem>>, %arg9: memref<1x4xf32, #tpu.memory_space<vmem>>, %arg10: memref<128x512xbf16, #tpu.memory_space<vmem>>, %arg11: memref<128x4xf32, #tpu.memory_space<vmem>>) attributes {dimension_semantics = [#tpu.dimension_semantics<parallel>], iteration_bounds = array<i64: 2>, scalar_prefetch = 0 : i64, scratch_operands = 0 : i64, tpu.core_type = #tpu.core_type<tc>, window_params = [{pipeline_mode = #tpu.pipeline_mode<synchronous>, transform_indices = @transform_0, window_bounds = array<i64: 256, 128>}, {transform_indices = @transform_1, window_bounds = array<i64: 128, 128>}, {transform_indices = @transform_2, window_bounds = array<i64: 128, 256>}, {transform_indices = @transform_3, window_bounds = array<i64: 128, 1>}, {pipeline_mode = #tpu.pipeline_mode<synchronous>, transform_indices = @transform_4, window_bounds = array<i64: 128, 512>}, {pipeline_mode = #tpu.pipeline_mode<synchronous>, transform_indices = @transform_5, window_bounds = array<i64: 128, 512>}, {pipeline_mode = #tpu.pipeline_mode<synchronous>, transform_indices = @transform_6, window_bounds = array<i64: 1, 512>}, {pipeline_mode = #tpu.pipeline_mode<synchronous>, transform_indices = @transform_7, window_bounds = array<i64: 128, 4>}, {pipeline_mode = #tpu.pipeline_mode<synchronous>, transform_indices = @transform_8, window_bounds = array<i64: 1, 4>}, {transform_indices = @transform_9, window_bounds = array<i64: 128, 512>}, {transform_indices = @transform_10, window_bounds = array<i64: 128, 4>}]} {
    %c0 = arith.constant 0 : index
    %c0_0 = arith.constant 0 : index
    %0 = vector.load %arg3[%c0, %c0_0] : memref<128x256xbf16, #tpu.memory_space<vmem>>, vector<128x256xbf16>
    %c0_1 = arith.constant 0 : index
    %c0_2 = arith.constant 0 : index
    %1 = vector.load %arg1[%c0_1, %c0_2] : memref<256x128xbf16, #tpu.memory_space<vmem>>, vector<256x128xbf16>
    %cst = arith.constant dense<0.000000e+00> : vector<128x128xf32>
    %2 = tpu.matmul %0, %1, %cst {dimension_numbers = #tpu.dot_dimension_numbers<[1], [0], [0], [1], [0, 0, 1, 1], [], []>} : vector<128x256xbf16>, vector<256x128xbf16>, vector<128x128xf32> -> vector<128x128xf32>
    %c0_3 = arith.constant 0 : index
    %c0_4 = arith.constant 0 : index
    %3 = vector.load %arg4[%c0_3, %c0_4] : memref<128x1xf32, #tpu.memory_space<vmem>>, vector<128x1xf32>
    %4 = vector.broadcast %3 : vector<128x1xf32> to vector<128x128xf32>
    %5 = arith.mulf %2, %4 : vector<128x128xf32>
    %c0_5 = arith.constant 0 : index
    %c0_6 = arith.constant 0 : index
    %6 = vector.load %arg2[%c0_5, %c0_6] : memref<128x128xbf16, #tpu.memory_space<vmem>>, vector<128x128xbf16>
    %7 = arith.truncf %5 : vector<128x128xf32> to vector<128x128xbf16>
    %c0_7 = arith.constant 0 : index
    %c0_8 = arith.constant 0 : index
    %8 = vector.load %arg5[%c0_7, %c0_8] : memref<128x512xbf16, #tpu.memory_space<vmem>>, vector<128x512xbf16>
    %cst_9 = arith.constant dense<0.000000e+00> : vector<128x512xf32>
    %9 = tpu.matmul %7, %8, %cst_9 {dimension_numbers = #tpu.dot_dimension_numbers<[1], [0], [0], [1], [0, 0, 1, 1], [], []>} : vector<128x128xbf16>, vector<128x512xbf16>, vector<128x512xf32> -> vector<128x512xf32>
    %c0_10 = arith.constant 0 : index
    %c0_11 = arith.constant 0 : index
    %10 = vector.load %arg6[%c0_10, %c0_11] : memref<128x512xbf16, #tpu.memory_space<vmem>>, vector<128x512xbf16>
    %cst_12 = arith.constant dense<0.000000e+00> : vector<128x512xf32>
    %11 = tpu.matmul %6, %10, %cst_12 {dimension_numbers = #tpu.dot_dimension_numbers<[1], [0], [0], [1], [0, 0, 1, 1], [], []>} : vector<128x128xbf16>, vector<128x512xbf16>, vector<128x512xf32> -> vector<128x512xf32>
    %12 = arith.addf %9, %11 : vector<128x512xf32>
    %c0_13 = arith.constant 0 : index
    %c0_14 = arith.constant 0 : index
    %13 = vector.load %arg7[%c0_13, %c0_14] : memref<1x512xf32, #tpu.memory_space<vmem>>, vector<1x512xf32>
    %14 = vector.broadcast %13 : vector<1x512xf32> to vector<128x512xf32>
    %15 = arith.addf %12, %14 : vector<128x512xf32>
    %cst_15 = arith.constant 0.000000e+00 : f32
    %16 = vector.broadcast %cst_15 : f32 to vector<128x512xf32>
    %17 = arith.maximumf %15, %16 : vector<128x512xf32>
    %18 = arith.truncf %17 : vector<128x512xf32> to vector<128x512xbf16>
    %c0_16 = arith.constant 0 : index
    %c0_17 = arith.constant 0 : index
    %19 = vector.load %arg10[%c0_16, %c0_17] : memref<128x512xbf16, #tpu.memory_space<vmem>>, vector<128x512xbf16>
    tpu.vector_store %arg10[%c0_16, %c0_17], %18 {strides = array<i32>} : memref<128x512xbf16, #tpu.memory_space<vmem>>, vector<128x512xbf16>,
    %c0_18 = arith.constant 0 : index
    %c0_19 = arith.constant 0 : index
    %20 = vector.load %arg8[%c0_18, %c0_19] : memref<128x4xbf16, #tpu.memory_space<vmem>>, vector<128x4xbf16>
    %cst_20 = arith.constant dense<0.000000e+00> : vector<128x4xf32>
    %21 = tpu.matmul %6, %20, %cst_20 {dimension_numbers = #tpu.dot_dimension_numbers<[1], [0], [0], [1], [0, 0, 1, 1], [], []>} : vector<128x128xbf16>, vector<128x4xbf16>, vector<128x4xf32> -> vector<128x4xf32>
    %c0_21 = arith.constant 0 : index
    %c0_22 = arith.constant 0 : index
    %22 = vector.load %arg9[%c0_21, %c0_22] : memref<1x4xf32, #tpu.memory_space<vmem>>, vector<1x4xf32>
    %23 = vector.broadcast %22 : vector<1x4xf32> to vector<128x4xf32>
    %24 = arith.addf %21, %23 : vector<128x4xf32>
    %cst_23 = arith.constant dense<0xFF800000> : vector<128xf32>
    %25 = vector.multi_reduction <maximumf>, %24, %cst_23 [1] : vector<128x4xf32> to vector<128xf32>
    %26 = vector.shape_cast %25 : vector<128xf32> to vector<128x1xf32>
    %27 = vector.broadcast %26 : vector<128x1xf32> to vector<128x4xf32>
    %28 = arith.subf %24, %27 : vector<128x4xf32>
    %29 = math.exp %28 : vector<128x4xf32>
    %cst_24 = arith.constant dense<0.000000e+00> : vector<128xf32>
    %30 = vector.multi_reduction <add>, %29, %cst_24 [1] : vector<128x4xf32> to vector<128xf32>
    %31 = vector.shape_cast %30 : vector<128xf32> to vector<128x1xf32>
    %32 = tpu.reciprocal %31 {approx = true} : vector<128x1xf32> -> vector<128x1xf32>
    %33 = vector.broadcast %32 : vector<128x1xf32> to vector<128x4xf32>
    %34 = arith.mulf %29, %33 : vector<128x4xf32>
    %35 = tpu.iota {dimensions = array<i32: 1>} : vector<128x4xi32>
    %cst_25 = arith.constant 0.000000e+00 : f32
    %36 = vector.broadcast %cst_25 : f32 to vector<128x4xf32>
    %37 = vector.extract_strided_slice %34 {offsets = [0, 0], sizes = [128, 1], strides = [1, 1]} : vector<128x4xf32> to vector<128x1xf32>
    %cst_26 = arith.constant 0.000000e+00 : f32
    %38 = vector.broadcast %cst_26 : f32 to vector<128x1xf32>
    %39 = vector.extract_strided_slice %34 {offsets = [0, 1], sizes = [128, 1], strides = [1, 1]} : vector<128x4xf32> to vector<128x1xf32>
    %40 = arith.cmpf ogt, %39, %37 : vector<128x1xf32>
    %41 = arith.extui %40 : vector<128x1xi1> to vector<128x1xi32>
    %42 = arith.sitofp %41 : vector<128x1xi32> to vector<128x1xf32>
    %43 = arith.addf %38, %42 : vector<128x1xf32>
    %44 = vector.extract_strided_slice %34 {offsets = [0, 2], sizes = [128, 1], strides = [1, 1]} : vector<128x4xf32> to vector<128x1xf32>
    %45 = arith.cmpf ogt, %44, %37 : vector<128x1xf32>
    %46 = arith.extui %45 : vector<128x1xi1> to vector<128x1xi32>
    %47 = arith.sitofp %46 : vector<128x1xi32> to vector<128x1xf32>
    %48 = arith.addf %43, %47 : vector<128x1xf32>
    %49 = vector.extract_strided_slice %34 {offsets = [0, 3], sizes = [128, 1], strides = [1, 1]} : vector<128x4xf32> to vector<128x1xf32>
    %50 = arith.cmpf ogt, %49, %37 : vector<128x1xf32>
    %51 = arith.extui %50 : vector<128x1xi1> to vector<128x1xi32>
    %52 = arith.sitofp %51 : vector<128x1xi32> to vector<128x1xf32>
    %53 = arith.addf %48, %52 : vector<128x1xf32>
    %cst_27 = arith.constant 2.000000e+00 : f32
    %54 = vector.broadcast %cst_27 : f32 to vector<128x1xf32>
    %55 = arith.cmpf olt, %53, %54 : vector<128x1xf32>
    %c0_i32 = arith.constant 0 : i32
    %56 = vector.broadcast %c0_i32 : i32 to vector<128x4xi32>
    %57 = arith.cmpi eq, %35, %56 : vector<128x4xi32>
    %58 = vector.broadcast %55 : vector<128x1xi1> to vector<128x4xi1>
    %59 = arith.andi %57, %58 : vector<128x4xi1>
    %60 = arith.select %59, %34, %36 : vector<128x4xi1>, vector<128x4xf32>
    %61 = vector.extract_strided_slice %34 {offsets = [0, 1], sizes = [128, 1], strides = [1, 1]} : vector<128x4xf32> to vector<128x1xf32>
    %cst_28 = arith.constant 0.000000e+00 : f32
    %62 = vector.broadcast %cst_28 : f32 to vector<128x1xf32>
    %63 = vector.extract_strided_slice %34 {offsets = [0, 0], sizes = [128, 1], strides = [1, 1]} : vector<128x4xf32> to vector<128x1xf32>
    %64 = arith.cmpf oge, %63, %61 : vector<128x1xf32>
    %65 = arith.extui %64 : vector<128x1xi1> to vector<128x1xi32>
    %66 = arith.sitofp %65 : vector<128x1xi32> to vector<128x1xf32>
    %67 = arith.addf %62, %66 : vector<128x1xf32>
    %68 = vector.extract_strided_slice %34 {offsets = [0, 2], sizes = [128, 1], strides = [1, 1]} : vector<128x4xf32> to vector<128x1xf32>
    %69 = arith.cmpf ogt, %68, %61 : vector<128x1xf32>
    %70 = arith.extui %69 : vector<128x1xi1> to vector<128x1xi32>
    %71 = arith.sitofp %70 : vector<128x1xi32> to vector<128x1xf32>
    %72 = arith.addf %67, %71 : vector<128x1xf32>
    %73 = vector.extract_strided_slice %34 {offsets = [0, 3], sizes = [128, 1], strides = [1, 1]} : vector<128x4xf32> to vector<128x1xf32>
    %74 = arith.cmpf ogt, %73, %61 : vector<128x1xf32>
    %75 = arith.extui %74 : vector<128x1xi1> to vector<128x1xi32>
    %76 = arith.sitofp %75 : vector<128x1xi32> to vector<128x1xf32>
    %77 = arith.addf %72, %76 : vector<128x1xf32>
    %cst_29 = arith.constant 2.000000e+00 : f32
    %78 = vector.broadcast %cst_29 : f32 to vector<128x1xf32>
    %79 = arith.cmpf olt, %77, %78 : vector<128x1xf32>
    %c1_i32 = arith.constant 1 : i32
    %80 = vector.broadcast %c1_i32 : i32 to vector<128x4xi32>
    %81 = arith.cmpi eq, %35, %80 : vector<128x4xi32>
    %82 = vector.broadcast %79 : vector<128x1xi1> to vector<128x4xi1>
    %83 = arith.andi %81, %82 : vector<128x4xi1>
    %84 = arith.select %83, %34, %60 : vector<128x4xi1>, vector<128x4xf32>
    %85 = vector.extract_strided_slice %34 {offsets = [0, 2], sizes = [128, 1], strides = [1, 1]} : vector<128x4xf32> to vector<128x1xf32>
    %cst_30 = arith.constant 0.000000e+00 : f32
    %86 = vector.broadcast %cst_30 : f32 to vector<128x1xf32>
    %87 = vector.extract_strided_slice %34 {offsets = [0, 0], sizes = [128, 1], strides = [1, 1]} : vector<128x4xf32> to vector<128x1xf32>
    %88 = arith.cmpf oge, %87, %85 : vector<128x1xf32>
    %89 = arith.extui %88 : vector<128x1xi1> to vector<128x1xi32>
    %90 = arith.sitofp %89 : vector<128x1xi32> to vector<128x1xf32>
    %91 = arith.addf %86, %90 : vector<128x1xf32>
    %92 = vector.extract_strided_slice %34 {offsets = [0, 1], sizes = [128, 1], strides = [1, 1]} : vector<128x4xf32> to vector<128x1xf32>
    %93 = arith.cmpf oge, %92, %85 : vector<128x1xf32>
    %94 = arith.extui %93 : vector<128x1xi1> to vector<128x1xi32>
    %95 = arith.sitofp %94 : vector<128x1xi32> to vector<128x1xf32>
    %96 = arith.addf %91, %95 : vector<128x1xf32>
    %97 = vector.extract_strided_slice %34 {offsets = [0, 3], sizes = [128, 1], strides = [1, 1]} : vector<128x4xf32> to vector<128x1xf32>
    %98 = arith.cmpf ogt, %97, %85 : vector<128x1xf32>
    %99 = arith.extui %98 : vector<128x1xi1> to vector<128x1xi32>
    %100 = arith.sitofp %99 : vector<128x1xi32> to vector<128x1xf32>
    %101 = arith.addf %96, %100 : vector<128x1xf32>
    %cst_31 = arith.constant 2.000000e+00 : f32
    %102 = vector.broadcast %cst_31 : f32 to vector<128x1xf32>
    %103 = arith.cmpf olt, %101, %102 : vector<128x1xf32>
    %c2_i32 = arith.constant 2 : i32
    %104 = vector.broadcast %c2_i32 : i32 to vector<128x4xi32>
    %105 = arith.cmpi eq, %35, %104 : vector<128x4xi32>
    %106 = vector.broadcast %103 : vector<128x1xi1> to vector<128x4xi1>
    %107 = arith.andi %105, %106 : vector<128x4xi1>
    %108 = arith.select %107, %34, %84 : vector<128x4xi1>, vector<128x4xf32>
    %109 = vector.extract_strided_slice %34 {offsets = [0, 3], sizes = [128, 1], strides = [1, 1]} : vector<128x4xf32> to vector<128x1xf32>
    %cst_32 = arith.constant 0.000000e+00 : f32
    %110 = vector.broadcast %cst_32 : f32 to vector<128x1xf32>
    %111 = vector.extract_strided_slice %34 {offsets = [0, 0], sizes = [128, 1], strides = [1, 1]} : vector<128x4xf32> to vector<128x1xf32>
    %112 = arith.cmpf oge, %111, %109 : vector<128x1xf32>
    %113 = arith.extui %112 : vector<128x1xi1> to vector<128x1xi32>
    %114 = arith.sitofp %113 : vector<128x1xi32> to vector<128x1xf32>
    %115 = arith.addf %110, %114 : vector<128x1xf32>
    %116 = vector.extract_strided_slice %34 {offsets = [0, 1], sizes = [128, 1], strides = [1, 1]} : vector<128x4xf32> to vector<128x1xf32>
    %117 = arith.cmpf oge, %116, %109 : vector<128x1xf32>
    %118 = arith.extui %117 : vector<128x1xi1> to vector<128x1xi32>
    %119 = arith.sitofp %118 : vector<128x1xi32> to vector<128x1xf32>
    %120 = arith.addf %115, %119 : vector<128x1xf32>
    %121 = vector.extract_strided_slice %34 {offsets = [0, 2], sizes = [128, 1], strides = [1, 1]} : vector<128x4xf32> to vector<128x1xf32>
    %122 = arith.cmpf oge, %121, %109 : vector<128x1xf32>
    %123 = arith.extui %122 : vector<128x1xi1> to vector<128x1xi32>
    %124 = arith.sitofp %123 : vector<128x1xi32> to vector<128x1xf32>
    %125 = arith.addf %120, %124 : vector<128x1xf32>
    %cst_33 = arith.constant 2.000000e+00 : f32
    %126 = vector.broadcast %cst_33 : f32 to vector<128x1xf32>
    %127 = arith.cmpf olt, %125, %126 : vector<128x1xf32>
    %c3_i32 = arith.constant 3 : i32
    %128 = vector.broadcast %c3_i32 : i32 to vector<128x4xi32>
    %129 = arith.cmpi eq, %35, %128 : vector<128x4xi32>
    %130 = vector.broadcast %127 : vector<128x1xi1> to vector<128x4xi1>
    %131 = arith.andi %129, %130 : vector<128x4xi1>
    %132 = arith.select %131, %34, %108 : vector<128x4xi1>, vector<128x4xf32>
    %c0_34 = arith.constant 0 : index
    %c0_35 = arith.constant 0 : index
    %133 = vector.load %arg11[%c0_34, %c0_35] : memref<128x4xf32, #tpu.memory_space<vmem>>, vector<128x4xf32>
    tpu.vector_store %arg11[%c0_34, %c0_35], %132 {strides = array<i32>} : memref<128x4xf32, #tpu.memory_space<vmem>>, vector<128x4xf32>,
    return
  }
  func.func @transform_0(%arg0: i32) -> (i32, i32) {
    %c0_i32 = arith.constant 0 : i32
    %c0_i32_0 = arith.constant 0 : i32
    %c0_i32_1 = arith.constant 0 : i32
    return %c0_i32, %c0_i32_0 : i32, i32
  }
  func.func @transform_1(%arg0: i32) -> (i32, i32) {
    %c0_i32 = arith.constant 0 : i32
    %c0_i32_0 = arith.constant 0 : i32
    return %arg0, %c0_i32 : i32, i32
  }
  func.func @transform_2(%arg0: i32) -> (i32, i32) {
    %c0_i32 = arith.constant 0 : i32
    %c0_i32_0 = arith.constant 0 : i32
    return %arg0, %c0_i32 : i32, i32
  }
  func.func @transform_3(%arg0: i32) -> (i32, i32) {
    %c0_i32 = arith.constant 0 : i32
    %c0_i32_0 = arith.constant 0 : i32
    return %arg0, %c0_i32 : i32, i32
  }
  func.func @transform_4(%arg0: i32) -> (i32, i32) {
    %c0_i32 = arith.constant 0 : i32
    %c0_i32_0 = arith.constant 0 : i32
    %c0_i32_1 = arith.constant 0 : i32
    return %c0_i32, %c0_i32_0 : i32, i32
  }
  func.func @transform_5(%arg0: i32) -> (i32, i32) {
    %c0_i32 = arith.constant 0 : i32
    %c0_i32_0 = arith.constant 0 : i32
    %c0_i32_1 = arith.constant 0 : i32
    return %c0_i32, %c0_i32_0 : i32, i32
  }
  func.func @transform_6(%arg0: i32) -> (i32, i32) {
    %c0_i32 = arith.constant 0 : i32
    %c0_i32_0 = arith.constant 0 : i32
    %c0_i32_1 = arith.constant 0 : i32
    return %c0_i32, %c0_i32_0 : i32, i32
  }
  func.func @transform_7(%arg0: i32) -> (i32, i32) {
    %c0_i32 = arith.constant 0 : i32
    %c0_i32_0 = arith.constant 0 : i32
    %c0_i32_1 = arith.constant 0 : i32
    return %c0_i32, %c0_i32_0 : i32, i32
  }
  func.func @transform_8(%arg0: i32) -> (i32, i32) {
    %c0_i32 = arith.constant 0 : i32
    %c0_i32_0 = arith.constant 0 : i32
    %c0_i32_1 = arith.constant 0 : i32
    return %c0_i32, %c0_i32_0 : i32, i32
  }
  func.func @transform_9(%arg0: i32) -> (i32, i32) {
    %c0_i32 = arith.constant 0 : i32
    %c0_i32_0 = arith.constant 0 : i32
    return %arg0, %c0_i32 : i32, i32
  }
  func.func @transform_10(%arg0: i32) -> (i32, i32) {
    %c0_i32 = arith.constant 0 : i32
    %c0_i32_0 = arith.constant 0 : i32
    return %arg0, %c0_i32 : i32, i32
  }
}

module attributes {stable_mosaic.version = 11 : i64} {
  func.func @_sage_layer2_combine_kernel(%arg0: i32, %arg1: memref<256x512xbf16, #tpu.memory_space<vmem>>, %arg2: memref<128x512xbf16, #tpu.memory_space<vmem>>, %arg3: memref<128x256xbf16, #tpu.memory_space<vmem>>, %arg4: memref<128x1xf32, #tpu.memory_space<vmem>>, %arg5: memref<128x4xf32, #tpu.memory_space<vmem>>, %arg6: memref<4x128x128xbf16, #tpu.memory_space<vmem>>, %arg7: memref<4x128x128xbf16, #tpu.memory_space<vmem>>, %arg8: memref<1x512xf32, #tpu.memory_space<vmem>>, %arg9: memref<128x128xf32, #tpu.memory_space<vmem>>) attributes {dimension_semantics = [#tpu.dimension_semantics<parallel>], iteration_bounds = array<i64: 2>, scalar_prefetch = 0 : i64, scratch_operands = 0 : i64, tpu.core_type = #tpu.core_type<tc>, window_params = [{pipeline_mode = #tpu.pipeline_mode<synchronous>, transform_indices = @transform_0, window_bounds = array<i64: 256, 512>}, {transform_indices = @transform_1, window_bounds = array<i64: 128, 512>}, {transform_indices = @transform_2, window_bounds = array<i64: 128, 256>}, {transform_indices = @transform_3, window_bounds = array<i64: 128, 1>}, {transform_indices = @transform_4, window_bounds = array<i64: 128, 4>}, {pipeline_mode = #tpu.pipeline_mode<synchronous>, transform_indices = @transform_5, window_bounds = array<i64: 4, 128, 128>}, {pipeline_mode = #tpu.pipeline_mode<synchronous>, transform_indices = @transform_6, window_bounds = array<i64: 4, 128, 128>}, {pipeline_mode = #tpu.pipeline_mode<synchronous>, transform_indices = @transform_7, window_bounds = array<i64: 1, 512>}, {transform_indices = @transform_8, window_bounds = array<i64: 128, 128>}]} {
    %c0 = arith.constant 0 : index
    %c0_0 = arith.constant 0 : index
    %0 = vector.load %arg3[%c0, %c0_0] : memref<128x256xbf16, #tpu.memory_space<vmem>>, vector<128x256xbf16>
    %c0_1 = arith.constant 0 : index
    %c0_2 = arith.constant 0 : index
    %1 = vector.load %arg1[%c0_1, %c0_2] : memref<256x512xbf16, #tpu.memory_space<vmem>>, vector<256x512xbf16>
    %cst = arith.constant dense<0.000000e+00> : vector<128x512xf32>
    %2 = tpu.matmul %0, %1, %cst {dimension_numbers = #tpu.dot_dimension_numbers<[1], [0], [0], [1], [0, 0, 1, 1], [], []>} : vector<128x256xbf16>, vector<256x512xbf16>, vector<128x512xf32> -> vector<128x512xf32>
    %c0_3 = arith.constant 0 : index
    %c0_4 = arith.constant 0 : index
    %3 = vector.load %arg4[%c0_3, %c0_4] : memref<128x1xf32, #tpu.memory_space<vmem>>, vector<128x1xf32>
    %4 = vector.broadcast %3 : vector<128x1xf32> to vector<128x512xf32>
    %5 = arith.mulf %2, %4 : vector<128x512xf32>
    %6 = arith.truncf %5 : vector<128x512xf32> to vector<128x512xbf16>
    %c0_5 = arith.constant 0 : index
    %c0_6 = arith.constant 0 : index
    %7 = vector.load %arg2[%c0_5, %c0_6] : memref<128x512xbf16, #tpu.memory_space<vmem>>, vector<128x512xbf16>
    %c0_7 = arith.constant 0 : index
    %c0_8 = arith.constant 0 : index
    %8 = vector.load %arg5[%c0_7, %c0_8] : memref<128x4xf32, #tpu.memory_space<vmem>>, vector<128x4xf32>
    %cst_9 = arith.constant 0.000000e+00 : f32
    %9 = vector.broadcast %cst_9 : f32 to vector<128x128xf32>
    %10 = vector.extract_strided_slice %6 {offsets = [0, 0], sizes = [128, 128], strides = [1, 1]} : vector<128x512xbf16> to vector<128x128xbf16>
    %c0_10 = arith.constant 0 : index
    %c0_11 = arith.constant 0 : index
    %c0_12 = arith.constant 0 : index
    %11 = vector.load %arg6[%c0_10, %c0_11, %c0_12] : memref<4x128x128xbf16, #tpu.memory_space<vmem>>, vector<1x128x128xbf16>
    %12 = vector.shape_cast %11 : vector<1x128x128xbf16> to vector<128x128xbf16>
    %cst_13 = arith.constant dense<0.000000e+00> : vector<128x128xf32>
    %13 = tpu.matmul %10, %12, %cst_13 {dimension_numbers = #tpu.dot_dimension_numbers<[1], [0], [0], [1], [0, 0, 1, 1], [], []>} : vector<128x128xbf16>, vector<128x128xbf16>, vector<128x128xf32> -> vector<128x128xf32>
    %14 = vector.extract_strided_slice %7 {offsets = [0, 0], sizes = [128, 128], strides = [1, 1]} : vector<128x512xbf16> to vector<128x128xbf16>
    %c0_14 = arith.constant 0 : index
    %c0_15 = arith.constant 0 : index
    %c0_16 = arith.constant 0 : index
    %15 = vector.load %arg7[%c0_14, %c0_15, %c0_16] : memref<4x128x128xbf16, #tpu.memory_space<vmem>>, vector<1x128x128xbf16>
    %16 = vector.shape_cast %15 : vector<1x128x128xbf16> to vector<128x128xbf16>
    %cst_17 = arith.constant dense<0.000000e+00> : vector<128x128xf32>
    %17 = tpu.matmul %14, %16, %cst_17 {dimension_numbers = #tpu.dot_dimension_numbers<[1], [0], [0], [1], [0, 0, 1, 1], [], []>} : vector<128x128xbf16>, vector<128x128xbf16>, vector<128x128xf32> -> vector<128x128xf32>
    %18 = arith.addf %13, %17 : vector<128x128xf32>
    %c0_18 = arith.constant 0 : index
    %c0_19 = arith.constant 0 : index
    %19 = vector.load %arg8[%c0_18, %c0_19] : memref<1x512xf32, #tpu.memory_space<vmem>>, vector<1x128xf32>
    %20 = vector.broadcast %19 : vector<1x128xf32> to vector<128x128xf32>
    %21 = arith.addf %18, %20 : vector<128x128xf32>
    %cst_20 = arith.constant 0.000000e+00 : f32
    %22 = vector.broadcast %cst_20 : f32 to vector<128x128xf32>
    %23 = arith.maximumf %21, %22 : vector<128x128xf32>
    %24 = vector.extract_strided_slice %8 {offsets = [0, 0], sizes = [128, 1], strides = [1, 1]} : vector<128x4xf32> to vector<128x1xf32>
    %25 = vector.broadcast %24 : vector<128x1xf32> to vector<128x128xf32>
    %26 = arith.mulf %25, %23 : vector<128x128xf32>
    %27 = arith.addf %9, %26 : vector<128x128xf32>
    %28 = vector.extract_strided_slice %6 {offsets = [0, 128], sizes = [128, 128], strides = [1, 1]} : vector<128x512xbf16> to vector<128x128xbf16>
    %c1 = arith.constant 1 : index
    %c0_21 = arith.constant 0 : index
    %c0_22 = arith.constant 0 : index
    %29 = vector.load %arg6[%c1, %c0_21, %c0_22] : memref<4x128x128xbf16, #tpu.memory_space<vmem>>, vector<1x128x128xbf16>
    %30 = vector.shape_cast %29 : vector<1x128x128xbf16> to vector<128x128xbf16>
    %cst_23 = arith.constant dense<0.000000e+00> : vector<128x128xf32>
    %31 = tpu.matmul %28, %30, %cst_23 {dimension_numbers = #tpu.dot_dimension_numbers<[1], [0], [0], [1], [0, 0, 1, 1], [], []>} : vector<128x128xbf16>, vector<128x128xbf16>, vector<128x128xf32> -> vector<128x128xf32>
    %32 = vector.extract_strided_slice %7 {offsets = [0, 128], sizes = [128, 128], strides = [1, 1]} : vector<128x512xbf16> to vector<128x128xbf16>
    %c1_24 = arith.constant 1 : index
    %c0_25 = arith.constant 0 : index
    %c0_26 = arith.constant 0 : index
    %33 = vector.load %arg7[%c1_24, %c0_25, %c0_26] : memref<4x128x128xbf16, #tpu.memory_space<vmem>>, vector<1x128x128xbf16>
    %34 = vector.shape_cast %33 : vector<1x128x128xbf16> to vector<128x128xbf16>
    %cst_27 = arith.constant dense<0.000000e+00> : vector<128x128xf32>
    %35 = tpu.matmul %32, %34, %cst_27 {dimension_numbers = #tpu.dot_dimension_numbers<[1], [0], [0], [1], [0, 0, 1, 1], [], []>} : vector<128x128xbf16>, vector<128x128xbf16>, vector<128x128xf32> -> vector<128x128xf32>
    %36 = arith.addf %31, %35 : vector<128x128xf32>
    %c0_28 = arith.constant 0 : index
    %c128 = arith.constant 128 : index
    %37 = vector.load %arg8[%c0_28, %c128] : memref<1x512xf32, #tpu.memory_space<vmem>>, vector<1x128xf32>
    %38 = vector.broadcast %37 : vector<1x128xf32> to vector<128x128xf32>
    %39 = arith.addf %36, %38 : vector<128x128xf32>
    %cst_29 = arith.constant 0.000000e+00 : f32
    %40 = vector.broadcast %cst_29 : f32 to vector<128x128xf32>
    %41 = arith.maximumf %39, %40 : vector<128x128xf32>
    %42 = vector.extract_strided_slice %8 {offsets = [0, 1], sizes = [128, 1], strides = [1, 1]} : vector<128x4xf32> to vector<128x1xf32>
    %43 = vector.broadcast %42 : vector<128x1xf32> to vector<128x128xf32>
    %44 = arith.mulf %43, %41 : vector<128x128xf32>
    %45 = arith.addf %27, %44 : vector<128x128xf32>
    %46 = vector.extract_strided_slice %6 {offsets = [0, 256], sizes = [128, 128], strides = [1, 1]} : vector<128x512xbf16> to vector<128x128xbf16>
    %c2 = arith.constant 2 : index
    %c0_30 = arith.constant 0 : index
    %c0_31 = arith.constant 0 : index
    %47 = vector.load %arg6[%c2, %c0_30, %c0_31] : memref<4x128x128xbf16, #tpu.memory_space<vmem>>, vector<1x128x128xbf16>
    %48 = vector.shape_cast %47 : vector<1x128x128xbf16> to vector<128x128xbf16>
    %cst_32 = arith.constant dense<0.000000e+00> : vector<128x128xf32>
    %49 = tpu.matmul %46, %48, %cst_32 {dimension_numbers = #tpu.dot_dimension_numbers<[1], [0], [0], [1], [0, 0, 1, 1], [], []>} : vector<128x128xbf16>, vector<128x128xbf16>, vector<128x128xf32> -> vector<128x128xf32>
    %50 = vector.extract_strided_slice %7 {offsets = [0, 256], sizes = [128, 128], strides = [1, 1]} : vector<128x512xbf16> to vector<128x128xbf16>
    %c2_33 = arith.constant 2 : index
    %c0_34 = arith.constant 0 : index
    %c0_35 = arith.constant 0 : index
    %51 = vector.load %arg7[%c2_33, %c0_34, %c0_35] : memref<4x128x128xbf16, #tpu.memory_space<vmem>>, vector<1x128x128xbf16>
    %52 = vector.shape_cast %51 : vector<1x128x128xbf16> to vector<128x128xbf16>
    %cst_36 = arith.constant dense<0.000000e+00> : vector<128x128xf32>
    %53 = tpu.matmul %50, %52, %cst_36 {dimension_numbers = #tpu.dot_dimension_numbers<[1], [0], [0], [1], [0, 0, 1, 1], [], []>} : vector<128x128xbf16>, vector<128x128xbf16>, vector<128x128xf32> -> vector<128x128xf32>
    %54 = arith.addf %49, %53 : vector<128x128xf32>
    %c0_37 = arith.constant 0 : index
    %c256 = arith.constant 256 : index
    %55 = vector.load %arg8[%c0_37, %c256] : memref<1x512xf32, #tpu.memory_space<vmem>>, vector<1x128xf32>
    %56 = vector.broadcast %55 : vector<1x128xf32> to vector<128x128xf32>
    %57 = arith.addf %54, %56 : vector<128x128xf32>
    %cst_38 = arith.constant 0.000000e+00 : f32
    %58 = vector.broadcast %cst_38 : f32 to vector<128x128xf32>
    %59 = arith.maximumf %57, %58 : vector<128x128xf32>
    %60 = vector.extract_strided_slice %8 {offsets = [0, 2], sizes = [128, 1], strides = [1, 1]} : vector<128x4xf32> to vector<128x1xf32>
    %61 = vector.broadcast %60 : vector<128x1xf32> to vector<128x128xf32>
    %62 = arith.mulf %61, %59 : vector<128x128xf32>
    %63 = arith.addf %45, %62 : vector<128x128xf32>
    %64 = vector.extract_strided_slice %6 {offsets = [0, 384], sizes = [128, 128], strides = [1, 1]} : vector<128x512xbf16> to vector<128x128xbf16>
    %c3 = arith.constant 3 : index
    %c0_39 = arith.constant 0 : index
    %c0_40 = arith.constant 0 : index
    %65 = vector.load %arg6[%c3, %c0_39, %c0_40] : memref<4x128x128xbf16, #tpu.memory_space<vmem>>, vector<1x128x128xbf16>
    %66 = vector.shape_cast %65 : vector<1x128x128xbf16> to vector<128x128xbf16>
    %cst_41 = arith.constant dense<0.000000e+00> : vector<128x128xf32>
    %67 = tpu.matmul %64, %66, %cst_41 {dimension_numbers = #tpu.dot_dimension_numbers<[1], [0], [0], [1], [0, 0, 1, 1], [], []>} : vector<128x128xbf16>, vector<128x128xbf16>, vector<128x128xf32> -> vector<128x128xf32>
    %68 = vector.extract_strided_slice %7 {offsets = [0, 384], sizes = [128, 128], strides = [1, 1]} : vector<128x512xbf16> to vector<128x128xbf16>
    %c3_42 = arith.constant 3 : index
    %c0_43 = arith.constant 0 : index
    %c0_44 = arith.constant 0 : index
    %69 = vector.load %arg7[%c3_42, %c0_43, %c0_44] : memref<4x128x128xbf16, #tpu.memory_space<vmem>>, vector<1x128x128xbf16>
    %70 = vector.shape_cast %69 : vector<1x128x128xbf16> to vector<128x128xbf16>
    %cst_45 = arith.constant dense<0.000000e+00> : vector<128x128xf32>
    %71 = tpu.matmul %68, %70, %cst_45 {dimension_numbers = #tpu.dot_dimension_numbers<[1], [0], [0], [1], [0, 0, 1, 1], [], []>} : vector<128x128xbf16>, vector<128x128xbf16>, vector<128x128xf32> -> vector<128x128xf32>
    %72 = arith.addf %67, %71 : vector<128x128xf32>
    %c0_46 = arith.constant 0 : index
    %c384 = arith.constant 384 : index
    %73 = vector.load %arg8[%c0_46, %c384] : memref<1x512xf32, #tpu.memory_space<vmem>>, vector<1x128xf32>
    %74 = vector.broadcast %73 : vector<1x128xf32> to vector<128x128xf32>
    %75 = arith.addf %72, %74 : vector<128x128xf32>
    %cst_47 = arith.constant 0.000000e+00 : f32
    %76 = vector.broadcast %cst_47 : f32 to vector<128x128xf32>
    %77 = arith.maximumf %75, %76 : vector<128x128xf32>
    %78 = vector.extract_strided_slice %8 {offsets = [0, 3], sizes = [128, 1], strides = [1, 1]} : vector<128x4xf32> to vector<128x1xf32>
    %79 = vector.broadcast %78 : vector<128x1xf32> to vector<128x128xf32>
    %80 = arith.mulf %79, %77 : vector<128x128xf32>
    %81 = arith.addf %63, %80 : vector<128x128xf32>
    %c0_48 = arith.constant 0 : index
    %c0_49 = arith.constant 0 : index
    %82 = vector.load %arg9[%c0_48, %c0_49] : memref<128x128xf32, #tpu.memory_space<vmem>>, vector<128x128xf32>
    tpu.vector_store %arg9[%c0_48, %c0_49], %81 {strides = array<i32>} : memref<128x128xf32, #tpu.memory_space<vmem>>, vector<128x128xf32>,
    return
  }
  func.func @transform_0(%arg0: i32) -> (i32, i32) {
    %c0_i32 = arith.constant 0 : i32
    %c0_i32_0 = arith.constant 0 : i32
    %c0_i32_1 = arith.constant 0 : i32
    return %c0_i32, %c0_i32_0 : i32, i32
  }
  func.func @transform_1(%arg0: i32) -> (i32, i32) {
    %c0_i32 = arith.constant 0 : i32
    %c0_i32_0 = arith.constant 0 : i32
    return %arg0, %c0_i32 : i32, i32
  }
  func.func @transform_2(%arg0: i32) -> (i32, i32) {
    %c0_i32 = arith.constant 0 : i32
    %c0_i32_0 = arith.constant 0 : i32
    return %arg0, %c0_i32 : i32, i32
  }
  func.func @transform_3(%arg0: i32) -> (i32, i32) {
    %c0_i32 = arith.constant 0 : i32
    %c0_i32_0 = arith.constant 0 : i32
    return %arg0, %c0_i32 : i32, i32
  }
  func.func @transform_4(%arg0: i32) -> (i32, i32) {
    %c0_i32 = arith.constant 0 : i32
    %c0_i32_0 = arith.constant 0 : i32
    return %arg0, %c0_i32 : i32, i32
  }
  func.func @transform_5(%arg0: i32) -> (i32, i32, i32) {
    %c0_i32 = arith.constant 0 : i32
    %c0_i32_0 = arith.constant 0 : i32
    %c0_i32_1 = arith.constant 0 : i32
    %c0_i32_2 = arith.constant 0 : i32
    return %c0_i32, %c0_i32_0, %c0_i32_1 : i32, i32, i32
  }
  func.func @transform_6(%arg0: i32) -> (i32, i32, i32) {
    %c0_i32 = arith.constant 0 : i32
    %c0_i32_0 = arith.constant 0 : i32
    %c0_i32_1 = arith.constant 0 : i32
    %c0_i32_2 = arith.constant 0 : i32
    return %c0_i32, %c0_i32_0, %c0_i32_1 : i32, i32, i32
  }
  func.func @transform_7(%arg0: i32) -> (i32, i32) {
    %c0_i32 = arith.constant 0 : i32
    %c0_i32_0 = arith.constant 0 : i32
    %c0_i32_1 = arith.constant 0 : i32
    return %c0_i32, %c0_i32_0 : i32, i32
  }
  func.func @transform_8(%arg0: i32) -> (i32, i32) {
    %c0_i32 = arith.constant 0 : i32
    %c0_i32_0 = arith.constant 0 : i32
    return %arg0, %c0_i32 : i32, i32
  }
}

</mosaic_0001>

<llo_original>
// kernel: moe_forward.3
$region0: #{moe_forward.3}
  #allocation0 [shape = 'u32[]', space=smem, size = 0x4, offset = 0x4, fixed_abs, tag = 'smem constant byte address 0x4 - core index']
  #allocation1 [shape = 'u32[72,128]{1,0:T(1,128)}', space=vmem, size = 0x9000, scoped, tag = 'internal scratch']
  %s0 = inlined_call_operand.vmem [shape: bf16[256,512], index: 0, kind: input, shape index: {}, may-alias: {0,1}]
  %s1 = inlined_call_operand.vmem [shape: bf16[256,512], index: 1, kind: input, shape index: {}, may-alias: {0,1}]
  %s2 = inlined_call_operand.vmem [shape: bf16[256,256], index: 2, kind: input, shape index: {}]
  %s3 = inlined_call_operand.vmem [shape: f32[256,1], index: 3, kind: input, shape index: {}]
  %s4 = inlined_call_operand.vmem [shape: f32[256,4], index: 4, kind: input, shape index: {}]
  %s5 = inlined_call_operand.vmem [shape: bf16[4,128,128], index: 5, kind: input, shape index: {}]
  %s6 = inlined_call_operand.vmem [shape: bf16[4,128,128], index: 6, kind: input, shape index: {}]
  %s7 = inlined_call_operand.vmem [shape: f32[1,512], index: 7, kind: input, shape index: {}]
  %s8 = inlined_call_operand.hbm [shape: f32[256,128], index: 8, kind: output, shape index: {}]
  %s9 = sld [smem:[#allocation0]]
  $region65: #{moe_forward.3} parent=0
    _
  %s11 = ssub.s32 1, %s9
  %s12 = scalar_select 0, %s11, %s9
  $region1: #{moe_forward.3} parent=0
    #allocation2 [shape = 'u8[131072]{0}', space=vmem, size = 0x20000, scoped, tag = 'output window, operand 0']
    #allocation3 [shape = 's32[2]{0}', space=sflag, size = 0x8, scoped, tag = 'scoped memory for moe_forward.3']
    %13 = vsyncpa [#allocation3], 0
    %s14 = scalar_lea.sflag [#allocation3], 1
    %15 = vsyncpa %s14, 0
    loop: start=0, step=1, limit=4
    $region2: #{moe_forward.3} parent=1 // loop_pre_header
      _
    $region3: #{moe_forward.3} parent=1 // loop_header
      %s17 = sphi 0, %s21
      %p18 = scmp.ge.s32.totalorder %s17, 4
      %s25 = sphi 0, %s25
      %s27 = sphi 0, %s25
      %s28 = sphi 0, %s27
      %s42 = sphi 0, %s28
      %s48 = sphi 0, %s50
      %s51 = sphi 0, %s48
      %s52 = sphi 0, %s51
      %s68 = sphi 0, %s52
      %s74 = sphi 0, %s76
      %s77 = sphi 0, %s74
      %s78 = sphi 0, %s77
      %s94 = sphi 0, %s78
      %s100 = sphi 0, %s102
      %s103 = sphi 0, %s100
      %s104 = sphi 0, %s103
      %s120 = sphi 0, %s104
      %s126 = sphi 0, %s128
      %s129 = sphi 0, %s126
      %s130 = sphi 0, %s129
      %s146 = sphi 0, %s130
      %s150 = sphi 0, %s150
      %s152 = sphi 0, %s150
      %s153 = sphi 0, %s152
      %s167 = sphi 0, %s153
      %s171 = sphi 0, %s171
      %s173 = sphi 0, %s171
      %s174 = sphi 0, %s173
      %s188 = sphi 0, %s174
      %s192 = sphi 0, %s192
      %s194 = sphi 0, %s192
      %s195 = sphi 0, %s194
      %s209 = sphi 0, %s195
      %s215 = sphi 0, %s217
      %s218 = sphi 0, %s215
      %s219 = sphi 0, %s218
      %s235 = sphi 0, %s219
    $region4: #{moe_forward.3} parent=1 // loop_header_branch
      %20 = sbr.rel (%p18) target = $region8
    $region5: #{moe_forward.3} parent=1 // loop_body
      %s22 = ssub.s32 %s17, 1
      %s23 = ssub.s32 %s17, 2
      %s24 = sadd.s32 %s17, 1
      %s26 = sadd.s32 %s25, 1
      %p29 = scmp.eq.s32.totalorder %s17, 1
      %p30 = scmp.ne.s32.totalorder %s25, %s27
      %p31 = scmp.eq.s32.totalorder %s17, 0
      %p32 = por %p30, %p31
      %p33 = scmp.ne.s32.totalorder %s25, %s27
      %p34 = scmp.eq.s32.totalorder %s22, 1
      %p35 = por %p33, %p34
      %p36 = scmp.ne.s32.totalorder %s27, %s28
      %p37 = scmp.eq.s32.totalorder %s22, 0
      %p38 = por %p36, %p37
      %p39 = scmp.ne.s32.totalorder %s27, %s28
      %p40 = scmp.eq.s32.totalorder %s23, 1
      %p41 = por %p39, %p40
      %p43 = scmp.ne.s32.totalorder %s28, %s42
      %p44 = scmp.eq.s32.totalorder %s23, 0
      %p45 = por %p43, %p44
      %s46 = ssub.s32 %s17, %s24
      %p47 = scmp.eq.s32.totalorder %s46, 0
      %s49 = sadd.s32 %s48, 1
      %s50 = scalar_select %p47, %s48, %s49
      %p53 = pneg %p47
      %p54 = scmp.eq.s32.totalorder %s17, 1
      %p55 = por %p53, %p54
      %p56 = scmp.ne.s32.totalorder %s48, %s51
      %p57 = scmp.eq.s32.totalorder %s17, 0
      %p58 = por %p56, %p57
      %p59 = scmp.ne.s32.totalorder %s48, %s51
      %p60 = scmp.eq.s32.totalorder %s22, 1
      %p61 = por %p59, %p60
      %p62 = scmp.ne.s32.totalorder %s51, %s52
      %p63 = scmp.eq.s32.totalorder %s22, 0
      %p64 = por %p62, %p63
      %p65 = scmp.ne.s32.totalorder %s51, %s52
      %p66 = scmp.eq.s32.totalorder %s23, 1
      %p67 = por %p65, %p66
      %p69 = scmp.ne.s32.totalorder %s52, %s68
      %p70 = scmp.eq.s32.totalorder %s23, 0
      %p71 = por %p69, %p70
      %s72 = ssub.s32 %s17, %s24
      %p73 = scmp.eq.s32.totalorder %s72, 0
      %s75 = sadd.s32 %s74, 1
      %s76 = scalar_select %p73, %s74, %s75
      %p79 = pneg %p73
      %p80 = scmp.eq.s32.totalorder %s17, 1
      %p81 = por %p79, %p80
      %p82 = scmp.ne.s32.totalorder %s74, %s77
      %p83 = scmp.eq.s32.totalorder %s17, 0
      %p84 = por %p82, %p83
      %p85 = scmp.ne.s32.totalorder %s74, %s77
      %p86 = scmp.eq.s32.totalorder %s22, 1
      %p87 = por %p85, %p86
      %p88 = scmp.ne.s32.totalorder %s77, %s78
      %p89 = scmp.eq.s32.totalorder %s22, 0
      %p90 = por %p88, %p89
      %p91 = scmp.ne.s32.totalorder %s77, %s78
      %p92 = scmp.eq.s32.totalorder %s23, 1
      %p93 = por %p91, %p92
      %p95 = scmp.ne.s32.totalorder %s78, %s94
      %p96 = scmp.eq.s32.totalorder %s23, 0
      %p97 = por %p95, %p96
      %s98 = ssub.s32 %s17, %s24
      %p99 = scmp.eq.s32.totalorder %s98, 0
      %s101 = sadd.s32 %s100, 1
      %s102 = scalar_select %p99, %s100, %s101
      %p105 = pneg %p99
      %p106 = scmp.eq.s32.totalorder %s17, 1
      %p107 = por %p105, %p106
      %p108 = scmp.ne.s32.totalorder %s100, %s103
      %p109 = scmp.eq.s32.totalorder %s17, 0
      %p110 = por %p108, %p109
      %p111 = scmp.ne.s32.totalorder %s100, %s103
      %p112 = scmp.eq.s32.totalorder %s22, 1
      %p113 = por %p111, %p112
      %p114 = scmp.ne.s32.totalorder %s103, %s104
      %p115 = scmp.eq.s32.totalorder %s22, 0
      %p116 = por %p114, %p115
      %p117 = scmp.ne.s32.totalorder %s103, %s104
      %p118 = scmp.eq.s32.totalorder %s23, 1
      %p119 = por %p117, %p118
      %p121 = scmp.ne.s32.totalorder %s104, %s120
      %p122 = scmp.eq.s32.totalorder %s23, 0
      %p123 = por %p121, %p122
      %s124 = ssub.s32 %s17, %s24
      %p125 = scmp.eq.s32.totalorder %s124, 0
      %s127 = sadd.s32 %s126, 1
      %s128 = scalar_select %p125, %s126, %s127
      %p131 = pneg %p125
      %p132 = scmp.eq.s32.totalorder %s17, 1
      %p133 = por %p131, %p132
      %p134 = scmp.ne.s32.totalorder %s126, %s129
      %p135 = scmp.eq.s32.totalorder %s17, 0
      %p136 = por %p134, %p135
      %p137 = scmp.ne.s32.totalorder %s126, %s129
      %p138 = scmp.eq.s32.totalorder %s22, 1
      %p139 = por %p137, %p138
      %p140 = scmp.ne.s32.totalorder %s129, %s130
      %p141 = scmp.eq.s32.totalorder %s22, 0
      %p142 = por %p140, %p141
      %p143 = scmp.ne.s32.totalorder %s129, %s130
      %p144 = scmp.eq.s32.totalorder %s23, 1
      %p145 = por %p143, %p144
      %p147 = scmp.ne.s32.totalorder %s130, %s146
      %p148 = scmp.eq.s32.totalorder %s23, 0
      %p149 = por %p147, %p148
      %s151 = sadd.s32 %s150, 1
      %p154 = scmp.eq.s32.totalorder %s17, 1
      %p155 = scmp.ne.s32.totalorder %s150, %s152
      %p156 = scmp.eq.s32.totalorder %s17, 0
      %p157 = por %p155, %p156
      %p158 = scmp.ne.s32.totalorder %s150, %s152
      %p159 = scmp.eq.s32.totalorder %s22, 1
      %p160 = por %p158, %p159
      %p161 = scmp.ne.s32.totalorder %s152, %s153
      %p162 = scmp.eq.s32.totalorder %s22, 0
      %p163 = por %p161, %p162
      %p164 = scmp.ne.s32.totalorder %s152, %s153
      %p165 = scmp.eq.s32.totalorder %s23, 1
      %p166 = por %p164, %p165
      %p168 = scmp.ne.s32.totalorder %s153, %s167
      %p169 = scmp.eq.s32.totalorder %s23, 0
      %p170 = por %p168, %p169
      %s172 = sadd.s32 %s171, 1
      %p175 = scmp.eq.s32.totalorder %s17, 1
      %p176 = scmp.ne.s32.totalorder %s171, %s173
      %p177 = scmp.eq.s32.totalorder %s17, 0
      %p178 = por %p176, %p177
      %p179 = scmp.ne.s32.totalorder %s171, %s173
      %p180 = scmp.eq.s32.totalorder %s22, 1
      %p181 = por %p179, %p180
      %p182 = scmp.ne.s32.totalorder %s173, %s174
      %p183 = scmp.eq.s32.totalorder %s22, 0
      %p184 = por %p182, %p183
      %p185 = scmp.ne.s32.totalorder %s173, %s174
      %p186 = scmp.eq.s32.totalorder %s23, 1
      %p187 = por %p185, %p186
      %p189 = scmp.ne.s32.totalorder %s174, %s188
      %p190 = scmp.eq.s32.totalorder %s23, 0
      %p191 = por %p189, %p190
      %s193 = sadd.s32 %s192, 1
      %p196 = scmp.eq.s32.totalorder %s17, 1
      %p197 = scmp.ne.s32.totalorder %s192, %s194
      %p198 = scmp.eq.s32.totalorder %s17, 0
      %p199 = por %p197, %p198
      %p200 = scmp.ne.s32.totalorder %s192, %s194
      %p201 = scmp.eq.s32.totalorder %s22, 1
      %p202 = por %p200, %p201
      %p203 = scmp.ne.s32.totalorder %s194, %s195
      %p204 = scmp.eq.s32.totalorder %s22, 0
      %p205 = por %p203, %p204
      %p206 = scmp.ne.s32.totalorder %s194, %s195
      %p207 = scmp.eq.s32.totalorder %s23, 1
      %p208 = por %p206, %p207
      %p210 = scmp.ne.s32.totalorder %s195, %s209
      %p211 = scmp.eq.s32.totalorder %s23, 0
      %p212 = por %p210, %p211
      %s213 = ssub.s32 %s17, %s24
      %p214 = scmp.eq.s32.totalorder %s213, 0
      %s216 = sadd.s32 %s215, 1
      %s217 = scalar_select %p214, %s215, %s216
      %p220 = pneg %p214
      %p221 = scmp.eq.s32.totalorder %s17, 1
      %p222 = por %p220, %p221
      %p223 = scmp.ne.s32.totalorder %s215, %s218
      %p224 = scmp.eq.s32.totalorder %s17, 0
      %p225 = por %p223, %p224
      %p226 = scmp.ne.s32.totalorder %s215, %s218
      %p227 = scmp.eq.s32.totalorder %s22, 1
      %p228 = por %p226, %p227
      %p229 = scmp.ne.s32.totalorder %s218, %s219
      %p230 = scmp.eq.s32.totalorder %s22, 0
      %p231 = por %p229, %p230
      %p232 = scmp.ne.s32.totalorder %s218, %s219
      %p233 = scmp.eq.s32.totalorder %s23, 1
      %p234 = por %p232, %p233
      %p236 = scmp.ne.s32.totalorder %s219, %s235
      %p237 = scmp.eq.s32.totalorder %s23, 0
      %p238 = por %p236, %p237
      %p239 = scmp.le.s32.totalorder 1, %s17
      %p240 = scmp.lt.s32.totalorder %s17, 3
      %p241 = pnand %p239, %p240
      %p242 = pneg %p241
      // Predicated region
      $region9: #{moe_forward.3} parent=5 // pred_check
        _
      $region10: #{moe_forward.3} parent=5 // pred_check_branch
        %244 = sbr.rel (%p241) target = $region12
      $region11: #{moe_forward.3} parent=5 // pred_region
        %s245 = ssub.s32 %s17, 1
        // Predicated region
        $region13: #{moe_forward.3} parent=11 // pred_check
          %p246 = pneg %p38
        $region14: #{moe_forward.3} parent=11 // pred_check_branch
          %248 = sbr.rel (%p246) target = $region16
        $region15: #{moe_forward.3} parent=11 // pred_region
          _
        $region16: #{moe_forward.3} parent=11 // pred_fallthru
          _
        // Predicated region
        $region17: #{moe_forward.3} parent=11 // pred_check
          %p249 = pneg %p163
        $region18: #{moe_forward.3} parent=11 // pred_check_branch
          %251 = sbr.rel (%p249) target = $region20
        $region19: #{moe_forward.3} parent=11 // pred_region
          _
        $region20: #{moe_forward.3} parent=11 // pred_fallthru
          _
        // Predicated region
        $region21: #{moe_forward.3} parent=11 // pred_check
          %p252 = pneg %p184
        $region22: #{moe_forward.3} parent=11 // pred_check_branch
          %254 = sbr.rel (%p252) target = $region24
        $region23: #{moe_forward.3} parent=11 // pred_region
          _
        $region24: #{moe_forward.3} parent=11 // pred_fallthru
          _
        // Predicated region
        $region25: #{moe_forward.3} parent=11 // pred_check
          %p255 = pneg %p205
        $region26: #{moe_forward.3} parent=11 // pred_check_branch
          %257 = sbr.rel (%p255) target = $region28
        $region27: #{moe_forward.3} parent=11 // pred_region
          _
        $region28: #{moe_forward.3} parent=11 // pred_fallthru
          _
      $region12: #{moe_forward.3} parent=5 // pred_fallthru
        _
      %p258 = scmp.lt.s32.totalorder %s17, 2
      // Predicated region
      $region29: #{moe_forward.3} parent=5 // pred_check
        %p259 = pneg %p258
      $region30: #{moe_forward.3} parent=5 // pred_check_branch
        %261 = sbr.rel (%p259) target = $region32
      $region31: #{moe_forward.3} parent=5 // pred_region
        // Predicated region
        $region33: #{moe_forward.3} parent=31 // pred_check
          %p262 = pneg %p58
        $region34: #{moe_forward.3} parent=31 // pred_check_branch
          %264 = sbr.rel (%p262) target = $region36
        $region35: #{moe_forward.3} parent=31 // pred_region
          %s265 = smul.u32 16, %s17
          %p266 = scmp.lt.s32.totalorder %s265, 31
          %s267 = scalar_select %p266, %s265, 31
          %s268 = smul.addr %s267, 4
          %s269 = smul.addr %s268, 4
          %s270 = scalar_lea.vmem %s1, %s269
          %s271 = smul.u32 16, %s17
        $region36: #{moe_forward.3} parent=31 // pred_fallthru
          _
        // Predicated region
        $region37: #{moe_forward.3} parent=31 // pred_check
          %p272 = pneg %p84
        $region38: #{moe_forward.3} parent=31 // pred_check_branch
          %274 = sbr.rel (%p272) target = $region40
        $region39: #{moe_forward.3} parent=31 // pred_region
          %s275 = smul.u32 16, %s17
          %p276 = scmp.lt.s32.totalorder %s275, 31
          %s277 = scalar_select %p276, %s275, 31
          %s278 = smul.addr %s277, 2
          %s279 = smul.addr %s278, 4
          %s280 = scalar_lea.vmem %s2, %s279
          %s281 = smul.u32 16, %s17
        $region40: #{moe_forward.3} parent=31 // pred_fallthru
          _
        // Predicated region
        $region41: #{moe_forward.3} parent=31 // pred_check
          %p282 = pneg %p110
        $region42: #{moe_forward.3} parent=31 // pred_check_branch
          %284 = sbr.rel (%p282) target = $region44
        $region43: #{moe_forward.3} parent=31 // pred_region
          %s285 = smul.u32 16, %s17
          %p286 = scmp.lt.s32.totalorder %s285, 31
          %s287 = scalar_select %p286, %s285, 31
          %s288 = smul.addr %s287, 8
          %s289 = scalar_lea.vmem %s3, %s288
          %s290 = smul.u32 16, %s17
        $region44: #{moe_forward.3} parent=31 // pred_fallthru
          _
        // Predicated region
        $region45: #{moe_forward.3} parent=31 // pred_check
          %p291 = pneg %p136
        $region46: #{moe_forward.3} parent=31 // pred_check_branch
          %293 = sbr.rel (%p291) target = $region48
        $region47: #{moe_forward.3} parent=31 // pred_region
          %s294 = smul.u32 16, %s17
          %p295 = scmp.lt.s32.totalorder %s294, 31
          %s296 = scalar_select %p295, %s294, 31
          %s297 = smul.addr %s296, 8
          %s298 = scalar_lea.vmem %s4, %s297
          %s299 = smul.u32 16, %s17
        $region48: #{moe_forward.3} parent=31 // pred_fallthru
          _
      $region32: #{moe_forward.3} parent=5 // pred_fallthru
        _
      %p300 = scmp.le.s32.totalorder 1, %s17
      %p301 = scmp.lt.s32.totalorder %s17, 3
      %p302 = pnand %p300, %p301
      %p303 = pneg %p302
      // Predicated region
      $region49: #{moe_forward.3} parent=5 // pred_check
        _
      $region50: #{moe_forward.3} parent=5 // pred_check_branch
        %305 = sbr.rel (%p302) target = $region52
      $region51: #{moe_forward.3} parent=5 // pred_region
        %s306 = ssub.s32 %s17, 1
        %p307 = pneg %p38
        %p308 = pneg %p35
        %s309 = smul.u32 16, %s22
        %p310 = scmp.lt.s32.totalorder %s309, 31
        %s311 = scalar_select %p310, %s309, 31
        %s312 = smul.addr %s311, 4
        %s313 = smul.addr %s312, 4
        %s314 = scalar_lea.vmem %s1, %s313
        %p315 = pneg %p64
        %p316 = pneg %p61
        %s317 = smul.u32 16, %s22
        %p318 = scmp.lt.s32.totalorder %s317, 31
        %s319 = scalar_select %p318, %s317, 31
        %s320 = smul.addr %s319, 2
        %s321 = smul.addr %s320, 4
        %s322 = scalar_lea.vmem %s2, %s321
        %p323 = pneg %p90
        %p324 = pneg %p87
        %s325 = smul.u32 16, %s22
        %p326 = scmp.lt.s32.totalorder %s325, 31
        %s327 = scalar_select %p326, %s325, 31
        %s328 = smul.addr %s327, 8
        %s329 = scalar_lea.vmem %s3, %s328
        %p330 = pneg %p116
        %p331 = pneg %p113
        %s332 = smul.u32 16, %s22
        %p333 = scmp.lt.s32.totalorder %s332, 31
        %s334 = scalar_select %p333, %s332, 31
        %s335 = smul.addr %s334, 8
        %s336 = scalar_lea.vmem %s4, %s335
        %p337 = pneg %p142
        %p338 = pneg %p139
        %p339 = pneg %p163
        %p340 = pneg %p160
        %p341 = pneg %p184
        %p342 = pneg %p181
        %p343 = pneg %p205
        %p344 = pneg %p202
        %p345 = pneg %p231
        %p346 = pneg %p228
        %s347 = sand.u32 %s218, 1
        %s348 = scalar_lea.sflag [#allocation3], %s347
        %s349 = sand.u32 %s218, 1
        %s350 = smul.addr %s349, 128
        %s351 = scalar_lea.vmem [#allocation2], %s350
        %s352 = smul.u32 16, %s22
        %p353 = scmp.lt.s32.totalorder %s352, 31
        %s354 = scalar_select %p353, %s352, 31
        %s355 = smul.addr %s354, 4
        %s356 = smul.addr %s355, 4
        %s357 = scalar_lea.vmem %s1, %s356
        %s358 = smul.u32 16, %s22
        %s359 = smul.u32 16, %s22
        %p360 = scmp.lt.s32.totalorder %s359, 31
        %s361 = scalar_select %p360, %s359, 31
        %s362 = smul.addr %s361, 2
        %s363 = smul.addr %s362, 4
        %s364 = scalar_lea.vmem %s2, %s363
        %s365 = smul.u32 16, %s22
        %s366 = smul.u32 16, %s22
        %p367 = scmp.lt.s32.totalorder %s366, 31
        %s368 = scalar_select %p367, %s366, 31
        %s369 = smul.addr %s368, 8
        %s370 = scalar_lea.vmem %s3, %s369
        %s371 = smul.u32 16, %s22
        %s372 = smul.u32 16, %s22
        %p373 = scmp.lt.s32.totalorder %s372, 31
        %s374 = scalar_select %p373, %s372, 31
        %s375 = smul.addr %s374, 8
        %s376 = scalar_lea.vmem %s4, %s375
        %s377 = smul.u32 16, %s22
        %s378 = smul.u32 16, %s22
        %v379 = vld [vmem:[%s364] sm:$0xff]
        %v380 = vld [vmem:[%s364 + $0x8] sm:$0xff]
        %v381 = vld [vmem:[%s364 + $0x10] sm:$0xff]
        %v382 = vld [vmem:[%s364 + $0x18] sm:$0xff]
        %v383 = vld [vmem:[%s364 + $0x20] sm:$0xff]
        %v384 = vld [vmem:[%s364 + $0x28] sm:$0xff]
        %v385 = vld [vmem:[%s364 + $0x30] sm:$0xff]
        %v386 = vld [vmem:[%s364 + $0x38] sm:$0xff]
        %v387 = vld [vmem:[%s364 + $0x40] sm:$0xff]
        %v388 = vld [vmem:[%s364 + $0x48] sm:$0xff]
        %v389 = vld [vmem:[%s364 + $0x50] sm:$0xff]
        %v390 = vld [vmem:[%s364 + $0x58] sm:$0xff]
        %v391 = vld [vmem:[%s364 + $0x60] sm:$0xff]
        %v392 = vld [vmem:[%s364 + $0x68] sm:$0xff]
        %v393 = vld [vmem:[%s364 + $0x70] sm:$0xff]
        %v394 = vld [vmem:[%s364 + $0x78] sm:$0xff]
        %v395 = vld [vmem:[%s0] sm:$0xff]
        %v396 = vld [vmem:[%s0 + $0x8] sm:$0xff]
        %v397 = vld [vmem:[%s0 + $0x10] sm:$0xff]
        %v398 = vld [vmem:[%s0 + $0x18] sm:$0xff]
        %v399 = vld [vmem:[%s0 + $0x20] sm:$0xff]
        %v400 = vld [vmem:[%s0 + $0x28] sm:$0xff]
        %v401 = vld [vmem:[%s0 + $0x30] sm:$0xff]
        %v402 = vld [vmem:[%s0 + $0x38] sm:$0xff]
        %v403 = vld [vmem:[%s0 + $0x40] sm:$0xff]
        %v404 = vld [vmem:[%s0 + $0x48] sm:$0xff]
        %v405 = vld [vmem:[%s0 + $0x50] sm:$0xff]
        %v406 = vld [vmem:[%s0 + $0x58] sm:$0xff]
        %v407 = vld [vmem:[%s0 + $0x60] sm:$0xff]
        %v408 = vld [vmem:[%s0 + $0x68] sm:$0xff]
        %v409 = vld [vmem:[%s0 + $0x70] sm:$0xff]
        %v410 = vld [vmem:[%s0 + $0x78] sm:$0xff]
        %v411 = vld [vmem:[%s0 + $0x80] sm:$0xff]
        %v412 = vld [vmem:[%s0 + $0x88] sm:$0xff]
        %v413 = vld [vmem:[%s0 + $0x90] sm:$0xff]
        %v414 = vld [vmem:[%s0 + $0x98] sm:$0xff]
        %v415 = vld [vmem:[%s0 + $0xa0] sm:$0xff]
        %v416 = vld [vmem:[%s0 + $0xa8] sm:$0xff]
        %v417 = vld [vmem:[%s0 + $0xb0] sm:$0xff]
        %v418 = vld [vmem:[%s0 + $0xb8] sm:$0xff]
        %v419 = vld [vmem:[%s0 + $0xc0] sm:$0xff]
        %v420 = vld [vmem:[%s0 + $0xc8] sm:$0xff]
        %v421 = vld [vmem:[%s0 + $0xd0] sm:$0xff]
        %v422 = vld [vmem:[%s0 + $0xd8] sm:$0xff]
        %v423 = vld [vmem:[%s0 + $0xe0] sm:$0xff]
        %v424 = vld [vmem:[%s0 + $0xe8] sm:$0xff]
        %v425 = vld [vmem:[%s0 + $0xf0] sm:$0xff]
        %v426 = vld [vmem:[%s0 + $0xf8] sm:$0xff]
        %v427 = vld [vmem:[%s0 + $0x100] sm:$0xff]
        %v428 = vld [vmem:[%s0 + $0x108] sm:$0xff]
        %v429 = vld [vmem:[%s0 + $0x110] sm:$0xff]
        %v430 = vld [vmem:[%s0 + $0x118] sm:$0xff]
        %v431 = vld [vmem:[%s0 + $0x120] sm:$0xff]
        %v432 = vld [vmem:[%s0 + $0x128] sm:$0xff]
        %v433 = vld [vmem:[%s0 + $0x130] sm:$0xff]
        %v434 = vld [vmem:[%s0 + $0x138] sm:$0xff]
        %v435 = vld [vmem:[%s0 + $0x140] sm:$0xff]
        %v436 = vld [vmem:[%s0 + $0x148] sm:$0xff]
        %v437 = vld [vmem:[%s0 + $0x150] sm:$0xff]
        %v438 = vld [vmem:[%s0 + $0x158] sm:$0xff]
        %v439 = vld [vmem:[%s0 + $0x160] sm:$0xff]
        %v440 = vld [vmem:[%s0 + $0x168] sm:$0xff]
        %v441 = vld [vmem:[%s0 + $0x170] sm:$0xff]
        %v442 = vld [vmem:[%s0 + $0x178] sm:$0xff]
        %v443 = vld [vmem:[%s0 + $0x180] sm:$0xff]
        %v444 = vld [vmem:[%s0 + $0x188] sm:$0xff]
        %v445 = vld [vmem:[%s0 + $0x190] sm:$0xff]
        %v446 = vld [vmem:[%s0 + $0x198] sm:$0xff]
        %v447 = vld [vmem:[%s0 + $0x1a0] sm:$0xff]
        %v448 = vld [vmem:[%s0 + $0x1a8] sm:$0xff]
        %v449 = vld [vmem:[%s0 + $0x1b0] sm:$0xff]
        %v450 = vld [vmem:[%s0 + $0x1b8] sm:$0xff]
        %v451 = vld [vmem:[%s0 + $0x1c0] sm:$0xff]
        %v452 = vld [vmem:[%s0 + $0x1c8] sm:$0xff]
        %v453 = vld [vmem:[%s0 + $0x1d0] sm:$0xff]
        %v454 = vld [vmem:[%s0 + $0x1d8] sm:$0xff]
        %v455 = vld [vmem:[%s0 + $0x1e0] sm:$0xff]
        %v456 = vld [vmem:[%s0 + $0x1e8] sm:$0xff]
        %v457 = vld [vmem:[%s0 + $0x1f0] sm:$0xff]
        %v458 = vld [vmem:[%s0 + $0x1f8] sm:$0xff]
        %v475 = vunpack.c.l.b16 %v379
        %v476 = vunpack.c.h.b16 %v379
        %v477 = vunpack.c.l.b16 %v380
        %v478 = vunpack.c.h.b16 %v380
        %v479 = vunpack.c.l.b16 %v381
        %v480 = vunpack.c.h.b16 %v381
        %v481 = vunpack.c.l.b16 %v382
        %v482 = vunpack.c.h.b16 %v382
        %v483 = vunpack.c.l.b16 %v383
        %v484 = vunpack.c.h.b16 %v383
        %v485 = vunpack.c.l.b16 %v384
        %v486 = vunpack.c.h.b16 %v384
        %v487 = vunpack.c.l.b16 %v385
        %v488 = vunpack.c.h.b16 %v385
        %v489 = vunpack.c.l.b16 %v386
        %v490 = vunpack.c.h.b16 %v386
        %v491 = vunpack.c.l.b16 %v387
        %v492 = vunpack.c.h.b16 %v387
        %v493 = vunpack.c.l.b16 %v388
        %v494 = vunpack.c.h.b16 %v388
        %v495 = vunpack.c.l.b16 %v389
        %v496 = vunpack.c.h.b16 %v389
        %v497 = vunpack.c.l.b16 %v390
        %v498 = vunpack.c.h.b16 %v390
        %v499 = vunpack.c.l.b16 %v391
        %v500 = vunpack.c.h.b16 %v391
        %v501 = vunpack.c.l.b16 %v392
        %v502 = vunpack.c.h.b16 %v392
        %v503 = vunpack.c.l.b16 %v393
        %v504 = vunpack.c.h.b16 %v393
        %v505 = vunpack.c.l.b16 %v394
        %v506 = vunpack.c.h.b16 %v394
        %v507 = vpack.c.b16 %v477, %v475
        %v508 = vpack.c.b16 %v478, %v476
        %v509 = vpack.c.b16 %v481, %v479
        %v510 = vpack.c.b16 %v482, %v480
        %v511 = vpack.c.b16 %v485, %v483
        %v512 = vpack.c.b16 %v486, %v484
        %v513 = vpack.c.b16 %v489, %v487
        %v514 = vpack.c.b16 %v490, %v488
        %v515 = vpack.c.b16 %v493, %v491
        %v516 = vpack.c.b16 %v494, %v492
        %v517 = vpack.c.b16 %v497, %v495
        %v518 = vpack.c.b16 %v498, %v496
        %v519 = vpack.c.b16 %v501, %v499
        %v520 = vpack.c.b16 %v502, %v500
        %v521 = vpack.c.b16 %v505, %v503
        %v522 = vpack.c.b16 %v506, %v504
        %v603 = vunpack.c.l.b16 %v395
        %v604 = vunpack.c.h.b16 %v395
        %v605 = vunpack.c.l.b16 %v396
        %v606 = vunpack.c.h.b16 %v396
        %v607 = vunpack.c.l.b16 %v397
        %v608 = vunpack.c.h.b16 %v397
        %v609 = vunpack.c.l.b16 %v398
        %v610 = vunpack.c.h.b16 %v398
        %v611 = vunpack.c.l.b16 %v399
        %v612 = vunpack.c.h.b16 %v399
        %v613 = vunpack.c.l.b16 %v400
        %v614 = vunpack.c.h.b16 %v400
        %v615 = vunpack.c.l.b16 %v401
        %v616 = vunpack.c.h.b16 %v401
        %v617 = vunpack.c.l.b16 %v402
        %v618 = vunpack.c.h.b16 %v402
        %v619 = vunpack.c.l.b16 %v403
        %v620 = vunpack.c.h.b16 %v403
        %v621 = vunpack.c.l.b16 %v404
        %v622 = vunpack.c.h.b16 %v404
        %v623 = vunpack.c.l.b16 %v405
        %v624 = vunpack.c.h.b16 %v405
        %v625 = vunpack.c.l.b16 %v406
        %v626 = vunpack.c.h.b16 %v406
        %v627 = vunpack.c.l.b16 %v407
        %v628 = vunpack.c.h.b16 %v407
        %v629 = vunpack.c.l.b16 %v408
        %v630 = vunpack.c.h.b16 %v408
        %v631 = vunpack.c.l.b16 %v409
        %v632 = vunpack.c.h.b16 %v409
        %v633 = vunpack.c.l.b16 %v410
        %v634 = vunpack.c.h.b16 %v410
        %v635 = vunpack.c.l.b16 %v411
        %v636 = vunpack.c.h.b16 %v411
        %v637 = vunpack.c.l.b16 %v412
        %v638 = vunpack.c.h.b16 %v412
        %v639 = vunpack.c.l.b16 %v413
        %v640 = vunpack.c.h.b16 %v413
        %v641 = vunpack.c.l.b16 %v414
        %v642 = vunpack.c.h.b16 %v414
        %v643 = vunpack.c.l.b16 %v415
        %v644 = vunpack.c.h.b16 %v415
        %v645 = vunpack.c.l.b16 %v416
        %v646 = vunpack.c.h.b16 %v416
        %v647 = vunpack.c.l.b16 %v417
        %v648 = vunpack.c.h.b16 %v417
        %v649 = vunpack.c.l.b16 %v418
        %v650 = vunpack.c.h.b16 %v418
        %v651 = vunpack.c.l.b16 %v419
        %v652 = vunpack.c.h.b16 %v419
        %v653 = vunpack.c.l.b16 %v420
        %v654 = vunpack.c.h.b16 %v420
        %v655 = vunpack.c.l.b16 %v421
        %v656 = vunpack.c.h.b16 %v421
        %v657 = vunpack.c.l.b16 %v422
        %v658 = vunpack.c.h.b16 %v422
        %v659 = vunpack.c.l.b16 %v423
        %v660 = vunpack.c.h.b16 %v423
        %v661 = vunpack.c.l.b16 %v424
        %v662 = vunpack.c.h.b16 %v424
        %v663 = vunpack.c.l.b16 %v425
        %v664 = vunpack.c.h.b16 %v425
        %v665 = vunpack.c.l.b16 %v426
        %v666 = vunpack.c.h.b16 %v426
        %v667 = vunpack.c.l.b16 %v427
        %v668 = vunpack.c.h.b16 %v427
        %v669 = vunpack.c.l.b16 %v428
        %v670 = vunpack.c.h.b16 %v428
        %v671 = vunpack.c.l.b16 %v429
        %v672 = vunpack.c.h.b16 %v429
        %v673 = vunpack.c.l.b16 %v430
        %v674 = vunpack.c.h.b16 %v430
        %v675 = vunpack.c.l.b16 %v431
        %v676 = vunpack.c.h.b16 %v431
        %v677 = vunpack.c.l.b16 %v432
        %v678 = vunpack.c.h.b16 %v432
        %v679 = vunpack.c.l.b16 %v433
        %v680 = vunpack.c.h.b16 %v433
        %v681 = vunpack.c.l.b16 %v434
        %v682 = vunpack.c.h.b16 %v434
        %v683 = vunpack.c.l.b16 %v435
        %v684 = vunpack.c.h.b16 %v435
        %v685 = vunpack.c.l.b16 %v436
        %v686 = vunpack.c.h.b16 %v436
        %v687 = vunpack.c.l.b16 %v437
        %v688 = vunpack.c.h.b16 %v437
        %v689 = vunpack.c.l.b16 %v438
        %v690 = vunpack.c.h.b16 %v438
        %v691 = vunpack.c.l.b16 %v439
        %v692 = vunpack.c.h.b16 %v439
        %v693 = vunpack.c.l.b16 %v440
        %v694 = vunpack.c.h.b16 %v440
        %v695 = vunpack.c.l.b16 %v441
        %v696 = vunpack.c.h.b16 %v441
        %v697 = vunpack.c.l.b16 %v442
        %v698 = vunpack.c.h.b16 %v442
        %v699 = vunpack.c.l.b16 %v443
        %v700 = vunpack.c.h.b16 %v443
        %v701 = vunpack.c.l.b16 %v444
        %v702 = vunpack.c.h.b16 %v444
        %v703 = vunpack.c.l.b16 %v445
        %v704 = vunpack.c.h.b16 %v445
        %v705 = vunpack.c.l.b16 %v446
        %v706 = vunpack.c.h.b16 %v446
        %v707 = vunpack.c.l.b16 %v447
        %v708 = vunpack.c.h.b16 %v447
        %v709 = vunpack.c.l.b16 %v448
        %v710 = vunpack.c.h.b16 %v448
        %v711 = vunpack.c.l.b16 %v449
        %v712 = vunpack.c.h.b16 %v449
        %v713 = vunpack.c.l.b16 %v450
        %v714 = vunpack.c.h.b16 %v450
        %v715 = vunpack.c.l.b16 %v451
        %v716 = vunpack.c.h.b16 %v451
        %v717 = vunpack.c.l.b16 %v452
        %v718 = vunpack.c.h.b16 %v452
        %v719 = vunpack.c.l.b16 %v453
        %v720 = vunpack.c.h.b16 %v453
        %v721 = vunpack.c.l.b16 %v454
        %v722 = vunpack.c.h.b16 %v454
        %v723 = vunpack.c.l.b16 %v455
        %v724 = vunpack.c.h.b16 %v455
        %v725 = vunpack.c.l.b16 %v456
        %v726 = vunpack.c.h.b16 %v456
        %v727 = vunpack.c.l.b16 %v457
        %v728 = vunpack.c.h.b16 %v457
        %v729 = vunpack.c.l.b16 %v458
        %v730 = vunpack.c.h.b16 %v458
        %v731 = vpack.c.b16 %v607, %v603
        %v732 = vpack.c.b16 %v608, %v604
        %v733 = vpack.c.b16 %v609, %v605
        %v734 = vpack.c.b16 %v610, %v606
        %v735 = vpack.c.b16 %v615, %v611
        %v736 = vpack.c.b16 %v616, %v612
        %v737 = vpack.c.b16 %v617, %v613
        %v738 = vpack.c.b16 %v618, %v614
        %v739 = vpack.c.b16 %v623, %v619
        %v740 = vpack.c.b16 %v624, %v620
        %v741 = vpack.c.b16 %v625, %v621
        %v742 = vpack.c.b16 %v626, %v622
        %v743 = vpack.c.b16 %v631, %v627
        %v744 = vpack.c.b16 %v632, %v628
        %v745 = vpack.c.b16 %v633, %v629
        %v746 = vpack.c.b16 %v634, %v630
        %v747 = vpack.c.b16 %v639, %v635
        %v748 = vpack.c.b16 %v640, %v636
        %v749 = vpack.c.b16 %v641, %v637
        %v750 = vpack.c.b16 %v642, %v638
        %v751 = vpack.c.b16 %v647, %v643
        %v752 = vpack.c.b16 %v648, %v644
        %v753 = vpack.c.b16 %v649, %v645
        %v754 = vpack.c.b16 %v650, %v646
        %v755 = vpack.c.b16 %v655, %v651
        %v756 = vpack.c.b16 %v656, %v652
        %v757 = vpack.c.b16 %v657, %v653
        %v758 = vpack.c.b16 %v658, %v654
        %v759 = vpack.c.b16 %v663, %v659
        %v760 = vpack.c.b16 %v664, %v660
        %v761 = vpack.c.b16 %v665, %v661
        %v762 = vpack.c.b16 %v666, %v662
        %v763 = vpack.c.b16 %v671, %v667
        %v764 = vpack.c.b16 %v672, %v668
        %v765 = vpack.c.b16 %v673, %v669
        %v766 = vpack.c.b16 %v674, %v670
        %v767 = vpack.c.b16 %v679, %v675
        %v768 = vpack.c.b16 %v680, %v676
        %v769 = vpack.c.b16 %v681, %v677
        %v770 = vpack.c.b16 %v682, %v678
        %v771 = vpack.c.b16 %v687, %v683
        %v772 = vpack.c.b16 %v688, %v684
        %v773 = vpack.c.b16 %v689, %v685
        %v774 = vpack.c.b16 %v690, %v686
        %v775 = vpack.c.b16 %v695, %v691
        %v776 = vpack.c.b16 %v696, %v692
        %v777 = vpack.c.b16 %v697, %v693
        %v778 = vpack.c.b16 %v698, %v694
        %v779 = vpack.c.b16 %v703, %v699
        %v780 = vpack.c.b16 %v704, %v700
        %v781 = vpack.c.b16 %v705, %v701
        %v782 = vpack.c.b16 %v706, %v702
        %v783 = vpack.c.b16 %v711, %v707
        %v784 = vpack.c.b16 %v712, %v708
        %v785 = vpack.c.b16 %v713, %v709
        %v786 = vpack.c.b16 %v714, %v710
        %v787 = vpack.c.b16 %v719, %v715
        %v788 = vpack.c.b16 %v720, %v716
        %v789 = vpack.c.b16 %v721, %v717
        %v790 = vpack.c.b16 %v722, %v718
        %v791 = vpack.c.b16 %v727, %v723
        %v792 = vpack.c.b16 %v728, %v724
        %v793 = vpack.c.b16 %v729, %v725
        %v794 = vpack.c.b16 %v730, %v726
        %859 = vmatpush.bf16.msra.mxu0 %v759
        %860 = vmatpush.bf16.msra.mxu0 %v755
        %861 = vmatpush.bf16.msra.mxu0 %v751
        %862 = vmatpush.bf16.msra.mxu0 %v747
        %863 = vmatpush.bf16.msra.mxu0 %v743
        %864 = vmatpush.bf16.msra.mxu0 %v739
        %865 = vmatpush.bf16.msra.mxu0 %v735
        %866 = vmatpush.bf16.msra.mxu0 %v731
        %867 = vmatmul.bf16.gmra.mxu0 %v507
        %v868 = vpop.f32.mrf.mxu0
        %v869 = vadd.f32 0.0, %v868
        %v870 = vpop.f32.mrf.mxu0
        %v871 = vadd.f32 0.0, %v870
        %872 = vmatmul.bf16.gmra.mxu0 %v509
        %v873 = vpop.f32.mrf.mxu0
        %v874 = vadd.f32 0.0, %v873
        %v875 = vpop.f32.mrf.mxu0
        %v876 = vadd.f32 0.0, %v875
        %877 = vmatmul.bf16.gmra.mxu0 %v511
        %v878 = vpop.f32.mrf.mxu0
        %v879 = vadd.f32 0.0, %v878
        %v880 = vpop.f32.mrf.mxu0
        %v881 = vadd.f32 0.0, %v880
        %882 = vmatmul.bf16.gmra.mxu0 %v513
        %v883 = vpop.f32.mrf.mxu0
        %v884 = vadd.f32 0.0, %v883
        %v885 = vpop.f32.mrf.mxu0
        %v886 = vadd.f32 0.0, %v885
        %887 = vmatmul.bf16.gmra.mxu0 %v515
        %v888 = vpop.f32.mrf.mxu0
        %v889 = vadd.f32 0.0, %v888
        %v890 = vpop.f32.mrf.mxu0
        %v891 = vadd.f32 0.0, %v890
        %892 = vmatmul.bf16.gmra.mxu0 %v517
        %v893 = vpop.f32.mrf.mxu0
        %v894 = vadd.f32 0.0, %v893
        %v895 = vpop.f32.mrf.mxu0
        %v896 = vadd.f32 0.0, %v895
        %897 = vmatmul.bf16.gmra.mxu0 %v519
        %v898 = vpop.f32.mrf.mxu0
        %v899 = vadd.f32 0.0, %v898
        %v900 = vpop.f32.mrf.mxu0
        %v901 = vadd.f32 0.0, %v900
        %902 = vmatmul.bf16.gmra.mxu0 %v521
        %v903 = vpop.f32.mrf.mxu0
        %v904 = vadd.f32 0.0, %v903
        %v905 = vpop.f32.mrf.mxu0
        %v906 = vadd.f32 0.0, %v905
        %907 = vdwg.mxu0
        %908 = vmatpush.bf16.msra.mxu0 %v791
        %909 = vmatpush.bf16.msra.mxu0 %v787
        %910 = vmatpush.bf16.msra.mxu0 %v783
        %911 = vmatpush.bf16.msra.mxu0 %v779
        %912 = vmatpush.bf16.msra.mxu0 %v775
        %913 = vmatpush.bf16.msra.mxu0 %v771
        %914 = vmatpush.bf16.msra.mxu0 %v767
        %915 = vmatpush.bf16.msra.mxu0 %v763
        %916 = vmatmul.bf16.gmra.mxu0 %v508
        %v917 = vpop.f32.mrf.mxu0
        %v918 = vadd.f32 %v869, %v917
        %v919 = vpop.f32.mrf.mxu0
        %v920 = vadd.f32 %v871, %v919
        %921 = vmatmul.bf16.gmra.mxu0 %v510
        %v922 = vpop.f32.mrf.mxu0
        %v923 = vadd.f32 %v874, %v922
        %v924 = vpop.f32.mrf.mxu0
        %v925 = vadd.f32 %v876, %v924
        %926 = vmatmul.bf16.gmra.mxu0 %v512
        %v927 = vpop.f32.mrf.mxu0
        %v928 = vadd.f32 %v879, %v927
        %v929 = vpop.f32.mrf.mxu0
        %v930 = vadd.f32 %v881, %v929
        %931 = vmatmul.bf16.gmra.mxu0 %v514
        %v932 = vpop.f32.mrf.mxu0
        %v933 = vadd.f32 %v884, %v932
        %v934 = vpop.f32.mrf.mxu0
        %v935 = vadd.f32 %v886, %v934
        %936 = vmatmul.bf16.gmra.mxu0 %v516
        %v937 = vpop.f32.mrf.mxu0
        %v938 = vadd.f32 %v889, %v937
        %v939 = vpop.f32.mrf.mxu0
        %v940 = vadd.f32 %v891, %v939
        %941 = vmatmul.bf16.gmra.mxu0 %v518
        %v942 = vpop.f32.mrf.mxu0
        %v943 = vadd.f32 %v894, %v942
        %v944 = vpop.f32.mrf.mxu0
        %v945 = vadd.f32 %v896, %v944
        %946 = vmatmul.bf16.gmra.mxu0 %v520
        %v947 = vpop.f32.mrf.mxu0
        %v948 = vadd.f32 %v899, %v947
        %v949 = vpop.f32.mrf.mxu0
        %v950 = vadd.f32 %v901, %v949
        %951 = vmatmul.bf16.gmra.mxu0 %v522
        %v952 = vpop.f32.mrf.mxu0
        %v953 = vadd.f32 %v904, %v952
        %v954 = vpop.f32.mrf.mxu0
        %v955 = vadd.f32 %v906, %v954
        %956 = vdwg.mxu0
        %957 = vmatpush.bf16.msra.mxu0 %v760
        %958 = vmatpush.bf16.msra.mxu0 %v756
        %959 = vmatpush.bf16.msra.mxu0 %v752
        %960 = vmatpush.bf16.msra.mxu0 %v748
        %961 = vmatpush.bf16.msra.mxu0 %v744
        %962 = vmatpush.bf16.msra.mxu0 %v740
        %963 = vmatpush.bf16.msra.mxu0 %v736
        %964 = vmatpush.bf16.msra.mxu0 %v732
        %965 = vmatmul.bf16.gmra.mxu0 %v507
        %v966 = vpop.f32.mrf.mxu0
        %v967 = vadd.f32 0.0, %v966
        %v968 = vpop.f32.mrf.mxu0
        %v969 = vadd.f32 0.0, %v968
        %970 = vmatmul.bf16.gmra.mxu0 %v509
        %v971 = vpop.f32.mrf.mxu0
        %v972 = vadd.f32 0.0, %v971
        %v973 = vpop.f32.mrf.mxu0
        %v974 = vadd.f32 0.0, %v973
        %975 = vmatmul.bf16.gmra.mxu0 %v511
        %v976 = vpop.f32.mrf.mxu0
        %v977 = vadd.f32 0.0, %v976
        %v978 = vpop.f32.mrf.mxu0
        %v979 = vadd.f32 0.0, %v978
        %980 = vmatmul.bf16.gmra.mxu0 %v513
        %v981 = vpop.f32.mrf.mxu0
        %v982 = vadd.f32 0.0, %v981
        %v983 = vpop.f32.mrf.mxu0
        %v984 = vadd.f32 0.0, %v983
        %985 = vmatmul.bf16.gmra.mxu0 %v515
        %v986 = vpop.f32.mrf.mxu0
        %v987 = vadd.f32 0.0, %v986
        %v988 = vpop.f32.mrf.mxu0
        %v989 = vadd.f32 0.0, %v988
        %990 = vmatmul.bf16.gmra.mxu0 %v517
        %v991 = vpop.f32.mrf.mxu0
        %v992 = vadd.f32 0.0, %v991
        %v993 = vpop.f32.mrf.mxu0
        %v994 = vadd.f32 0.0, %v993
        %995 = vmatmul.bf16.gmra.mxu0 %v519
        %v996 = vpop.f32.mrf.mxu0
        %v997 = vadd.f32 0.0, %v996
        %v998 = vpop.f32.mrf.mxu0
        %v999 = vadd.f32 0.0, %v998
        %1000 = vmatmul.bf16.gmra.mxu0 %v521
        %v1001 = vpop.f32.mrf.mxu0
        %v1002 = vadd.f32 0.0, %v1001
        %v1003 = vpop.f32.mrf.mxu0
        %v1004 = vadd.f32 0.0, %v1003
        %1005 = vdwg.mxu0
        %1006 = vmatpush.bf16.msra.mxu0 %v792
        %1007 = vmatpush.bf16.msra.mxu0 %v788
        %1008 = vmatpush.bf16.msra.mxu0 %v784
        %1009 = vmatpush.bf16.msra.mxu0 %v780
        %1010 = vmatpush.bf16.msra.mxu0 %v776
        %1011 = vmatpush.bf16.msra.mxu0 %v772
        %1012 = vmatpush.bf16.msra.mxu0 %v768
        %1013 = vmatpush.bf16.msra.mxu0 %v764
        %1014 = vmatmul.bf16.gmra.mxu0 %v508
        %v1015 = vpop.f32.mrf.mxu0
        %v1016 = vadd.f32 %v967, %v1015
        %v1017 = vpop.f32.mrf.mxu0
        %v1018 = vadd.f32 %v969, %v1017
        %1019 = vmatmul.bf16.gmra.mxu0 %v510
        %v1020 = vpop.f32.mrf.mxu0
        %v1021 = vadd.f32 %v972, %v1020
        %v1022 = vpop.f32.mrf.mxu0
        %v1023 = vadd.f32 %v974, %v1022
        %1024 = vmatmul.bf16.gmra.mxu0 %v512
        %v1025 = vpop.f32.mrf.mxu0
        %v1026 = vadd.f32 %v977, %v1025
        %v1027 = vpop.f32.mrf.mxu0
        %v1028 = vadd.f32 %v979, %v1027
        %1029 = vmatmul.bf16.gmra.mxu0 %v514
        %v1030 = vpop.f32.mrf.mxu0
        %v1031 = vadd.f32 %v982, %v1030
        %v1032 = vpop.f32.mrf.mxu0
        %v1033 = vadd.f32 %v984, %v1032
        %1034 = vmatmul.bf16.gmra.mxu0 %v516
        %v1035 = vpop.f32.mrf.mxu0
        %v1036 = vadd.f32 %v987, %v1035
        %v1037 = vpop.f32.mrf.mxu0
        %v1038 = vadd.f32 %v989, %v1037
        %1039 = vmatmul.bf16.gmra.mxu0 %v518
        %v1040 = vpop.f32.mrf.mxu0
        %v1041 = vadd.f32 %v992, %v1040
        %v1042 = vpop.f32.mrf.mxu0
        %v1043 = vadd.f32 %v994, %v1042
        %1044 = vmatmul.bf16.gmra.mxu0 %v520
        %v1045 = vpop.f32.mrf.mxu0
        %v1046 = vadd.f32 %v997, %v1045
        %v1047 = vpop.f32.mrf.mxu0
        %v1048 = vadd.f32 %v999, %v1047
        %1049 = vmatmul.bf16.gmra.mxu0 %v522
        %v1050 = vpop.f32.mrf.mxu0
        %v1051 = vadd.f32 %v1002, %v1050
        %v1052 = vpop.f32.mrf.mxu0
        %v1053 = vadd.f32 %v1004, %v1052
        %1054 = vdwg.mxu0
        %1055 = vmatpush.bf16.msra.mxu0 %v761
        %1056 = vmatpush.bf16.msra.mxu0 %v757
        %1057 = vmatpush.bf16.msra.mxu0 %v753
        %1058 = vmatpush.bf16.msra.mxu0 %v749
        %1059 = vmatpush.bf16.msra.mxu0 %v745
        %1060 = vmatpush.bf16.msra.mxu0 %v741
        %1061 = vmatpush.bf16.msra.mxu0 %v737
        %1062 = vmatpush.bf16.msra.mxu0 %v733
        %1063 = vmatmul.bf16.gmra.mxu0 %v507
        %v1064 = vpop.f32.mrf.mxu0
        %v1065 = vadd.f32 0.0, %v1064
        %v1066 = vpop.f32.mrf.mxu0
        %v1067 = vadd.f32 0.0, %v1066
        %1068 = vmatmul.bf16.gmra.mxu0 %v509
        %v1069 = vpop.f32.mrf.mxu0
        %v1070 = vadd.f32 0.0, %v1069
        %v1071 = vpop.f32.mrf.mxu0
        %v1072 = vadd.f32 0.0, %v1071
        %1073 = vmatmul.bf16.gmra.mxu0 %v511
        %v1074 = vpop.f32.mrf.mxu0
        %v1075 = vadd.f32 0.0, %v1074
        %v1076 = vpop.f32.mrf.mxu0
        %v1077 = vadd.f32 0.0, %v1076
        %1078 = vmatmul.bf16.gmra.mxu0 %v513
        %v1079 = vpop.f32.mrf.mxu0
        %v1080 = vadd.f32 0.0, %v1079
        %v1081 = vpop.f32.mrf.mxu0
        %v1082 = vadd.f32 0.0, %v1081
        %1083 = vmatmul.bf16.gmra.mxu0 %v515
        %v1084 = vpop.f32.mrf.mxu0
        %v1085 = vadd.f32 0.0, %v1084
        %v1086 = vpop.f32.mrf.mxu0
        %v1087 = vadd.f32 0.0, %v1086
        %1088 = vmatmul.bf16.gmra.mxu0 %v517
        %v1089 = vpop.f32.mrf.mxu0
        %v1090 = vadd.f32 0.0, %v1089
        %v1091 = vpop.f32.mrf.mxu0
        %v1092 = vadd.f32 0.0, %v1091
        %1093 = vmatmul.bf16.gmra.mxu0 %v519
        %v1094 = vpop.f32.mrf.mxu0
        %v1095 = vadd.f32 0.0, %v1094
        %v1096 = vpop.f32.mrf.mxu0
        %v1097 = vadd.f32 0.0, %v1096
        %1098 = vmatmul.bf16.gmra.mxu0 %v521
        %v1099 = vpop.f32.mrf.mxu0
        %v1100 = vadd.f32 0.0, %v1099
        %v1101 = vpop.f32.mrf.mxu0
        %v1102 = vadd.f32 0.0, %v1101
        %1103 = vdwg.mxu0
        %1104 = vmatpush.bf16.msra.mxu0 %v793
        %1105 = vmatpush.bf16.msra.mxu0 %v789
        %1106 = vmatpush.bf16.msra.mxu0 %v785
        %1107 = vmatpush.bf16.msra.mxu0 %v781
        %1108 = vmatpush.bf16.msra.mxu0 %v777
        %1109 = vmatpush.bf16.msra.mxu0 %v773
        %1110 = vmatpush.bf16.msra.mxu0 %v769
        %1111 = vmatpush.bf16.msra.mxu0 %v765
        %1112 = vmatmul.bf16.gmra.mxu0 %v508
        %v1113 = vpop.f32.mrf.mxu0
        %v1114 = vadd.f32 %v1065, %v1113
        %v1115 = vpop.f32.mrf.mxu0
        %v1116 = vadd.f32 %v1067, %v1115
        %1117 = vmatmul.bf16.gmra.mxu0 %v510
        %v1118 = vpop.f32.mrf.mxu0
        %v1119 = vadd.f32 %v1070, %v1118
        %v1120 = vpop.f32.mrf.mxu0
        %v1121 = vadd.f32 %v1072, %v1120
        %1122 = vmatmul.bf16.gmra.mxu0 %v512
        %v1123 = vpop.f32.mrf.mxu0
        %v1124 = vadd.f32 %v1075, %v1123
        %v1125 = vpop.f32.mrf.mxu0
        %v1126 = vadd.f32 %v1077, %v1125
        %1127 = vmatmul.bf16.gmra.mxu0 %v514
        %v1128 = vpop.f32.mrf.mxu0
        %v1129 = vadd.f32 %v1080, %v1128
        %v1130 = vpop.f32.mrf.mxu0
        %v1131 = vadd.f32 %v1082, %v1130
        %1132 = vmatmul.bf16.gmra.mxu0 %v516
        %v1133 = vpop.f32.mrf.mxu0
        %v1134 = vadd.f32 %v1085, %v1133
        %v1135 = vpop.f32.mrf.mxu0
        %v1136 = vadd.f32 %v1087, %v1135
        %1137 = vmatmul.bf16.gmra.mxu0 %v518
        %v1138 = vpop.f32.mrf.mxu0
        %v1139 = vadd.f32 %v1090, %v1138
        %v1140 = vpop.f32.mrf.mxu0
        %v1141 = vadd.f32 %v1092, %v1140
        %1142 = vmatmul.bf16.gmra.mxu0 %v520
        %v1143 = vpop.f32.mrf.mxu0
        %v1144 = vadd.f32 %v1095, %v1143
        %v1145 = vpop.f32.mrf.mxu0
        %v1146 = vadd.f32 %v1097, %v1145
        %1147 = vmatmul.bf16.gmra.mxu0 %v522
        %v1148 = vpop.f32.mrf.mxu0
        %v1149 = vadd.f32 %v1100, %v1148
        %v1150 = vpop.f32.mrf.mxu0
        %v1151 = vadd.f32 %v1102, %v1150
        %1152 = vdwg.mxu0
        %1153 = vmatpush.bf16.msra.mxu0 %v762
        %1154 = vmatpush.bf16.msra.mxu0 %v758
        %1155 = vmatpush.bf16.msra.mxu0 %v754
        %1156 = vmatpush.bf16.msra.mxu0 %v750
        %1157 = vmatpush.bf16.msra.mxu0 %v746
        %1158 = vmatpush.bf16.msra.mxu0 %v742
        %1159 = vmatpush.bf16.msra.mxu0 %v738
        %1160 = vmatpush.bf16.msra.mxu0 %v734
        %1161 = vmatmul.bf16.gmra.mxu0 %v507
        %v1162 = vpop.f32.mrf.mxu0
        %v1163 = vadd.f32 0.0, %v1162
        %v1164 = vpop.f32.mrf.mxu0
        %v1165 = vadd.f32 0.0, %v1164
        %1166 = vmatmul.bf16.gmra.mxu0 %v509
        %v1167 = vpop.f32.mrf.mxu0
        %v1168 = vadd.f32 0.0, %v1167
        %v1169 = vpop.f32.mrf.mxu0
        %v1170 = vadd.f32 0.0, %v1169
        %1171 = vmatmul.bf16.gmra.mxu0 %v511
        %v1172 = vpop.f32.mrf.mxu0
        %v1173 = vadd.f32 0.0, %v1172
        %v1174 = vpop.f32.mrf.mxu0
        %v1175 = vadd.f32 0.0, %v1174
        %1176 = vmatmul.bf16.gmra.mxu0 %v513
        %v1177 = vpop.f32.mrf.mxu0
        %v1178 = vadd.f32 0.0, %v1177
        %v1179 = vpop.f32.mrf.mxu0
        %v1180 = vadd.f32 0.0, %v1179
        %1181 = vmatmul.bf16.gmra.mxu0 %v515
        %v1182 = vpop.f32.mrf.mxu0
        %v1183 = vadd.f32 0.0, %v1182
        %v1184 = vpop.f32.mrf.mxu0
        %v1185 = vadd.f32 0.0, %v1184
        %1186 = vmatmul.bf16.gmra.mxu0 %v517
        %v1187 = vpop.f32.mrf.mxu0
        %v1188 = vadd.f32 0.0, %v1187
        %v1189 = vpop.f32.mrf.mxu0
        %v1190 = vadd.f32 0.0, %v1189
        %1191 = vmatmul.bf16.gmra.mxu0 %v519
        %v1192 = vpop.f32.mrf.mxu0
        %v1193 = vadd.f32 0.0, %v1192
        %v1194 = vpop.f32.mrf.mxu0
        %v1195 = vadd.f32 0.0, %v1194
        %1196 = vmatmul.bf16.gmra.mxu0 %v521
        %v1197 = vpop.f32.mrf.mxu0
        %v1198 = vadd.f32 0.0, %v1197
        %v1199 = vpop.f32.mrf.mxu0
        %v1200 = vadd.f32 0.0, %v1199
        %1201 = vdwg.mxu0
        %1202 = vmatpush.bf16.msra.mxu0 %v794
        %1203 = vmatpush.bf16.msra.mxu0 %v790
        %1204 = vmatpush.bf16.msra.mxu0 %v786
        %1205 = vmatpush.bf16.msra.mxu0 %v782
        %1206 = vmatpush.bf16.msra.mxu0 %v778
        %1207 = vmatpush.bf16.msra.mxu0 %v774
        %1208 = vmatpush.bf16.msra.mxu0 %v770
        %1209 = vmatpush.bf16.msra.mxu0 %v766
        %1210 = vmatmul.bf16.gmra.mxu0 %v508
        %v1211 = vpop.f32.mrf.mxu0
        %v1212 = vadd.f32 %v1163, %v1211
        %v1213 = vpop.f32.mrf.mxu0
        %v1214 = vadd.f32 %v1165, %v1213
        %1215 = vmatmul.bf16.gmra.mxu0 %v510
        %v1216 = vpop.f32.mrf.mxu0
        %v1217 = vadd.f32 %v1168, %v1216
        %v1218 = vpop.f32.mrf.mxu0
        %v1219 = vadd.f32 %v1170, %v1218
        %1220 = vmatmul.bf16.gmra.mxu0 %v512
        %v1221 = vpop.f32.mrf.mxu0
        %v1222 = vadd.f32 %v1173, %v1221
        %v1223 = vpop.f32.mrf.mxu0
        %v1224 = vadd.f32 %v1175, %v1223
        %1225 = vmatmul.bf16.gmra.mxu0 %v514
        %v1226 = vpop.f32.mrf.mxu0
        %v1227 = vadd.f32 %v1178, %v1226
        %v1228 = vpop.f32.mrf.mxu0
        %v1229 = vadd.f32 %v1180, %v1228
        %1230 = vmatmul.bf16.gmra.mxu0 %v516
        %v1231 = vpop.f32.mrf.mxu0
        %v1232 = vadd.f32 %v1183, %v1231
        %v1233 = vpop.f32.mrf.mxu0
        %v1234 = vadd.f32 %v1185, %v1233
        %1235 = vmatmul.bf16.gmra.mxu0 %v518
        %v1236 = vpop.f32.mrf.mxu0
        %v1237 = vadd.f32 %v1188, %v1236
        %v1238 = vpop.f32.mrf.mxu0
        %v1239 = vadd.f32 %v1190, %v1238
        %1240 = vmatmul.bf16.gmra.mxu0 %v520
        %v1241 = vpop.f32.mrf.mxu0
        %v1242 = vadd.f32 %v1193, %v1241
        %v1243 = vpop.f32.mrf.mxu0
        %v1244 = vadd.f32 %v1195, %v1243
        %1245 = vmatmul.bf16.gmra.mxu0 %v522
        %v1246 = vpop.f32.mrf.mxu0
        %v1247 = vadd.f32 %v1198, %v1246
        %v1248 = vpop.f32.mrf.mxu0
        %v1249 = vadd.f32 %v1200, %v1248
        %1250 = vdwg.mxu0
        %v1251 = vld [vmem:[%s370] sm:$0xff]
        %v1252 = vld [vmem:[%s370 + $0x8] sm:$0xff]
        %v1253 = vld [vmem:[%s370 + $0x10] sm:$0xff]
        %v1254 = vld [vmem:[%s370 + $0x18] sm:$0xff]
        %v1255 = vld [vmem:[%s370 + $0x20] sm:$0xff]
        %v1256 = vld [vmem:[%s370 + $0x28] sm:$0xff]
        %v1257 = vld [vmem:[%s370 + $0x30] sm:$0xff]
        %v1258 = vld [vmem:[%s370 + $0x38] sm:$0xff]
        %v1259 = vld [vmem:[%s370 + $0x40] sm:$0xff]
        %v1260 = vld [vmem:[%s370 + $0x48] sm:$0xff]
        %v1261 = vld [vmem:[%s370 + $0x50] sm:$0xff]
        %v1262 = vld [vmem:[%s370 + $0x58] sm:$0xff]
        %v1263 = vld [vmem:[%s370 + $0x60] sm:$0xff]
        %v1264 = vld [vmem:[%s370 + $0x68] sm:$0xff]
        %v1265 = vld [vmem:[%s370 + $0x70] sm:$0xff]
        %v1266 = vld [vmem:[%s370 + $0x78] sm:$0xff]
        %1268 = vset.pattern.permute.xlu0 0
        %1269 = vperm.xlu0 %1268, %v1251
        %v1270 = vpop.permute.xlu0 %1269
        %1273 = vset.pattern.permute.xlu0 0
        %1274 = vperm.xlu0 %1273, %v1252
        %v1275 = vpop.permute.xlu0 %1274
        %1278 = vset.pattern.permute.xlu0 0
        %1279 = vperm.xlu0 %1278, %v1253
        %v1280 = vpop.permute.xlu0 %1279
        %1283 = vset.pattern.permute.xlu0 0
        %1284 = vperm.xlu0 %1283, %v1254
        %v1285 = vpop.permute.xlu0 %1284
        %1288 = vset.pattern.permute.xlu0 0
        %1289 = vperm.xlu0 %1288, %v1255
        %v1290 = vpop.permute.xlu0 %1289
        %1293 = vset.pattern.permute.xlu0 0
        %1294 = vperm.xlu0 %1293, %v1256
        %v1295 = vpop.permute.xlu0 %1294
        %1298 = vset.pattern.permute.xlu0 0
        %1299 = vperm.xlu0 %1298, %v1257
        %v1300 = vpop.permute.xlu0 %1299
        %1303 = vset.pattern.permute.xlu0 0
        %1304 = vperm.xlu0 %1303, %v1258
        %v1305 = vpop.permute.xlu0 %1304
        %1308 = vset.pattern.permute.xlu0 0
        %1309 = vperm.xlu0 %1308, %v1259
        %v1310 = vpop.permute.xlu0 %1309
        %1313 = vset.pattern.permute.xlu0 0
        %1314 = vperm.xlu0 %1313, %v1260
        %v1315 = vpop.permute.xlu0 %1314
        %1318 = vset.pattern.permute.xlu0 0
        %1319 = vperm.xlu0 %1318, %v1261
        %v1320 = vpop.permute.xlu0 %1319
        %1323 = vset.pattern.permute.xlu0 0
        %1324 = vperm.xlu0 %1323, %v1262
        %v1325 = vpop.permute.xlu0 %1324
        %1328 = vset.pattern.permute.xlu0 0
        %1329 = vperm.xlu0 %1328, %v1263
        %v1330 = vpop.permute.xlu0 %1329
        %1333 = vset.pattern.permute.xlu0 0
        %1334 = vperm.xlu0 %1333, %v1264
        %v1335 = vpop.permute.xlu0 %1334
        %1338 = vset.pattern.permute.xlu0 0
        %1339 = vperm.xlu0 %1338, %v1265
        %v1340 = vpop.permute.xlu0 %1339
        %1343 = vset.pattern.permute.xlu0 0
        %1344 = vperm.xlu0 %1343, %v1266
        %v1345 = vpop.permute.xlu0 %1344
        %v1347 = vmul.f32 %v918, %v1270
        %v1348 = vmul.f32 %v1016, %v1270
        %v1349 = vmul.f32 %v1114, %v1270
        %v1350 = vmul.f32 %v1212, %v1270
        %v1351 = vmul.f32 %v920, %v1275
        %v1352 = vmul.f32 %v1018, %v1275
        %v1353 = vmul.f32 %v1116, %v1275
        %v1354 = vmul.f32 %v1214, %v1275
        %v1355 = vmul.f32 %v923, %v1280
        %v1356 = vmul.f32 %v1021, %v1280
        %v1357 = vmul.f32 %v1119, %v1280
        %v1358 = vmul.f32 %v1217, %v1280
        %v1359 = vmul.f32 %v925, %v1285
        %v1360 = vmul.f32 %v1023, %v1285
        %v1361 = vmul.f32 %v1121, %v1285
        %v1362 = vmul.f32 %v1219, %v1285
        %v1363 = vmul.f32 %v928, %v1290
        %v1364 = vmul.f32 %v1026, %v1290
        %v1365 = vmul.f32 %v1124, %v1290
        %v1366 = vmul.f32 %v1222, %v1290
        %v1367 = vmul.f32 %v930, %v1295
        %v1368 = vmul.f32 %v1028, %v1295
        %v1369 = vmul.f32 %v1126, %v1295
        %v1370 = vmul.f32 %v1224, %v1295
        %v1371 = vmul.f32 %v933, %v1300
        %v1372 = vmul.f32 %v1031, %v1300
        %v1373 = vmul.f32 %v1129, %v1300
        %v1374 = vmul.f32 %v1227, %v1300
        %v1375 = vmul.f32 %v935, %v1305
        %v1376 = vmul.f32 %v1033, %v1305
        %v1377 = vmul.f32 %v1131, %v1305
        %v1378 = vmul.f32 %v1229, %v1305
        %v1379 = vmul.f32 %v938, %v1310
        %v1380 = vmul.f32 %v1036, %v1310
        %v1381 = vmul.f32 %v1134, %v1310
        %v1382 = vmul.f32 %v1232, %v1310
        %v1383 = vmul.f32 %v940, %v1315
        %v1384 = vmul.f32 %v1038, %v1315
        %v1385 = vmul.f32 %v1136, %v1315
        %v1386 = vmul.f32 %v1234, %v1315
        %v1387 = vmul.f32 %v943, %v1320
        %v1388 = vmul.f32 %v1041, %v1320
        %v1389 = vmul.f32 %v1139, %v1320
        %v1390 = vmul.f32 %v1237, %v1320
        %v1391 = vmul.f32 %v945, %v1325
        %v1392 = vmul.f32 %v1043, %v1325
        %v1393 = vmul.f32 %v1141, %v1325
        %v1394 = vmul.f32 %v1239, %v1325
        %v1395 = vmul.f32 %v948, %v1330
        %v1396 = vmul.f32 %v1046, %v1330
        %v1397 = vmul.f32 %v1144, %v1330
        %v1398 = vmul.f32 %v1242, %v1330
        %v1399 = vmul.f32 %v950, %v1335
        %v1400 = vmul.f32 %v1048, %v1335
        %v1401 = vmul.f32 %v1146, %v1335
        %v1402 = vmul.f32 %v1244, %v1335
        %v1403 = vmul.f32 %v953, %v1340
        %v1404 = vmul.f32 %v1051, %v1340
        %v1405 = vmul.f32 %v1149, %v1340
        %v1406 = vmul.f32 %v1247, %v1340
        %v1407 = vmul.f32 %v955, %v1345
        %v1408 = vmul.f32 %v1053, %v1345
        %v1409 = vmul.f32 %v1151, %v1345
        %v1410 = vmul.f32 %v1249, %v1345
        %v1411 = vpack.c.bf16 %v1348, %v1347
        %v1412 = vpack.c.bf16 %v1350, %v1349
        %v1413 = vpack.c.bf16 %v1352, %v1351
        %v1414 = vpack.c.bf16 %v1354, %v1353
        %v1415 = vpack.c.bf16 %v1356, %v1355
        %v1416 = vpack.c.bf16 %v1358, %v1357
        %v1417 = vpack.c.bf16 %v1360, %v1359
        %v1418 = vpack.c.bf16 %v1362, %v1361
        %v1419 = vpack.c.bf16 %v1364, %v1363
        %v1420 = vpack.c.bf16 %v1366, %v1365
        %v1421 = vpack.c.bf16 %v1368, %v1367
        %v1422 = vpack.c.bf16 %v1370, %v1369
        %v1423 = vpack.c.bf16 %v1372, %v1371
        %v1424 = vpack.c.bf16 %v1374, %v1373
        %v1425 = vpack.c.bf16 %v1376, %v1375
        %v1426 = vpack.c.bf16 %v1378, %v1377
        %v1427 = vpack.c.bf16 %v1380, %v1379
        %v1428 = vpack.c.bf16 %v1382, %v1381
        %v1429 = vpack.c.bf16 %v1384, %v1383
        %v1430 = vpack.c.bf16 %v1386, %v1385
        %v1431 = vpack.c.bf16 %v1388, %v1387
        %v1432 = vpack.c.bf16 %v1390, %v1389
        %v1433 = vpack.c.bf16 %v1392, %v1391
        %v1434 = vpack.c.bf16 %v1394, %v1393
        %v1435 = vpack.c.bf16 %v1396, %v1395
        %v1436 = vpack.c.bf16 %v1398, %v1397
        %v1437 = vpack.c.bf16 %v1400, %v1399
        %v1438 = vpack.c.bf16 %v1402, %v1401
        %v1439 = vpack.c.bf16 %v1404, %v1403
        %v1440 = vpack.c.bf16 %v1406, %v1405
        %v1441 = vpack.c.bf16 %v1408, %v1407
        %v1442 = vpack.c.bf16 %v1410, %v1409
        %v1443 = vld [vmem:[%s357] sm:$0xff]
        %v1444 = vld [vmem:[%s357 + $0x8] sm:$0xff]
        %v1445 = vld [vmem:[%s357 + $0x10] sm:$0xff]
        %v1446 = vld [vmem:[%s357 + $0x18] sm:$0xff]
        %v1447 = vld [vmem:[%s357 + $0x20] sm:$0xff]
        %v1448 = vld [vmem:[%s357 + $0x28] sm:$0xff]
        %v1449 = vld [vmem:[%s357 + $0x30] sm:$0xff]
        %v1450 = vld [vmem:[%s357 + $0x38] sm:$0xff]
        %v1451 = vld [vmem:[%s357 + $0x40] sm:$0xff]
        %v1452 = vld [vmem:[%s357 + $0x48] sm:$0xff]
        %v1453 = vld [vmem:[%s357 + $0x50] sm:$0xff]
        %v1454 = vld [vmem:[%s357 + $0x58] sm:$0xff]
        %v1455 = vld [vmem:[%s357 + $0x60] sm:$0xff]
        %v1456 = vld [vmem:[%s357 + $0x68] sm:$0xff]
        %v1457 = vld [vmem:[%s357 + $0x70] sm:$0xff]
        %v1458 = vld [vmem:[%s357 + $0x78] sm:$0xff]
        %v1459 = vld [vmem:[%s357 + $0x80] sm:$0xff]
        %v1460 = vld [vmem:[%s357 + $0x88] sm:$0xff]
        %v1461 = vld [vmem:[%s357 + $0x90] sm:$0xff]
        %v1462 = vld [vmem:[%s357 + $0x98] sm:$0xff]
        %v1463 = vld [vmem:[%s357 + $0xa0] sm:$0xff]
        %v1464 = vld [vmem:[%s357 + $0xa8] sm:$0xff]
        %v1465 = vld [vmem:[%s357 + $0xb0] sm:$0xff]
        %v1466 = vld [vmem:[%s357 + $0xb8] sm:$0xff]
        %v1467 = vld [vmem:[%s357 + $0xc0] sm:$0xff]
        %v1468 = vld [vmem:[%s357 + $0xc8] sm:$0xff]
        %v1469 = vld [vmem:[%s357 + $0xd0] sm:$0xff]
        %v1470 = vld [vmem:[%s357 + $0xd8] sm:$0xff]
        %v1471 = vld [vmem:[%s357 + $0xe0] sm:$0xff]
        %v1472 = vld [vmem:[%s357 + $0xe8] sm:$0xff]
        %v1473 = vld [vmem:[%s357 + $0xf0] sm:$0xff]
        %v1474 = vld [vmem:[%s357 + $0xf8] sm:$0xff]
        %v1475 = vld [vmem:[%s376] sm:$0xff]
        %v1476 = vld [vmem:[%s376 + $0x8] sm:$0xff]
        %v1477 = vld [vmem:[%s376 + $0x10] sm:$0xff]
        %v1478 = vld [vmem:[%s376 + $0x18] sm:$0xff]
        %v1479 = vld [vmem:[%s376 + $0x20] sm:$0xff]
        %v1480 = vld [vmem:[%s376 + $0x28] sm:$0xff]
        %v1481 = vld [vmem:[%s376 + $0x30] sm:$0xff]
        %v1482 = vld [vmem:[%s376 + $0x38] sm:$0xff]
        %v1483 = vld [vmem:[%s376 + $0x40] sm:$0xff]
        %v1484 = vld [vmem:[%s376 + $0x48] sm:$0xff]
        %v1485 = vld [vmem:[%s376 + $0x50] sm:$0xff]
        %v1486 = vld [vmem:[%s376 + $0x58] sm:$0xff]
        %v1487 = vld [vmem:[%s376 + $0x60] sm:$0xff]
        %v1488 = vld [vmem:[%s376 + $0x68] sm:$0xff]
        %v1489 = vld [vmem:[%s376 + $0x70] sm:$0xff]
        %v1490 = vld [vmem:[%s376 + $0x78] sm:$0xff]
        %v1491 = vld [vmem:[%s5] sm:$0xf]
        %v1492 = vld [vmem:[%s5 + $0x4] sm:$0xf]
        %v1493 = vld [vmem:[%s5 + $0x8] sm:$0xf]
        %v1494 = vld [vmem:[%s5 + $0xc] sm:$0xf]
        %v1495 = vld [vmem:[%s5 + $0x10] sm:$0xf]
        %v1496 = vld [vmem:[%s5 + $0x14] sm:$0xf]
        %v1497 = vld [vmem:[%s5 + $0x18] sm:$0xf]
        %v1498 = vld [vmem:[%s5 + $0x1c] sm:$0xf]
        %v1499 = vld [vmem:[%s5 + $0x20] sm:$0xf]
        %v1500 = vld [vmem:[%s5 + $0x24] sm:$0xf]
        %v1501 = vld [vmem:[%s5 + $0x28] sm:$0xf]
        %v1502 = vld [vmem:[%s5 + $0x2c] sm:$0xf]
        %v1503 = vld [vmem:[%s5 + $0x30] sm:$0xf]
        %v1504 = vld [vmem:[%s5 + $0x34] sm:$0xf]
        %v1505 = vld [vmem:[%s5 + $0x38] sm:$0xf]
        %v1506 = vld [vmem:[%s5 + $0x3c] sm:$0xf]
        %v1507 = vld [vmem:[%s6] sm:$0xf]
        %v1508 = vld [vmem:[%s6 + $0x4] sm:$0xf]
        %v1509 = vld [vmem:[%s6 + $0x8] sm:$0xf]
        %v1510 = vld [vmem:[%s6 + $0xc] sm:$0xf]
        %v1511 = vld [vmem:[%s6 + $0x10] sm:$0xf]
        %v1512 = vld [vmem:[%s6 + $0x14] sm:$0xf]
        %v1513 = vld [vmem:[%s6 + $0x18] sm:$0xf]
        %v1514 = vld [vmem:[%s6 + $0x1c] sm:$0xf]
        %v1515 = vld [vmem:[%s6 + $0x20] sm:$0xf]
        %v1516 = vld [vmem:[%s6 + $0x24] sm:$0xf]
        %v1517 = vld [vmem:[%s6 + $0x28] sm:$0xf]
        %v1518 = vld [vmem:[%s6 + $0x2c] sm:$0xf]
        %v1519 = vld [vmem:[%s6 + $0x30] sm:$0xf]
        %v1520 = vld [vmem:[%s6 + $0x34] sm:$0xf]
        %v1521 = vld [vmem:[%s6 + $0x38] sm:$0xf]
        %v1522 = vld [vmem:[%s6 + $0x3c] sm:$0xf]
        %v1539 = vunpack.c.l.b16 %v1443
        %v1540 = vunpack.c.l.b16 %v1445
        %v1541 = vunpack.c.l.b16 %v1447
        %v1542 = vunpack.c.l.b16 %v1449
        %v1543 = vunpack.c.l.b16 %v1451
        %v1544 = vunpack.c.l.b16 %v1453
        %v1545 = vunpack.c.l.b16 %v1455
        %v1546 = vunpack.c.l.b16 %v1457
        %v1547 = vunpack.c.l.b16 %v1459
        %v1548 = vunpack.c.l.b16 %v1461
        %v1549 = vunpack.c.l.b16 %v1463
        %v1550 = vunpack.c.l.b16 %v1465
        %v1551 = vunpack.c.l.b16 %v1467
        %v1552 = vunpack.c.l.b16 %v1469
        %v1553 = vunpack.c.l.b16 %v1471
        %v1554 = vunpack.c.l.b16 %v1473
        %v1555 = vpack.c.b16 %v1540, %v1539
        %v1556 = vpack.c.b16 %v1542, %v1541
        %v1557 = vpack.c.b16 %v1544, %v1543
        %v1558 = vpack.c.b16 %v1546, %v1545
        %v1559 = vpack.c.b16 %v1548, %v1547
        %v1560 = vpack.c.b16 %v1550, %v1549
        %v1561 = vpack.c.b16 %v1552, %v1551
        %v1562 = vpack.c.b16 %v1554, %v1553
        %v1587 = vunpack.c.l.b16 %v1507
        %v1588 = vunpack.c.l.b16 %v1508
        %v1589 = vunpack.c.l.b16 %v1509
        %v1590 = vunpack.c.l.b16 %v1510
        %v1591 = vunpack.c.l.b16 %v1511
        %v1592 = vunpack.c.l.b16 %v1512
        %v1593 = vunpack.c.l.b16 %v1513
        %v1594 = vunpack.c.l.b16 %v1514
        %v1595 = vunpack.c.l.b16 %v1515
        %v1596 = vunpack.c.l.b16 %v1516
        %v1597 = vunpack.c.l.b16 %v1517
        %v1598 = vunpack.c.l.b16 %v1518
        %v1599 = vunpack.c.l.b16 %v1519
        %v1600 = vunpack.c.l.b16 %v1520
        %v1601 = vunpack.c.l.b16 %v1521
        %v1602 = vunpack.c.l.b16 %v1522
        %v1603 = vpack.c.b16 %v1588, %v1587
        %v1604 = vpack.c.b16 %v1590, %v1589
        %v1605 = vpack.c.b16 %v1592, %v1591
        %v1606 = vpack.c.b16 %v1594, %v1593
        %v1607 = vpack.c.b16 %v1596, %v1595
        %v1608 = vpack.c.b16 %v1598, %v1597
        %v1609 = vpack.c.b16 %v1600, %v1599
        %v1610 = vpack.c.b16 %v1602, %v1601
        %1619 = vmatpush.bf16.msra.mxu0 %v1610
        %1620 = vmatpush.bf16.msra.mxu0 %v1609
        %1621 = vmatpush.bf16.msra.mxu0 %v1608
        %1622 = vmatpush.bf16.msra.mxu0 %v1607
        %1623 = vmatpush.bf16.msra.mxu0 %v1606
        %1624 = vmatpush.bf16.msra.mxu0 %v1605
        %1625 = vmatpush.bf16.msra.mxu0 %v1604
        %1626 = vmatpush.bf16.msra.mxu0 %v1603
        %1627 = vmatmul.bf16.gmra.mxu0 %v1555
        %v1628 = vpop.f32.mrf.mxu0
        %v1629 = vadd.f32 0.0, %v1628
        %v1630 = vpop.f32.mrf.mxu0
        %v1631 = vadd.f32 0.0, %v1630
        %1632 = vmatmul.bf16.gmra.mxu0 %v1556
        %v1633 = vpop.f32.mrf.mxu0
        %v1634 = vadd.f32 0.0, %v1633
        %v1635 = vpop.f32.mrf.mxu0
        %v1636 = vadd.f32 0.0, %v1635
        %1637 = vmatmul.bf16.gmra.mxu0 %v1557
        %v1638 = vpop.f32.mrf.mxu0
        %v1639 = vadd.f32 0.0, %v1638
        %v1640 = vpop.f32.mrf.mxu0
        %v1641 = vadd.f32 0.0, %v1640
        %1642 = vmatmul.bf16.gmra.mxu0 %v1558
        %v1643 = vpop.f32.mrf.mxu0
        %v1644 = vadd.f32 0.0, %v1643
        %v1645 = vpop.f32.mrf.mxu0
        %v1646 = vadd.f32 0.0, %v1645
        %1647 = vmatmul.bf16.gmra.mxu0 %v1559
        %v1648 = vpop.f32.mrf.mxu0
        %v1649 = vadd.f32 0.0, %v1648
        %v1650 = vpop.f32.mrf.mxu0
        %v1651 = vadd.f32 0.0, %v1650
        %1652 = vmatmul.bf16.gmra.mxu0 %v1560
        %v1653 = vpop.f32.mrf.mxu0
        %v1654 = vadd.f32 0.0, %v1653
        %v1655 = vpop.f32.mrf.mxu0
        %v1656 = vadd.f32 0.0, %v1655
        %1657 = vmatmul.bf16.gmra.mxu0 %v1561
        %v1658 = vpop.f32.mrf.mxu0
        %v1659 = vadd.f32 0.0, %v1658
        %v1660 = vpop.f32.mrf.mxu0
        %v1661 = vadd.f32 0.0, %v1660
        %1662 = vmatmul.bf16.gmra.mxu0 %v1562
        %v1663 = vpop.f32.mrf.mxu0
        %v1664 = vadd.f32 0.0, %v1663
        %v1665 = vpop.f32.mrf.mxu0
        %v1666 = vadd.f32 0.0, %v1665
        %1667 = vdwg.mxu0
        %v1684 = vunpack.c.l.b16 %v1411
        %v1685 = vunpack.c.l.b16 %v1413
        %v1686 = vunpack.c.l.b16 %v1415
        %v1687 = vunpack.c.l.b16 %v1417
        %v1688 = vunpack.c.l.b16 %v1419
        %v1689 = vunpack.c.l.b16 %v1421
        %v1690 = vunpack.c.l.b16 %v1423
        %v1691 = vunpack.c.l.b16 %v1425
        %v1692 = vunpack.c.l.b16 %v1427
        %v1693 = vunpack.c.l.b16 %v1429
        %v1694 = vunpack.c.l.b16 %v1431
        %v1695 = vunpack.c.l.b16 %v1433
        %v1696 = vunpack.c.l.b16 %v1435
        %v1697 = vunpack.c.l.b16 %v1437
        %v1698 = vunpack.c.l.b16 %v1439
        %v1699 = vunpack.c.l.b16 %v1441
        %v1700 = vpack.c.b16 %v1685, %v1684
        %v1701 = vpack.c.b16 %v1687, %v1686
        %v1702 = vpack.c.b16 %v1689, %v1688
        %v1703 = vpack.c.b16 %v1691, %v1690
        %v1704 = vpack.c.b16 %v1693, %v1692
        %v1705 = vpack.c.b16 %v1695, %v1694
        %v1706 = vpack.c.b16 %v1697, %v1696
        %v1707 = vpack.c.b16 %v1699, %v1698
        %v1732 = vunpack.c.l.b16 %v1491
        %v1733 = vunpack.c.l.b16 %v1492
        %v1734 = vunpack.c.l.b16 %v1493
        %v1735 = vunpack.c.l.b16 %v1494
        %v1736 = vunpack.c.l.b16 %v1495
        %v1737 = vunpack.c.l.b16 %v1496
        %v1738 = vunpack.c.l.b16 %v1497
        %v1739 = vunpack.c.l.b16 %v1498
        %v1740 = vunpack.c.l.b16 %v1499
        %v1741 = vunpack.c.l.b16 %v1500
        %v1742 = vunpack.c.l.b16 %v1501
        %v1743 = vunpack.c.l.b16 %v1502
        %v1744 = vunpack.c.l.b16 %v1503
        %v1745 = vunpack.c.l.b16 %v1504
        %v1746 = vunpack.c.l.b16 %v1505
        %v1747 = vunpack.c.l.b16 %v1506
        %v1748 = vpack.c.b16 %v1733, %v1732
        %v1749 = vpack.c.b16 %v1735, %v1734
        %v1750 = vpack.c.b16 %v1737, %v1736
        %v1751 = vpack.c.b16 %v1739, %v1738
        %v1752 = vpack.c.b16 %v1741, %v1740
        %v1753 = vpack.c.b16 %v1743, %v1742
        %v1754 = vpack.c.b16 %v1745, %v1744
        %v1755 = vpack.c.b16 %v1747, %v1746
        %1764 = vmatpush.bf16.msra.mxu0 %v1755
        %1765 = vmatpush.bf16.msra.mxu0 %v1754
        %1766 = vmatpush.bf16.msra.mxu0 %v1753
        %1767 = vmatpush.bf16.msra.mxu0 %v1752
        %1768 = vmatpush.bf16.msra.mxu0 %v1751
        %1769 = vmatpush.bf16.msra.mxu0 %v1750
        %1770 = vmatpush.bf16.msra.mxu0 %v1749
        %1771 = vmatpush.bf16.msra.mxu0 %v1748
        %1772 = vmatmul.bf16.gmra.mxu0 %v1700
        %v1773 = vpop.f32.mrf.mxu0
        %v1774 = vadd.f32 %v1629, %v1773
        %v1775 = vpop.f32.mrf.mxu0
        %v1776 = vadd.f32 %v1631, %v1775
        %1777 = vmatmul.bf16.gmra.mxu0 %v1701
        %v1778 = vpop.f32.mrf.mxu0
        %v1779 = vadd.f32 %v1634, %v1778
        %v1780 = vpop.f32.mrf.mxu0
        %v1781 = vadd.f32 %v1636, %v1780
        %1782 = vmatmul.bf16.gmra.mxu0 %v1702
        %v1783 = vpop.f32.mrf.mxu0
        %v1784 = vadd.f32 %v1639, %v1783
        %v1785 = vpop.f32.mrf.mxu0
        %v1786 = vadd.f32 %v1641, %v1785
        %1787 = vmatmul.bf16.gmra.mxu0 %v1703
        %v1788 = vpop.f32.mrf.mxu0
        %v1789 = vadd.f32 %v1644, %v1788
        %v1790 = vpop.f32.mrf.mxu0
        %v1791 = vadd.f32 %v1646, %v1790
        %1792 = vmatmul.bf16.gmra.mxu0 %v1704
        %v1793 = vpop.f32.mrf.mxu0
        %v1794 = vadd.f32 %v1649, %v1793
        %v1795 = vpop.f32.mrf.mxu0
        %v1796 = vadd.f32 %v1651, %v1795
        %1797 = vmatmul.bf16.gmra.mxu0 %v1705
        %v1798 = vpop.f32.mrf.mxu0
        %v1799 = vadd.f32 %v1654, %v1798
        %v1800 = vpop.f32.mrf.mxu0
        %v1801 = vadd.f32 %v1656, %v1800
        %1802 = vmatmul.bf16.gmra.mxu0 %v1706
        %v1803 = vpop.f32.mrf.mxu0
        %v1804 = vadd.f32 %v1659, %v1803
        %v1805 = vpop.f32.mrf.mxu0
        %v1806 = vadd.f32 %v1661, %v1805
        %1807 = vmatmul.bf16.gmra.mxu0 %v1707
        %v1808 = vpop.f32.mrf.mxu0
        %v1809 = vadd.f32 %v1664, %v1808
        %v1810 = vpop.f32.mrf.mxu0
        %v1811 = vadd.f32 %v1666, %v1810
        %1812 = vdwg.mxu0
        %v1813 = vld [vmem:[%s7] sm:$0x1]
        %v1815 = vperm.slane %v1813, 0
        %v1817 = vadd.f32 %v1774, %v1815
        %v1818 = vadd.f32 %v1776, %v1815
        %v1819 = vadd.f32 %v1779, %v1815
        %v1820 = vadd.f32 %v1781, %v1815
        %v1821 = vadd.f32 %v1784, %v1815
        %v1822 = vadd.f32 %v1786, %v1815
        %v1823 = vadd.f32 %v1789, %v1815
        %v1824 = vadd.f32 %v1791, %v1815
        %v1825 = vadd.f32 %v1794, %v1815
        %v1826 = vadd.f32 %v1796, %v1815
        %v1827 = vadd.f32 %v1799, %v1815
        %v1828 = vadd.f32 %v1801, %v1815
        %v1829 = vadd.f32 %v1804, %v1815
        %v1830 = vadd.f32 %v1806, %v1815
        %v1831 = vadd.f32 %v1809, %v1815
        %v1832 = vadd.f32 %v1811, %v1815
        %v1833 = vmax.f32 %v1817, 0.0
        %v1834 = vmax.f32 %v1818, 0.0
        %v1835 = vmax.f32 %v1819, 0.0
        %v1836 = vmax.f32 %v1820, 0.0
        %v1837 = vmax.f32 %v1821, 0.0
        %v1838 = vmax.f32 %v1822, 0.0
        %v1839 = vmax.f32 %v1823, 0.0
        %v1840 = vmax.f32 %v1824, 0.0
        %v1841 = vmax.f32 %v1825, 0.0
        %v1842 = vmax.f32 %v1826, 0.0
        %v1843 = vmax.f32 %v1827, 0.0
        %v1844 = vmax.f32 %v1828, 0.0
        %v1845 = vmax.f32 %v1829, 0.0
        %v1846 = vmax.f32 %v1830, 0.0
        %v1847 = vmax.f32 %v1831, 0.0
        %v1848 = vmax.f32 %v1832, 0.0
        %1850 = vset.pattern.permute.xlu0 0
        %1851 = vperm.xlu0 %1850, %v1475
        %v1852 = vpop.permute.xlu0 %1851
        %1855 = vset.pattern.permute.xlu0 0
        %1856 = vperm.xlu0 %1855, %v1476
        %v1857 = vpop.permute.xlu0 %1856
        %1860 = vset.pattern.permute.xlu0 0
        %1861 = vperm.xlu0 %1860, %v1477
        %v1862 = vpop.permute.xlu0 %1861
        %1865 = vset.pattern.permute.xlu0 0
        %1866 = vperm.xlu0 %1865, %v1478
        %v1867 = vpop.permute.xlu0 %1866
        %1870 = vset.pattern.permute.xlu0 0
        %1871 = vperm.xlu0 %1870, %v1479
        %v1872 = vpop.permute.xlu0 %1871
        %1875 = vset.pattern.permute.xlu0 0
        %1876 = vperm.xlu0 %1875, %v1480
        %v1877 = vpop.permute.xlu0 %1876
        %1880 = vset.pattern.permute.xlu0 0
        %1881 = vperm.xlu0 %1880, %v1481
        %v1882 = vpop.permute.xlu0 %1881
        %1885 = vset.pattern.permute.xlu0 0
        %1886 = vperm.xlu0 %1885, %v1482
        %v1887 = vpop.permute.xlu0 %1886
        %1890 = vset.pattern.permute.xlu0 0
        %1891 = vperm.xlu0 %1890, %v1483
        %v1892 = vpop.permute.xlu0 %1891
        %1895 = vset.pattern.permute.xlu0 0
        %1896 = vperm.xlu0 %1895, %v1484
        %v1897 = vpop.permute.xlu0 %1896
        %1900 = vset.pattern.permute.xlu0 0
        %1901 = vperm.xlu0 %1900, %v1485
        %v1902 = vpop.permute.xlu0 %1901
        %1905 = vset.pattern.permute.xlu0 0
        %1906 = vperm.xlu0 %1905, %v1486
        %v1907 = vpop.permute.xlu0 %1906
        %1910 = vset.pattern.permute.xlu0 0
        %1911 = vperm.xlu0 %1910, %v1487
        %v1912 = vpop.permute.xlu0 %1911
        %1915 = vset.pattern.permute.xlu0 0
        %1916 = vperm.xlu0 %1915, %v1488
        %v1917 = vpop.permute.xlu0 %1916
        %1920 = vset.pattern.permute.xlu0 0
        %1921 = vperm.xlu0 %1920, %v1489
        %v1922 = vpop.permute.xlu0 %1921
        %1925 = vset.pattern.permute.xlu0 0
        %1926 = vperm.xlu0 %1925, %v1490
        %v1927 = vpop.permute.xlu0 %1926
        %v1929 = vmul.f32 %v1852, %v1833
        %v1930 = vmul.f32 %v1857, %v1834
        %v1931 = vmul.f32 %v1862, %v1835
        %v1932 = vmul.f32 %v1867, %v1836
        %v1933 = vmul.f32 %v1872, %v1837
        %v1934 = vmul.f32 %v1877, %v1838
        %v1935 = vmul.f32 %v1882, %v1839
        %v1936 = vmul.f32 %v1887, %v1840
        %v1937 = vmul.f32 %v1892, %v1841
        %v1938 = vmul.f32 %v1897, %v1842
        %v1939 = vmul.f32 %v1902, %v1843
        %v1940 = vmul.f32 %v1907, %v1844
        %v1941 = vmul.f32 %v1912, %v1845
        %v1942 = vmul.f32 %v1917, %v1846
        %v1943 = vmul.f32 %v1922, %v1847
        %v1944 = vmul.f32 %v1927, %v1848
        %v1945 = vadd.f32 %v1929, 0.0
        %v1946 = vadd.f32 %v1930, 0.0
        %v1947 = vadd.f32 %v1931, 0.0
        %v1948 = vadd.f32 %v1932, 0.0
        %v1949 = vadd.f32 %v1933, 0.0
        %v1950 = vadd.f32 %v1934, 0.0
        %v1951 = vadd.f32 %v1935, 0.0
        %v1952 = vadd.f32 %v1936, 0.0
        %v1953 = vadd.f32 %v1937, 0.0
        %v1954 = vadd.f32 %v1938, 0.0
        %v1955 = vadd.f32 %v1939, 0.0
        %v1956 = vadd.f32 %v1940, 0.0
        %v1957 = vadd.f32 %v1941, 0.0
        %v1958 = vadd.f32 %v1942, 0.0
        %v1959 = vadd.f32 %v1943, 0.0
        %v1960 = vadd.f32 %v1944, 0.0
        %s1961 = scalar_lea.vmem %s5, 64
        %v1962 = vld [vmem:[%s1961] sm:$0xf]
        %v1963 = vld [vmem:[%s1961 + $0x4] sm:$0xf]
        %v1964 = vld [vmem:[%s1961 + $0x8] sm:$0xf]
        %v1965 = vld [vmem:[%s1961 + $0xc] sm:$0xf]
        %v1966 = vld [vmem:[%s1961 + $0x10] sm:$0xf]
        %v1967 = vld [vmem:[%s1961 + $0x14] sm:$0xf]
        %v1968 = vld [vmem:[%s1961 + $0x18] sm:$0xf]
        %v1969 = vld [vmem:[%s1961 + $0x1c] sm:$0xf]
        %v1970 = vld [vmem:[%s1961 + $0x20] sm:$0xf]
        %v1971 = vld [vmem:[%s1961 + $0x24] sm:$0xf]
        %v1972 = vld [vmem:[%s1961 + $0x28] sm:$0xf]
        %v1973 = vld [vmem:[%s1961 + $0x2c] sm:$0xf]
        %v1974 = vld [vmem:[%s1961 + $0x30] sm:$0xf]
        %v1975 = vld [vmem:[%s1961 + $0x34] sm:$0xf]
        %v1976 = vld [vmem:[%s1961 + $0x38] sm:$0xf]
        %v1977 = vld [vmem:[%s1961 + $0x3c] sm:$0xf]
        %s1978 = scalar_lea.vmem %s6, 64
        %v1979 = vld [vmem:[%s1978] sm:$0xf]
        %v1980 = vld [vmem:[%s1978 + $0x4] sm:$0xf]
        %v1981 = vld [vmem:[%s1978 + $0x8] sm:$0xf]
        %v1982 = vld [vmem:[%s1978 + $0xc] sm:$0xf]
        %v1983 = vld [vmem:[%s1978 + $0x10] sm:$0xf]
        %v1984 = vld [vmem:[%s1978 + $0x14] sm:$0xf]
        %v1985 = vld [vmem:[%s1978 + $0x18] sm:$0xf]
        %v1986 = vld [vmem:[%s1978 + $0x1c] sm:$0xf]
        %v1987 = vld [vmem:[%s1978 + $0x20] sm:$0xf]
        %v1988 = vld [vmem:[%s1978 + $0x24] sm:$0xf]
        %v1989 = vld [vmem:[%s1978 + $0x28] sm:$0xf]
        %v1990 = vld [vmem:[%s1978 + $0x2c] sm:$0xf]
        %v1991 = vld [vmem:[%s1978 + $0x30] sm:$0xf]
        %v1992 = vld [vmem:[%s1978 + $0x34] sm:$0xf]
        %v1993 = vld [vmem:[%s1978 + $0x38] sm:$0xf]
        %v1994 = vld [vmem:[%s1978 + $0x3c] sm:$0xf]
        %v1995 = vunpack.c.h.b16 %v1443
        %v1996 = vunpack.c.h.b16 %v1445
        %v1997 = vunpack.c.h.b16 %v1447
        %v1998 = vunpack.c.h.b16 %v1449
        %v1999 = vunpack.c.h.b16 %v1451
        %v2000 = vunpack.c.h.b16 %v1453
        %v2001 = vunpack.c.h.b16 %v1455
        %v2002 = vunpack.c.h.b16 %v1457
        %v2003 = vunpack.c.h.b16 %v1459
        %v2004 = vunpack.c.h.b16 %v1461
        %v2005 = vunpack.c.h.b16 %v1463
        %v2006 = vunpack.c.h.b16 %v1465
        %v2007 = vunpack.c.h.b16 %v1467
        %v2008 = vunpack.c.h.b16 %v1469
        %v2009 = vunpack.c.h.b16 %v1471
        %v2010 = vunpack.c.h.b16 %v1473
        %v2011 = vpack.c.b16 %v1996, %v1995
        %v2012 = vpack.c.b16 %v1998, %v1997
        %v2013 = vpack.c.b16 %v2000, %v1999
        %v2014 = vpack.c.b16 %v2002, %v2001
        %v2015 = vpack.c.b16 %v2004, %v2003
        %v2016 = vpack.c.b16 %v2006, %v2005
        %v2017 = vpack.c.b16 %v2008, %v2007
        %v2018 = vpack.c.b16 %v2010, %v2009
        %v2043 = vunpack.c.l.b16 %v1979
        %v2044 = vunpack.c.l.b16 %v1980
        %v2045 = vunpack.c.l.b16 %v1981
        %v2046 = vunpack.c.l.b16 %v1982
        %v2047 = vunpack.c.l.b16 %v1983
        %v2048 = vunpack.c.l.b16 %v1984
        %v2049 = vunpack.c.l.b16 %v1985
        %v2050 = vunpack.c.l.b16 %v1986
        %v2051 = vunpack.c.l.b16 %v1987
        %v2052 = vunpack.c.l.b16 %v1988
        %v2053 = vunpack.c.l.b16 %v1989
        %v2054 = vunpack.c.l.b16 %v1990
        %v2055 = vunpack.c.l.b16 %v1991
        %v2056 = vunpack.c.l.b16 %v1992
        %v2057 = vunpack.c.l.b16 %v1993
        %v2058 = vunpack.c.l.b16 %v1994
        %v2059 = vpack.c.b16 %v2044, %v2043
        %v2060 = vpack.c.b16 %v2046, %v2045
        %v2061 = vpack.c.b16 %v2048, %v2047
        %v2062 = vpack.c.b16 %v2050, %v2049
        %v2063 = vpack.c.b16 %v2052, %v2051
        %v2064 = vpack.c.b16 %v2054, %v2053
        %v2065 = vpack.c.b16 %v2056, %v2055
        %v2066 = vpack.c.b16 %v2058, %v2057
        %2075 = vmatpush.bf16.msra.mxu0 %v2066
        %2076 = vmatpush.bf16.msra.mxu0 %v2065
        %2077 = vmatpush.bf16.msra.mxu0 %v2064
        %2078 = vmatpush.bf16.msra.mxu0 %v2063
        %2079 = vmatpush.bf16.msra.mxu0 %v2062
        %2080 = vmatpush.bf16.msra.mxu0 %v2061
        %2081 = vmatpush.bf16.msra.mxu0 %v2060
        %2082 = vmatpush.bf16.msra.mxu0 %v2059
        %2083 = vmatmul.bf16.gmra.mxu0 %v2011
        %v2084 = vpop.f32.mrf.mxu0
        %v2085 = vadd.f32 0.0, %v2084
        %v2086 = vpop.f32.mrf.mxu0
        %v2087 = vadd.f32 0.0, %v2086
        %2088 = vmatmul.bf16.gmra.mxu0 %v2012
        %v2089 = vpop.f32.mrf.mxu0
        %v2090 = vadd.f32 0.0, %v2089
        %v2091 = vpop.f32.mrf.mxu0
        %v2092 = vadd.f32 0.0, %v2091
        %2093 = vmatmul.bf16.gmra.mxu0 %v2013
        %v2094 = vpop.f32.mrf.mxu0
        %v2095 = vadd.f32 0.0, %v2094
        %v2096 = vpop.f32.mrf.mxu0
        %v2097 = vadd.f32 0.0, %v2096
        %2098 = vmatmul.bf16.gmra.mxu0 %v2014
        %v2099 = vpop.f32.mrf.mxu0
        %v2100 = vadd.f32 0.0, %v2099
        %v2101 = vpop.f32.mrf.mxu0
        %v2102 = vadd.f32 0.0, %v2101
        %2103 = vmatmul.bf16.gmra.mxu0 %v2015
        %v2104 = vpop.f32.mrf.mxu0
        %v2105 = vadd.f32 0.0, %v2104
        %v2106 = vpop.f32.mrf.mxu0
        %v2107 = vadd.f32 0.0, %v2106
        %2108 = vmatmul.bf16.gmra.mxu0 %v2016
        %v2109 = vpop.f32.mrf.mxu0
        %v2110 = vadd.f32 0.0, %v2109
        %v2111 = vpop.f32.mrf.mxu0
        %v2112 = vadd.f32 0.0, %v2111
        %2113 = vmatmul.bf16.gmra.mxu0 %v2017
        %v2114 = vpop.f32.mrf.mxu0
        %v2115 = vadd.f32 0.0, %v2114
        %v2116 = vpop.f32.mrf.mxu0
        %v2117 = vadd.f32 0.0, %v2116
        %2118 = vmatmul.bf16.gmra.mxu0 %v2018
        %v2119 = vpop.f32.mrf.mxu0
        %v2120 = vadd.f32 0.0, %v2119
        %v2121 = vpop.f32.mrf.mxu0
        %v2122 = vadd.f32 0.0, %v2121
        %2123 = vdwg.mxu0
        %v2124 = vunpack.c.h.b16 %v1411
        %v2125 = vunpack.c.h.b16 %v1413
        %v2126 = vunpack.c.h.b16 %v1415
        %v2127 = vunpack.c.h.b16 %v1417
        %v2128 = vunpack.c.h.b16 %v1419
        %v2129 = vunpack.c.h.b16 %v1421
        %v2130 = vunpack.c.h.b16 %v1423
        %v2131 = vunpack.c.h.b16 %v1425
        %v2132 = vunpack.c.h.b16 %v1427
        %v2133 = vunpack.c.h.b16 %v1429
        %v2134 = vunpack.c.h.b16 %v1431
        %v2135 = vunpack.c.h.b16 %v1433
        %v2136 = vunpack.c.h.b16 %v1435
        %v2137 = vunpack.c.h.b16 %v1437
        %v2138 = vunpack.c.h.b16 %v1439
        %v2139 = vunpack.c.h.b16 %v1441
        %v2140 = vpack.c.b16 %v2125, %v2124
        %v2141 = vpack.c.b16 %v2127, %v2126
        %v2142 = vpack.c.b16 %v2129, %v2128
        %v2143 = vpack.c.b16 %v2131, %v2130
        %v2144 = vpack.c.b16 %v2133, %v2132
        %v2145 = vpack.c.b16 %v2135, %v2134
        %v2146 = vpack.c.b16 %v2137, %v2136
        %v2147 = vpack.c.b16 %v2139, %v2138
        %v2172 = vunpack.c.l.b16 %v1962
        %v2173 = vunpack.c.l.b16 %v1963
        %v2174 = vunpack.c.l.b16 %v1964
        %v2175 = vunpack.c.l.b16 %v1965
        %v2176 = vunpack.c.l.b16 %v1966
        %v2177 = vunpack.c.l.b16 %v1967
        %v2178 = vunpack.c.l.b16 %v1968
        %v2179 = vunpack.c.l.b16 %v1969
        %v2180 = vunpack.c.l.b16 %v1970
        %v2181 = vunpack.c.l.b16 %v1971
        %v2182 = vunpack.c.l.b16 %v1972
        %v2183 = vunpack.c.l.b16 %v1973
        %v2184 = vunpack.c.l.b16 %v1974
        %v2185 = vunpack.c.l.b16 %v1975
        %v2186 = vunpack.c.l.b16 %v1976
        %v2187 = vunpack.c.l.b16 %v1977
        %v2188 = vpack.c.b16 %v2173, %v2172
        %v2189 = vpack.c.b16 %v2175, %v2174
        %v2190 = vpack.c.b16 %v2177, %v2176
        %v2191 = vpack.c.b16 %v2179, %v2178
        %v2192 = vpack.c.b16 %v2181, %v2180
        %v2193 = vpack.c.b16 %v2183, %v2182
        %v2194 = vpack.c.b16 %v2185, %v2184
        %v2195 = vpack.c.b16 %v2187, %v2186
        %2204 = vmatpush.bf16.msra.mxu0 %v2195
        %2205 = vmatpush.bf16.msra.mxu0 %v2194
        %2206 = vmatpush.bf16.msra.mxu0 %v2193
        %2207 = vmatpush.bf16.msra.mxu0 %v2192
        %2208 = vmatpush.bf16.msra.mxu0 %v2191
        %2209 = vmatpush.bf16.msra.mxu0 %v2190
        %2210 = vmatpush.bf16.msra.mxu0 %v2189
        %2211 = vmatpush.bf16.msra.mxu0 %v2188
        %2212 = vmatmul.bf16.gmra.mxu0 %v2140
        %v2213 = vpop.f32.mrf.mxu0
        %v2214 = vadd.f32 %v2085, %v2213
        %v2215 = vpop.f32.mrf.mxu0
        %v2216 = vadd.f32 %v2087, %v2215
        %2217 = vmatmul.bf16.gmra.mxu0 %v2141
        %v2218 = vpop.f32.mrf.mxu0
        %v2219 = vadd.f32 %v2090, %v2218
        %v2220 = vpop.f32.mrf.mxu0
        %v2221 = vadd.f32 %v2092, %v2220
        %2222 = vmatmul.bf16.gmra.mxu0 %v2142
        %v2223 = vpop.f32.mrf.mxu0
        %v2224 = vadd.f32 %v2095, %v2223
        %v2225 = vpop.f32.mrf.mxu0
        %v2226 = vadd.f32 %v2097, %v2225
        %2227 = vmatmul.bf16.gmra.mxu0 %v2143
        %v2228 = vpop.f32.mrf.mxu0
        %v2229 = vadd.f32 %v2100, %v2228
        %v2230 = vpop.f32.mrf.mxu0
        %v2231 = vadd.f32 %v2102, %v2230
        %2232 = vmatmul.bf16.gmra.mxu0 %v2144
        %v2233 = vpop.f32.mrf.mxu0
        %v2234 = vadd.f32 %v2105, %v2233
        %v2235 = vpop.f32.mrf.mxu0
        %v2236 = vadd.f32 %v2107, %v2235
        %2237 = vmatmul.bf16.gmra.mxu0 %v2145
        %v2238 = vpop.f32.mrf.mxu0
        %v2239 = vadd.f32 %v2110, %v2238
        %v2240 = vpop.f32.mrf.mxu0
        %v2241 = vadd.f32 %v2112, %v2240
        %2242 = vmatmul.bf16.gmra.mxu0 %v2146
        %v2243 = vpop.f32.mrf.mxu0
        %v2244 = vadd.f32 %v2115, %v2243
        %v2245 = vpop.f32.mrf.mxu0
        %v2246 = vadd.f32 %v2117, %v2245
        %2247 = vmatmul.bf16.gmra.mxu0 %v2147
        %v2248 = vpop.f32.mrf.mxu0
        %v2249 = vadd.f32 %v2120, %v2248
        %v2250 = vpop.f32.mrf.mxu0
        %v2251 = vadd.f32 %v2122, %v2250
        %2252 = vdwg.mxu0
        %v2253 = vld [vmem:[%s7 + $0x1] sm:$0x1]
        %v2255 = vperm.slane %v2253, 0
        %v2257 = vadd.f32 %v2214, %v2255
        %v2258 = vadd.f32 %v2216, %v2255
        %v2259 = vadd.f32 %v2219, %v2255
        %v2260 = vadd.f32 %v2221, %v2255
        %v2261 = vadd.f32 %v2224, %v2255
        %v2262 = vadd.f32 %v2226, %v2255
        %v2263 = vadd.f32 %v2229, %v2255
        %v2264 = vadd.f32 %v2231, %v2255
        %v2265 = vadd.f32 %v2234, %v2255
        %v2266 = vadd.f32 %v2236, %v2255
        %v2267 = vadd.f32 %v2239, %v2255
        %v2268 = vadd.f32 %v2241, %v2255
        %v2269 = vadd.f32 %v2244, %v2255
        %v2270 = vadd.f32 %v2246, %v2255
        %v2271 = vadd.f32 %v2249, %v2255
        %v2272 = vadd.f32 %v2251, %v2255
        %v2273 = vmax.f32 %v2257, 0.0
        %v2274 = vmax.f32 %v2258, 0.0
        %v2275 = vmax.f32 %v2259, 0.0
        %v2276 = vmax.f32 %v2260, 0.0
        %v2277 = vmax.f32 %v2261, 0.0
        %v2278 = vmax.f32 %v2262, 0.0
        %v2279 = vmax.f32 %v2263, 0.0
        %v2280 = vmax.f32 %v2264, 0.0
        %v2281 = vmax.f32 %v2265, 0.0
        %v2282 = vmax.f32 %v2266, 0.0
        %v2283 = vmax.f32 %v2267, 0.0
        %v2284 = vmax.f32 %v2268, 0.0
        %v2285 = vmax.f32 %v2269, 0.0
        %v2286 = vmax.f32 %v2270, 0.0
        %v2287 = vmax.f32 %v2271, 0.0
        %v2288 = vmax.f32 %v2272, 0.0
        %2289 = vset.pattern.permute.xlu0 1
        %2290 = vperm.xlu0 %2289, %v1475
        %v2291 = vpop.permute.xlu0 %2290
        %2293 = vset.pattern.permute.xlu0 1
        %2294 = vperm.xlu0 %2293, %v1476
        %v2295 = vpop.permute.xlu0 %2294
        %2297 = vset.pattern.permute.xlu0 1
        %2298 = vperm.xlu0 %2297, %v1477
        %v2299 = vpop.permute.xlu0 %2298
        %2301 = vset.pattern.permute.xlu0 1
        %2302 = vperm.xlu0 %2301, %v1478
        %v2303 = vpop.permute.xlu0 %2302
        %2305 = vset.pattern.permute.xlu0 1
        %2306 = vperm.xlu0 %2305, %v1479
        %v2307 = vpop.permute.xlu0 %2306
        %2309 = vset.pattern.permute.xlu0 1
        %2310 = vperm.xlu0 %2309, %v1480
        %v2311 = vpop.permute.xlu0 %2310
        %2313 = vset.pattern.permute.xlu0 1
        %2314 = vperm.xlu0 %2313, %v1481
        %v2315 = vpop.permute.xlu0 %2314
        %2317 = vset.pattern.permute.xlu0 1
        %2318 = vperm.xlu0 %2317, %v1482
        %v2319 = vpop.permute.xlu0 %2318
        %2321 = vset.pattern.permute.xlu0 1
        %2322 = vperm.xlu0 %2321, %v1483
        %v2323 = vpop.permute.xlu0 %2322
        %2325 = vset.pattern.permute.xlu0 1
        %2326 = vperm.xlu0 %2325, %v1484
        %v2327 = vpop.permute.xlu0 %2326
        %2329 = vset.pattern.permute.xlu0 1
        %2330 = vperm.xlu0 %2329, %v1485
        %v2331 = vpop.permute.xlu0 %2330
        %2333 = vset.pattern.permute.xlu0 1
        %2334 = vperm.xlu0 %2333, %v1486
        %v2335 = vpop.permute.xlu0 %2334
        %2337 = vset.pattern.permute.xlu0 1
        %2338 = vperm.xlu0 %2337, %v1487
        %v2339 = vpop.permute.xlu0 %2338
        %2341 = vset.pattern.permute.xlu0 1
        %2342 = vperm.xlu0 %2341, %v1488
        %v2343 = vpop.permute.xlu0 %2342
        %2345 = vset.pattern.permute.xlu0 1
        %2346 = vperm.xlu0 %2345, %v1489
        %v2347 = vpop.permute.xlu0 %2346
        %2349 = vset.pattern.permute.xlu0 1
        %2350 = vperm.xlu0 %2349, %v1490
        %v2351 = vpop.permute.xlu0 %2350
        %v2353 = vmul.f32 %v2291, %v2273
        %v2354 = vmul.f32 %v2295, %v2274
        %v2355 = vmul.f32 %v2299, %v2275
        %v2356 = vmul.f32 %v2303, %v2276
        %v2357 = vmul.f32 %v2307, %v2277
        %v2358 = vmul.f32 %v2311, %v2278
        %v2359 = vmul.f32 %v2315, %v2279
        %v2360 = vmul.f32 %v2319, %v2280
        %v2361 = vmul.f32 %v2323, %v2281
        %v2362 = vmul.f32 %v2327, %v2282
        %v2363 = vmul.f32 %v2331, %v2283
        %v2364 = vmul.f32 %v2335, %v2284
        %v2365 = vmul.f32 %v2339, %v2285
        %v2366 = vmul.f32 %v2343, %v2286
        %v2367 = vmul.f32 %v2347, %v2287
        %v2368 = vmul.f32 %v2351, %v2288
        %v2369 = vadd.f32 %v1945, %v2353
        %v2370 = vadd.f32 %v1946, %v2354
        %v2371 = vadd.f32 %v1947, %v2355
        %v2372 = vadd.f32 %v1948, %v2356
        %v2373 = vadd.f32 %v1949, %v2357
        %v2374 = vadd.f32 %v1950, %v2358
        %v2375 = vadd.f32 %v1951, %v2359
        %v2376 = vadd.f32 %v1952, %v2360
        %v2377 = vadd.f32 %v1953, %v2361
        %v2378 = vadd.f32 %v1954, %v2362
        %v2379 = vadd.f32 %v1955, %v2363
        %v2380 = vadd.f32 %v1956, %v2364
        %v2381 = vadd.f32 %v1957, %v2365
        %v2382 = vadd.f32 %v1958, %v2366
        %v2383 = vadd.f32 %v1959, %v2367
        %v2384 = vadd.f32 %v1960, %v2368
        %s2385 = scalar_lea.vmem %s5, 128
        %v2386 = vld [vmem:[%s2385] sm:$0xf]
        %v2387 = vld [vmem:[%s2385 + $0x4] sm:$0xf]
        %v2388 = vld [vmem:[%s2385 + $0x8] sm:$0xf]
        %v2389 = vld [vmem:[%s2385 + $0xc] sm:$0xf]
        %v2390 = vld [vmem:[%s2385 + $0x10] sm:$0xf]
        %v2391 = vld [vmem:[%s2385 + $0x14] sm:$0xf]
        %v2392 = vld [vmem:[%s2385 + $0x18] sm:$0xf]
        %v2393 = vld [vmem:[%s2385 + $0x1c] sm:$0xf]
        %v2394 = vld [vmem:[%s2385 + $0x20] sm:$0xf]
        %v2395 = vld [vmem:[%s2385 + $0x24] sm:$0xf]
        %v2396 = vld [vmem:[%s2385 + $0x28] sm:$0xf]
        %v2397 = vld [vmem:[%s2385 + $0x2c] sm:$0xf]
        %v2398 = vld [vmem:[%s2385 + $0x30] sm:$0xf]
        %v2399 = vld [vmem:[%s2385 + $0x34] sm:$0xf]
        %v2400 = vld [vmem:[%s2385 + $0x38] sm:$0xf]
        %v2401 = vld [vmem:[%s2385 + $0x3c] sm:$0xf]
        %s2402 = scalar_lea.vmem %s6, 128
        %v2403 = vld [vmem:[%s2402] sm:$0xf]
        %v2404 = vld [vmem:[%s2402 + $0x4] sm:$0xf]
        %v2405 = vld [vmem:[%s2402 + $0x8] sm:$0xf]
        %v2406 = vld [vmem:[%s2402 + $0xc] sm:$0xf]
        %v2407 = vld [vmem:[%s2402 + $0x10] sm:$0xf]
        %v2408 = vld [vmem:[%s2402 + $0x14] sm:$0xf]
        %v2409 = vld [vmem:[%s2402 + $0x18] sm:$0xf]
        %v2410 = vld [vmem:[%s2402 + $0x1c] sm:$0xf]
        %v2411 = vld [vmem:[%s2402 + $0x20] sm:$0xf]
        %v2412 = vld [vmem:[%s2402 + $0x24] sm:$0xf]
        %v2413 = vld [vmem:[%s2402 + $0x28] sm:$0xf]
        %v2414 = vld [vmem:[%s2402 + $0x2c] sm:$0xf]
        %v2415 = vld [vmem:[%s2402 + $0x30] sm:$0xf]
        %v2416 = vld [vmem:[%s2402 + $0x34] sm:$0xf]
        %v2417 = vld [vmem:[%s2402 + $0x38] sm:$0xf]
        %v2418 = vld [vmem:[%s2402 + $0x3c] sm:$0xf]
        %v2435 = vunpack.c.l.b16 %v1444
        %v2436 = vunpack.c.l.b16 %v1446
        %v2437 = vunpack.c.l.b16 %v1448
        %v2438 = vunpack.c.l.b16 %v1450
        %v2439 = vunpack.c.l.b16 %v1452
        %v2440 = vunpack.c.l.b16 %v1454
        %v2441 = vunpack.c.l.b16 %v1456
        %v2442 = vunpack.c.l.b16 %v1458
        %v2443 = vunpack.c.l.b16 %v1460
        %v2444 = vunpack.c.l.b16 %v1462
        %v2445 = vunpack.c.l.b16 %v1464
        %v2446 = vunpack.c.l.b16 %v1466
        %v2447 = vunpack.c.l.b16 %v1468
        %v2448 = vunpack.c.l.b16 %v1470
        %v2449 = vunpack.c.l.b16 %v1472
        %v2450 = vunpack.c.l.b16 %v1474
        %v2451 = vpack.c.b16 %v2436, %v2435
        %v2452 = vpack.c.b16 %v2438, %v2437
        %v2453 = vpack.c.b16 %v2440, %v2439
        %v2454 = vpack.c.b16 %v2442, %v2441
        %v2455 = vpack.c.b16 %v2444, %v2443
        %v2456 = vpack.c.b16 %v2446, %v2445
        %v2457 = vpack.c.b16 %v2448, %v2447
        %v2458 = vpack.c.b16 %v2450, %v2449
        %v2483 = vunpack.c.l.b16 %v2403
        %v2484 = vunpack.c.l.b16 %v2404
        %v2485 = vunpack.c.l.b16 %v2405
        %v2486 = vunpack.c.l.b16 %v2406
        %v2487 = vunpack.c.l.b16 %v2407
        %v2488 = vunpack.c.l.b16 %v2408
        %v2489 = vunpack.c.l.b16 %v2409
        %v2490 = vunpack.c.l.b16 %v2410
        %v2491 = vunpack.c.l.b16 %v2411
        %v2492 = vunpack.c.l.b16 %v2412
        %v2493 = vunpack.c.l.b16 %v2413
        %v2494 = vunpack.c.l.b16 %v2414
        %v2495 = vunpack.c.l.b16 %v2415
        %v2496 = vunpack.c.l.b16 %v2416
        %v2497 = vunpack.c.l.b16 %v2417
        %v2498 = vunpack.c.l.b16 %v2418
        %v2499 = vpack.c.b16 %v2484, %v2483
        %v2500 = vpack.c.b16 %v2486, %v2485
        %v2501 = vpack.c.b16 %v2488, %v2487
        %v2502 = vpack.c.b16 %v2490, %v2489
        %v2503 = vpack.c.b16 %v2492, %v2491
        %v2504 = vpack.c.b16 %v2494, %v2493
        %v2505 = vpack.c.b16 %v2496, %v2495
        %v2506 = vpack.c.b16 %v2498, %v2497
        %2515 = vmatpush.bf16.msra.mxu0 %v2506
        %2516 = vmatpush.bf16.msra.mxu0 %v2505
        %2517 = vmatpush.bf16.msra.mxu0 %v2504
        %2518 = vmatpush.bf16.msra.mxu0 %v2503
        %2519 = vmatpush.bf16.msra.mxu0 %v2502
        %2520 = vmatpush.bf16.msra.mxu0 %v2501
        %2521 = vmatpush.bf16.msra.mxu0 %v2500
        %2522 = vmatpush.bf16.msra.mxu0 %v2499
        %2523 = vmatmul.bf16.gmra.mxu0 %v2451
        %v2524 = vpop.f32.mrf.mxu0
        %v2525 = vadd.f32 0.0, %v2524
        %v2526 = vpop.f32.mrf.mxu0
        %v2527 = vadd.f32 0.0, %v2526
        %2528 = vmatmul.bf16.gmra.mxu0 %v2452
        %v2529 = vpop.f32.mrf.mxu0
        %v2530 = vadd.f32 0.0, %v2529
        %v2531 = vpop.f32.mrf.mxu0
        %v2532 = vadd.f32 0.0, %v2531
        %2533 = vmatmul.bf16.gmra.mxu0 %v2453
        %v2534 = vpop.f32.mrf.mxu0
        %v2535 = vadd.f32 0.0, %v2534
        %v2536 = vpop.f32.mrf.mxu0
        %v2537 = vadd.f32 0.0, %v2536
        %2538 = vmatmul.bf16.gmra.mxu0 %v2454
        %v2539 = vpop.f32.mrf.mxu0
        %v2540 = vadd.f32 0.0, %v2539
        %v2541 = vpop.f32.mrf.mxu0
        %v2542 = vadd.f32 0.0, %v2541
        %2543 = vmatmul.bf16.gmra.mxu0 %v2455
        %v2544 = vpop.f32.mrf.mxu0
        %v2545 = vadd.f32 0.0, %v2544
        %v2546 = vpop.f32.mrf.mxu0
        %v2547 = vadd.f32 0.0, %v2546
        %2548 = vmatmul.bf16.gmra.mxu0 %v2456
        %v2549 = vpop.f32.mrf.mxu0
        %v2550 = vadd.f32 0.0, %v2549
        %v2551 = vpop.f32.mrf.mxu0
        %v2552 = vadd.f32 0.0, %v2551
        %2553 = vmatmul.bf16.gmra.mxu0 %v2457
        %v2554 = vpop.f32.mrf.mxu0
        %v2555 = vadd.f32 0.0, %v2554
        %v2556 = vpop.f32.mrf.mxu0
        %v2557 = vadd.f32 0.0, %v2556
        %2558 = vmatmul.bf16.gmra.mxu0 %v2458
        %v2559 = vpop.f32.mrf.mxu0
        %v2560 = vadd.f32 0.0, %v2559
        %v2561 = vpop.f32.mrf.mxu0
        %v2562 = vadd.f32 0.0, %v2561
        %2563 = vdwg.mxu0
        %v2580 = vunpack.c.l.b16 %v1412
        %v2581 = vunpack.c.l.b16 %v1414
        %v2582 = vunpack.c.l.b16 %v1416
        %v2583 = vunpack.c.l.b16 %v1418
        %v2584 = vunpack.c.l.b16 %v1420
        %v2585 = vunpack.c.l.b16 %v1422
        %v2586 = vunpack.c.l.b16 %v1424
        %v2587 = vunpack.c.l.b16 %v1426
        %v2588 = vunpack.c.l.b16 %v1428
        %v2589 = vunpack.c.l.b16 %v1430
        %v2590 = vunpack.c.l.b16 %v1432
        %v2591 = vunpack.c.l.b16 %v1434
        %v2592 = vunpack.c.l.b16 %v1436
        %v2593 = vunpack.c.l.b16 %v1438
        %v2594 = vunpack.c.l.b16 %v1440
        %v2595 = vunpack.c.l.b16 %v1442
        %v2596 = vpack.c.b16 %v2581, %v2580
        %v2597 = vpack.c.b16 %v2583, %v2582
        %v2598 = vpack.c.b16 %v2585, %v2584
        %v2599 = vpack.c.b16 %v2587, %v2586
        %v2600 = vpack.c.b16 %v2589, %v2588
        %v2601 = vpack.c.b16 %v2591, %v2590
        %v2602 = vpack.c.b16 %v2593, %v2592
        %v2603 = vpack.c.b16 %v2595, %v2594
        %v2628 = vunpack.c.l.b16 %v2386
        %v2629 = vunpack.c.l.b16 %v2387
        %v2630 = vunpack.c.l.b16 %v2388
        %v2631 = vunpack.c.l.b16 %v2389
        %v2632 = vunpack.c.l.b16 %v2390
        %v2633 = vunpack.c.l.b16 %v2391
        %v2634 = vunpack.c.l.b16 %v2392
        %v2635 = vunpack.c.l.b16 %v2393
        %v2636 = vunpack.c.l.b16 %v2394
        %v2637 = vunpack.c.l.b16 %v2395
        %v2638 = vunpack.c.l.b16 %v2396
        %v2639 = vunpack.c.l.b16 %v2397
        %v2640 = vunpack.c.l.b16 %v2398
        %v2641 = vunpack.c.l.b16 %v2399
        %v2642 = vunpack.c.l.b16 %v2400
        %v2643 = vunpack.c.l.b16 %v2401
        %v2644 = vpack.c.b16 %v2629, %v2628
        %v2645 = vpack.c.b16 %v2631, %v2630
        %v2646 = vpack.c.b16 %v2633, %v2632
        %v2647 = vpack.c.b16 %v2635, %v2634
        %v2648 = vpack.c.b16 %v2637, %v2636
        %v2649 = vpack.c.b16 %v2639, %v2638
        %v2650 = vpack.c.b16 %v2641, %v2640
        %v2651 = vpack.c.b16 %v2643, %v2642
        %2660 = vmatpush.bf16.msra.mxu0 %v2651
        %2661 = vmatpush.bf16.msra.mxu0 %v2650
        %2662 = vmatpush.bf16.msra.mxu0 %v2649
        %2663 = vmatpush.bf16.msra.mxu0 %v2648
        %2664 = vmatpush.bf16.msra.mxu0 %v2647
        %2665 = vmatpush.bf16.msra.mxu0 %v2646
        %2666 = vmatpush.bf16.msra.mxu0 %v2645
        %2667 = vmatpush.bf16.msra.mxu0 %v2644
        %2668 = vmatmul.bf16.gmra.mxu0 %v2596
        %v2669 = vpop.f32.mrf.mxu0
        %v2670 = vadd.f32 %v2525, %v2669
        %v2671 = vpop.f32.mrf.mxu0
        %v2672 = vadd.f32 %v2527, %v2671
        %2673 = vmatmul.bf16.gmra.mxu0 %v2597
        %v2674 = vpop.f32.mrf.mxu0
        %v2675 = vadd.f32 %v2530, %v2674
        %v2676 = vpop.f32.mrf.mxu0
        %v2677 = vadd.f32 %v2532, %v2676
        %2678 = vmatmul.bf16.gmra.mxu0 %v2598
        %v2679 = vpop.f32.mrf.mxu0
        %v2680 = vadd.f32 %v2535, %v2679
        %v2681 = vpop.f32.mrf.mxu0
        %v2682 = vadd.f32 %v2537, %v2681
        %2683 = vmatmul.bf16.gmra.mxu0 %v2599
        %v2684 = vpop.f32.mrf.mxu0
        %v2685 = vadd.f32 %v2540, %v2684
        %v2686 = vpop.f32.mrf.mxu0
        %v2687 = vadd.f32 %v2542, %v2686
        %2688 = vmatmul.bf16.gmra.mxu0 %v2600
        %v2689 = vpop.f32.mrf.mxu0
        %v2690 = vadd.f32 %v2545, %v2689
        %v2691 = vpop.f32.mrf.mxu0
        %v2692 = vadd.f32 %v2547, %v2691
        %2693 = vmatmul.bf16.gmra.mxu0 %v2601
        %v2694 = vpop.f32.mrf.mxu0
        %v2695 = vadd.f32 %v2550, %v2694
        %v2696 = vpop.f32.mrf.mxu0
        %v2697 = vadd.f32 %v2552, %v2696
        %2698 = vmatmul.bf16.gmra.mxu0 %v2602
        %v2699 = vpop.f32.mrf.mxu0
        %v2700 = vadd.f32 %v2555, %v2699
        %v2701 = vpop.f32.mrf.mxu0
        %v2702 = vadd.f32 %v2557, %v2701
        %2703 = vmatmul.bf16.gmra.mxu0 %v2603
        %v2704 = vpop.f32.mrf.mxu0
        %v2705 = vadd.f32 %v2560, %v2704
        %v2706 = vpop.f32.mrf.mxu0
        %v2707 = vadd.f32 %v2562, %v2706
        %2708 = vdwg.mxu0
        %v2709 = vld [vmem:[%s7 + $0x2] sm:$0x1]
        %v2711 = vperm.slane %v2709, 0
        %v2713 = vadd.f32 %v2670, %v2711
        %v2714 = vadd.f32 %v2672, %v2711
        %v2715 = vadd.f32 %v2675, %v2711
        %v2716 = vadd.f32 %v2677, %v2711
        %v2717 = vadd.f32 %v2680, %v2711
        %v2718 = vadd.f32 %v2682, %v2711
        %v2719 = vadd.f32 %v2685, %v2711
        %v2720 = vadd.f32 %v2687, %v2711
        %v2721 = vadd.f32 %v2690, %v2711
        %v2722 = vadd.f32 %v2692, %v2711
        %v2723 = vadd.f32 %v2695, %v2711
        %v2724 = vadd.f32 %v2697, %v2711
        %v2725 = vadd.f32 %v2700, %v2711
        %v2726 = vadd.f32 %v2702, %v2711
        %v2727 = vadd.f32 %v2705, %v2711
        %v2728 = vadd.f32 %v2707, %v2711
        %v2729 = vmax.f32 %v2713, 0.0
        %v2730 = vmax.f32 %v2714, 0.0
        %v2731 = vmax.f32 %v2715, 0.0
        %v2732 = vmax.f32 %v2716, 0.0
        %v2733 = vmax.f32 %v2717, 0.0
        %v2734 = vmax.f32 %v2718, 0.0
        %v2735 = vmax.f32 %v2719, 0.0
        %v2736 = vmax.f32 %v2720, 0.0
        %v2737 = vmax.f32 %v2721, 0.0
        %v2738 = vmax.f32 %v2722, 0.0
        %v2739 = vmax.f32 %v2723, 0.0
        %v2740 = vmax.f32 %v2724, 0.0
        %v2741 = vmax.f32 %v2725, 0.0
        %v2742 = vmax.f32 %v2726, 0.0
        %v2743 = vmax.f32 %v2727, 0.0
        %v2744 = vmax.f32 %v2728, 0.0
        %2745 = vset.pattern.permute.xlu0 2
        %2746 = vperm.xlu0 %2745, %v1475
        %v2747 = vpop.permute.xlu0 %2746
        %2749 = vset.pattern.permute.xlu0 2
        %2750 = vperm.xlu0 %2749, %v1476
        %v2751 = vpop.permute.xlu0 %2750
        %2753 = vset.pattern.permute.xlu0 2
        %2754 = vperm.xlu0 %2753, %v1477
        %v2755 = vpop.permute.xlu0 %2754
        %2757 = vset.pattern.permute.xlu0 2
        %2758 = vperm.xlu0 %2757, %v1478
        %v2759 = vpop.permute.xlu0 %2758
        %2761 = vset.pattern.permute.xlu0 2
        %2762 = vperm.xlu0 %2761, %v1479
        %v2763 = vpop.permute.xlu0 %2762
        %2765 = vset.pattern.permute.xlu0 2
        %2766 = vperm.xlu0 %2765, %v1480
        %v2767 = vpop.permute.xlu0 %2766
        %2769 = vset.pattern.permute.xlu0 2
        %2770 = vperm.xlu0 %2769, %v1481
        %v2771 = vpop.permute.xlu0 %2770
        %2773 = vset.pattern.permute.xlu0 2
        %2774 = vperm.xlu0 %2773, %v1482
        %v2775 = vpop.permute.xlu0 %2774
        %2777 = vset.pattern.permute.xlu0 2
        %2778 = vperm.xlu0 %2777, %v1483
        %v2779 = vpop.permute.xlu0 %2778
        %2781 = vset.pattern.permute.xlu0 2
        %2782 = vperm.xlu0 %2781, %v1484
        %v2783 = vpop.permute.xlu0 %2782
        %2785 = vset.pattern.permute.xlu0 2
        %2786 = vperm.xlu0 %2785, %v1485
        %v2787 = vpop.permute.xlu0 %2786
        %2789 = vset.pattern.permute.xlu0 2
        %2790 = vperm.xlu0 %2789, %v1486
        %v2791 = vpop.permute.xlu0 %2790
        %2793 = vset.pattern.permute.xlu0 2
        %2794 = vperm.xlu0 %2793, %v1487
        %v2795 = vpop.permute.xlu0 %2794
        %2797 = vset.pattern.permute.xlu0 2
        %2798 = vperm.xlu0 %2797, %v1488
        %v2799 = vpop.permute.xlu0 %2798
        %2801 = vset.pattern.permute.xlu0 2
        %2802 = vperm.xlu0 %2801, %v1489
        %v2803 = vpop.permute.xlu0 %2802
        %2805 = vset.pattern.permute.xlu0 2
        %2806 = vperm.xlu0 %2805, %v1490
        %v2807 = vpop.permute.xlu0 %2806
        %v2809 = vmul.f32 %v2747, %v2729
        %v2810 = vmul.f32 %v2751, %v2730
        %v2811 = vmul.f32 %v2755, %v2731
        %v2812 = vmul.f32 %v2759, %v2732
        %v2813 = vmul.f32 %v2763, %v2733
        %v2814 = vmul.f32 %v2767, %v2734
        %v2815 = vmul.f32 %v2771, %v2735
        %v2816 = vmul.f32 %v2775, %v2736
        %v2817 = vmul.f32 %v2779, %v2737
        %v2818 = vmul.f32 %v2783, %v2738
        %v2819 = vmul.f32 %v2787, %v2739
        %v2820 = vmul.f32 %v2791, %v2740
        %v2821 = vmul.f32 %v2795, %v2741
        %v2822 = vmul.f32 %v2799, %v2742
        %v2823 = vmul.f32 %v2803, %v2743
        %v2824 = vmul.f32 %v2807, %v2744
        %v2825 = vadd.f32 %v2369, %v2809
        %v2826 = vadd.f32 %v2370, %v2810
        %v2827 = vadd.f32 %v2371, %v2811
        %v2828 = vadd.f32 %v2372, %v2812
        %v2829 = vadd.f32 %v2373, %v2813
        %v2830 = vadd.f32 %v2374, %v2814
        %v2831 = vadd.f32 %v2375, %v2815
        %v2832 = vadd.f32 %v2376, %v2816
        %v2833 = vadd.f32 %v2377, %v2817
        %v2834 = vadd.f32 %v2378, %v2818
        %v2835 = vadd.f32 %v2379, %v2819
        %v2836 = vadd.f32 %v2380, %v2820
        %v2837 = vadd.f32 %v2381, %v2821
        %v2838 = vadd.f32 %v2382, %v2822
        %v2839 = vadd.f32 %v2383, %v2823
        %v2840 = vadd.f32 %v2384, %v2824
        %s2841 = scalar_lea.vmem %s5, 192
        %v2842 = vld [vmem:[%s2841] sm:$0xf]
        %v2843 = vld [vmem:[%s2841 + $0x4] sm:$0xf]
        %v2844 = vld [vmem:[%s2841 + $0x8] sm:$0xf]
        %v2845 = vld [vmem:[%s2841 + $0xc] sm:$0xf]
        %v2846 = vld [vmem:[%s2841 + $0x10] sm:$0xf]
        %v2847 = vld [vmem:[%s2841 + $0x14] sm:$0xf]
        %v2848 = vld [vmem:[%s2841 + $0x18] sm:$0xf]
        %v2849 = vld [vmem:[%s2841 + $0x1c] sm:$0xf]
        %v2850 = vld [vmem:[%s2841 + $0x20] sm:$0xf]
        %v2851 = vld [vmem:[%s2841 + $0x24] sm:$0xf]
        %v2852 = vld [vmem:[%s2841 + $0x28] sm:$0xf]
        %v2853 = vld [vmem:[%s2841 + $0x2c] sm:$0xf]
        %v2854 = vld [vmem:[%s2841 + $0x30] sm:$0xf]
        %v2855 = vld [vmem:[%s2841 + $0x34] sm:$0xf]
        %v2856 = vld [vmem:[%s2841 + $0x38] sm:$0xf]
        %v2857 = vld [vmem:[%s2841 + $0x3c] sm:$0xf]
        %s2858 = scalar_lea.vmem %s6, 192
        %v2859 = vld [vmem:[%s2858] sm:$0xf]
        %v2860 = vld [vmem:[%s2858 + $0x4] sm:$0xf]
        %v2861 = vld [vmem:[%s2858 + $0x8] sm:$0xf]
        %v2862 = vld [vmem:[%s2858 + $0xc] sm:$0xf]
        %v2863 = vld [vmem:[%s2858 + $0x10] sm:$0xf]
        %v2864 = vld [vmem:[%s2858 + $0x14] sm:$0xf]
        %v2865 = vld [vmem:[%s2858 + $0x18] sm:$0xf]
        %v2866 = vld [vmem:[%s2858 + $0x1c] sm:$0xf]
        %v2867 = vld [vmem:[%s2858 + $0x20] sm:$0xf]
        %v2868 = vld [vmem:[%s2858 + $0x24] sm:$0xf]
        %v2869 = vld [vmem:[%s2858 + $0x28] sm:$0xf]
        %v2870 = vld [vmem:[%s2858 + $0x2c] sm:$0xf]
        %v2871 = vld [vmem:[%s2858 + $0x30] sm:$0xf]
        %v2872 = vld [vmem:[%s2858 + $0x34] sm:$0xf]
        %v2873 = vld [vmem:[%s2858 + $0x38] sm:$0xf]
        %v2874 = vld [vmem:[%s2858 + $0x3c] sm:$0xf]
        %v2875 = vunpack.c.h.b16 %v1444
        %v2876 = vunpack.c.h.b16 %v1446
        %v2877 = vunpack.c.h.b16 %v1448
        %v2878 = vunpack.c.h.b16 %v1450
        %v2879 = vunpack.c.h.b16 %v1452
        %v2880 = vunpack.c.h.b16 %v1454
        %v2881 = vunpack.c.h.b16 %v1456
        %v2882 = vunpack.c.h.b16 %v1458
        %v2883 = vunpack.c.h.b16 %v1460
        %v2884 = vunpack.c.h.b16 %v1462
        %v2885 = vunpack.c.h.b16 %v1464
        %v2886 = vunpack.c.h.b16 %v1466
        %v2887 = vunpack.c.h.b16 %v1468
        %v2888 = vunpack.c.h.b16 %v1470
        %v2889 = vunpack.c.h.b16 %v1472
        %v2890 = vunpack.c.h.b16 %v1474
        %v2891 = vpack.c.b16 %v2876, %v2875
        %v2892 = vpack.c.b16 %v2878, %v2877
        %v2893 = vpack.c.b16 %v2880, %v2879
        %v2894 = vpack.c.b16 %v2882, %v2881
        %v2895 = vpack.c.b16 %v2884, %v2883
        %v2896 = vpack.c.b16 %v2886, %v2885
        %v2897 = vpack.c.b16 %v2888, %v2887
        %v2898 = vpack.c.b16 %v2890, %v2889
        %v2923 = vunpack.c.l.b16 %v2859
        %v2924 = vunpack.c.l.b16 %v2860
        %v2925 = vunpack.c.l.b16 %v2861
        %v2926 = vunpack.c.l.b16 %v2862
        %v2927 = vunpack.c.l.b16 %v2863
        %v2928 = vunpack.c.l.b16 %v2864
        %v2929 = vunpack.c.l.b16 %v2865
        %v2930 = vunpack.c.l.b16 %v2866
        %v2931 = vunpack.c.l.b16 %v2867
        %v2932 = vunpack.c.l.b16 %v2868
        %v2933 = vunpack.c.l.b16 %v2869
        %v2934 = vunpack.c.l.b16 %v2870
        %v2935 = vunpack.c.l.b16 %v2871
        %v2936 = vunpack.c.l.b16 %v2872
        %v2937 = vunpack.c.l.b16 %v2873
        %v2938 = vunpack.c.l.b16 %v2874
        %v2939 = vpack.c.b16 %v2924, %v2923
        %v2940 = vpack.c.b16 %v2926, %v2925
        %v2941 = vpack.c.b16 %v2928, %v2927
        %v2942 = vpack.c.b16 %v2930, %v2929
        %v2943 = vpack.c.b16 %v2932, %v2931
        %v2944 = vpack.c.b16 %v2934, %v2933
        %v2945 = vpack.c.b16 %v2936, %v2935
        %v2946 = vpack.c.b16 %v2938, %v2937
        %2955 = vmatpush.bf16.msra.mxu0 %v2946
        %2956 = vmatpush.bf16.msra.mxu0 %v2945
        %2957 = vmatpush.bf16.msra.mxu0 %v2944
        %2958 = vmatpush.bf16.msra.mxu0 %v2943
        %2959 = vmatpush.bf16.msra.mxu0 %v2942
        %2960 = vmatpush.bf16.msra.mxu0 %v2941
        %2961 = vmatpush.bf16.msra.mxu0 %v2940
        %2962 = vmatpush.bf16.msra.mxu0 %v2939
        %2963 = vmatmul.bf16.gmra.mxu0 %v2891
        %v2964 = vpop.f32.mrf.mxu0
        %v2965 = vadd.f32 0.0, %v2964
        %v2966 = vpop.f32.mrf.mxu0
        %v2967 = vadd.f32 0.0, %v2966
        %2968 = vmatmul.bf16.gmra.mxu0 %v2892
        %v2969 = vpop.f32.mrf.mxu0
        %v2970 = vadd.f32 0.0, %v2969
        %v2971 = vpop.f32.mrf.mxu0
        %v2972 = vadd.f32 0.0, %v2971
        %2973 = vmatmul.bf16.gmra.mxu0 %v2893
        %v2974 = vpop.f32.mrf.mxu0
        %v2975 = vadd.f32 0.0, %v2974
        %v2976 = vpop.f32.mrf.mxu0
        %v2977 = vadd.f32 0.0, %v2976
        %2978 = vmatmul.bf16.gmra.mxu0 %v2894
        %v2979 = vpop.f32.mrf.mxu0
        %v2980 = vadd.f32 0.0, %v2979
        %v2981 = vpop.f32.mrf.mxu0
        %v2982 = vadd.f32 0.0, %v2981
        %2983 = vmatmul.bf16.gmra.mxu0 %v2895
        %v2984 = vpop.f32.mrf.mxu0
        %v2985 = vadd.f32 0.0, %v2984
        %v2986 = vpop.f32.mrf.mxu0
        %v2987 = vadd.f32 0.0, %v2986
        %2988 = vmatmul.bf16.gmra.mxu0 %v2896
        %v2989 = vpop.f32.mrf.mxu0
        %v2990 = vadd.f32 0.0, %v2989
        %v2991 = vpop.f32.mrf.mxu0
        %v2992 = vadd.f32 0.0, %v2991
        %2993 = vmatmul.bf16.gmra.mxu0 %v2897
        %v2994 = vpop.f32.mrf.mxu0
        %v2995 = vadd.f32 0.0, %v2994
        %v2996 = vpop.f32.mrf.mxu0
        %v2997 = vadd.f32 0.0, %v2996
        %2998 = vmatmul.bf16.gmra.mxu0 %v2898
        %v2999 = vpop.f32.mrf.mxu0
        %v3000 = vadd.f32 0.0, %v2999
        %v3001 = vpop.f32.mrf.mxu0
        %v3002 = vadd.f32 0.0, %v3001
        %3003 = vdwg.mxu0
        %v3004 = vunpack.c.h.b16 %v1412
        %v3005 = vunpack.c.h.b16 %v1414
        %v3006 = vunpack.c.h.b16 %v1416
        %v3007 = vunpack.c.h.b16 %v1418
        %v3008 = vunpack.c.h.b16 %v1420
        %v3009 = vunpack.c.h.b16 %v1422
        %v3010 = vunpack.c.h.b16 %v1424
        %v3011 = vunpack.c.h.b16 %v1426
        %v3012 = vunpack.c.h.b16 %v1428
        %v3013 = vunpack.c.h.b16 %v1430
        %v3014 = vunpack.c.h.b16 %v1432
        %v3015 = vunpack.c.h.b16 %v1434
        %v3016 = vunpack.c.h.b16 %v1436
        %v3017 = vunpack.c.h.b16 %v1438
        %v3018 = vunpack.c.h.b16 %v1440
        %v3019 = vunpack.c.h.b16 %v1442
        %v3020 = vpack.c.b16 %v3005, %v3004
        %v3021 = vpack.c.b16 %v3007, %v3006
        %v3022 = vpack.c.b16 %v3009, %v3008
        %v3023 = vpack.c.b16 %v3011, %v3010
        %v3024 = vpack.c.b16 %v3013, %v3012
        %v3025 = vpack.c.b16 %v3015, %v3014
        %v3026 = vpack.c.b16 %v3017, %v3016
        %v3027 = vpack.c.b16 %v3019, %v3018
        %v3052 = vunpack.c.l.b16 %v2842
        %v3053 = vunpack.c.l.b16 %v2843
        %v3054 = vunpack.c.l.b16 %v2844
        %v3055 = vunpack.c.l.b16 %v2845
        %v3056 = vunpack.c.l.b16 %v2846
        %v3057 = vunpack.c.l.b16 %v2847
        %v3058 = vunpack.c.l.b16 %v2848
        %v3059 = vunpack.c.l.b16 %v2849
        %v3060 = vunpack.c.l.b16 %v2850
        %v3061 = vunpack.c.l.b16 %v2851
        %v3062 = vunpack.c.l.b16 %v2852
        %v3063 = vunpack.c.l.b16 %v2853
        %v3064 = vunpack.c.l.b16 %v2854
        %v3065 = vunpack.c.l.b16 %v2855
        %v3066 = vunpack.c.l.b16 %v2856
        %v3067 = vunpack.c.l.b16 %v2857
        %v3068 = vpack.c.b16 %v3053, %v3052
        %v3069 = vpack.c.b16 %v3055, %v3054
        %v3070 = vpack.c.b16 %v3057, %v3056
        %v3071 = vpack.c.b16 %v3059, %v3058
        %v3072 = vpack.c.b16 %v3061, %v3060
        %v3073 = vpack.c.b16 %v3063, %v3062
        %v3074 = vpack.c.b16 %v3065, %v3064
        %v3075 = vpack.c.b16 %v3067, %v3066
        %3084 = vmatpush.bf16.msra.mxu0 %v3075
        %3085 = vmatpush.bf16.msra.mxu0 %v3074
        %3086 = vmatpush.bf16.msra.mxu0 %v3073
        %3087 = vmatpush.bf16.msra.mxu0 %v3072
        %3088 = vmatpush.bf16.msra.mxu0 %v3071
        %3089 = vmatpush.bf16.msra.mxu0 %v3070
        %3090 = vmatpush.bf16.msra.mxu0 %v3069
        %3091 = vmatpush.bf16.msra.mxu0 %v3068
        %3092 = vmatmul.bf16.gmra.mxu0 %v3020
        %v3093 = vpop.f32.mrf.mxu0
        %v3094 = vadd.f32 %v2965, %v3093
        %v3095 = vpop.f32.mrf.mxu0
        %v3096 = vadd.f32 %v2967, %v3095
        %3097 = vmatmul.bf16.gmra.mxu0 %v3021
        %v3098 = vpop.f32.mrf.mxu0
        %v3099 = vadd.f32 %v2970, %v3098
        %v3100 = vpop.f32.mrf.mxu0
        %v3101 = vadd.f32 %v2972, %v3100
        %3102 = vmatmul.bf16.gmra.mxu0 %v3022
        %v3103 = vpop.f32.mrf.mxu0
        %v3104 = vadd.f32 %v2975, %v3103
        %v3105 = vpop.f32.mrf.mxu0
        %v3106 = vadd.f32 %v2977, %v3105
        %3107 = vmatmul.bf16.gmra.mxu0 %v3023
        %v3108 = vpop.f32.mrf.mxu0
        %v3109 = vadd.f32 %v2980, %v3108
        %v3110 = vpop.f32.mrf.mxu0
        %v3111 = vadd.f32 %v2982, %v3110
        %3112 = vmatmul.bf16.gmra.mxu0 %v3024
        %v3113 = vpop.f32.mrf.mxu0
        %v3114 = vadd.f32 %v2985, %v3113
        %v3115 = vpop.f32.mrf.mxu0
        %v3116 = vadd.f32 %v2987, %v3115
        %3117 = vmatmul.bf16.gmra.mxu0 %v3025
        %v3118 = vpop.f32.mrf.mxu0
        %v3119 = vadd.f32 %v2990, %v3118
        %v3120 = vpop.f32.mrf.mxu0
        %v3121 = vadd.f32 %v2992, %v3120
        %3122 = vmatmul.bf16.gmra.mxu0 %v3026
        %v3123 = vpop.f32.mrf.mxu0
        %v3124 = vadd.f32 %v2995, %v3123
        %v3125 = vpop.f32.mrf.mxu0
        %v3126 = vadd.f32 %v2997, %v3125
        %3127 = vmatmul.bf16.gmra.mxu0 %v3027
        %v3128 = vpop.f32.mrf.mxu0
        %v3129 = vadd.f32 %v3000, %v3128
        %v3130 = vpop.f32.mrf.mxu0
        %v3131 = vadd.f32 %v3002, %v3130
        %3132 = vdwg.mxu0
        %v3133 = vld [vmem:[%s7 + $0x3] sm:$0x1]
        %v3135 = vperm.slane %v3133, 0
        %v3137 = vadd.f32 %v3094, %v3135
        %v3138 = vadd.f32 %v3096, %v3135
        %v3139 = vadd.f32 %v3099, %v3135
        %v3140 = vadd.f32 %v3101, %v3135
        %v3141 = vadd.f32 %v3104, %v3135
        %v3142 = vadd.f32 %v3106, %v3135
        %v3143 = vadd.f32 %v3109, %v3135
        %v3144 = vadd.f32 %v3111, %v3135
        %v3145 = vadd.f32 %v3114, %v3135
        %v3146 = vadd.f32 %v3116, %v3135
        %v3147 = vadd.f32 %v3119, %v3135
        %v3148 = vadd.f32 %v3121, %v3135
        %v3149 = vadd.f32 %v3124, %v3135
        %v3150 = vadd.f32 %v3126, %v3135
        %v3151 = vadd.f32 %v3129, %v3135
        %v3152 = vadd.f32 %v3131, %v3135
        %v3153 = vmax.f32 %v3137, 0.0
        %v3154 = vmax.f32 %v3138, 0.0
        %v3155 = vmax.f32 %v3139, 0.0
        %v3156 = vmax.f32 %v3140, 0.0
        %v3157 = vmax.f32 %v3141, 0.0
        %v3158 = vmax.f32 %v3142, 0.0
        %v3159 = vmax.f32 %v3143, 0.0
        %v3160 = vmax.f32 %v3144, 0.0
        %v3161 = vmax.f32 %v3145, 0.0
        %v3162 = vmax.f32 %v3146, 0.0
        %v3163 = vmax.f32 %v3147, 0.0
        %v3164 = vmax.f32 %v3148, 0.0
        %v3165 = vmax.f32 %v3149, 0.0
        %v3166 = vmax.f32 %v3150, 0.0
        %v3167 = vmax.f32 %v3151, 0.0
        %v3168 = vmax.f32 %v3152, 0.0
        %3169 = vset.pattern.permute.xlu0 3
        %3170 = vperm.xlu0 %3169, %v1475
        %v3171 = vpop.permute.xlu0 %3170
        %3173 = vset.pattern.permute.xlu0 3
        %3174 = vperm.xlu0 %3173, %v1476
        %v3175 = vpop.permute.xlu0 %3174
        %3177 = vset.pattern.permute.xlu0 3
        %3178 = vperm.xlu0 %3177, %v1477
        %v3179 = vpop.permute.xlu0 %3178
        %3181 = vset.pattern.permute.xlu0 3
        %3182 = vperm.xlu0 %3181, %v1478
        %v3183 = vpop.permute.xlu0 %3182
        %3185 = vset.pattern.permute.xlu0 3
        %3186 = vperm.xlu0 %3185, %v1479
        %v3187 = vpop.permute.xlu0 %3186
        %3189 = vset.pattern.permute.xlu0 3
        %3190 = vperm.xlu0 %3189, %v1480
        %v3191 = vpop.permute.xlu0 %3190
        %3193 = vset.pattern.permute.xlu0 3
        %3194 = vperm.xlu0 %3193, %v1481
        %v3195 = vpop.permute.xlu0 %3194
        %3197 = vset.pattern.permute.xlu0 3
        %3198 = vperm.xlu0 %3197, %v1482
        %v3199 = vpop.permute.xlu0 %3198
        %3201 = vset.pattern.permute.xlu0 3
        %3202 = vperm.xlu0 %3201, %v1483
        %v3203 = vpop.permute.xlu0 %3202
        %3205 = vset.pattern.permute.xlu0 3
        %3206 = vperm.xlu0 %3205, %v1484
        %v3207 = vpop.permute.xlu0 %3206
        %3209 = vset.pattern.permute.xlu0 3
        %3210 = vperm.xlu0 %3209, %v1485
        %v3211 = vpop.permute.xlu0 %3210
        %3213 = vset.pattern.permute.xlu0 3
        %3214 = vperm.xlu0 %3213, %v1486
        %v3215 = vpop.permute.xlu0 %3214
        %3217 = vset.pattern.permute.xlu0 3
        %3218 = vperm.xlu0 %3217, %v1487
        %v3219 = vpop.permute.xlu0 %3218
        %3221 = vset.pattern.permute.xlu0 3
        %3222 = vperm.xlu0 %3221, %v1488
        %v3223 = vpop.permute.xlu0 %3222
        %3225 = vset.pattern.permute.xlu0 3
        %3226 = vperm.xlu0 %3225, %v1489
        %v3227 = vpop.permute.xlu0 %3226
        %3229 = vset.pattern.permute.xlu0 3
        %3230 = vperm.xlu0 %3229, %v1490
        %v3231 = vpop.permute.xlu0 %3230
        %v3233 = vmul.f32 %v3171, %v3153
        %v3234 = vmul.f32 %v3175, %v3154
        %v3235 = vmul.f32 %v3179, %v3155
        %v3236 = vmul.f32 %v3183, %v3156
        %v3237 = vmul.f32 %v3187, %v3157
        %v3238 = vmul.f32 %v3191, %v3158
        %v3239 = vmul.f32 %v3195, %v3159
        %v3240 = vmul.f32 %v3199, %v3160
        %v3241 = vmul.f32 %v3203, %v3161
        %v3242 = vmul.f32 %v3207, %v3162
        %v3243 = vmul.f32 %v3211, %v3163
        %v3244 = vmul.f32 %v3215, %v3164
        %v3245 = vmul.f32 %v3219, %v3165
        %v3246 = vmul.f32 %v3223, %v3166
        %v3247 = vmul.f32 %v3227, %v3167
        %v3248 = vmul.f32 %v3231, %v3168
        %v3249 = vadd.f32 %v2825, %v3233
        %v3250 = vadd.f32 %v2826, %v3234
        %v3251 = vadd.f32 %v2827, %v3235
        %v3252 = vadd.f32 %v2828, %v3236
        %v3253 = vadd.f32 %v2829, %v3237
        %v3254 = vadd.f32 %v2830, %v3238
        %v3255 = vadd.f32 %v2831, %v3239
        %v3256 = vadd.f32 %v2832, %v3240
        %v3257 = vadd.f32 %v2833, %v3241
        %v3258 = vadd.f32 %v2834, %v3242
        %v3259 = vadd.f32 %v2835, %v3243
        %v3260 = vadd.f32 %v2836, %v3244
        %v3261 = vadd.f32 %v2837, %v3245
        %v3262 = vadd.f32 %v2838, %v3246
        %v3263 = vadd.f32 %v2839, %v3247
        %v3264 = vadd.f32 %v2840, %v3248
        %3265 = vst [vmem:[%s351] sm:$0xff] %v3249
        %3266 = vst [vmem:[%s351 + $0x8] sm:$0xff] %v3250
        %3267 = vst [vmem:[%s351 + $0x10] sm:$0xff] %v3251
        %3268 = vst [vmem:[%s351 + $0x18] sm:$0xff] %v3252
        %3269 = vst [vmem:[%s351 + $0x20] sm:$0xff] %v3253
        %3270 = vst [vmem:[%s351 + $0x28] sm:$0xff] %v3254
        %3271 = vst [vmem:[%s351 + $0x30] sm:$0xff] %v3255
        %3272 = vst [vmem:[%s351 + $0x38] sm:$0xff] %v3256
        %3273 = vst [vmem:[%s351 + $0x40] sm:$0xff] %v3257
        %3274 = vst [vmem:[%s351 + $0x48] sm:$0xff] %v3258
        %3275 = vst [vmem:[%s351 + $0x50] sm:$0xff] %v3259
        %3276 = vst [vmem:[%s351 + $0x58] sm:$0xff] %v3260
        %3277 = vst [vmem:[%s351 + $0x60] sm:$0xff] %v3261
        %3278 = vst [vmem:[%s351 + $0x68] sm:$0xff] %v3262
        %3279 = vst [vmem:[%s351 + $0x70] sm:$0xff] %v3263
        %3280 = vst [vmem:[%s351 + $0x78] sm:$0xff] %v3264
        %s3281 = sand.u32 %s218, 1
        %s3282 = scalar_lea.sflag [#allocation3], %s3281
        %s3283 = sand.u32 %s218, 1
        %s3284 = smul.addr %s3283, 128
        %s3285 = scalar_lea.vmem [#allocation2], %s3284
        // Predicated region
        $region53: #{moe_forward.3} parent=51 // pred_check
          %p3286 = pneg %p228
        $region54: #{moe_forward.3} parent=51 // pred_check_branch
          %3288 = sbr.rel (%p3286) target = $region56
        $region55: #{moe_forward.3} parent=51 // pred_region
          %s3289 = smul.u32 16, %s22
          %3291 = vsyncadd %s3282, 0
          %s3292 = smul.addr %s3289, 8
          %s3293 = scalar_lea.hbm %s8, %s3292
          %s3294 = sshll.u32 %s3285, 4
          %s3295 = int_to_ptr.vmem [resolvable:$true] %s3294
          %s3296 = sshll.u32 %s3293, 4
          %s3297 = int_to_ptr.hbm [resolvable:$true] %s3296
          %3302 = dma.vmem_to_hbm [thread:$0]  %s3295, 2048, %s3297, %s3282, 128, 128, 8
        $region56: #{moe_forward.3} parent=51 // pred_fallthru
          _
      $region52: #{moe_forward.3} parent=5 // pred_fallthru
        _
      %p3303 = scmp.le.s32.totalorder 2, %s17
      // Predicated region
      $region57: #{moe_forward.3} parent=5 // pred_check
        %p3304 = pneg %p3303
      $region58: #{moe_forward.3} parent=5 // pred_check_branch
        %3306 = sbr.rel (%p3304) target = $region60
      $region59: #{moe_forward.3} parent=5 // pred_region
        %s3307 = ssub.s32 %s17, 2
        // Predicated region
        $region61: #{moe_forward.3} parent=59 // pred_check
          %p3308 = pneg %p234
        $region62: #{moe_forward.3} parent=59 // pred_check_branch
          %3310 = sbr.rel (%p3308) target = $region64
        $region63: #{moe_forward.3} parent=59 // pred_region
          %s3311 = sand.u32 %s219, 1
          %s3312 = scalar_lea.sflag [#allocation3], %s3311
          %s3313 = sand.u32 %s219, 1
          %s3314 = smul.addr %s3313, 128
          %s3315 = scalar_lea.vmem [#allocation2], %s3314
          %3317 = dma.done %s3312, 2048
        $region64: #{moe_forward.3} parent=59 // pred_fallthru
          _
      $region60: #{moe_forward.3} parent=5 // pred_fallthru
        _
    $region6: #{moe_forward.3} parent=1 // loop_footer
      %s21 = sadd.s32 1, %s17
    $region7: #{moe_forward.3} parent=1 // loop_footer_branch
      %16 = sbr.rel target = $region3
    $region8: #{moe_forward.3} parent=1 // loop_exit
      _
    %3318 = vsyncpa [#allocation3], 1
    %s3319 = scalar_lea.sflag [#allocation3], 1
    %3320 = vsyncpa %s3319, 1

// kernel: moe_forward.2
$region0: #{moe_forward.2}
  #allocation0 [shape = 'u32[]', space=smem, size = 0x4, offset = 0x4, fixed_abs, tag = 'smem constant byte address 0x4 - core index']
  #allocation1 [shape = 'u32[72,128]{1,0:T(1,128)}', space=vmem, size = 0x9000, scoped, tag = 'internal scratch']
  %s0 = inlined_call_operand.vmem [shape: bf16[256,128], index: 0, kind: input, shape index: {}, may-alias: {0,1}]
  %s1 = inlined_call_operand.vmem [shape: bf16[256,128], index: 1, kind: input, shape index: {}, may-alias: {0,1}]
  %s2 = inlined_call_operand.vmem [shape: bf16[256,256], index: 2, kind: input, shape index: {}]
  %s3 = inlined_call_operand.vmem [shape: f32[256,1], index: 3, kind: input, shape index: {}]
  %s4 = inlined_call_operand.vmem [shape: bf16[128,512], index: 4, kind: input, shape index: {}]
  %s5 = inlined_call_operand.vmem [shape: bf16[128,512], index: 5, kind: input, shape index: {}]
  %s6 = inlined_call_operand.vmem [shape: f32[1,512], index: 6, kind: input, shape index: {}]
  %s7 = inlined_call_operand.vmem [shape: bf16[128,4], index: 7, kind: input, shape index: {}]
  %s8 = inlined_call_operand.vmem [shape: f32[1,4], index: 8, kind: input, shape index: {}]
  %s9 = inlined_call_operand.vmem [shape: bf16[256,512], index: 9, kind: output, shape index: {0}]
  %s10 = inlined_call_operand.vmem [shape: f32[256,4], index: 10, kind: output, shape index: {1}]
  %11 = xla_tuple %s9, %s10
  %s12 = sld [smem:[#allocation0]]
  $region77: #{moe_forward.2} parent=0
    _
  %s14 = ssub.s32 1, %s12
  %s15 = scalar_select 0, %s14, %s12
  loop: start=0, step=1, limit=4
  $region2: #{moe_forward.2} parent=0 // loop_pre_header
    _
  $region3: #{moe_forward.2} parent=0 // loop_header
    %s17 = sphi 0, %s21
    %p18 = scmp.ge.s32.totalorder %s17, 4
    %s25 = sphi 0, %s25
    %s27 = sphi 0, %s25
    %s28 = sphi 0, %s27
    %s42 = sphi 0, %s28
    %s48 = sphi 0, %s50
    %s51 = sphi 0, %s48
    %s52 = sphi 0, %s51
    %s68 = sphi 0, %s52
    %s74 = sphi 0, %s76
    %s77 = sphi 0, %s74
    %s78 = sphi 0, %s77
    %s94 = sphi 0, %s78
    %s100 = sphi 0, %s102
    %s103 = sphi 0, %s100
    %s104 = sphi 0, %s103
    %s120 = sphi 0, %s104
    %s124 = sphi 0, %s124
    %s126 = sphi 0, %s124
    %s127 = sphi 0, %s126
    %s141 = sphi 0, %s127
    %s145 = sphi 0, %s145
    %s147 = sphi 0, %s145
    %s148 = sphi 0, %s147
    %s162 = sphi 0, %s148
    %s166 = sphi 0, %s166
    %s168 = sphi 0, %s166
    %s169 = sphi 0, %s168
    %s183 = sphi 0, %s169
    %s187 = sphi 0, %s187
    %s189 = sphi 0, %s187
    %s190 = sphi 0, %s189
    %s204 = sphi 0, %s190
    %s208 = sphi 0, %s208
    %s210 = sphi 0, %s208
    %s211 = sphi 0, %s210
    %s225 = sphi 0, %s211
    %s231 = sphi 0, %s233
    %s234 = sphi 0, %s231
    %s235 = sphi 0, %s234
    %s251 = sphi 0, %s235
    %s257 = sphi 0, %s259
    %s260 = sphi 0, %s257
    %s261 = sphi 0, %s260
    %s277 = sphi 0, %s261
  $region4: #{moe_forward.2} parent=0 // loop_header_branch
    %20 = sbr.rel (%p18) target = $region8
  $region5: #{moe_forward.2} parent=0 // loop_body
    %s22 = ssub.s32 %s17, 1
    %s23 = ssub.s32 %s17, 2
    %s24 = sadd.s32 %s17, 1
    %s26 = sadd.s32 %s25, 1
    %p29 = scmp.eq.s32.totalorder %s17, 1
    %p30 = scmp.ne.s32.totalorder %s25, %s27
    %p31 = scmp.eq.s32.totalorder %s17, 0
    %p32 = por %p30, %p31
    %p33 = scmp.ne.s32.totalorder %s25, %s27
    %p34 = scmp.eq.s32.totalorder %s22, 1
    %p35 = por %p33, %p34
    %p36 = scmp.ne.s32.totalorder %s27, %s28
    %p37 = scmp.eq.s32.totalorder %s22, 0
    %p38 = por %p36, %p37
    %p39 = scmp.ne.s32.totalorder %s27, %s28
    %p40 = scmp.eq.s32.totalorder %s23, 1
    %p41 = por %p39, %p40
    %p43 = scmp.ne.s32.totalorder %s28, %s42
    %p44 = scmp.eq.s32.totalorder %s23, 0
    %p45 = por %p43, %p44
    %s46 = ssub.s32 %s17, %s24
    %p47 = scmp.eq.s32.totalorder %s46, 0
    %s49 = sadd.s32 %s48, 1
    %s50 = scalar_select %p47, %s48, %s49
    %p53 = pneg %p47
    %p54 = scmp.eq.s32.totalorder %s17, 1
    %p55 = por %p53, %p54
    %p56 = scmp.ne.s32.totalorder %s48, %s51
    %p57 = scmp.eq.s32.totalorder %s17, 0
    %p58 = por %p56, %p57
    %p59 = scmp.ne.s32.totalorder %s48, %s51
    %p60 = scmp.eq.s32.totalorder %s22, 1
    %p61 = por %p59, %p60
    %p62 = scmp.ne.s32.totalorder %s51, %s52
    %p63 = scmp.eq.s32.totalorder %s22, 0
    %p64 = por %p62, %p63
    %p65 = scmp.ne.s32.totalorder %s51, %s52
    %p66 = scmp.eq.s32.totalorder %s23, 1
    %p67 = por %p65, %p66
    %p69 = scmp.ne.s32.totalorder %s52, %s68
    %p70 = scmp.eq.s32.totalorder %s23, 0
    %p71 = por %p69, %p70
    %s72 = ssub.s32 %s17, %s24
    %p73 = scmp.eq.s32.totalorder %s72, 0
    %s75 = sadd.s32 %s74, 1
    %s76 = scalar_select %p73, %s74, %s75
    %p79 = pneg %p73
    %p80 = scmp.eq.s32.totalorder %s17, 1
    %p81 = por %p79, %p80
    %p82 = scmp.ne.s32.totalorder %s74, %s77
    %p83 = scmp.eq.s32.totalorder %s17, 0
    %p84 = por %p82, %p83
    %p85 = scmp.ne.s32.totalorder %s74, %s77
    %p86 = scmp.eq.s32.totalorder %s22, 1
    %p87 = por %p85, %p86
    %p88 = scmp.ne.s32.totalorder %s77, %s78
    %p89 = scmp.eq.s32.totalorder %s22, 0
    %p90 = por %p88, %p89
    %p91 = scmp.ne.s32.totalorder %s77, %s78
    %p92 = scmp.eq.s32.totalorder %s23, 1
    %p93 = por %p91, %p92
    %p95 = scmp.ne.s32.totalorder %s78, %s94
    %p96 = scmp.eq.s32.totalorder %s23, 0
    %p97 = por %p95, %p96
    %s98 = ssub.s32 %s17, %s24
    %p99 = scmp.eq.s32.totalorder %s98, 0
    %s101 = sadd.s32 %s100, 1
    %s102 = scalar_select %p99, %s100, %s101
    %p105 = pneg %p99
    %p106 = scmp.eq.s32.totalorder %s17, 1
    %p107 = por %p105, %p106
    %p108 = scmp.ne.s32.totalorder %s100, %s103
    %p109 = scmp.eq.s32.totalorder %s17, 0
    %p110 = por %p108, %p109
    %p111 = scmp.ne.s32.totalorder %s100, %s103
    %p112 = scmp.eq.s32.totalorder %s22, 1
    %p113 = por %p111, %p112
    %p114 = scmp.ne.s32.totalorder %s103, %s104
    %p115 = scmp.eq.s32.totalorder %s22, 0
    %p116 = por %p114, %p115
    %p117 = scmp.ne.s32.totalorder %s103, %s104
    %p118 = scmp.eq.s32.totalorder %s23, 1
    %p119 = por %p117, %p118
    %p121 = scmp.ne.s32.totalorder %s104, %s120
    %p122 = scmp.eq.s32.totalorder %s23, 0
    %p123 = por %p121, %p122
    %s125 = sadd.s32 %s124, 1
    %p128 = scmp.eq.s32.totalorder %s17, 1
    %p129 = scmp.ne.s32.totalorder %s124, %s126
    %p130 = scmp.eq.s32.totalorder %s17, 0
    %p131 = por %p129, %p130
    %p132 = scmp.ne.s32.totalorder %s124, %s126
    %p133 = scmp.eq.s32.totalorder %s22, 1
    %p134 = por %p132, %p133
    %p135 = scmp.ne.s32.totalorder %s126, %s127
    %p136 = scmp.eq.s32.totalorder %s22, 0
    %p137 = por %p135, %p136
    %p138 = scmp.ne.s32.totalorder %s126, %s127
    %p139 = scmp.eq.s32.totalorder %s23, 1
    %p140 = por %p138, %p139
    %p142 = scmp.ne.s32.totalorder %s127, %s141
    %p143 = scmp.eq.s32.totalorder %s23, 0
    %p144 = por %p142, %p143
    %s146 = sadd.s32 %s145, 1
    %p149 = scmp.eq.s32.totalorder %s17, 1
    %p150 = scmp.ne.s32.totalorder %s145, %s147
    %p151 = scmp.eq.s32.totalorder %s17, 0
    %p152 = por %p150, %p151
    %p153 = scmp.ne.s32.totalorder %s145, %s147
    %p154 = scmp.eq.s32.totalorder %s22, 1
    %p155 = por %p153, %p154
    %p156 = scmp.ne.s32.totalorder %s147, %s148
    %p157 = scmp.eq.s32.totalorder %s22, 0
    %p158 = por %p156, %p157
    %p159 = scmp.ne.s32.totalorder %s147, %s148
    %p160 = scmp.eq.s32.totalorder %s23, 1
    %p161 = por %p159, %p160
    %p163 = scmp.ne.s32.totalorder %s148, %s162
    %p164 = scmp.eq.s32.totalorder %s23, 0
    %p165 = por %p163, %p164
    %s167 = sadd.s32 %s166, 1
    %p170 = scmp.eq.s32.totalorder %s17, 1
    %p171 = scmp.ne.s32.totalorder %s166, %s168
    %p172 = scmp.eq.s32.totalorder %s17, 0
    %p173 = por %p171, %p172
    %p174 = scmp.ne.s32.totalorder %s166, %s168
    %p175 = scmp.eq.s32.totalorder %s22, 1
    %p176 = por %p174, %p175
    %p177 = scmp.ne.s32.totalorder %s168, %s169
    %p178 = scmp.eq.s32.totalorder %s22, 0
    %p179 = por %p177, %p178
    %p180 = scmp.ne.s32.totalorder %s168, %s169
    %p181 = scmp.eq.s32.totalorder %s23, 1
    %p182 = por %p180, %p181
    %p184 = scmp.ne.s32.totalorder %s169, %s183
    %p185 = scmp.eq.s32.totalorder %s23, 0
    %p186 = por %p184, %p185
    %s188 = sadd.s32 %s187, 1
    %p191 = scmp.eq.s32.totalorder %s17, 1
    %p192 = scmp.ne.s32.totalorder %s187, %s189
    %p193 = scmp.eq.s32.totalorder %s17, 0
    %p194 = por %p192, %p193
    %p195 = scmp.ne.s32.totalorder %s187, %s189
    %p196 = scmp.eq.s32.totalorder %s22, 1
    %p197 = por %p195, %p196
    %p198 = scmp.ne.s32.totalorder %s189, %s190
    %p199 = scmp.eq.s32.totalorder %s22, 0
    %p200 = por %p198, %p199
    %p201 = scmp.ne.s32.totalorder %s189, %s190
    %p202 = scmp.eq.s32.totalorder %s23, 1
    %p203 = por %p201, %p202
    %p205 = scmp.ne.s32.totalorder %s190, %s204
    %p206 = scmp.eq.s32.totalorder %s23, 0
    %p207 = por %p205, %p206
    %s209 = sadd.s32 %s208, 1
    %p212 = scmp.eq.s32.totalorder %s17, 1
    %p213 = scmp.ne.s32.totalorder %s208, %s210
    %p214 = scmp.eq.s32.totalorder %s17, 0
    %p215 = por %p213, %p214
    %p216 = scmp.ne.s32.totalorder %s208, %s210
    %p217 = scmp.eq.s32.totalorder %s22, 1
    %p218 = por %p216, %p217
    %p219 = scmp.ne.s32.totalorder %s210, %s211
    %p220 = scmp.eq.s32.totalorder %s22, 0
    %p221 = por %p219, %p220
    %p222 = scmp.ne.s32.totalorder %s210, %s211
    %p223 = scmp.eq.s32.totalorder %s23, 1
    %p224 = por %p222, %p223
    %p226 = scmp.ne.s32.totalorder %s211, %s225
    %p227 = scmp.eq.s32.totalorder %s23, 0
    %p228 = por %p226, %p227
    %s229 = ssub.s32 %s17, %s24
    %p230 = scmp.eq.s32.totalorder %s229, 0
    %s232 = sadd.s32 %s231, 1
    %s233 = scalar_select %p230, %s231, %s232
    %p236 = pneg %p230
    %p237 = scmp.eq.s32.totalorder %s17, 1
    %p238 = por %p236, %p237
    %p239 = scmp.ne.s32.totalorder %s231, %s234
    %p240 = scmp.eq.s32.totalorder %s17, 0
    %p241 = por %p239, %p240
    %p242 = scmp.ne.s32.totalorder %s231, %s234
    %p243 = scmp.eq.s32.totalorder %s22, 1
    %p244 = por %p242, %p243
    %p245 = scmp.ne.s32.totalorder %s234, %s235
    %p246 = scmp.eq.s32.totalorder %s22, 0
    %p247 = por %p245, %p246
    %p248 = scmp.ne.s32.totalorder %s234, %s235
    %p249 = scmp.eq.s32.totalorder %s23, 1
    %p250 = por %p248, %p249
    %p252 = scmp.ne.s32.totalorder %s235, %s251
    %p253 = scmp.eq.s32.totalorder %s23, 0
    %p254 = por %p252, %p253
    %s255 = ssub.s32 %s17, %s24
    %p256 = scmp.eq.s32.totalorder %s255, 0
    %s258 = sadd.s32 %s257, 1
    %s259 = scalar_select %p256, %s257, %s258
    %p262 = pneg %p256
    %p263 = scmp.eq.s32.totalorder %s17, 1
    %p264 = por %p262, %p263
    %p265 = scmp.ne.s32.totalorder %s257, %s260
    %p266 = scmp.eq.s32.totalorder %s17, 0
    %p267 = por %p265, %p266
    %p268 = scmp.ne.s32.totalorder %s257, %s260
    %p269 = scmp.eq.s32.totalorder %s22, 1
    %p270 = por %p268, %p269
    %p271 = scmp.ne.s32.totalorder %s260, %s261
    %p272 = scmp.eq.s32.totalorder %s22, 0
    %p273 = por %p271, %p272
    %p274 = scmp.ne.s32.totalorder %s260, %s261
    %p275 = scmp.eq.s32.totalorder %s23, 1
    %p276 = por %p274, %p275
    %p278 = scmp.ne.s32.totalorder %s261, %s277
    %p279 = scmp.eq.s32.totalorder %s23, 0
    %p280 = por %p278, %p279
    %p281 = scmp.le.s32.totalorder 1, %s17
    %p282 = scmp.lt.s32.totalorder %s17, 3
    %p283 = pnand %p281, %p282
    %p284 = pneg %p283
    // Predicated region
    $region9: #{moe_forward.2} parent=5 // pred_check
      _
    $region10: #{moe_forward.2} parent=5 // pred_check_branch
      %286 = sbr.rel (%p283) target = $region12
    $region11: #{moe_forward.2} parent=5 // pred_region
      %s287 = ssub.s32 %s17, 1
      // Predicated region
      $region13: #{moe_forward.2} parent=11 // pred_check
        %p288 = pneg %p38
      $region14: #{moe_forward.2} parent=11 // pred_check_branch
        %290 = sbr.rel (%p288) target = $region16
      $region15: #{moe_forward.2} parent=11 // pred_region
        _
      $region16: #{moe_forward.2} parent=11 // pred_fallthru
        _
      // Predicated region
      $region17: #{moe_forward.2} parent=11 // pred_check
        %p291 = pneg %p137
      $region18: #{moe_forward.2} parent=11 // pred_check_branch
        %293 = sbr.rel (%p291) target = $region20
      $region19: #{moe_forward.2} parent=11 // pred_region
        _
      $region20: #{moe_forward.2} parent=11 // pred_fallthru
        _
      // Predicated region
      $region21: #{moe_forward.2} parent=11 // pred_check
        %p294 = pneg %p158
      $region22: #{moe_forward.2} parent=11 // pred_check_branch
        %296 = sbr.rel (%p294) target = $region24
      $region23: #{moe_forward.2} parent=11 // pred_region
        _
      $region24: #{moe_forward.2} parent=11 // pred_fallthru
        _
      // Predicated region
      $region25: #{moe_forward.2} parent=11 // pred_check
        %p297 = pneg %p179
      $region26: #{moe_forward.2} parent=11 // pred_check_branch
        %299 = sbr.rel (%p297) target = $region28
      $region27: #{moe_forward.2} parent=11 // pred_region
        _
      $region28: #{moe_forward.2} parent=11 // pred_fallthru
        _
      // Predicated region
      $region29: #{moe_forward.2} parent=11 // pred_check
        %p300 = pneg %p200
      $region30: #{moe_forward.2} parent=11 // pred_check_branch
        %302 = sbr.rel (%p300) target = $region32
      $region31: #{moe_forward.2} parent=11 // pred_region
        _
      $region32: #{moe_forward.2} parent=11 // pred_fallthru
        _
      // Predicated region
      $region33: #{moe_forward.2} parent=11 // pred_check
        %p303 = pneg %p221
      $region34: #{moe_forward.2} parent=11 // pred_check_branch
        %305 = sbr.rel (%p303) target = $region36
      $region35: #{moe_forward.2} parent=11 // pred_region
        _
      $region36: #{moe_forward.2} parent=11 // pred_fallthru
        _
    $region12: #{moe_forward.2} parent=5 // pred_fallthru
      _
    %p306 = scmp.lt.s32.totalorder %s17, 2
    // Predicated region
    $region37: #{moe_forward.2} parent=5 // pred_check
      %p307 = pneg %p306
    $region38: #{moe_forward.2} parent=5 // pred_check_branch
      %309 = sbr.rel (%p307) target = $region40
    $region39: #{moe_forward.2} parent=5 // pred_region
      // Predicated region
      $region41: #{moe_forward.2} parent=39 // pred_check
        %p310 = pneg %p58
      $region42: #{moe_forward.2} parent=39 // pred_check_branch
        %312 = sbr.rel (%p310) target = $region44
      $region43: #{moe_forward.2} parent=39 // pred_region
        %s313 = smul.u32 16, %s17
        %p314 = scmp.lt.s32.totalorder %s313, 31
        %s315 = scalar_select %p314, %s313, 31
        %s316 = smul.addr %s315, 4
        %s317 = scalar_lea.vmem %s1, %s316
        %s318 = smul.u32 16, %s17
      $region44: #{moe_forward.2} parent=39 // pred_fallthru
        _
      // Predicated region
      $region45: #{moe_forward.2} parent=39 // pred_check
        %p319 = pneg %p84
      $region46: #{moe_forward.2} parent=39 // pred_check_branch
        %321 = sbr.rel (%p319) target = $region48
      $region47: #{moe_forward.2} parent=39 // pred_region
        %s322 = smul.u32 16, %s17
        %p323 = scmp.lt.s32.totalorder %s322, 31
        %s324 = scalar_select %p323, %s322, 31
        %s325 = smul.addr %s324, 2
        %s326 = smul.addr %s325, 4
        %s327 = scalar_lea.vmem %s2, %s326
        %s328 = smul.u32 16, %s17
      $region48: #{moe_forward.2} parent=39 // pred_fallthru
        _
      // Predicated region
      $region49: #{moe_forward.2} parent=39 // pred_check
        %p329 = pneg %p110
      $region50: #{moe_forward.2} parent=39 // pred_check_branch
        %331 = sbr.rel (%p329) target = $region52
      $region51: #{moe_forward.2} parent=39 // pred_region
        %s332 = smul.u32 16, %s17
        %p333 = scmp.lt.s32.totalorder %s332, 31
        %s334 = scalar_select %p333, %s332, 31
        %s335 = smul.addr %s334, 8
        %s336 = scalar_lea.vmem %s3, %s335
        %s337 = smul.u32 16, %s17
      $region52: #{moe_forward.2} parent=39 // pred_fallthru
        _
    $region40: #{moe_forward.2} parent=5 // pred_fallthru
      _
    %p338 = scmp.le.s32.totalorder 1, %s17
    %p339 = scmp.lt.s32.totalorder %s17, 3
    %p340 = pnand %p338, %p339
    %p341 = pneg %p340
    // Predicated region
    $region53: #{moe_forward.2} parent=5 // pred_check
      _
    $region54: #{moe_forward.2} parent=5 // pred_check_branch
      %343 = sbr.rel (%p340) target = $region56
    $region55: #{moe_forward.2} parent=5 // pred_region
      %s344 = ssub.s32 %s17, 1
      %p345 = pneg %p38
      %p346 = pneg %p35
      %s347 = smul.u32 16, %s22
      %p348 = scmp.lt.s32.totalorder %s347, 31
      %s349 = scalar_select %p348, %s347, 31
      %s350 = smul.addr %s349, 4
      %s351 = scalar_lea.vmem %s1, %s350
      %p352 = pneg %p64
      %p353 = pneg %p61
      %s354 = smul.u32 16, %s22
      %p355 = scmp.lt.s32.totalorder %s354, 31
      %s356 = scalar_select %p355, %s354, 31
      %s357 = smul.addr %s356, 2
      %s358 = smul.addr %s357, 4
      %s359 = scalar_lea.vmem %s2, %s358
      %p360 = pneg %p90
      %p361 = pneg %p87
      %s362 = smul.u32 16, %s22
      %p363 = scmp.lt.s32.totalorder %s362, 31
      %s364 = scalar_select %p363, %s362, 31
      %s365 = smul.addr %s364, 8
      %s366 = scalar_lea.vmem %s3, %s365
      %p367 = pneg %p116
      %p368 = pneg %p113
      %p369 = pneg %p137
      %p370 = pneg %p134
      %p371 = pneg %p158
      %p372 = pneg %p155
      %p373 = pneg %p179
      %p374 = pneg %p176
      %p375 = pneg %p200
      %p376 = pneg %p197
      %p377 = pneg %p221
      %p378 = pneg %p218
      %p379 = pneg %p247
      %p380 = pneg %p244
      %s381 = smul.u32 16, %s22
      %p382 = scmp.lt.s32.totalorder %s381, 31
      %s383 = scalar_select %p382, %s381, 31
      %s384 = smul.addr %s383, 4
      %s385 = smul.addr %s384, 4
      %s386 = scalar_lea.vmem %s9, %s385
      %p387 = pneg %p273
      %p388 = pneg %p270
      %s389 = smul.u32 16, %s22
      %p390 = scmp.lt.s32.totalorder %s389, 31
      %s391 = scalar_select %p390, %s389, 31
      %s392 = smul.addr %s391, 8
      %s393 = scalar_lea.vmem %s10, %s392
      %s394 = smul.u32 16, %s22
      %p395 = scmp.lt.s32.totalorder %s394, 31
      %s396 = scalar_select %p395, %s394, 31
      %s397 = smul.addr %s396, 4
      %s398 = scalar_lea.vmem %s1, %s397
      %s399 = smul.u32 16, %s22
      %s400 = smul.u32 16, %s22
      %p401 = scmp.lt.s32.totalorder %s400, 31
      %s402 = scalar_select %p401, %s400, 31
      %s403 = smul.addr %s402, 2
      %s404 = smul.addr %s403, 4
      %s405 = scalar_lea.vmem %s2, %s404
      %s406 = smul.u32 16, %s22
      %s407 = smul.u32 16, %s22
      %p408 = scmp.lt.s32.totalorder %s407, 31
      %s409 = scalar_select %p408, %s407, 31
      %s410 = smul.addr %s409, 8
      %s411 = scalar_lea.vmem %s3, %s410
      %s412 = smul.u32 16, %s22
      %s413 = smul.u32 16, %s22
      %p414 = scmp.lt.s32.totalorder %s413, 31
      %s415 = scalar_select %p414, %s413, 31
      %s416 = smul.addr %s415, 4
      %s417 = smul.addr %s416, 4
      %s418 = scalar_lea.vmem %s9, %s417
      %s419 = smul.u32 16, %s22
      %s420 = smul.u32 16, %s22
      %p421 = scmp.lt.s32.totalorder %s420, 31
      %s422 = scalar_select %p421, %s420, 31
      %s423 = smul.addr %s422, 8
      %s424 = scalar_lea.vmem %s10, %s423
      %s425 = smul.u32 16, %s22
      %v426 = vld [vmem:[%s405] sm:$0xff]
      %v427 = vld [vmem:[%s405 + $0x8] sm:$0xff]
      %v428 = vld [vmem:[%s405 + $0x10] sm:$0xff]
      %v429 = vld [vmem:[%s405 + $0x18] sm:$0xff]
      %v430 = vld [vmem:[%s405 + $0x20] sm:$0xff]
      %v431 = vld [vmem:[%s405 + $0x28] sm:$0xff]
      %v432 = vld [vmem:[%s405 + $0x30] sm:$0xff]
      %v433 = vld [vmem:[%s405 + $0x38] sm:$0xff]
      %v434 = vld [vmem:[%s405 + $0x40] sm:$0xff]
      %v435 = vld [vmem:[%s405 + $0x48] sm:$0xff]
      %v436 = vld [vmem:[%s405 + $0x50] sm:$0xff]
      %v437 = vld [vmem:[%s405 + $0x58] sm:$0xff]
      %v438 = vld [vmem:[%s405 + $0x60] sm:$0xff]
      %v439 = vld [vmem:[%s405 + $0x68] sm:$0xff]
      %v440 = vld [vmem:[%s405 + $0x70] sm:$0xff]
      %v441 = vld [vmem:[%s405 + $0x78] sm:$0xff]
      %v442 = vld [vmem:[%s0] sm:$0xf]
      %v443 = vld [vmem:[%s0 + $0x4] sm:$0xf]
      %v444 = vld [vmem:[%s0 + $0x8] sm:$0xf]
      %v445 = vld [vmem:[%s0 + $0xc] sm:$0xf]
      %v446 = vld [vmem:[%s0 + $0x10] sm:$0xf]
      %v447 = vld [vmem:[%s0 + $0x14] sm:$0xf]
      %v448 = vld [vmem:[%s0 + $0x18] sm:$0xf]
      %v449 = vld [vmem:[%s0 + $0x1c] sm:$0xf]
      %v450 = vld [vmem:[%s0 + $0x20] sm:$0xf]
      %v451 = vld [vmem:[%s0 + $0x24] sm:$0xf]
      %v452 = vld [vmem:[%s0 + $0x28] sm:$0xf]
      %v453 = vld [vmem:[%s0 + $0x2c] sm:$0xf]
      %v454 = vld [vmem:[%s0 + $0x30] sm:$0xf]
      %v455 = vld [vmem:[%s0 + $0x34] sm:$0xf]
      %v456 = vld [vmem:[%s0 + $0x38] sm:$0xf]
      %v457 = vld [vmem:[%s0 + $0x3c] sm:$0xf]
      %v458 = vld [vmem:[%s0 + $0x40] sm:$0xf]
      %v459 = vld [vmem:[%s0 + $0x44] sm:$0xf]
      %v460 = vld [vmem:[%s0 + $0x48] sm:$0xf]
      %v461 = vld [vmem:[%s0 + $0x4c] sm:$0xf]
      %v462 = vld [vmem:[%s0 + $0x50] sm:$0xf]
      %v463 = vld [vmem:[%s0 + $0x54] sm:$0xf]
      %v464 = vld [vmem:[%s0 + $0x58] sm:$0xf]
      %v465 = vld [vmem:[%s0 + $0x5c] sm:$0xf]
      %v466 = vld [vmem:[%s0 + $0x60] sm:$0xf]
      %v467 = vld [vmem:[%s0 + $0x64] sm:$0xf]
      %v468 = vld [vmem:[%s0 + $0x68] sm:$0xf]
      %v469 = vld [vmem:[%s0 + $0x6c] sm:$0xf]
      %v470 = vld [vmem:[%s0 + $0x70] sm:$0xf]
      %v471 = vld [vmem:[%s0 + $0x74] sm:$0xf]
      %v472 = vld [vmem:[%s0 + $0x78] sm:$0xf]
      %v473 = vld [vmem:[%s0 + $0x7c] sm:$0xf]
      %v490 = vunpack.c.l.b16 %v426
      %v491 = vunpack.c.h.b16 %v426
      %v492 = vunpack.c.l.b16 %v427
      %v493 = vunpack.c.h.b16 %v427
      %v494 = vunpack.c.l.b16 %v428
      %v495 = vunpack.c.h.b16 %v428
      %v496 = vunpack.c.l.b16 %v429
      %v497 = vunpack.c.h.b16 %v429
      %v498 = vunpack.c.l.b16 %v430
      %v499 = vunpack.c.h.b16 %v430
      %v500 = vunpack.c.l.b16 %v431
      %v501 = vunpack.c.h.b16 %v431
      %v502 = vunpack.c.l.b16 %v432
      %v503 = vunpack.c.h.b16 %v432
      %v504 = vunpack.c.l.b16 %v433
      %v505 = vunpack.c.h.b16 %v433
      %v506 = vunpack.c.l.b16 %v434
      %v507 = vunpack.c.h.b16 %v434
      %v508 = vunpack.c.l.b16 %v435
      %v509 = vunpack.c.h.b16 %v435
      %v510 = vunpack.c.l.b16 %v436
      %v511 = vunpack.c.h.b16 %v436
      %v512 = vunpack.c.l.b16 %v437
      %v513 = vunpack.c.h.b16 %v437
      %v514 = vunpack.c.l.b16 %v438
      %v515 = vunpack.c.h.b16 %v438
      %v516 = vunpack.c.l.b16 %v439
      %v517 = vunpack.c.h.b16 %v439
      %v518 = vunpack.c.l.b16 %v440
      %v519 = vunpack.c.h.b16 %v440
      %v520 = vunpack.c.l.b16 %v441
      %v521 = vunpack.c.h.b16 %v441
      %v522 = vpack.c.b16 %v492, %v490
      %v523 = vpack.c.b16 %v493, %v491
      %v524 = vpack.c.b16 %v496, %v494
      %v525 = vpack.c.b16 %v497, %v495
      %v526 = vpack.c.b16 %v500, %v498
      %v527 = vpack.c.b16 %v501, %v499
      %v528 = vpack.c.b16 %v504, %v502
      %v529 = vpack.c.b16 %v505, %v503
      %v530 = vpack.c.b16 %v508, %v506
      %v531 = vpack.c.b16 %v509, %v507
      %v532 = vpack.c.b16 %v512, %v510
      %v533 = vpack.c.b16 %v513, %v511
      %v534 = vpack.c.b16 %v516, %v514
      %v535 = vpack.c.b16 %v517, %v515
      %v536 = vpack.c.b16 %v520, %v518
      %v537 = vpack.c.b16 %v521, %v519
      %v586 = vunpack.c.l.b16 %v442
      %v587 = vunpack.c.l.b16 %v443
      %v588 = vunpack.c.l.b16 %v444
      %v589 = vunpack.c.l.b16 %v445
      %v590 = vunpack.c.l.b16 %v446
      %v591 = vunpack.c.l.b16 %v447
      %v592 = vunpack.c.l.b16 %v448
      %v593 = vunpack.c.l.b16 %v449
      %v594 = vunpack.c.l.b16 %v450
      %v595 = vunpack.c.l.b16 %v451
      %v596 = vunpack.c.l.b16 %v452
      %v597 = vunpack.c.l.b16 %v453
      %v598 = vunpack.c.l.b16 %v454
      %v599 = vunpack.c.l.b16 %v455
      %v600 = vunpack.c.l.b16 %v456
      %v601 = vunpack.c.l.b16 %v457
      %v602 = vunpack.c.l.b16 %v458
      %v603 = vunpack.c.l.b16 %v459
      %v604 = vunpack.c.l.b16 %v460
      %v605 = vunpack.c.l.b16 %v461
      %v606 = vunpack.c.l.b16 %v462
      %v607 = vunpack.c.l.b16 %v463
      %v608 = vunpack.c.l.b16 %v464
      %v609 = vunpack.c.l.b16 %v465
      %v610 = vunpack.c.l.b16 %v466
      %v611 = vunpack.c.l.b16 %v467
      %v612 = vunpack.c.l.b16 %v468
      %v613 = vunpack.c.l.b16 %v469
      %v614 = vunpack.c.l.b16 %v470
      %v615 = vunpack.c.l.b16 %v471
      %v616 = vunpack.c.l.b16 %v472
      %v617 = vunpack.c.l.b16 %v473
      %v618 = vpack.c.b16 %v587, %v586
      %v619 = vpack.c.b16 %v589, %v588
      %v620 = vpack.c.b16 %v591, %v590
      %v621 = vpack.c.b16 %v593, %v592
      %v622 = vpack.c.b16 %v595, %v594
      %v623 = vpack.c.b16 %v597, %v596
      %v624 = vpack.c.b16 %v599, %v598
      %v625 = vpack.c.b16 %v601, %v600
      %v626 = vpack.c.b16 %v603, %v602
      %v627 = vpack.c.b16 %v605, %v604
      %v628 = vpack.c.b16 %v607, %v606
      %v629 = vpack.c.b16 %v609, %v608
      %v630 = vpack.c.b16 %v611, %v610
      %v631 = vpack.c.b16 %v613, %v612
      %v632 = vpack.c.b16 %v615, %v614
      %v633 = vpack.c.b16 %v617, %v616
      %650 = vmatpush.bf16.msra.mxu0 %v625
      %651 = vmatpush.bf16.msra.mxu0 %v624
      %652 = vmatpush.bf16.msra.mxu0 %v623
      %653 = vmatpush.bf16.msra.mxu0 %v622
      %654 = vmatpush.bf16.msra.mxu0 %v621
      %655 = vmatpush.bf16.msra.mxu0 %v620
      %656 = vmatpush.bf16.msra.mxu0 %v619
      %657 = vmatpush.bf16.msra.mxu0 %v618
      %658 = vmatmul.bf16.gmra.mxu0 %v522
      %v659 = vpop.f32.mrf.mxu0
      %v660 = vadd.f32 0.0, %v659
      %v661 = vpop.f32.mrf.mxu0
      %v662 = vadd.f32 0.0, %v661
      %663 = vmatmul.bf16.gmra.mxu0 %v524
      %v664 = vpop.f32.mrf.mxu0
      %v665 = vadd.f32 0.0, %v664
      %v666 = vpop.f32.mrf.mxu0
      %v667 = vadd.f32 0.0, %v666
      %668 = vmatmul.bf16.gmra.mxu0 %v526
      %v669 = vpop.f32.mrf.mxu0
      %v670 = vadd.f32 0.0, %v669
      %v671 = vpop.f32.mrf.mxu0
      %v672 = vadd.f32 0.0, %v671
      %673 = vmatmul.bf16.gmra.mxu0 %v528
      %v674 = vpop.f32.mrf.mxu0
      %v675 = vadd.f32 0.0, %v674
      %v676 = vpop.f32.mrf.mxu0
      %v677 = vadd.f32 0.0, %v676
      %678 = vmatmul.bf16.gmra.mxu0 %v530
      %v679 = vpop.f32.mrf.mxu0
      %v680 = vadd.f32 0.0, %v679
      %v681 = vpop.f32.mrf.mxu0
      %v682 = vadd.f32 0.0, %v681
      %683 = vmatmul.bf16.gmra.mxu0 %v532
      %v684 = vpop.f32.mrf.mxu0
      %v685 = vadd.f32 0.0, %v684
      %v686 = vpop.f32.mrf.mxu0
      %v687 = vadd.f32 0.0, %v686
      %688 = vmatmul.bf16.gmra.mxu0 %v534
      %v689 = vpop.f32.mrf.mxu0
      %v690 = vadd.f32 0.0, %v689
      %v691 = vpop.f32.mrf.mxu0
      %v692 = vadd.f32 0.0, %v691
      %693 = vmatmul.bf16.gmra.mxu0 %v536
      %v694 = vpop.f32.mrf.mxu0
      %v695 = vadd.f32 0.0, %v694
      %v696 = vpop.f32.mrf.mxu0
      %v697 = vadd.f32 0.0, %v696
      %698 = vdwg.mxu0
      %699 = vmatpush.bf16.msra.mxu0 %v633
      %700 = vmatpush.bf16.msra.mxu0 %v632
      %701 = vmatpush.bf16.msra.mxu0 %v631
      %702 = vmatpush.bf16.msra.mxu0 %v630
      %703 = vmatpush.bf16.msra.mxu0 %v629
      %704 = vmatpush.bf16.msra.mxu0 %v628
      %705 = vmatpush.bf16.msra.mxu0 %v627
      %706 = vmatpush.bf16.msra.mxu0 %v626
      %707 = vmatmul.bf16.gmra.mxu0 %v523
      %v708 = vpop.f32.mrf.mxu0
      %v709 = vadd.f32 %v660, %v708
      %v710 = vpop.f32.mrf.mxu0
      %v711 = vadd.f32 %v662, %v710
      %712 = vmatmul.bf16.gmra.mxu0 %v525
      %v713 = vpop.f32.mrf.mxu0
      %v714 = vadd.f32 %v665, %v713
      %v715 = vpop.f32.mrf.mxu0
      %v716 = vadd.f32 %v667, %v715
      %717 = vmatmul.bf16.gmra.mxu0 %v527
      %v718 = vpop.f32.mrf.mxu0
      %v719 = vadd.f32 %v670, %v718
      %v720 = vpop.f32.mrf.mxu0
      %v721 = vadd.f32 %v672, %v720
      %722 = vmatmul.bf16.gmra.mxu0 %v529
      %v723 = vpop.f32.mrf.mxu0
      %v724 = vadd.f32 %v675, %v723
      %v725 = vpop.f32.mrf.mxu0
      %v726 = vadd.f32 %v677, %v725
      %727 = vmatmul.bf16.gmra.mxu0 %v531
      %v728 = vpop.f32.mrf.mxu0
      %v729 = vadd.f32 %v680, %v728
      %v730 = vpop.f32.mrf.mxu0
      %v731 = vadd.f32 %v682, %v730
      %732 = vmatmul.bf16.gmra.mxu0 %v533
      %v733 = vpop.f32.mrf.mxu0
      %v734 = vadd.f32 %v685, %v733
      %v735 = vpop.f32.mrf.mxu0
      %v736 = vadd.f32 %v687, %v735
      %737 = vmatmul.bf16.gmra.mxu0 %v535
      %v738 = vpop.f32.mrf.mxu0
      %v739 = vadd.f32 %v690, %v738
      %v740 = vpop.f32.mrf.mxu0
      %v741 = vadd.f32 %v692, %v740
      %742 = vmatmul.bf16.gmra.mxu0 %v537
      %v743 = vpop.f32.mrf.mxu0
      %v744 = vadd.f32 %v695, %v743
      %v745 = vpop.f32.mrf.mxu0
      %v746 = vadd.f32 %v697, %v745
      %747 = vdwg.mxu0
      %v748 = vld [vmem:[%s411] sm:$0xff]
      %v749 = vld [vmem:[%s411 + $0x8] sm:$0xff]
      %v750 = vld [vmem:[%s411 + $0x10] sm:$0xff]
      %v751 = vld [vmem:[%s411 + $0x18] sm:$0xff]
      %v752 = vld [vmem:[%s411 + $0x20] sm:$0xff]
      %v753 = vld [vmem:[%s411 + $0x28] sm:$0xff]
      %v754 = vld [vmem:[%s411 + $0x30] sm:$0xff]
      %v755 = vld [vmem:[%s411 + $0x38] sm:$0xff]
      %v756 = vld [vmem:[%s411 + $0x40] sm:$0xff]
      %v757 = vld [vmem:[%s411 + $0x48] sm:$0xff]
      %v758 = vld [vmem:[%s411 + $0x50] sm:$0xff]
      %v759 = vld [vmem:[%s411 + $0x58] sm:$0xff]
      %v760 = vld [vmem:[%s411 + $0x60] sm:$0xff]
      %v761 = vld [vmem:[%s411 + $0x68] sm:$0xff]
      %v762 = vld [vmem:[%s411 + $0x70] sm:$0xff]
      %v763 = vld [vmem:[%s411 + $0x78] sm:$0xff]
      %765 = vset.pattern.permute.xlu0 0
      %766 = vperm.xlu0 %765, %v748
      %v767 = vpop.permute.xlu0 %766
      %770 = vset.pattern.permute.xlu0 0
      %771 = vperm.xlu0 %770, %v749
      %v772 = vpop.permute.xlu0 %771
      %775 = vset.pattern.permute.xlu0 0
      %776 = vperm.xlu0 %775, %v750
      %v777 = vpop.permute.xlu0 %776
      %780 = vset.pattern.permute.xlu0 0
      %781 = vperm.xlu0 %780, %v751
      %v782 = vpop.permute.xlu0 %781
      %785 = vset.pattern.permute.xlu0 0
      %786 = vperm.xlu0 %785, %v752
      %v787 = vpop.permute.xlu0 %786
      %790 = vset.pattern.permute.xlu0 0
      %791 = vperm.xlu0 %790, %v753
      %v792 = vpop.permute.xlu0 %791
      %795 = vset.pattern.permute.xlu0 0
      %796 = vperm.xlu0 %795, %v754
      %v797 = vpop.permute.xlu0 %796
      %800 = vset.pattern.permute.xlu0 0
      %801 = vperm.xlu0 %800, %v755
      %v802 = vpop.permute.xlu0 %801
      %805 = vset.pattern.permute.xlu0 0
      %806 = vperm.xlu0 %805, %v756
      %v807 = vpop.permute.xlu0 %806
      %810 = vset.pattern.permute.xlu0 0
      %811 = vperm.xlu0 %810, %v757
      %v812 = vpop.permute.xlu0 %811
      %815 = vset.pattern.permute.xlu0 0
      %816 = vperm.xlu0 %815, %v758
      %v817 = vpop.permute.xlu0 %816
      %820 = vset.pattern.permute.xlu0 0
      %821 = vperm.xlu0 %820, %v759
      %v822 = vpop.permute.xlu0 %821
      %825 = vset.pattern.permute.xlu0 0
      %826 = vperm.xlu0 %825, %v760
      %v827 = vpop.permute.xlu0 %826
      %830 = vset.pattern.permute.xlu0 0
      %831 = vperm.xlu0 %830, %v761
      %v832 = vpop.permute.xlu0 %831
      %835 = vset.pattern.permute.xlu0 0
      %836 = vperm.xlu0 %835, %v762
      %v837 = vpop.permute.xlu0 %836
      %840 = vset.pattern.permute.xlu0 0
      %841 = vperm.xlu0 %840, %v763
      %v842 = vpop.permute.xlu0 %841
      %v844 = vmul.f32 %v709, %v767
      %v845 = vmul.f32 %v711, %v772
      %v846 = vmul.f32 %v714, %v777
      %v847 = vmul.f32 %v716, %v782
      %v848 = vmul.f32 %v719, %v787
      %v849 = vmul.f32 %v721, %v792
      %v850 = vmul.f32 %v724, %v797
      %v851 = vmul.f32 %v726, %v802
      %v852 = vmul.f32 %v729, %v807
      %v853 = vmul.f32 %v731, %v812
      %v854 = vmul.f32 %v734, %v817
      %v855 = vmul.f32 %v736, %v822
      %v856 = vmul.f32 %v739, %v827
      %v857 = vmul.f32 %v741, %v832
      %v858 = vmul.f32 %v744, %v837
      %v859 = vmul.f32 %v746, %v842
      %v860 = vld [vmem:[%s398] sm:$0xf]
      %v861 = vld [vmem:[%s398 + $0x4] sm:$0xf]
      %v862 = vld [vmem:[%s398 + $0x8] sm:$0xf]
      %v863 = vld [vmem:[%s398 + $0xc] sm:$0xf]
      %v864 = vld [vmem:[%s398 + $0x10] sm:$0xf]
      %v865 = vld [vmem:[%s398 + $0x14] sm:$0xf]
      %v866 = vld [vmem:[%s398 + $0x18] sm:$0xf]
      %v867 = vld [vmem:[%s398 + $0x1c] sm:$0xf]
      %v868 = vld [vmem:[%s398 + $0x20] sm:$0xf]
      %v869 = vld [vmem:[%s398 + $0x24] sm:$0xf]
      %v870 = vld [vmem:[%s398 + $0x28] sm:$0xf]
      %v871 = vld [vmem:[%s398 + $0x2c] sm:$0xf]
      %v872 = vld [vmem:[%s398 + $0x30] sm:$0xf]
      %v873 = vld [vmem:[%s398 + $0x34] sm:$0xf]
      %v874 = vld [vmem:[%s398 + $0x38] sm:$0xf]
      %v875 = vld [vmem:[%s398 + $0x3c] sm:$0xf]
      %v876 = vpack.c.bf16 %v845, %v844
      %v877 = vpack.c.bf16 %v847, %v846
      %v878 = vpack.c.bf16 %v849, %v848
      %v879 = vpack.c.bf16 %v851, %v850
      %v880 = vpack.c.bf16 %v853, %v852
      %v881 = vpack.c.bf16 %v855, %v854
      %v882 = vpack.c.bf16 %v857, %v856
      %v883 = vpack.c.bf16 %v859, %v858
      %v884 = vld [vmem:[%s4] sm:$0xff]
      %v885 = vld [vmem:[%s4 + $0x8] sm:$0xff]
      %v886 = vld [vmem:[%s4 + $0x10] sm:$0xff]
      %v887 = vld [vmem:[%s4 + $0x18] sm:$0xff]
      %v888 = vld [vmem:[%s4 + $0x20] sm:$0xff]
      %v889 = vld [vmem:[%s4 + $0x28] sm:$0xff]
      %v890 = vld [vmem:[%s4 + $0x30] sm:$0xff]
      %v891 = vld [vmem:[%s4 + $0x38] sm:$0xff]
      %v892 = vld [vmem:[%s4 + $0x40] sm:$0xff]
      %v893 = vld [vmem:[%s4 + $0x48] sm:$0xff]
      %v894 = vld [vmem:[%s4 + $0x50] sm:$0xff]
      %v895 = vld [vmem:[%s4 + $0x58] sm:$0xff]
      %v896 = vld [vmem:[%s4 + $0x60] sm:$0xff]
      %v897 = vld [vmem:[%s4 + $0x68] sm:$0xff]
      %v898 = vld [vmem:[%s4 + $0x70] sm:$0xff]
      %v899 = vld [vmem:[%s4 + $0x78] sm:$0xff]
      %v900 = vld [vmem:[%s4 + $0x80] sm:$0xff]
      %v901 = vld [vmem:[%s4 + $0x88] sm:$0xff]
      %v902 = vld [vmem:[%s4 + $0x90] sm:$0xff]
      %v903 = vld [vmem:[%s4 + $0x98] sm:$0xff]
      %v904 = vld [vmem:[%s4 + $0xa0] sm:$0xff]
      %v905 = vld [vmem:[%s4 + $0xa8] sm:$0xff]
      %v906 = vld [vmem:[%s4 + $0xb0] sm:$0xff]
      %v907 = vld [vmem:[%s4 + $0xb8] sm:$0xff]
      %v908 = vld [vmem:[%s4 + $0xc0] sm:$0xff]
      %v909 = vld [vmem:[%s4 + $0xc8] sm:$0xff]
      %v910 = vld [vmem:[%s4 + $0xd0] sm:$0xff]
      %v911 = vld [vmem:[%s4 + $0xd8] sm:$0xff]
      %v912 = vld [vmem:[%s4 + $0xe0] sm:$0xff]
      %v913 = vld [vmem:[%s4 + $0xe8] sm:$0xff]
      %v914 = vld [vmem:[%s4 + $0xf0] sm:$0xff]
      %v915 = vld [vmem:[%s4 + $0xf8] sm:$0xff]
      %v916 = vld [vmem:[%s5] sm:$0xff]
      %v917 = vld [vmem:[%s5 + $0x8] sm:$0xff]
      %v918 = vld [vmem:[%s5 + $0x10] sm:$0xff]
      %v919 = vld [vmem:[%s5 + $0x18] sm:$0xff]
      %v920 = vld [vmem:[%s5 + $0x20] sm:$0xff]
      %v921 = vld [vmem:[%s5 + $0x28] sm:$0xff]
      %v922 = vld [vmem:[%s5 + $0x30] sm:$0xff]
      %v923 = vld [vmem:[%s5 + $0x38] sm:$0xff]
      %v924 = vld [vmem:[%s5 + $0x40] sm:$0xff]
      %v925 = vld [vmem:[%s5 + $0x48] sm:$0xff]
      %v926 = vld [vmem:[%s5 + $0x50] sm:$0xff]
      %v927 = vld [vmem:[%s5 + $0x58] sm:$0xff]
      %v928 = vld [vmem:[%s5 + $0x60] sm:$0xff]
      %v929 = vld [vmem:[%s5 + $0x68] sm:$0xff]
      %v930 = vld [vmem:[%s5 + $0x70] sm:$0xff]
      %v931 = vld [vmem:[%s5 + $0x78] sm:$0xff]
      %v932 = vld [vmem:[%s5 + $0x80] sm:$0xff]
      %v933 = vld [vmem:[%s5 + $0x88] sm:$0xff]
      %v934 = vld [vmem:[%s5 + $0x90] sm:$0xff]
      %v935 = vld [vmem:[%s5 + $0x98] sm:$0xff]
      %v936 = vld [vmem:[%s5 + $0xa0] sm:$0xff]
      %v937 = vld [vmem:[%s5 + $0xa8] sm:$0xff]
      %v938 = vld [vmem:[%s5 + $0xb0] sm:$0xff]
      %v939 = vld [vmem:[%s5 + $0xb8] sm:$0xff]
      %v940 = vld [vmem:[%s5 + $0xc0] sm:$0xff]
      %v941 = vld [vmem:[%s5 + $0xc8] sm:$0xff]
      %v942 = vld [vmem:[%s5 + $0xd0] sm:$0xff]
      %v943 = vld [vmem:[%s5 + $0xd8] sm:$0xff]
      %v944 = vld [vmem:[%s5 + $0xe0] sm:$0xff]
      %v945 = vld [vmem:[%s5 + $0xe8] sm:$0xff]
      %v946 = vld [vmem:[%s5 + $0xf0] sm:$0xff]
      %v947 = vld [vmem:[%s5 + $0xf8] sm:$0xff]
      %v964 = vunpack.c.l.b16 %v860
      %v965 = vunpack.c.l.b16 %v861
      %v966 = vunpack.c.l.b16 %v862
      %v967 = vunpack.c.l.b16 %v863
      %v968 = vunpack.c.l.b16 %v864
      %v969 = vunpack.c.l.b16 %v865
      %v970 = vunpack.c.l.b16 %v866
      %v971 = vunpack.c.l.b16 %v867
      %v972 = vunpack.c.l.b16 %v868
      %v973 = vunpack.c.l.b16 %v869
      %v974 = vunpack.c.l.b16 %v870
      %v975 = vunpack.c.l.b16 %v871
      %v976 = vunpack.c.l.b16 %v872
      %v977 = vunpack.c.l.b16 %v873
      %v978 = vunpack.c.l.b16 %v874
      %v979 = vunpack.c.l.b16 %v875
      %v980 = vpack.c.b16 %v965, %v964
      %v981 = vpack.c.b16 %v967, %v966
      %v982 = vpack.c.b16 %v969, %v968
      %v983 = vpack.c.b16 %v971, %v970
      %v984 = vpack.c.b16 %v973, %v972
      %v985 = vpack.c.b16 %v975, %v974
      %v986 = vpack.c.b16 %v977, %v976
      %v987 = vpack.c.b16 %v979, %v978
      %v1028 = vunpack.c.l.b16 %v916
      %v1029 = vunpack.c.h.b16 %v916
      %v1030 = vunpack.c.l.b16 %v917
      %v1031 = vunpack.c.h.b16 %v917
      %v1032 = vunpack.c.l.b16 %v918
      %v1033 = vunpack.c.h.b16 %v918
      %v1034 = vunpack.c.l.b16 %v919
      %v1035 = vunpack.c.h.b16 %v919
      %v1036 = vunpack.c.l.b16 %v920
      %v1037 = vunpack.c.h.b16 %v920
      %v1038 = vunpack.c.l.b16 %v921
      %v1039 = vunpack.c.h.b16 %v921
      %v1040 = vunpack.c.l.b16 %v922
      %v1041 = vunpack.c.h.b16 %v922
      %v1042 = vunpack.c.l.b16 %v923
      %v1043 = vunpack.c.h.b16 %v923
      %v1044 = vunpack.c.l.b16 %v924
      %v1045 = vunpack.c.h.b16 %v924
      %v1046 = vunpack.c.l.b16 %v925
      %v1047 = vunpack.c.h.b16 %v925
      %v1048 = vunpack.c.l.b16 %v926
      %v1049 = vunpack.c.h.b16 %v926
      %v1050 = vunpack.c.l.b16 %v927
      %v1051 = vunpack.c.h.b16 %v927
      %v1052 = vunpack.c.l.b16 %v928
      %v1053 = vunpack.c.h.b16 %v928
      %v1054 = vunpack.c.l.b16 %v929
      %v1055 = vunpack.c.h.b16 %v929
      %v1056 = vunpack.c.l.b16 %v930
      %v1057 = vunpack.c.h.b16 %v930
      %v1058 = vunpack.c.l.b16 %v931
      %v1059 = vunpack.c.h.b16 %v931
      %v1060 = vunpack.c.l.b16 %v932
      %v1061 = vunpack.c.h.b16 %v932
      %v1062 = vunpack.c.l.b16 %v933
      %v1063 = vunpack.c.h.b16 %v933
      %v1064 = vunpack.c.l.b16 %v934
      %v1065 = vunpack.c.h.b16 %v934
      %v1066 = vunpack.c.l.b16 %v935
      %v1067 = vunpack.c.h.b16 %v935
      %v1068 = vunpack.c.l.b16 %v936
      %v1069 = vunpack.c.h.b16 %v936
      %v1070 = vunpack.c.l.b16 %v937
      %v1071 = vunpack.c.h.b16 %v937
      %v1072 = vunpack.c.l.b16 %v938
      %v1073 = vunpack.c.h.b16 %v938
      %v1074 = vunpack.c.l.b16 %v939
      %v1075 = vunpack.c.h.b16 %v939
      %v1076 = vunpack.c.l.b16 %v940
      %v1077 = vunpack.c.h.b16 %v940
      %v1078 = vunpack.c.l.b16 %v941
      %v1079 = vunpack.c.h.b16 %v941
      %v1080 = vunpack.c.l.b16 %v942
      %v1081 = vunpack.c.h.b16 %v942
      %v1082 = vunpack.c.l.b16 %v943
      %v1083 = vunpack.c.h.b16 %v943
      %v1084 = vunpack.c.l.b16 %v944
      %v1085 = vunpack.c.h.b16 %v944
      %v1086 = vunpack.c.l.b16 %v945
      %v1087 = vunpack.c.h.b16 %v945
      %v1088 = vunpack.c.l.b16 %v946
      %v1089 = vunpack.c.h.b16 %v946
      %v1090 = vunpack.c.l.b16 %v947
      %v1091 = vunpack.c.h.b16 %v947
      %v1092 = vpack.c.b16 %v1032, %v1028
      %v1093 = vpack.c.b16 %v1033, %v1029
      %v1094 = vpack.c.b16 %v1034, %v1030
      %v1095 = vpack.c.b16 %v1035, %v1031
      %v1096 = vpack.c.b16 %v1040, %v1036
      %v1097 = vpack.c.b16 %v1041, %v1037
      %v1098 = vpack.c.b16 %v1042, %v1038
      %v1099 = vpack.c.b16 %v1043, %v1039
      %v1100 = vpack.c.b16 %v1048, %v1044
      %v1101 = vpack.c.b16 %v1049, %v1045
      %v1102 = vpack.c.b16 %v1050, %v1046
      %v1103 = vpack.c.b16 %v1051, %v1047
      %v1104 = vpack.c.b16 %v1056, %v1052
      %v1105 = vpack.c.b16 %v1057, %v1053
      %v1106 = vpack.c.b16 %v1058, %v1054
      %v1107 = vpack.c.b16 %v1059, %v1055
      %v1108 = vpack.c.b16 %v1064, %v1060
      %v1109 = vpack.c.b16 %v1065, %v1061
      %v1110 = vpack.c.b16 %v1066, %v1062
      %v1111 = vpack.c.b16 %v1067, %v1063
      %v1112 = vpack.c.b16 %v1072, %v1068
      %v1113 = vpack.c.b16 %v1073, %v1069
      %v1114 = vpack.c.b16 %v1074, %v1070
      %v1115 = vpack.c.b16 %v1075, %v1071
      %v1116 = vpack.c.b16 %v1080, %v1076
      %v1117 = vpack.c.b16 %v1081, %v1077
      %v1118 = vpack.c.b16 %v1082, %v1078
      %v1119 = vpack.c.b16 %v1083, %v1079
      %v1120 = vpack.c.b16 %v1088, %v1084
      %v1121 = vpack.c.b16 %v1089, %v1085
      %v1122 = vpack.c.b16 %v1090, %v1086
      %v1123 = vpack.c.b16 %v1091, %v1087
      %1156 = vmatpush.bf16.msra.mxu0 %v1120
      %1157 = vmatpush.bf16.msra.mxu0 %v1116
      %1158 = vmatpush.bf16.msra.mxu0 %v1112
      %1159 = vmatpush.bf16.msra.mxu0 %v1108
      %1160 = vmatpush.bf16.msra.mxu0 %v1104
      %1161 = vmatpush.bf16.msra.mxu0 %v1100
      %1162 = vmatpush.bf16.msra.mxu0 %v1096
      %1163 = vmatpush.bf16.msra.mxu0 %v1092
      %1164 = vmatmul.bf16.gmra.mxu0 %v980
      %v1165 = vpop.f32.mrf.mxu0
      %v1166 = vadd.f32 0.0, %v1165
      %v1167 = vpop.f32.mrf.mxu0
      %v1168 = vadd.f32 0.0, %v1167
      %1169 = vmatmul.bf16.gmra.mxu0 %v981
      %v1170 = vpop.f32.mrf.mxu0
      %v1171 = vadd.f32 0.0, %v1170
      %v1172 = vpop.f32.mrf.mxu0
      %v1173 = vadd.f32 0.0, %v1172
      %1174 = vmatmul.bf16.gmra.mxu0 %v982
      %v1175 = vpop.f32.mrf.mxu0
      %v1176 = vadd.f32 0.0, %v1175
      %v1177 = vpop.f32.mrf.mxu0
      %v1178 = vadd.f32 0.0, %v1177
      %1179 = vmatmul.bf16.gmra.mxu0 %v983
      %v1180 = vpop.f32.mrf.mxu0
      %v1181 = vadd.f32 0.0, %v1180
      %v1182 = vpop.f32.mrf.mxu0
      %v1183 = vadd.f32 0.0, %v1182
      %1184 = vmatmul.bf16.gmra.mxu0 %v984
      %v1185 = vpop.f32.mrf.mxu0
      %v1186 = vadd.f32 0.0, %v1185
      %v1187 = vpop.f32.mrf.mxu0
      %v1188 = vadd.f32 0.0, %v1187
      %1189 = vmatmul.bf16.gmra.mxu0 %v985
      %v1190 = vpop.f32.mrf.mxu0
      %v1191 = vadd.f32 0.0, %v1190
      %v1192 = vpop.f32.mrf.mxu0
      %v1193 = vadd.f32 0.0, %v1192
      %1194 = vmatmul.bf16.gmra.mxu0 %v986
      %v1195 = vpop.f32.mrf.mxu0
      %v1196 = vadd.f32 0.0, %v1195
      %v1197 = vpop.f32.mrf.mxu0
      %v1198 = vadd.f32 0.0, %v1197
      %1199 = vmatmul.bf16.gmra.mxu0 %v987
      %v1200 = vpop.f32.mrf.mxu0
      %v1201 = vadd.f32 0.0, %v1200
      %v1202 = vpop.f32.mrf.mxu0
      %v1203 = vadd.f32 0.0, %v1202
      %1204 = vdwg.mxu0
      %1205 = vmatpush.bf16.msra.mxu0 %v1121
      %1206 = vmatpush.bf16.msra.mxu0 %v1117
      %1207 = vmatpush.bf16.msra.mxu0 %v1113
      %1208 = vmatpush.bf16.msra.mxu0 %v1109
      %1209 = vmatpush.bf16.msra.mxu0 %v1105
      %1210 = vmatpush.bf16.msra.mxu0 %v1101
      %1211 = vmatpush.bf16.msra.mxu0 %v1097
      %1212 = vmatpush.bf16.msra.mxu0 %v1093
      %1213 = vmatmul.bf16.gmra.mxu0 %v980
      %v1214 = vpop.f32.mrf.mxu0
      %v1215 = vadd.f32 0.0, %v1214
      %v1216 = vpop.f32.mrf.mxu0
      %v1217 = vadd.f32 0.0, %v1216
      %1218 = vmatmul.bf16.gmra.mxu0 %v981
      %v1219 = vpop.f32.mrf.mxu0
      %v1220 = vadd.f32 0.0, %v1219
      %v1221 = vpop.f32.mrf.mxu0
      %v1222 = vadd.f32 0.0, %v1221
      %1223 = vmatmul.bf16.gmra.mxu0 %v982
      %v1224 = vpop.f32.mrf.mxu0
      %v1225 = vadd.f32 0.0, %v1224
      %v1226 = vpop.f32.mrf.mxu0
      %v1227 = vadd.f32 0.0, %v1226
      %1228 = vmatmul.bf16.gmra.mxu0 %v983
      %v1229 = vpop.f32.mrf.mxu0
      %v1230 = vadd.f32 0.0, %v1229
      %v1231 = vpop.f32.mrf.mxu0
      %v1232 = vadd.f32 0.0, %v1231
      %1233 = vmatmul.bf16.gmra.mxu0 %v984
      %v1234 = vpop.f32.mrf.mxu0
      %v1235 = vadd.f32 0.0, %v1234
      %v1236 = vpop.f32.mrf.mxu0
      %v1237 = vadd.f32 0.0, %v1236
      %1238 = vmatmul.bf16.gmra.mxu0 %v985
      %v1239 = vpop.f32.mrf.mxu0
      %v1240 = vadd.f32 0.0, %v1239
      %v1241 = vpop.f32.mrf.mxu0
      %v1242 = vadd.f32 0.0, %v1241
      %1243 = vmatmul.bf16.gmra.mxu0 %v986
      %v1244 = vpop.f32.mrf.mxu0
      %v1245 = vadd.f32 0.0, %v1244
      %v1246 = vpop.f32.mrf.mxu0
      %v1247 = vadd.f32 0.0, %v1246
      %1248 = vmatmul.bf16.gmra.mxu0 %v987
      %v1249 = vpop.f32.mrf.mxu0
      %v1250 = vadd.f32 0.0, %v1249
      %v1251 = vpop.f32.mrf.mxu0
      %v1252 = vadd.f32 0.0, %v1251
      %1253 = vdwg.mxu0
      %1254 = vmatpush.bf16.msra.mxu0 %v1122
      %1255 = vmatpush.bf16.msra.mxu0 %v1118
      %1256 = vmatpush.bf16.msra.mxu0 %v1114
      %1257 = vmatpush.bf16.msra.mxu0 %v1110
      %1258 = vmatpush.bf16.msra.mxu0 %v1106
      %1259 = vmatpush.bf16.msra.mxu0 %v1102
      %1260 = vmatpush.bf16.msra.mxu0 %v1098
      %1261 = vmatpush.bf16.msra.mxu0 %v1094
      %1262 = vmatmul.bf16.gmra.mxu0 %v980
      %v1263 = vpop.f32.mrf.mxu0
      %v1264 = vadd.f32 0.0, %v1263
      %v1265 = vpop.f32.mrf.mxu0
      %v1266 = vadd.f32 0.0, %v1265
      %1267 = vmatmul.bf16.gmra.mxu0 %v981
      %v1268 = vpop.f32.mrf.mxu0
      %v1269 = vadd.f32 0.0, %v1268
      %v1270 = vpop.f32.mrf.mxu0
      %v1271 = vadd.f32 0.0, %v1270
      %1272 = vmatmul.bf16.gmra.mxu0 %v982
      %v1273 = vpop.f32.mrf.mxu0
      %v1274 = vadd.f32 0.0, %v1273
      %v1275 = vpop.f32.mrf.mxu0
      %v1276 = vadd.f32 0.0, %v1275
      %1277 = vmatmul.bf16.gmra.mxu0 %v983
      %v1278 = vpop.f32.mrf.mxu0
      %v1279 = vadd.f32 0.0, %v1278
      %v1280 = vpop.f32.mrf.mxu0
      %v1281 = vadd.f32 0.0, %v1280
      %1282 = vmatmul.bf16.gmra.mxu0 %v984
      %v1283 = vpop.f32.mrf.mxu0
      %v1284 = vadd.f32 0.0, %v1283
      %v1285 = vpop.f32.mrf.mxu0
      %v1286 = vadd.f32 0.0, %v1285
      %1287 = vmatmul.bf16.gmra.mxu0 %v985
      %v1288 = vpop.f32.mrf.mxu0
      %v1289 = vadd.f32 0.0, %v1288
      %v1290 = vpop.f32.mrf.mxu0
      %v1291 = vadd.f32 0.0, %v1290
      %1292 = vmatmul.bf16.gmra.mxu0 %v986
      %v1293 = vpop.f32.mrf.mxu0
      %v1294 = vadd.f32 0.0, %v1293
      %v1295 = vpop.f32.mrf.mxu0
      %v1296 = vadd.f32 0.0, %v1295
      %1297 = vmatmul.bf16.gmra.mxu0 %v987
      %v1298 = vpop.f32.mrf.mxu0
      %v1299 = vadd.f32 0.0, %v1298
      %v1300 = vpop.f32.mrf.mxu0
      %v1301 = vadd.f32 0.0, %v1300
      %1302 = vdwg.mxu0
      %1303 = vmatpush.bf16.msra.mxu0 %v1123
      %1304 = vmatpush.bf16.msra.mxu0 %v1119
      %1305 = vmatpush.bf16.msra.mxu0 %v1115
      %1306 = vmatpush.bf16.msra.mxu0 %v1111
      %1307 = vmatpush.bf16.msra.mxu0 %v1107
      %1308 = vmatpush.bf16.msra.mxu0 %v1103
      %1309 = vmatpush.bf16.msra.mxu0 %v1099
      %1310 = vmatpush.bf16.msra.mxu0 %v1095
      %1311 = vmatmul.bf16.gmra.mxu0 %v980
      %v1312 = vpop.f32.mrf.mxu0
      %v1313 = vadd.f32 0.0, %v1312
      %v1314 = vpop.f32.mrf.mxu0
      %v1315 = vadd.f32 0.0, %v1314
      %1316 = vmatmul.bf16.gmra.mxu0 %v981
      %v1317 = vpop.f32.mrf.mxu0
      %v1318 = vadd.f32 0.0, %v1317
      %v1319 = vpop.f32.mrf.mxu0
      %v1320 = vadd.f32 0.0, %v1319
      %1321 = vmatmul.bf16.gmra.mxu0 %v982
      %v1322 = vpop.f32.mrf.mxu0
      %v1323 = vadd.f32 0.0, %v1322
      %v1324 = vpop.f32.mrf.mxu0
      %v1325 = vadd.f32 0.0, %v1324
      %1326 = vmatmul.bf16.gmra.mxu0 %v983
      %v1327 = vpop.f32.mrf.mxu0
      %v1328 = vadd.f32 0.0, %v1327
      %v1329 = vpop.f32.mrf.mxu0
      %v1330 = vadd.f32 0.0, %v1329
      %1331 = vmatmul.bf16.gmra.mxu0 %v984
      %v1332 = vpop.f32.mrf.mxu0
      %v1333 = vadd.f32 0.0, %v1332
      %v1334 = vpop.f32.mrf.mxu0
      %v1335 = vadd.f32 0.0, %v1334
      %1336 = vmatmul.bf16.gmra.mxu0 %v985
      %v1337 = vpop.f32.mrf.mxu0
      %v1338 = vadd.f32 0.0, %v1337
      %v1339 = vpop.f32.mrf.mxu0
      %v1340 = vadd.f32 0.0, %v1339
      %1341 = vmatmul.bf16.gmra.mxu0 %v986
      %v1342 = vpop.f32.mrf.mxu0
      %v1343 = vadd.f32 0.0, %v1342
      %v1344 = vpop.f32.mrf.mxu0
      %v1345 = vadd.f32 0.0, %v1344
      %1346 = vmatmul.bf16.gmra.mxu0 %v987
      %v1347 = vpop.f32.mrf.mxu0
      %v1348 = vadd.f32 0.0, %v1347
      %v1349 = vpop.f32.mrf.mxu0
      %v1350 = vadd.f32 0.0, %v1349
      %1351 = vdwg.mxu0
      %v1384 = vunpack.c.l.b16 %v884
      %v1385 = vunpack.c.h.b16 %v884
      %v1386 = vunpack.c.l.b16 %v885
      %v1387 = vunpack.c.h.b16 %v885
      %v1388 = vunpack.c.l.b16 %v886
      %v1389 = vunpack.c.h.b16 %v886
      %v1390 = vunpack.c.l.b16 %v887
      %v1391 = vunpack.c.h.b16 %v887
      %v1392 = vunpack.c.l.b16 %v888
      %v1393 = vunpack.c.h.b16 %v888
      %v1394 = vunpack.c.l.b16 %v889
      %v1395 = vunpack.c.h.b16 %v889
      %v1396 = vunpack.c.l.b16 %v890
      %v1397 = vunpack.c.h.b16 %v890
      %v1398 = vunpack.c.l.b16 %v891
      %v1399 = vunpack.c.h.b16 %v891
      %v1400 = vunpack.c.l.b16 %v892
      %v1401 = vunpack.c.h.b16 %v892
      %v1402 = vunpack.c.l.b16 %v893
      %v1403 = vunpack.c.h.b16 %v893
      %v1404 = vunpack.c.l.b16 %v894
      %v1405 = vunpack.c.h.b16 %v894
      %v1406 = vunpack.c.l.b16 %v895
      %v1407 = vunpack.c.h.b16 %v895
      %v1408 = vunpack.c.l.b16 %v896
      %v1409 = vunpack.c.h.b16 %v896
      %v1410 = vunpack.c.l.b16 %v897
      %v1411 = vunpack.c.h.b16 %v897
      %v1412 = vunpack.c.l.b16 %v898
      %v1413 = vunpack.c.h.b16 %v898
      %v1414 = vunpack.c.l.b16 %v899
      %v1415 = vunpack.c.h.b16 %v899
      %v1416 = vunpack.c.l.b16 %v900
      %v1417 = vunpack.c.h.b16 %v900
      %v1418 = vunpack.c.l.b16 %v901
      %v1419 = vunpack.c.h.b16 %v901
      %v1420 = vunpack.c.l.b16 %v902
      %v1421 = vunpack.c.h.b16 %v902
      %v1422 = vunpack.c.l.b16 %v903
      %v1423 = vunpack.c.h.b16 %v903
      %v1424 = vunpack.c.l.b16 %v904
      %v1425 = vunpack.c.h.b16 %v904
      %v1426 = vunpack.c.l.b16 %v905
      %v1427 = vunpack.c.h.b16 %v905
      %v1428 = vunpack.c.l.b16 %v906
      %v1429 = vunpack.c.h.b16 %v906
      %v1430 = vunpack.c.l.b16 %v907
      %v1431 = vunpack.c.h.b16 %v907
      %v1432 = vunpack.c.l.b16 %v908
      %v1433 = vunpack.c.h.b16 %v908
      %v1434 = vunpack.c.l.b16 %v909
      %v1435 = vunpack.c.h.b16 %v909
      %v1436 = vunpack.c.l.b16 %v910
      %v1437 = vunpack.c.h.b16 %v910
      %v1438 = vunpack.c.l.b16 %v911
      %v1439 = vunpack.c.h.b16 %v911
      %v1440 = vunpack.c.l.b16 %v912
      %v1441 = vunpack.c.h.b16 %v912
      %v1442 = vunpack.c.l.b16 %v913
      %v1443 = vunpack.c.h.b16 %v913
      %v1444 = vunpack.c.l.b16 %v914
      %v1445 = vunpack.c.h.b16 %v914
      %v1446 = vunpack.c.l.b16 %v915
      %v1447 = vunpack.c.h.b16 %v915
      %v1448 = vpack.c.b16 %v1388, %v1384
      %v1449 = vpack.c.b16 %v1389, %v1385
      %v1450 = vpack.c.b16 %v1390, %v1386
      %v1451 = vpack.c.b16 %v1391, %v1387
      %v1452 = vpack.c.b16 %v1396, %v1392
      %v1453 = vpack.c.b16 %v1397, %v1393
      %v1454 = vpack.c.b16 %v1398, %v1394
      %v1455 = vpack.c.b16 %v1399, %v1395
      %v1456 = vpack.c.b16 %v1404, %v1400
      %v1457 = vpack.c.b16 %v1405, %v1401
      %v1458 = vpack.c.b16 %v1406, %v1402
      %v1459 = vpack.c.b16 %v1407, %v1403
      %v1460 = vpack.c.b16 %v1412, %v1408
      %v1461 = vpack.c.b16 %v1413, %v1409
      %v1462 = vpack.c.b16 %v1414, %v1410
      %v1463 = vpack.c.b16 %v1415, %v1411
      %v1464 = vpack.c.b16 %v1420, %v1416
      %v1465 = vpack.c.b16 %v1421, %v1417
      %v1466 = vpack.c.b16 %v1422, %v1418
      %v1467 = vpack.c.b16 %v1423, %v1419
      %v1468 = vpack.c.b16 %v1428, %v1424
      %v1469 = vpack.c.b16 %v1429, %v1425
      %v1470 = vpack.c.b16 %v1430, %v1426
      %v1471 = vpack.c.b16 %v1431, %v1427
      %v1472 = vpack.c.b16 %v1436, %v1432
      %v1473 = vpack.c.b16 %v1437, %v1433
      %v1474 = vpack.c.b16 %v1438, %v1434
      %v1475 = vpack.c.b16 %v1439, %v1435
      %v1476 = vpack.c.b16 %v1444, %v1440
      %v1477 = vpack.c.b16 %v1445, %v1441
      %v1478 = vpack.c.b16 %v1446, %v1442
      %v1479 = vpack.c.b16 %v1447, %v1443
      %1512 = vmatpush.bf16.msra.mxu0 %v1476
      %1513 = vmatpush.bf16.msra.mxu0 %v1472
      %1514 = vmatpush.bf16.msra.mxu0 %v1468
      %1515 = vmatpush.bf16.msra.mxu0 %v1464
      %1516 = vmatpush.bf16.msra.mxu0 %v1460
      %1517 = vmatpush.bf16.msra.mxu0 %v1456
      %1518 = vmatpush.bf16.msra.mxu0 %v1452
      %1519 = vmatpush.bf16.msra.mxu0 %v1448
      %1520 = vmatmul.bf16.gmra.mxu0 %v876
      %v1521 = vpop.f32.mrf.mxu0
      %v1522 = vadd.f32 %v1166, %v1521
      %v1523 = vpop.f32.mrf.mxu0
      %v1524 = vadd.f32 %v1168, %v1523
      %1525 = vmatmul.bf16.gmra.mxu0 %v877
      %v1526 = vpop.f32.mrf.mxu0
      %v1527 = vadd.f32 %v1171, %v1526
      %v1528 = vpop.f32.mrf.mxu0
      %v1529 = vadd.f32 %v1173, %v1528
      %1530 = vmatmul.bf16.gmra.mxu0 %v878
      %v1531 = vpop.f32.mrf.mxu0
      %v1532 = vadd.f32 %v1176, %v1531
      %v1533 = vpop.f32.mrf.mxu0
      %v1534 = vadd.f32 %v1178, %v1533
      %1535 = vmatmul.bf16.gmra.mxu0 %v879
      %v1536 = vpop.f32.mrf.mxu0
      %v1537 = vadd.f32 %v1181, %v1536
      %v1538 = vpop.f32.mrf.mxu0
      %v1539 = vadd.f32 %v1183, %v1538
      %1540 = vmatmul.bf16.gmra.mxu0 %v880
      %v1541 = vpop.f32.mrf.mxu0
      %v1542 = vadd.f32 %v1186, %v1541
      %v1543 = vpop.f32.mrf.mxu0
      %v1544 = vadd.f32 %v1188, %v1543
      %1545 = vmatmul.bf16.gmra.mxu0 %v881
      %v1546 = vpop.f32.mrf.mxu0
      %v1547 = vadd.f32 %v1191, %v1546
      %v1548 = vpop.f32.mrf.mxu0
      %v1549 = vadd.f32 %v1193, %v1548
      %1550 = vmatmul.bf16.gmra.mxu0 %v882
      %v1551 = vpop.f32.mrf.mxu0
      %v1552 = vadd.f32 %v1196, %v1551
      %v1553 = vpop.f32.mrf.mxu0
      %v1554 = vadd.f32 %v1198, %v1553
      %1555 = vmatmul.bf16.gmra.mxu0 %v883
      %v1556 = vpop.f32.mrf.mxu0
      %v1557 = vadd.f32 %v1201, %v1556
      %v1558 = vpop.f32.mrf.mxu0
      %v1559 = vadd.f32 %v1203, %v1558
      %1560 = vdwg.mxu0
      %1561 = vmatpush.bf16.msra.mxu0 %v1477
      %1562 = vmatpush.bf16.msra.mxu0 %v1473
      %1563 = vmatpush.bf16.msra.mxu0 %v1469
      %1564 = vmatpush.bf16.msra.mxu0 %v1465
      %1565 = vmatpush.bf16.msra.mxu0 %v1461
      %1566 = vmatpush.bf16.msra.mxu0 %v1457
      %1567 = vmatpush.bf16.msra.mxu0 %v1453
      %1568 = vmatpush.bf16.msra.mxu0 %v1449
      %1569 = vmatmul.bf16.gmra.mxu0 %v876
      %v1570 = vpop.f32.mrf.mxu0
      %v1571 = vadd.f32 %v1215, %v1570
      %v1572 = vpop.f32.mrf.mxu0
      %v1573 = vadd.f32 %v1217, %v1572
      %1574 = vmatmul.bf16.gmra.mxu0 %v877
      %v1575 = vpop.f32.mrf.mxu0
      %v1576 = vadd.f32 %v1220, %v1575
      %v1577 = vpop.f32.mrf.mxu0
      %v1578 = vadd.f32 %v1222, %v1577
      %1579 = vmatmul.bf16.gmra.mxu0 %v878
      %v1580 = vpop.f32.mrf.mxu0
      %v1581 = vadd.f32 %v1225, %v1580
      %v1582 = vpop.f32.mrf.mxu0
      %v1583 = vadd.f32 %v1227, %v1582
      %1584 = vmatmul.bf16.gmra.mxu0 %v879
      %v1585 = vpop.f32.mrf.mxu0
      %v1586 = vadd.f32 %v1230, %v1585
      %v1587 = vpop.f32.mrf.mxu0
      %v1588 = vadd.f32 %v1232, %v1587
      %1589 = vmatmul.bf16.gmra.mxu0 %v880
      %v1590 = vpop.f32.mrf.mxu0
      %v1591 = vadd.f32 %v1235, %v1590
      %v1592 = vpop.f32.mrf.mxu0
      %v1593 = vadd.f32 %v1237, %v1592
      %1594 = vmatmul.bf16.gmra.mxu0 %v881
      %v1595 = vpop.f32.mrf.mxu0
      %v1596 = vadd.f32 %v1240, %v1595
      %v1597 = vpop.f32.mrf.mxu0
      %v1598 = vadd.f32 %v1242, %v1597
      %1599 = vmatmul.bf16.gmra.mxu0 %v882
      %v1600 = vpop.f32.mrf.mxu0
      %v1601 = vadd.f32 %v1245, %v1600
      %v1602 = vpop.f32.mrf.mxu0
      %v1603 = vadd.f32 %v1247, %v1602
      %1604 = vmatmul.bf16.gmra.mxu0 %v883
      %v1605 = vpop.f32.mrf.mxu0
      %v1606 = vadd.f32 %v1250, %v1605
      %v1607 = vpop.f32.mrf.mxu0
      %v1608 = vadd.f32 %v1252, %v1607
      %1609 = vdwg.mxu0
      %1610 = vmatpush.bf16.msra.mxu0 %v1478
      %1611 = vmatpush.bf16.msra.mxu0 %v1474
      %1612 = vmatpush.bf16.msra.mxu0 %v1470
      %1613 = vmatpush.bf16.msra.mxu0 %v1466
      %1614 = vmatpush.bf16.msra.mxu0 %v1462
      %1615 = vmatpush.bf16.msra.mxu0 %v1458
      %1616 = vmatpush.bf16.msra.mxu0 %v1454
      %1617 = vmatpush.bf16.msra.mxu0 %v1450
      %1618 = vmatmul.bf16.gmra.mxu0 %v876
      %v1619 = vpop.f32.mrf.mxu0
      %v1620 = vadd.f32 %v1264, %v1619
      %v1621 = vpop.f32.mrf.mxu0
      %v1622 = vadd.f32 %v1266, %v1621
      %1623 = vmatmul.bf16.gmra.mxu0 %v877
      %v1624 = vpop.f32.mrf.mxu0
      %v1625 = vadd.f32 %v1269, %v1624
      %v1626 = vpop.f32.mrf.mxu0
      %v1627 = vadd.f32 %v1271, %v1626
      %1628 = vmatmul.bf16.gmra.mxu0 %v878
      %v1629 = vpop.f32.mrf.mxu0
      %v1630 = vadd.f32 %v1274, %v1629
      %v1631 = vpop.f32.mrf.mxu0
      %v1632 = vadd.f32 %v1276, %v1631
      %1633 = vmatmul.bf16.gmra.mxu0 %v879
      %v1634 = vpop.f32.mrf.mxu0
      %v1635 = vadd.f32 %v1279, %v1634
      %v1636 = vpop.f32.mrf.mxu0
      %v1637 = vadd.f32 %v1281, %v1636
      %1638 = vmatmul.bf16.gmra.mxu0 %v880
      %v1639 = vpop.f32.mrf.mxu0
      %v1640 = vadd.f32 %v1284, %v1639
      %v1641 = vpop.f32.mrf.mxu0
      %v1642 = vadd.f32 %v1286, %v1641
      %1643 = vmatmul.bf16.gmra.mxu0 %v881
      %v1644 = vpop.f32.mrf.mxu0
      %v1645 = vadd.f32 %v1289, %v1644
      %v1646 = vpop.f32.mrf.mxu0
      %v1647 = vadd.f32 %v1291, %v1646
      %1648 = vmatmul.bf16.gmra.mxu0 %v882
      %v1649 = vpop.f32.mrf.mxu0
      %v1650 = vadd.f32 %v1294, %v1649
      %v1651 = vpop.f32.mrf.mxu0
      %v1652 = vadd.f32 %v1296, %v1651
      %1653 = vmatmul.bf16.gmra.mxu0 %v883
      %v1654 = vpop.f32.mrf.mxu0
      %v1655 = vadd.f32 %v1299, %v1654
      %v1656 = vpop.f32.mrf.mxu0
      %v1657 = vadd.f32 %v1301, %v1656
      %1658 = vdwg.mxu0
      %1659 = vmatpush.bf16.msra.mxu0 %v1479
      %1660 = vmatpush.bf16.msra.mxu0 %v1475
      %1661 = vmatpush.bf16.msra.mxu0 %v1471
      %1662 = vmatpush.bf16.msra.mxu0 %v1467
      %1663 = vmatpush.bf16.msra.mxu0 %v1463
      %1664 = vmatpush.bf16.msra.mxu0 %v1459
      %1665 = vmatpush.bf16.msra.mxu0 %v1455
      %1666 = vmatpush.bf16.msra.mxu0 %v1451
      %1667 = vmatmul.bf16.gmra.mxu0 %v876
      %v1668 = vpop.f32.mrf.mxu0
      %v1669 = vadd.f32 %v1313, %v1668
      %v1670 = vpop.f32.mrf.mxu0
      %v1671 = vadd.f32 %v1315, %v1670
      %1672 = vmatmul.bf16.gmra.mxu0 %v877
      %v1673 = vpop.f32.mrf.mxu0
      %v1674 = vadd.f32 %v1318, %v1673
      %v1675 = vpop.f32.mrf.mxu0
      %v1676 = vadd.f32 %v1320, %v1675
      %1677 = vmatmul.bf16.gmra.mxu0 %v878
      %v1678 = vpop.f32.mrf.mxu0
      %v1679 = vadd.f32 %v1323, %v1678
      %v1680 = vpop.f32.mrf.mxu0
      %v1681 = vadd.f32 %v1325, %v1680
      %1682 = vmatmul.bf16.gmra.mxu0 %v879
      %v1683 = vpop.f32.mrf.mxu0
      %v1684 = vadd.f32 %v1328, %v1683
      %v1685 = vpop.f32.mrf.mxu0
      %v1686 = vadd.f32 %v1330, %v1685
      %1687 = vmatmul.bf16.gmra.mxu0 %v880
      %v1688 = vpop.f32.mrf.mxu0
      %v1689 = vadd.f32 %v1333, %v1688
      %v1690 = vpop.f32.mrf.mxu0
      %v1691 = vadd.f32 %v1335, %v1690
      %1692 = vmatmul.bf16.gmra.mxu0 %v881
      %v1693 = vpop.f32.mrf.mxu0
      %v1694 = vadd.f32 %v1338, %v1693
      %v1695 = vpop.f32.mrf.mxu0
      %v1696 = vadd.f32 %v1340, %v1695
      %1697 = vmatmul.bf16.gmra.mxu0 %v882
      %v1698 = vpop.f32.mrf.mxu0
      %v1699 = vadd.f32 %v1343, %v1698
      %v1700 = vpop.f32.mrf.mxu0
      %v1701 = vadd.f32 %v1345, %v1700
      %1702 = vmatmul.bf16.gmra.mxu0 %v883
      %v1703 = vpop.f32.mrf.mxu0
      %v1704 = vadd.f32 %v1348, %v1703
      %v1705 = vpop.f32.mrf.mxu0
      %v1706 = vadd.f32 %v1350, %v1705
      %1707 = vdwg.mxu0
      %v1708 = vld [vmem:[%s6] sm:$0xf]
      %v1710 = vperm.slane %v1708, 0
      %v1711 = vperm.slane %v1708, 1
      %v1712 = vperm.slane %v1708, 2
      %v1713 = vperm.slane %v1708, 3
      %v1718 = vadd.f32 %v1522, %v1710
      %v1719 = vadd.f32 %v1571, %v1711
      %v1720 = vadd.f32 %v1620, %v1712
      %v1721 = vadd.f32 %v1669, %v1713
      %v1722 = vadd.f32 %v1524, %v1710
      %v1723 = vadd.f32 %v1573, %v1711
      %v1724 = vadd.f32 %v1622, %v1712
      %v1725 = vadd.f32 %v1671, %v1713
      %v1726 = vadd.f32 %v1527, %v1710
      %v1727 = vadd.f32 %v1576, %v1711
      %v1728 = vadd.f32 %v1625, %v1712
      %v1729 = vadd.f32 %v1674, %v1713
      %v1730 = vadd.f32 %v1529, %v1710
      %v1731 = vadd.f32 %v1578, %v1711
      %v1732 = vadd.f32 %v1627, %v1712
      %v1733 = vadd.f32 %v1676, %v1713
      %v1734 = vadd.f32 %v1532, %v1710
      %v1735 = vadd.f32 %v1581, %v1711
      %v1736 = vadd.f32 %v1630, %v1712
      %v1737 = vadd.f32 %v1679, %v1713
      %v1738 = vadd.f32 %v1534, %v1710
      %v1739 = vadd.f32 %v1583, %v1711
      %v1740 = vadd.f32 %v1632, %v1712
      %v1741 = vadd.f32 %v1681, %v1713
      %v1742 = vadd.f32 %v1537, %v1710
      %v1743 = vadd.f32 %v1586, %v1711
      %v1744 = vadd.f32 %v1635, %v1712
      %v1745 = vadd.f32 %v1684, %v1713
      %v1746 = vadd.f32 %v1539, %v1710
      %v1747 = vadd.f32 %v1588, %v1711
      %v1748 = vadd.f32 %v1637, %v1712
      %v1749 = vadd.f32 %v1686, %v1713
      %v1750 = vadd.f32 %v1542, %v1710
      %v1751 = vadd.f32 %v1591, %v1711
      %v1752 = vadd.f32 %v1640, %v1712
      %v1753 = vadd.f32 %v1689, %v1713
      %v1754 = vadd.f32 %v1544, %v1710
      %v1755 = vadd.f32 %v1593, %v1711
      %v1756 = vadd.f32 %v1642, %v1712
      %v1757 = vadd.f32 %v1691, %v1713
      %v1758 = vadd.f32 %v1547, %v1710
      %v1759 = vadd.f32 %v1596, %v1711
      %v1760 = vadd.f32 %v1645, %v1712
      %v1761 = vadd.f32 %v1694, %v1713
      %v1762 = vadd.f32 %v1549, %v1710
      %v1763 = vadd.f32 %v1598, %v1711
      %v1764 = vadd.f32 %v1647, %v1712
      %v1765 = vadd.f32 %v1696, %v1713
      %v1766 = vadd.f32 %v1552, %v1710
      %v1767 = vadd.f32 %v1601, %v1711
      %v1768 = vadd.f32 %v1650, %v1712
      %v1769 = vadd.f32 %v1699, %v1713
      %v1770 = vadd.f32 %v1554, %v1710
      %v1771 = vadd.f32 %v1603, %v1711
      %v1772 = vadd.f32 %v1652, %v1712
      %v1773 = vadd.f32 %v1701, %v1713
      %v1774 = vadd.f32 %v1557, %v1710
      %v1775 = vadd.f32 %v1606, %v1711
      %v1776 = vadd.f32 %v1655, %v1712
      %v1777 = vadd.f32 %v1704, %v1713
      %v1778 = vadd.f32 %v1559, %v1710
      %v1779 = vadd.f32 %v1608, %v1711
      %v1780 = vadd.f32 %v1657, %v1712
      %v1781 = vadd.f32 %v1706, %v1713
      %v1782 = vmax.f32 %v1718, 0.0
      %v1783 = vmax.f32 %v1719, 0.0
      %v1784 = vmax.f32 %v1720, 0.0
      %v1785 = vmax.f32 %v1721, 0.0
      %v1786 = vmax.f32 %v1722, 0.0
      %v1787 = vmax.f32 %v1723, 0.0
      %v1788 = vmax.f32 %v1724, 0.0
      %v1789 = vmax.f32 %v1725, 0.0
      %v1790 = vmax.f32 %v1726, 0.0
      %v1791 = vmax.f32 %v1727, 0.0
      %v1792 = vmax.f32 %v1728, 0.0
      %v1793 = vmax.f32 %v1729, 0.0
      %v1794 = vmax.f32 %v1730, 0.0
      %v1795 = vmax.f32 %v1731, 0.0
      %v1796 = vmax.f32 %v1732, 0.0
      %v1797 = vmax.f32 %v1733, 0.0
      %v1798 = vmax.f32 %v1734, 0.0
      %v1799 = vmax.f32 %v1735, 0.0
      %v1800 = vmax.f32 %v1736, 0.0
      %v1801 = vmax.f32 %v1737, 0.0
      %v1802 = vmax.f32 %v1738, 0.0
      %v1803 = vmax.f32 %v1739, 0.0
      %v1804 = vmax.f32 %v1740, 0.0
      %v1805 = vmax.f32 %v1741, 0.0
      %v1806 = vmax.f32 %v1742, 0.0
      %v1807 = vmax.f32 %v1743, 0.0
      %v1808 = vmax.f32 %v1744, 0.0
      %v1809 = vmax.f32 %v1745, 0.0
      %v1810 = vmax.f32 %v1746, 0.0
      %v1811 = vmax.f32 %v1747, 0.0
      %v1812 = vmax.f32 %v1748, 0.0
      %v1813 = vmax.f32 %v1749, 0.0
      %v1814 = vmax.f32 %v1750, 0.0
      %v1815 = vmax.f32 %v1751, 0.0
      %v1816 = vmax.f32 %v1752, 0.0
      %v1817 = vmax.f32 %v1753, 0.0
      %v1818 = vmax.f32 %v1754, 0.0
      %v1819 = vmax.f32 %v1755, 0.0
      %v1820 = vmax.f32 %v1756, 0.0
      %v1821 = vmax.f32 %v1757, 0.0
      %v1822 = vmax.f32 %v1758, 0.0
      %v1823 = vmax.f32 %v1759, 0.0
      %v1824 = vmax.f32 %v1760, 0.0
      %v1825 = vmax.f32 %v1761, 0.0
      %v1826 = vmax.f32 %v1762, 0.0
      %v1827 = vmax.f32 %v1763, 0.0
      %v1828 = vmax.f32 %v1764, 0.0
      %v1829 = vmax.f32 %v1765, 0.0
      %v1830 = vmax.f32 %v1766, 0.0
      %v1831 = vmax.f32 %v1767, 0.0
      %v1832 = vmax.f32 %v1768, 0.0
      %v1833 = vmax.f32 %v1769, 0.0
      %v1834 = vmax.f32 %v1770, 0.0
      %v1835 = vmax.f32 %v1771, 0.0
      %v1836 = vmax.f32 %v1772, 0.0
      %v1837 = vmax.f32 %v1773, 0.0
      %v1838 = vmax.f32 %v1774, 0.0
      %v1839 = vmax.f32 %v1775, 0.0
      %v1840 = vmax.f32 %v1776, 0.0
      %v1841 = vmax.f32 %v1777, 0.0
      %v1842 = vmax.f32 %v1778, 0.0
      %v1843 = vmax.f32 %v1779, 0.0
      %v1844 = vmax.f32 %v1780, 0.0
      %v1845 = vmax.f32 %v1781, 0.0
      %v1846 = vpack.c.bf16 %v1783, %v1782
      %v1847 = vpack.c.bf16 %v1785, %v1784
      %v1848 = vpack.c.bf16 %v1787, %v1786
      %v1849 = vpack.c.bf16 %v1789, %v1788
      %v1850 = vpack.c.bf16 %v1791, %v1790
      %v1851 = vpack.c.bf16 %v1793, %v1792
      %v1852 = vpack.c.bf16 %v1795, %v1794
      %v1853 = vpack.c.bf16 %v1797, %v1796
      %v1854 = vpack.c.bf16 %v1799, %v1798
      %v1855 = vpack.c.bf16 %v1801, %v1800
      %v1856 = vpack.c.bf16 %v1803, %v1802
      %v1857 = vpack.c.bf16 %v1805, %v1804
      %v1858 = vpack.c.bf16 %v1807, %v1806
      %v1859 = vpack.c.bf16 %v1809, %v1808
      %v1860 = vpack.c.bf16 %v1811, %v1810
      %v1861 = vpack.c.bf16 %v1813, %v1812
      %v1862 = vpack.c.bf16 %v1815, %v1814
      %v1863 = vpack.c.bf16 %v1817, %v1816
      %v1864 = vpack.c.bf16 %v1819, %v1818
      %v1865 = vpack.c.bf16 %v1821, %v1820
      %v1866 = vpack.c.bf16 %v1823, %v1822
      %v1867 = vpack.c.bf16 %v1825, %v1824
      %v1868 = vpack.c.bf16 %v1827, %v1826
      %v1869 = vpack.c.bf16 %v1829, %v1828
      %v1870 = vpack.c.bf16 %v1831, %v1830
      %v1871 = vpack.c.bf16 %v1833, %v1832
      %v1872 = vpack.c.bf16 %v1835, %v1834
      %v1873 = vpack.c.bf16 %v1837, %v1836
      %v1874 = vpack.c.bf16 %v1839, %v1838
      %v1875 = vpack.c.bf16 %v1841, %v1840
      %v1876 = vpack.c.bf16 %v1843, %v1842
      %v1877 = vpack.c.bf16 %v1845, %v1844
      %1878 = vst [vmem:[%s418] sm:$0xff] %v1846
      %1879 = vst [vmem:[%s418 + $0x8] sm:$0xff] %v1847
      %1880 = vst [vmem:[%s418 + $0x10] sm:$0xff] %v1848
      %1881 = vst [vmem:[%s418 + $0x18] sm:$0xff] %v1849
      %1882 = vst [vmem:[%s418 + $0x20] sm:$0xff] %v1850
      %1883 = vst [vmem:[%s418 + $0x28] sm:$0xff] %v1851
      %1884 = vst [vmem:[%s418 + $0x30] sm:$0xff] %v1852
      %1885 = vst [vmem:[%s418 + $0x38] sm:$0xff] %v1853
      %1886 = vst [vmem:[%s418 + $0x40] sm:$0xff] %v1854
      %1887 = vst [vmem:[%s418 + $0x48] sm:$0xff] %v1855
      %1888 = vst [vmem:[%s418 + $0x50] sm:$0xff] %v1856
      %1889 = vst [vmem:[%s418 + $0x58] sm:$0xff] %v1857
      %1890 = vst [vmem:[%s418 + $0x60] sm:$0xff] %v1858
      %1891 = vst [vmem:[%s418 + $0x68] sm:$0xff] %v1859
      %1892 = vst [vmem:[%s418 + $0x70] sm:$0xff] %v1860
      %1893 = vst [vmem:[%s418 + $0x78] sm:$0xff] %v1861
      %1894 = vst [vmem:[%s418 + $0x80] sm:$0xff] %v1862
      %1895 = vst [vmem:[%s418 + $0x88] sm:$0xff] %v1863
      %1896 = vst [vmem:[%s418 + $0x90] sm:$0xff] %v1864
      %1897 = vst [vmem:[%s418 + $0x98] sm:$0xff] %v1865
      %1898 = vst [vmem:[%s418 + $0xa0] sm:$0xff] %v1866
      %1899 = vst [vmem:[%s418 + $0xa8] sm:$0xff] %v1867
      %1900 = vst [vmem:[%s418 + $0xb0] sm:$0xff] %v1868
      %1901 = vst [vmem:[%s418 + $0xb8] sm:$0xff] %v1869
      %1902 = vst [vmem:[%s418 + $0xc0] sm:$0xff] %v1870
      %1903 = vst [vmem:[%s418 + $0xc8] sm:$0xff] %v1871
      %1904 = vst [vmem:[%s418 + $0xd0] sm:$0xff] %v1872
      %1905 = vst [vmem:[%s418 + $0xd8] sm:$0xff] %v1873
      %1906 = vst [vmem:[%s418 + $0xe0] sm:$0xff] %v1874
      %1907 = vst [vmem:[%s418 + $0xe8] sm:$0xff] %v1875
      %1908 = vst [vmem:[%s418 + $0xf0] sm:$0xff] %v1876
      %1909 = vst [vmem:[%s418 + $0xf8] sm:$0xff] %v1877
      %v1910 = vld [vmem:[%s7] sm:$0xf]
      %v1911 = vld [vmem:[%s7 + $0x4] sm:$0xf]
      %v1912 = vld [vmem:[%s7 + $0x8] sm:$0xf]
      %v1913 = vld [vmem:[%s7 + $0xc] sm:$0xf]
      %v1914 = vld [vmem:[%s7 + $0x10] sm:$0xf]
      %v1915 = vld [vmem:[%s7 + $0x14] sm:$0xf]
      %v1916 = vld [vmem:[%s7 + $0x18] sm:$0xf]
      %v1917 = vld [vmem:[%s7 + $0x1c] sm:$0xf]
      %v1918 = vld [vmem:[%s7 + $0x20] sm:$0xf]
      %v1919 = vld [vmem:[%s7 + $0x24] sm:$0xf]
      %v1920 = vld [vmem:[%s7 + $0x28] sm:$0xf]
      %v1921 = vld [vmem:[%s7 + $0x2c] sm:$0xf]
      %v1922 = vld [vmem:[%s7 + $0x30] sm:$0xf]
      %v1923 = vld [vmem:[%s7 + $0x34] sm:$0xf]
      %v1924 = vld [vmem:[%s7 + $0x38] sm:$0xf]
      %v1925 = vld [vmem:[%s7 + $0x3c] sm:$0xf]
      %v1926 = vld [vmem:[%s8] sm:$0x1]
      %v1928 = vperm.slane %v1926, 0
      %v1946 = vunpack.c.l.b16 %v1910
      %v1947 = vunpack.c.l.b16 %v1911
      %v1948 = vunpack.c.l.b16 %v1912
      %v1949 = vunpack.c.l.b16 %v1913
      %v1950 = vunpack.c.l.b16 %v1914
      %v1951 = vunpack.c.l.b16 %v1915
      %v1952 = vunpack.c.l.b16 %v1916
      %v1953 = vunpack.c.l.b16 %v1917
      %v1954 = vunpack.c.l.b16 %v1918
      %v1955 = vunpack.c.l.b16 %v1919
      %v1956 = vunpack.c.l.b16 %v1920
      %v1957 = vunpack.c.l.b16 %v1921
      %v1958 = vunpack.c.l.b16 %v1922
      %v1959 = vunpack.c.l.b16 %v1923
      %v1960 = vunpack.c.l.b16 %v1924
      %v1961 = vunpack.c.l.b16 %v1925
      %v1962 = vpack.c.b16 %v1947, %v1946
      %v1963 = vpack.c.b16 %v1949, %v1948
      %v1964 = vpack.c.b16 %v1951, %v1950
      %v1965 = vpack.c.b16 %v1953, %v1952
      %v1966 = vpack.c.b16 %v1955, %v1954
      %v1967 = vpack.c.b16 %v1957, %v1956
      %v1968 = vpack.c.b16 %v1959, %v1958
      %v1969 = vpack.c.b16 %v1961, %v1960
      %1978 = vmatpush.bf16.msra.mxu0 %v1969
      %1979 = vmatpush.bf16.msra.mxu0 %v1968
      %1980 = vmatpush.bf16.msra.mxu0 %v1967
      %1981 = vmatpush.bf16.msra.mxu0 %v1966
      %1982 = vmatpush.bf16.msra.mxu0 %v1965
      %1983 = vmatpush.bf16.msra.mxu0 %v1964
      %1984 = vmatpush.bf16.msra.mxu0 %v1963
      %1985 = vmatpush.bf16.msra.mxu0 %v1962
      %1986 = vmatmul.bf16.gmra.mxu0 %v980
      %v1987 = vpop.f32.mrf.mxu0
      %v1988 = vadd.f32 %v1928, %v1987
      %v1989 = vpop.f32.mrf.mxu0
      %v1990 = vadd.f32 %v1928, %v1989
      %1991 = vmatmul.bf16.gmra.mxu0 %v981
      %v1992 = vpop.f32.mrf.mxu0
      %v1993 = vadd.f32 %v1928, %v1992
      %v1994 = vpop.f32.mrf.mxu0
      %v1995 = vadd.f32 %v1928, %v1994
      %1996 = vmatmul.bf16.gmra.mxu0 %v982
      %v1997 = vpop.f32.mrf.mxu0
      %v1998 = vadd.f32 %v1928, %v1997
      %v1999 = vpop.f32.mrf.mxu0
      %v2000 = vadd.f32 %v1928, %v1999
      %2001 = vmatmul.bf16.gmra.mxu0 %v983
      %v2002 = vpop.f32.mrf.mxu0
      %v2003 = vadd.f32 %v1928, %v2002
      %v2004 = vpop.f32.mrf.mxu0
      %v2005 = vadd.f32 %v1928, %v2004
      %2006 = vmatmul.bf16.gmra.mxu0 %v984
      %v2007 = vpop.f32.mrf.mxu0
      %v2008 = vadd.f32 %v1928, %v2007
      %v2009 = vpop.f32.mrf.mxu0
      %v2010 = vadd.f32 %v1928, %v2009
      %2011 = vmatmul.bf16.gmra.mxu0 %v985
      %v2012 = vpop.f32.mrf.mxu0
      %v2013 = vadd.f32 %v1928, %v2012
      %v2014 = vpop.f32.mrf.mxu0
      %v2015 = vadd.f32 %v1928, %v2014
      %2016 = vmatmul.bf16.gmra.mxu0 %v986
      %v2017 = vpop.f32.mrf.mxu0
      %v2018 = vadd.f32 %v1928, %v2017
      %v2019 = vpop.f32.mrf.mxu0
      %v2020 = vadd.f32 %v1928, %v2019
      %2021 = vmatmul.bf16.gmra.mxu0 %v987
      %v2022 = vpop.f32.mrf.mxu0
      %v2023 = vadd.f32 %v1928, %v2022
      %v2024 = vpop.f32.mrf.mxu0
      %v2025 = vadd.f32 %v1928, %v2024
      %2026 = vdwg.mxu0
      %vm2027 = vcmask 31744
      %v2028 = vsel %vm2027, %v1988, -inf
      %2029 = vmax.xlane.f32.xlu0 %v2028
      %v2030 = vpop.xlane.xlu0 %2029
      %v2031 = vsel %vm2027, %v1990, -inf
      %2032 = vmax.xlane.f32.xlu0 %v2031
      %v2033 = vpop.xlane.xlu0 %2032
      %v2034 = vsel %vm2027, %v1993, -inf
      %2035 = vmax.xlane.f32.xlu0 %v2034
      %v2036 = vpop.xlane.xlu0 %2035
      %v2037 = vsel %vm2027, %v1995, -inf
      %2038 = vmax.xlane.f32.xlu0 %v2037
      %v2039 = vpop.xlane.xlu0 %2038
      %v2040 = vsel %vm2027, %v1998, -inf
      %2041 = vmax.xlane.f32.xlu0 %v2040
      %v2042 = vpop.xlane.xlu0 %2041
      %v2043 = vsel %vm2027, %v2000, -inf
      %2044 = vmax.xlane.f32.xlu0 %v2043
      %v2045 = vpop.xlane.xlu0 %2044
      %v2046 = vsel %vm2027, %v2003, -inf
      %2047 = vmax.xlane.f32.xlu0 %v2046
      %v2048 = vpop.xlane.xlu0 %2047
      %v2049 = vsel %vm2027, %v2005, -inf
      %2050 = vmax.xlane.f32.xlu0 %v2049
      %v2051 = vpop.xlane.xlu0 %2050
      %v2052 = vsel %vm2027, %v2008, -inf
      %2053 = vmax.xlane.f32.xlu0 %v2052
      %v2054 = vpop.xlane.xlu0 %2053
      %v2055 = vsel %vm2027, %v2010, -inf
      %2056 = vmax.xlane.f32.xlu0 %v2055
      %v2057 = vpop.xlane.xlu0 %2056
      %v2058 = vsel %vm2027, %v2013, -inf
      %2059 = vmax.xlane.f32.xlu0 %v2058
      %v2060 = vpop.xlane.xlu0 %2059
      %v2061 = vsel %vm2027, %v2015, -inf
      %2062 = vmax.xlane.f32.xlu0 %v2061
      %v2063 = vpop.xlane.xlu0 %2062
      %v2064 = vsel %vm2027, %v2018, -inf
      %2065 = vmax.xlane.f32.xlu0 %v2064
      %v2066 = vpop.xlane.xlu0 %2065
      %v2067 = vsel %vm2027, %v2020, -inf
      %2068 = vmax.xlane.f32.xlu0 %v2067
      %v2069 = vpop.xlane.xlu0 %2068
      %v2070 = vsel %vm2027, %v2023, -inf
      %2071 = vmax.xlane.f32.xlu0 %v2070
      %v2072 = vpop.xlane.xlu0 %2071
      %v2073 = vsel %vm2027, %v2025, -inf
      %2074 = vmax.xlane.f32.xlu0 %v2073
      %v2075 = vpop.xlane.xlu0 %2074
      %v2076 = vsub.f32 %v1988, %v2030
      %v2077 = vsub.f32 %v1990, %v2033
      %v2078 = vsub.f32 %v1993, %v2036
      %v2079 = vsub.f32 %v1995, %v2039
      %v2080 = vsub.f32 %v1998, %v2042
      %v2081 = vsub.f32 %v2000, %v2045
      %v2082 = vsub.f32 %v2003, %v2048
      %v2083 = vsub.f32 %v2005, %v2051
      %v2084 = vsub.f32 %v2008, %v2054
      %v2085 = vsub.f32 %v2010, %v2057
      %v2086 = vsub.f32 %v2013, %v2060
      %v2087 = vsub.f32 %v2015, %v2063
      %v2088 = vsub.f32 %v2018, %v2066
      %v2089 = vsub.f32 %v2020, %v2069
      %v2090 = vsub.f32 %v2023, %v2072
      %v2091 = vsub.f32 %v2025, %v2075
      %v2092 = vmul.f32 %v2076, 1.442695
      %v2093 = vpow.pop %v2092
      %v2094 = vmul.f32 %v2077, 1.442695
      %v2095 = vpow.pop %v2094
      %v2096 = vmul.f32 %v2078, 1.442695
      %v2097 = vpow.pop %v2096
      %v2098 = vmul.f32 %v2079, 1.442695
      %v2099 = vpow.pop %v2098
      %v2100 = vmul.f32 %v2080, 1.442695
      %v2101 = vpow.pop %v2100
      %v2102 = vmul.f32 %v2081, 1.442695
      %v2103 = vpow.pop %v2102
      %v2104 = vmul.f32 %v2082, 1.442695
      %v2105 = vpow.pop %v2104
      %v2106 = vmul.f32 %v2083, 1.442695
      %v2107 = vpow.pop %v2106
      %v2108 = vmul.f32 %v2084, 1.442695
      %v2109 = vpow.pop %v2108
      %v2110 = vmul.f32 %v2085, 1.442695
      %v2111 = vpow.pop %v2110
      %v2112 = vmul.f32 %v2086, 1.442695
      %v2113 = vpow.pop %v2112
      %v2114 = vmul.f32 %v2087, 1.442695
      %v2115 = vpow.pop %v2114
      %v2116 = vmul.f32 %v2088, 1.442695
      %v2117 = vpow.pop %v2116
      %v2118 = vmul.f32 %v2089, 1.442695
      %v2119 = vpow.pop %v2118
      %v2120 = vmul.f32 %v2090, 1.442695
      %v2121 = vpow.pop %v2120
      %v2122 = vmul.f32 %v2091, 1.442695
      %v2123 = vpow.pop %v2122
      %v2124 = vsel %vm2027, %v2093, 0.0
      %2125 = vadd.xlane.f32.xlu0 %v2124
      %v2126 = vpop.xlane.xlu0 %2125
      %v2127 = vsel %vm2027, %v2095, 0.0
      %2128 = vadd.xlane.f32.xlu0 %v2127
      %v2129 = vpop.xlane.xlu0 %2128
      %v2130 = vsel %vm2027, %v2097, 0.0
      %2131 = vadd.xlane.f32.xlu0 %v2130
      %v2132 = vpop.xlane.xlu0 %2131
      %v2133 = vsel %vm2027, %v2099, 0.0
      %2134 = vadd.xlane.f32.xlu0 %v2133
      %v2135 = vpop.xlane.xlu0 %2134
      %v2136 = vsel %vm2027, %v2101, 0.0
      %2137 = vadd.xlane.f32.xlu0 %v2136
      %v2138 = vpop.xlane.xlu0 %2137
      %v2139 = vsel %vm2027, %v2103, 0.0
      %2140 = vadd.xlane.f32.xlu0 %v2139
      %v2141 = vpop.xlane.xlu0 %2140
      %v2142 = vsel %vm2027, %v2105, 0.0
      %2143 = vadd.xlane.f32.xlu0 %v2142
      %v2144 = vpop.xlane.xlu0 %2143
      %v2145 = vsel %vm2027, %v2107, 0.0
      %2146 = vadd.xlane.f32.xlu0 %v2145
      %v2147 = vpop.xlane.xlu0 %2146
      %v2148 = vsel %vm2027, %v2109, 0.0
      %2149 = vadd.xlane.f32.xlu0 %v2148
      %v2150 = vpop.xlane.xlu0 %2149
      %v2151 = vsel %vm2027, %v2111, 0.0
      %2152 = vadd.xlane.f32.xlu0 %v2151
      %v2153 = vpop.xlane.xlu0 %2152
      %v2154 = vsel %vm2027, %v2113, 0.0
      %2155 = vadd.xlane.f32.xlu0 %v2154
      %v2156 = vpop.xlane.xlu0 %2155
      %v2157 = vsel %vm2027, %v2115, 0.0
      %2158 = vadd.xlane.f32.xlu0 %v2157
      %v2159 = vpop.xlane.xlu0 %2158
      %v2160 = vsel %vm2027, %v2117, 0.0
      %2161 = vadd.xlane.f32.xlu0 %v2160
      %v2162 = vpop.xlane.xlu0 %2161
      %v2163 = vsel %vm2027, %v2119, 0.0
      %2164 = vadd.xlane.f32.xlu0 %v2163
      %v2165 = vpop.xlane.xlu0 %2164
      %v2166 = vsel %vm2027, %v2121, 0.0
      %2167 = vadd.xlane.f32.xlu0 %v2166
      %v2168 = vpop.xlane.xlu0 %2167
      %v2169 = vsel %vm2027, %v2123, 0.0
      %2170 = vadd.xlane.f32.xlu0 %v2169
      %v2171 = vpop.xlane.xlu0 %2170
      %v2172 = vrcp.pop %v2126
      %v2173 = vrcp.pop %v2129
      %v2174 = vrcp.pop %v2132
      %v2175 = vrcp.pop %v2135
      %v2176 = vrcp.pop %v2138
      %v2177 = vrcp.pop %v2141
      %v2178 = vrcp.pop %v2144
      %v2179 = vrcp.pop %v2147
      %v2180 = vrcp.pop %v2150
      %v2181 = vrcp.pop %v2153
      %v2182 = vrcp.pop %v2156
      %v2183 = vrcp.pop %v2159
      %v2184 = vrcp.pop %v2162
      %v2185 = vrcp.pop %v2165
      %v2186 = vrcp.pop %v2168
      %v2187 = vrcp.pop %v2171
      %v2188 = vmul.f32 %v2093, %v2172
      %v2189 = vmul.f32 %v2095, %v2173
      %v2190 = vmul.f32 %v2097, %v2174
      %v2191 = vmul.f32 %v2099, %v2175
      %v2192 = vmul.f32 %v2101, %v2176
      %v2193 = vmul.f32 %v2103, %v2177
      %v2194 = vmul.f32 %v2105, %v2178
      %v2195 = vmul.f32 %v2107, %v2179
      %v2196 = vmul.f32 %v2109, %v2180
      %v2197 = vmul.f32 %v2111, %v2181
      %v2198 = vmul.f32 %v2113, %v2182
      %v2199 = vmul.f32 %v2115, %v2183
      %v2200 = vmul.f32 %v2117, %v2184
      %v2201 = vmul.f32 %v2119, %v2185
      %v2202 = vmul.f32 %v2121, %v2186
      %v2203 = vmul.f32 %v2123, %v2187
      %v2204 = vlaneseq
      %v2205 = vand.u32 %v2204, 127
      %2222 = vrot.lane.b32.xlu0 %v2188, 1
      %v2223 = vpop.permute.xlu0 %2222
      %2224 = vrot.lane.b32.xlu0 %v2189, 1
      %v2225 = vpop.permute.xlu0 %2224
      %2226 = vrot.lane.b32.xlu0 %v2190, 1
      %v2227 = vpop.permute.xlu0 %2226
      %2228 = vrot.lane.b32.xlu0 %v2191, 1
      %v2229 = vpop.permute.xlu0 %2228
      %2230 = vrot.lane.b32.xlu0 %v2192, 1
      %v2231 = vpop.permute.xlu0 %2230
      %2232 = vrot.lane.b32.xlu0 %v2193, 1
      %v2233 = vpop.permute.xlu0 %2232
      %2234 = vrot.lane.b32.xlu0 %v2194, 1
      %v2235 = vpop.permute.xlu0 %2234
      %2236 = vrot.lane.b32.xlu0 %v2195, 1
      %v2237 = vpop.permute.xlu0 %2236
      %2238 = vrot.lane.b32.xlu0 %v2196, 1
      %v2239 = vpop.permute.xlu0 %2238
      %2240 = vrot.lane.b32.xlu0 %v2197, 1
      %v2241 = vpop.permute.xlu0 %2240
      %2242 = vrot.lane.b32.xlu0 %v2198, 1
      %v2243 = vpop.permute.xlu0 %2242
      %2244 = vrot.lane.b32.xlu0 %v2199, 1
      %v2245 = vpop.permute.xlu0 %2244
      %2246 = vrot.lane.b32.xlu0 %v2200, 1
      %v2247 = vpop.permute.xlu0 %2246
      %2248 = vrot.lane.b32.xlu0 %v2201, 1
      %v2249 = vpop.permute.xlu0 %2248
      %2250 = vrot.lane.b32.xlu0 %v2202, 1
      %v2251 = vpop.permute.xlu0 %2250
      %2252 = vrot.lane.b32.xlu0 %v2203, 1
      %v2253 = vpop.permute.xlu0 %2252
      %vm2270 = vcmp.gt.f32.partialorder %v2188, %v2223
      %vm2271 = vcmp.gt.f32.partialorder %v2189, %v2225
      %vm2272 = vcmp.gt.f32.partialorder %v2190, %v2227
      %vm2273 = vcmp.gt.f32.partialorder %v2191, %v2229
      %vm2274 = vcmp.gt.f32.partialorder %v2192, %v2231
      %vm2275 = vcmp.gt.f32.partialorder %v2193, %v2233
      %vm2276 = vcmp.gt.f32.partialorder %v2194, %v2235
      %vm2277 = vcmp.gt.f32.partialorder %v2195, %v2237
      %vm2278 = vcmp.gt.f32.partialorder %v2196, %v2239
      %vm2279 = vcmp.gt.f32.partialorder %v2197, %v2241
      %vm2280 = vcmp.gt.f32.partialorder %v2198, %v2243
      %vm2281 = vcmp.gt.f32.partialorder %v2199, %v2245
      %vm2282 = vcmp.gt.f32.partialorder %v2200, %v2247
      %vm2283 = vcmp.gt.f32.partialorder %v2201, %v2249
      %vm2284 = vcmp.gt.f32.partialorder %v2202, %v2251
      %vm2285 = vcmp.gt.f32.partialorder %v2203, %v2253
      %v2286 = vsel %vm2270, 1, 0
      %v2287 = vsel %vm2271, 1, 0
      %v2288 = vsel %vm2272, 1, 0
      %v2289 = vsel %vm2273, 1, 0
      %v2290 = vsel %vm2274, 1, 0
      %v2291 = vsel %vm2275, 1, 0
      %v2292 = vsel %vm2276, 1, 0
      %v2293 = vsel %vm2277, 1, 0
      %v2294 = vsel %vm2278, 1, 0
      %v2295 = vsel %vm2279, 1, 0
      %v2296 = vsel %vm2280, 1, 0
      %v2297 = vsel %vm2281, 1, 0
      %v2298 = vsel %vm2282, 1, 0
      %v2299 = vsel %vm2283, 1, 0
      %v2300 = vsel %vm2284, 1, 0
      %v2301 = vsel %vm2285, 1, 0
      %v2302 = vcvt.s32.f32 %v2286
      %v2303 = vcvt.s32.f32 %v2287
      %v2304 = vcvt.s32.f32 %v2288
      %v2305 = vcvt.s32.f32 %v2289
      %v2306 = vcvt.s32.f32 %v2290
      %v2307 = vcvt.s32.f32 %v2291
      %v2308 = vcvt.s32.f32 %v2292
      %v2309 = vcvt.s32.f32 %v2293
      %v2310 = vcvt.s32.f32 %v2294
      %v2311 = vcvt.s32.f32 %v2295
      %v2312 = vcvt.s32.f32 %v2296
      %v2313 = vcvt.s32.f32 %v2297
      %v2314 = vcvt.s32.f32 %v2298
      %v2315 = vcvt.s32.f32 %v2299
      %v2316 = vcvt.s32.f32 %v2300
      %v2317 = vcvt.s32.f32 %v2301
      %v2318 = vadd.f32 %v2302, 0.0
      %v2319 = vadd.f32 %v2303, 0.0
      %v2320 = vadd.f32 %v2304, 0.0
      %v2321 = vadd.f32 %v2305, 0.0
      %v2322 = vadd.f32 %v2306, 0.0
      %v2323 = vadd.f32 %v2307, 0.0
      %v2324 = vadd.f32 %v2308, 0.0
      %v2325 = vadd.f32 %v2309, 0.0
      %v2326 = vadd.f32 %v2310, 0.0
      %v2327 = vadd.f32 %v2311, 0.0
      %v2328 = vadd.f32 %v2312, 0.0
      %v2329 = vadd.f32 %v2313, 0.0
      %v2330 = vadd.f32 %v2314, 0.0
      %v2331 = vadd.f32 %v2315, 0.0
      %v2332 = vadd.f32 %v2316, 0.0
      %v2333 = vadd.f32 %v2317, 0.0
      %2334 = vrot.lane.b32.xlu0 %v2188, 2
      %v2335 = vpop.permute.xlu0 %2334
      %2336 = vrot.lane.b32.xlu0 %v2189, 2
      %v2337 = vpop.permute.xlu0 %2336
      %2338 = vrot.lane.b32.xlu0 %v2190, 2
      %v2339 = vpop.permute.xlu0 %2338
      %2340 = vrot.lane.b32.xlu0 %v2191, 2
      %v2341 = vpop.permute.xlu0 %2340
      %2342 = vrot.lane.b32.xlu0 %v2192, 2
      %v2343 = vpop.permute.xlu0 %2342
      %2344 = vrot.lane.b32.xlu0 %v2193, 2
      %v2345 = vpop.permute.xlu0 %2344
      %2346 = vrot.lane.b32.xlu0 %v2194, 2
      %v2347 = vpop.permute.xlu0 %2346
      %2348 = vrot.lane.b32.xlu0 %v2195, 2
      %v2349 = vpop.permute.xlu0 %2348
      %2350 = vrot.lane.b32.xlu0 %v2196, 2
      %v2351 = vpop.permute.xlu0 %2350
      %2352 = vrot.lane.b32.xlu0 %v2197, 2
      %v2353 = vpop.permute.xlu0 %2352
      %2354 = vrot.lane.b32.xlu0 %v2198, 2
      %v2355 = vpop.permute.xlu0 %2354
      %2356 = vrot.lane.b32.xlu0 %v2199, 2
      %v2357 = vpop.permute.xlu0 %2356
      %2358 = vrot.lane.b32.xlu0 %v2200, 2
      %v2359 = vpop.permute.xlu0 %2358
      %2360 = vrot.lane.b32.xlu0 %v2201, 2
      %v2361 = vpop.permute.xlu0 %2360
      %2362 = vrot.lane.b32.xlu0 %v2202, 2
      %v2363 = vpop.permute.xlu0 %2362
      %2364 = vrot.lane.b32.xlu0 %v2203, 2
      %v2365 = vpop.permute.xlu0 %2364
      %vm2382 = vcmp.gt.f32.partialorder %v2188, %v2335
      %vm2383 = vcmp.gt.f32.partialorder %v2189, %v2337
      %vm2384 = vcmp.gt.f32.partialorder %v2190, %v2339
      %vm2385 = vcmp.gt.f32.partialorder %v2191, %v2341
      %vm2386 = vcmp.gt.f32.partialorder %v2192, %v2343
      %vm2387 = vcmp.gt.f32.partialorder %v2193, %v2345
      %vm2388 = vcmp.gt.f32.partialorder %v2194, %v2347
      %vm2389 = vcmp.gt.f32.partialorder %v2195, %v2349
      %vm2390 = vcmp.gt.f32.partialorder %v2196, %v2351
      %vm2391 = vcmp.gt.f32.partialorder %v2197, %v2353
      %vm2392 = vcmp.gt.f32.partialorder %v2198, %v2355
      %vm2393 = vcmp.gt.f32.partialorder %v2199, %v2357
      %vm2394 = vcmp.gt.f32.partialorder %v2200, %v2359
      %vm2395 = vcmp.gt.f32.partialorder %v2201, %v2361
      %vm2396 = vcmp.gt.f32.partialorder %v2202, %v2363
      %vm2397 = vcmp.gt.f32.partialorder %v2203, %v2365
      %v2398 = vsel %vm2382, 1, 0
      %v2399 = vsel %vm2383, 1, 0
      %v2400 = vsel %vm2384, 1, 0
      %v2401 = vsel %vm2385, 1, 0
      %v2402 = vsel %vm2386, 1, 0
      %v2403 = vsel %vm2387, 1, 0
      %v2404 = vsel %vm2388, 1, 0
      %v2405 = vsel %vm2389, 1, 0
      %v2406 = vsel %vm2390, 1, 0
      %v2407 = vsel %vm2391, 1, 0
      %v2408 = vsel %vm2392, 1, 0
      %v2409 = vsel %vm2393, 1, 0
      %v2410 = vsel %vm2394, 1, 0
      %v2411 = vsel %vm2395, 1, 0
      %v2412 = vsel %vm2396, 1, 0
      %v2413 = vsel %vm2397, 1, 0
      %v2414 = vcvt.s32.f32 %v2398
      %v2415 = vcvt.s32.f32 %v2399
      %v2416 = vcvt.s32.f32 %v2400
      %v2417 = vcvt.s32.f32 %v2401
      %v2418 = vcvt.s32.f32 %v2402
      %v2419 = vcvt.s32.f32 %v2403
      %v2420 = vcvt.s32.f32 %v2404
      %v2421 = vcvt.s32.f32 %v2405
      %v2422 = vcvt.s32.f32 %v2406
      %v2423 = vcvt.s32.f32 %v2407
      %v2424 = vcvt.s32.f32 %v2408
      %v2425 = vcvt.s32.f32 %v2409
      %v2426 = vcvt.s32.f32 %v2410
      %v2427 = vcvt.s32.f32 %v2411
      %v2428 = vcvt.s32.f32 %v2412
      %v2429 = vcvt.s32.f32 %v2413
      %2446 = vrot.lane.b32.xlu0 %v2414, 127
      %v2447 = vpop.permute.xlu0 %2446
      %2448 = vrot.lane.b32.xlu0 %v2415, 127
      %v2449 = vpop.permute.xlu0 %2448
      %2450 = vrot.lane.b32.xlu0 %v2416, 127
      %v2451 = vpop.permute.xlu0 %2450
      %2452 = vrot.lane.b32.xlu0 %v2417, 127
      %v2453 = vpop.permute.xlu0 %2452
      %2454 = vrot.lane.b32.xlu0 %v2418, 127
      %v2455 = vpop.permute.xlu0 %2454
      %2456 = vrot.lane.b32.xlu0 %v2419, 127
      %v2457 = vpop.permute.xlu0 %2456
      %2458 = vrot.lane.b32.xlu0 %v2420, 127
      %v2459 = vpop.permute.xlu0 %2458
      %2460 = vrot.lane.b32.xlu0 %v2421, 127
      %v2461 = vpop.permute.xlu0 %2460
      %2462 = vrot.lane.b32.xlu0 %v2422, 127
      %v2463 = vpop.permute.xlu0 %2462
      %2464 = vrot.lane.b32.xlu0 %v2423, 127
      %v2465 = vpop.permute.xlu0 %2464
      %2466 = vrot.lane.b32.xlu0 %v2424, 127
      %v2467 = vpop.permute.xlu0 %2466
      %2468 = vrot.lane.b32.xlu0 %v2425, 127
      %v2469 = vpop.permute.xlu0 %2468
      %2470 = vrot.lane.b32.xlu0 %v2426, 127
      %v2471 = vpop.permute.xlu0 %2470
      %2472 = vrot.lane.b32.xlu0 %v2427, 127
      %v2473 = vpop.permute.xlu0 %2472
      %2474 = vrot.lane.b32.xlu0 %v2428, 127
      %v2475 = vpop.permute.xlu0 %2474
      %2476 = vrot.lane.b32.xlu0 %v2429, 127
      %v2477 = vpop.permute.xlu0 %2476
      %v2494 = vadd.f32 %v2318, %v2447
      %v2495 = vadd.f32 %v2319, %v2449
      %v2496 = vadd.f32 %v2320, %v2451
      %v2497 = vadd.f32 %v2321, %v2453
      %v2498 = vadd.f32 %v2322, %v2455
      %v2499 = vadd.f32 %v2323, %v2457
      %v2500 = vadd.f32 %v2324, %v2459
      %v2501 = vadd.f32 %v2325, %v2461
      %v2502 = vadd.f32 %v2326, %v2463
      %v2503 = vadd.f32 %v2327, %v2465
      %v2504 = vadd.f32 %v2328, %v2467
      %v2505 = vadd.f32 %v2329, %v2469
      %v2506 = vadd.f32 %v2330, %v2471
      %v2507 = vadd.f32 %v2331, %v2473
      %v2508 = vadd.f32 %v2332, %v2475
      %v2509 = vadd.f32 %v2333, %v2477
      %2510 = vrot.lane.b32.xlu0 %v2188, 3
      %v2511 = vpop.permute.xlu0 %2510
      %2512 = vrot.lane.b32.xlu0 %v2189, 3
      %v2513 = vpop.permute.xlu0 %2512
      %2514 = vrot.lane.b32.xlu0 %v2190, 3
      %v2515 = vpop.permute.xlu0 %2514
      %2516 = vrot.lane.b32.xlu0 %v2191, 3
      %v2517 = vpop.permute.xlu0 %2516
      %2518 = vrot.lane.b32.xlu0 %v2192, 3
      %v2519 = vpop.permute.xlu0 %2518
      %2520 = vrot.lane.b32.xlu0 %v2193, 3
      %v2521 = vpop.permute.xlu0 %2520
      %2522 = vrot.lane.b32.xlu0 %v2194, 3
      %v2523 = vpop.permute.xlu0 %2522
      %2524 = vrot.lane.b32.xlu0 %v2195, 3
      %v2525 = vpop.permute.xlu0 %2524
      %2526 = vrot.lane.b32.xlu0 %v2196, 3
      %v2527 = vpop.permute.xlu0 %2526
      %2528 = vrot.lane.b32.xlu0 %v2197, 3
      %v2529 = vpop.permute.xlu0 %2528
      %2530 = vrot.lane.b32.xlu0 %v2198, 3
      %v2531 = vpop.permute.xlu0 %2530
      %2532 = vrot.lane.b32.xlu0 %v2199, 3
      %v2533 = vpop.permute.xlu0 %2532
      %2534 = vrot.lane.b32.xlu0 %v2200, 3
      %v2535 = vpop.permute.xlu0 %2534
      %2536 = vrot.lane.b32.xlu0 %v2201, 3
      %v2537 = vpop.permute.xlu0 %2536
      %2538 = vrot.lane.b32.xlu0 %v2202, 3
      %v2539 = vpop.permute.xlu0 %2538
      %2540 = vrot.lane.b32.xlu0 %v2203, 3
      %v2541 = vpop.permute.xlu0 %2540
      %vm2558 = vcmp.gt.f32.partialorder %v2188, %v2511
      %vm2559 = vcmp.gt.f32.partialorder %v2189, %v2513
      %vm2560 = vcmp.gt.f32.partialorder %v2190, %v2515
      %vm2561 = vcmp.gt.f32.partialorder %v2191, %v2517
      %vm2562 = vcmp.gt.f32.partialorder %v2192, %v2519
      %vm2563 = vcmp.gt.f32.partialorder %v2193, %v2521
      %vm2564 = vcmp.gt.f32.partialorder %v2194, %v2523
      %vm2565 = vcmp.gt.f32.partialorder %v2195, %v2525
      %vm2566 = vcmp.gt.f32.partialorder %v2196, %v2527
      %vm2567 = vcmp.gt.f32.partialorder %v2197, %v2529
      %vm2568 = vcmp.gt.f32.partialorder %v2198, %v2531
      %vm2569 = vcmp.gt.f32.partialorder %v2199, %v2533
      %vm2570 = vcmp.gt.f32.partialorder %v2200, %v2535
      %vm2571 = vcmp.gt.f32.partialorder %v2201, %v2537
      %vm2572 = vcmp.gt.f32.partialorder %v2202, %v2539
      %vm2573 = vcmp.gt.f32.partialorder %v2203, %v2541
      %v2574 = vsel %vm2558, 1, 0
      %v2575 = vsel %vm2559, 1, 0
      %v2576 = vsel %vm2560, 1, 0
      %v2577 = vsel %vm2561, 1, 0
      %v2578 = vsel %vm2562, 1, 0
      %v2579 = vsel %vm2563, 1, 0
      %v2580 = vsel %vm2564, 1, 0
      %v2581 = vsel %vm2565, 1, 0
      %v2582 = vsel %vm2566, 1, 0
      %v2583 = vsel %vm2567, 1, 0
      %v2584 = vsel %vm2568, 1, 0
      %v2585 = vsel %vm2569, 1, 0
      %v2586 = vsel %vm2570, 1, 0
      %v2587 = vsel %vm2571, 1, 0
      %v2588 = vsel %vm2572, 1, 0
      %v2589 = vsel %vm2573, 1, 0
      %v2590 = vcvt.s32.f32 %v2574
      %v2591 = vcvt.s32.f32 %v2575
      %v2592 = vcvt.s32.f32 %v2576
      %v2593 = vcvt.s32.f32 %v2577
      %v2594 = vcvt.s32.f32 %v2578
      %v2595 = vcvt.s32.f32 %v2579
      %v2596 = vcvt.s32.f32 %v2580
      %v2597 = vcvt.s32.f32 %v2581
      %v2598 = vcvt.s32.f32 %v2582
      %v2599 = vcvt.s32.f32 %v2583
      %v2600 = vcvt.s32.f32 %v2584
      %v2601 = vcvt.s32.f32 %v2585
      %v2602 = vcvt.s32.f32 %v2586
      %v2603 = vcvt.s32.f32 %v2587
      %v2604 = vcvt.s32.f32 %v2588
      %v2605 = vcvt.s32.f32 %v2589
      %2622 = vrot.lane.b32.xlu0 %v2590, 126
      %v2623 = vpop.permute.xlu0 %2622
      %2624 = vrot.lane.b32.xlu0 %v2591, 126
      %v2625 = vpop.permute.xlu0 %2624
      %2626 = vrot.lane.b32.xlu0 %v2592, 126
      %v2627 = vpop.permute.xlu0 %2626
      %2628 = vrot.lane.b32.xlu0 %v2593, 126
      %v2629 = vpop.permute.xlu0 %2628
      %2630 = vrot.lane.b32.xlu0 %v2594, 126
      %v2631 = vpop.permute.xlu0 %2630
      %2632 = vrot.lane.b32.xlu0 %v2595, 126
      %v2633 = vpop.permute.xlu0 %2632
      %2634 = vrot.lane.b32.xlu0 %v2596, 126
      %v2635 = vpop.permute.xlu0 %2634
      %2636 = vrot.lane.b32.xlu0 %v2597, 126
      %v2637 = vpop.permute.xlu0 %2636
      %2638 = vrot.lane.b32.xlu0 %v2598, 126
      %v2639 = vpop.permute.xlu0 %2638
      %2640 = vrot.lane.b32.xlu0 %v2599, 126
      %v2641 = vpop.permute.xlu0 %2640
      %2642 = vrot.lane.b32.xlu0 %v2600, 126
      %v2643 = vpop.permute.xlu0 %2642
      %2644 = vrot.lane.b32.xlu0 %v2601, 126
      %v2645 = vpop.permute.xlu0 %2644
      %2646 = vrot.lane.b32.xlu0 %v2602, 126
      %v2647 = vpop.permute.xlu0 %2646
      %2648 = vrot.lane.b32.xlu0 %v2603, 126
      %v2649 = vpop.permute.xlu0 %2648
      %2650 = vrot.lane.b32.xlu0 %v2604, 126
      %v2651 = vpop.permute.xlu0 %2650
      %2652 = vrot.lane.b32.xlu0 %v2605, 126
      %v2653 = vpop.permute.xlu0 %2652
      %v2670 = vadd.f32 %v2494, %v2623
      %v2671 = vadd.f32 %v2495, %v2625
      %v2672 = vadd.f32 %v2496, %v2627
      %v2673 = vadd.f32 %v2497, %v2629
      %v2674 = vadd.f32 %v2498, %v2631
      %v2675 = vadd.f32 %v2499, %v2633
      %v2676 = vadd.f32 %v2500, %v2635
      %v2677 = vadd.f32 %v2501, %v2637
      %v2678 = vadd.f32 %v2502, %v2639
      %v2679 = vadd.f32 %v2503, %v2641
      %v2680 = vadd.f32 %v2504, %v2643
      %v2681 = vadd.f32 %v2505, %v2645
      %v2682 = vadd.f32 %v2506, %v2647
      %v2683 = vadd.f32 %v2507, %v2649
      %v2684 = vadd.f32 %v2508, %v2651
      %v2685 = vadd.f32 %v2509, %v2653
      %vm2686 = vcmp.lt.f32.partialorder %v2670, 2.0
      %vm2687 = vcmp.lt.f32.partialorder %v2671, 2.0
      %vm2688 = vcmp.lt.f32.partialorder %v2672, 2.0
      %vm2689 = vcmp.lt.f32.partialorder %v2673, 2.0
      %vm2690 = vcmp.lt.f32.partialorder %v2674, 2.0
      %vm2691 = vcmp.lt.f32.partialorder %v2675, 2.0
      %vm2692 = vcmp.lt.f32.partialorder %v2676, 2.0
      %vm2693 = vcmp.lt.f32.partialorder %v2677, 2.0
      %vm2694 = vcmp.lt.f32.partialorder %v2678, 2.0
      %vm2695 = vcmp.lt.f32.partialorder %v2679, 2.0
      %vm2696 = vcmp.lt.f32.partialorder %v2680, 2.0
      %vm2697 = vcmp.lt.f32.partialorder %v2681, 2.0
      %vm2698 = vcmp.lt.f32.partialorder %v2682, 2.0
      %vm2699 = vcmp.lt.f32.partialorder %v2683, 2.0
      %vm2700 = vcmp.lt.f32.partialorder %v2684, 2.0
      %vm2701 = vcmp.lt.f32.partialorder %v2685, 2.0
      %vm2702 = vcmp.eq.s32.totalorder %v2205, 0
      %v2703 = vsel %vm2686, 1, 0
      %v2704 = vsel %vm2687, 1, 0
      %v2705 = vsel %vm2688, 1, 0
      %v2706 = vsel %vm2689, 1, 0
      %v2707 = vsel %vm2690, 1, 0
      %v2708 = vsel %vm2691, 1, 0
      %v2709 = vsel %vm2692, 1, 0
      %v2710 = vsel %vm2693, 1, 0
      %v2711 = vsel %vm2694, 1, 0
      %v2712 = vsel %vm2695, 1, 0
      %v2713 = vsel %vm2696, 1, 0
      %v2714 = vsel %vm2697, 1, 0
      %v2715 = vsel %vm2698, 1, 0
      %v2716 = vsel %vm2699, 1, 0
      %v2717 = vsel %vm2700, 1, 0
      %v2718 = vsel %vm2701, 1, 0
      %2719 = vset.pattern.permute.xlu0 1
      %2720 = vperm.xlu0 %2719, %v2703
      %v2721 = vpop.permute.xlu0 %2720
      %2722 = vset.pattern.permute.xlu0 1
      %2723 = vperm.xlu0 %2722, %v2704
      %v2724 = vpop.permute.xlu0 %2723
      %2725 = vset.pattern.permute.xlu0 1
      %2726 = vperm.xlu0 %2725, %v2705
      %v2727 = vpop.permute.xlu0 %2726
      %2728 = vset.pattern.permute.xlu0 1
      %2729 = vperm.xlu0 %2728, %v2706
      %v2730 = vpop.permute.xlu0 %2729
      %2731 = vset.pattern.permute.xlu0 1
      %2732 = vperm.xlu0 %2731, %v2707
      %v2733 = vpop.permute.xlu0 %2732
      %2734 = vset.pattern.permute.xlu0 1
      %2735 = vperm.xlu0 %2734, %v2708
      %v2736 = vpop.permute.xlu0 %2735
      %2737 = vset.pattern.permute.xlu0 1
      %2738 = vperm.xlu0 %2737, %v2709
      %v2739 = vpop.permute.xlu0 %2738
      %2740 = vset.pattern.permute.xlu0 1
      %2741 = vperm.xlu0 %2740, %v2710
      %v2742 = vpop.permute.xlu0 %2741
      %2743 = vset.pattern.permute.xlu0 1
      %2744 = vperm.xlu0 %2743, %v2711
      %v2745 = vpop.permute.xlu0 %2744
      %2746 = vset.pattern.permute.xlu0 1
      %2747 = vperm.xlu0 %2746, %v2712
      %v2748 = vpop.permute.xlu0 %2747
      %2749 = vset.pattern.permute.xlu0 1
      %2750 = vperm.xlu0 %2749, %v2713
      %v2751 = vpop.permute.xlu0 %2750
      %2752 = vset.pattern.permute.xlu0 1
      %2753 = vperm.xlu0 %2752, %v2714
      %v2754 = vpop.permute.xlu0 %2753
      %2755 = vset.pattern.permute.xlu0 1
      %2756 = vperm.xlu0 %2755, %v2715
      %v2757 = vpop.permute.xlu0 %2756
      %2758 = vset.pattern.permute.xlu0 1
      %2759 = vperm.xlu0 %2758, %v2716
      %v2760 = vpop.permute.xlu0 %2759
      %2761 = vset.pattern.permute.xlu0 1
      %2762 = vperm.xlu0 %2761, %v2717
      %v2763 = vpop.permute.xlu0 %2762
      %2764 = vset.pattern.permute.xlu0 1
      %2765 = vperm.xlu0 %2764, %v2718
      %v2766 = vpop.permute.xlu0 %2765
      %vm2767 = vcmp.eq.s32.totalorder %v2721, 1
      %vm2768 = vcmp.eq.s32.totalorder %v2724, 1
      %vm2769 = vcmp.eq.s32.totalorder %v2727, 1
      %vm2770 = vcmp.eq.s32.totalorder %v2730, 1
      %vm2771 = vcmp.eq.s32.totalorder %v2733, 1
      %vm2772 = vcmp.eq.s32.totalorder %v2736, 1
      %vm2773 = vcmp.eq.s32.totalorder %v2739, 1
      %vm2774 = vcmp.eq.s32.totalorder %v2742, 1
      %vm2775 = vcmp.eq.s32.totalorder %v2745, 1
      %vm2776 = vcmp.eq.s32.totalorder %v2748, 1
      %vm2777 = vcmp.eq.s32.totalorder %v2751, 1
      %vm2778 = vcmp.eq.s32.totalorder %v2754, 1
      %vm2779 = vcmp.eq.s32.totalorder %v2757, 1
      %vm2780 = vcmp.eq.s32.totalorder %v2760, 1
      %vm2781 = vcmp.eq.s32.totalorder %v2763, 1
      %vm2782 = vcmp.eq.s32.totalorder %v2766, 1
      %vm2783 = vmand %vm2702, %vm2767
      %vm2784 = vmand %vm2702, %vm2768
      %vm2785 = vmand %vm2702, %vm2769
      %vm2786 = vmand %vm2702, %vm2770
      %vm2787 = vmand %vm2702, %vm2771
      %vm2788 = vmand %vm2702, %vm2772
      %vm2789 = vmand %vm2702, %vm2773
      %vm2790 = vmand %vm2702, %vm2774
      %vm2791 = vmand %vm2702, %vm2775
      %vm2792 = vmand %vm2702, %vm2776
      %vm2793 = vmand %vm2702, %vm2777
      %vm2794 = vmand %vm2702, %vm2778
      %vm2795 = vmand %vm2702, %vm2779
      %vm2796 = vmand %vm2702, %vm2780
      %vm2797 = vmand %vm2702, %vm2781
      %vm2798 = vmand %vm2702, %vm2782
      %v2799 = vsel %vm2783, %v2188, 0.0
      %v2800 = vsel %vm2784, %v2189, 0.0
      %v2801 = vsel %vm2785, %v2190, 0.0
      %v2802 = vsel %vm2786, %v2191, 0.0
      %v2803 = vsel %vm2787, %v2192, 0.0
      %v2804 = vsel %vm2788, %v2193, 0.0
      %v2805 = vsel %vm2789, %v2194, 0.0
      %v2806 = vsel %vm2790, %v2195, 0.0
      %v2807 = vsel %vm2791, %v2196, 0.0
      %v2808 = vsel %vm2792, %v2197, 0.0
      %v2809 = vsel %vm2793, %v2198, 0.0
      %v2810 = vsel %vm2794, %v2199, 0.0
      %v2811 = vsel %vm2795, %v2200, 0.0
      %v2812 = vsel %vm2796, %v2201, 0.0
      %v2813 = vsel %vm2797, %v2202, 0.0
      %v2814 = vsel %vm2798, %v2203, 0.0
      %2815 = vrot.lane.b32.xlu0 %v2188, 127
      %v2816 = vpop.permute.xlu0 %2815
      %2817 = vrot.lane.b32.xlu0 %v2189, 127
      %v2818 = vpop.permute.xlu0 %2817
      %2819 = vrot.lane.b32.xlu0 %v2190, 127
      %v2820 = vpop.permute.xlu0 %2819
      %2821 = vrot.lane.b32.xlu0 %v2191, 127
      %v2822 = vpop.permute.xlu0 %2821
      %2823 = vrot.lane.b32.xlu0 %v2192, 127
      %v2824 = vpop.permute.xlu0 %2823
      %2825 = vrot.lane.b32.xlu0 %v2193, 127
      %v2826 = vpop.permute.xlu0 %2825
      %2827 = vrot.lane.b32.xlu0 %v2194, 127
      %v2828 = vpop.permute.xlu0 %2827
      %2829 = vrot.lane.b32.xlu0 %v2195, 127
      %v2830 = vpop.permute.xlu0 %2829
      %2831 = vrot.lane.b32.xlu0 %v2196, 127
      %v2832 = vpop.permute.xlu0 %2831
      %2833 = vrot.lane.b32.xlu0 %v2197, 127
      %v2834 = vpop.permute.xlu0 %2833
      %2835 = vrot.lane.b32.xlu0 %v2198, 127
      %v2836 = vpop.permute.xlu0 %2835
      %2837 = vrot.lane.b32.xlu0 %v2199, 127
      %v2838 = vpop.permute.xlu0 %2837
      %2839 = vrot.lane.b32.xlu0 %v2200, 127
      %v2840 = vpop.permute.xlu0 %2839
      %2841 = vrot.lane.b32.xlu0 %v2201, 127
      %v2842 = vpop.permute.xlu0 %2841
      %2843 = vrot.lane.b32.xlu0 %v2202, 127
      %v2844 = vpop.permute.xlu0 %2843
      %2845 = vrot.lane.b32.xlu0 %v2203, 127
      %v2846 = vpop.permute.xlu0 %2845
      %vm2863 = vcmp.ge.f32.partialorder %v2188, %v2816
      %vm2864 = vcmp.ge.f32.partialorder %v2189, %v2818
      %vm2865 = vcmp.ge.f32.partialorder %v2190, %v2820
      %vm2866 = vcmp.ge.f32.partialorder %v2191, %v2822
      %vm2867 = vcmp.ge.f32.partialorder %v2192, %v2824
      %vm2868 = vcmp.ge.f32.partialorder %v2193, %v2826
      %vm2869 = vcmp.ge.f32.partialorder %v2194, %v2828
      %vm2870 = vcmp.ge.f32.partialorder %v2195, %v2830
      %vm2871 = vcmp.ge.f32.partialorder %v2196, %v2832
      %vm2872 = vcmp.ge.f32.partialorder %v2197, %v2834
      %vm2873 = vcmp.ge.f32.partialorder %v2198, %v2836
      %vm2874 = vcmp.ge.f32.partialorder %v2199, %v2838
      %vm2875 = vcmp.ge.f32.partialorder %v2200, %v2840
      %vm2876 = vcmp.ge.f32.partialorder %v2201, %v2842
      %vm2877 = vcmp.ge.f32.partialorder %v2202, %v2844
      %vm2878 = vcmp.ge.f32.partialorder %v2203, %v2846
      %v2879 = vsel %vm2863, 1, 0
      %v2880 = vsel %vm2864, 1, 0
      %v2881 = vsel %vm2865, 1, 0
      %v2882 = vsel %vm2866, 1, 0
      %v2883 = vsel %vm2867, 1, 0
      %v2884 = vsel %vm2868, 1, 0
      %v2885 = vsel %vm2869, 1, 0
      %v2886 = vsel %vm2870, 1, 0
      %v2887 = vsel %vm2871, 1, 0
      %v2888 = vsel %vm2872, 1, 0
      %v2889 = vsel %vm2873, 1, 0
      %v2890 = vsel %vm2874, 1, 0
      %v2891 = vsel %vm2875, 1, 0
      %v2892 = vsel %vm2876, 1, 0
      %v2893 = vsel %vm2877, 1, 0
      %v2894 = vsel %vm2878, 1, 0
      %v2895 = vcvt.s32.f32 %v2879
      %v2896 = vcvt.s32.f32 %v2880
      %v2897 = vcvt.s32.f32 %v2881
      %v2898 = vcvt.s32.f32 %v2882
      %v2899 = vcvt.s32.f32 %v2883
      %v2900 = vcvt.s32.f32 %v2884
      %v2901 = vcvt.s32.f32 %v2885
      %v2902 = vcvt.s32.f32 %v2886
      %v2903 = vcvt.s32.f32 %v2887
      %v2904 = vcvt.s32.f32 %v2888
      %v2905 = vcvt.s32.f32 %v2889
      %v2906 = vcvt.s32.f32 %v2890
      %v2907 = vcvt.s32.f32 %v2891
      %v2908 = vcvt.s32.f32 %v2892
      %v2909 = vcvt.s32.f32 %v2893
      %v2910 = vcvt.s32.f32 %v2894
      %v2911 = vadd.f32 %v2895, 0.0
      %v2912 = vadd.f32 %v2896, 0.0
      %v2913 = vadd.f32 %v2897, 0.0
      %v2914 = vadd.f32 %v2898, 0.0
      %v2915 = vadd.f32 %v2899, 0.0
      %v2916 = vadd.f32 %v2900, 0.0
      %v2917 = vadd.f32 %v2901, 0.0
      %v2918 = vadd.f32 %v2902, 0.0
      %v2919 = vadd.f32 %v2903, 0.0
      %v2920 = vadd.f32 %v2904, 0.0
      %v2921 = vadd.f32 %v2905, 0.0
      %v2922 = vadd.f32 %v2906, 0.0
      %v2923 = vadd.f32 %v2907, 0.0
      %v2924 = vadd.f32 %v2908, 0.0
      %v2925 = vadd.f32 %v2909, 0.0
      %v2926 = vadd.f32 %v2910, 0.0
      %2943 = vrot.lane.b32.xlu0 %v2302, 126
      %v2944 = vpop.permute.xlu0 %2943
      %2945 = vrot.lane.b32.xlu0 %v2303, 126
      %v2946 = vpop.permute.xlu0 %2945
      %2947 = vrot.lane.b32.xlu0 %v2304, 126
      %v2948 = vpop.permute.xlu0 %2947
      %2949 = vrot.lane.b32.xlu0 %v2305, 126
      %v2950 = vpop.permute.xlu0 %2949
      %2951 = vrot.lane.b32.xlu0 %v2306, 126
      %v2952 = vpop.permute.xlu0 %2951
      %2953 = vrot.lane.b32.xlu0 %v2307, 126
      %v2954 = vpop.permute.xlu0 %2953
      %2955 = vrot.lane.b32.xlu0 %v2308, 126
      %v2956 = vpop.permute.xlu0 %2955
      %2957 = vrot.lane.b32.xlu0 %v2309, 126
      %v2958 = vpop.permute.xlu0 %2957
      %2959 = vrot.lane.b32.xlu0 %v2310, 126
      %v2960 = vpop.permute.xlu0 %2959
      %2961 = vrot.lane.b32.xlu0 %v2311, 126
      %v2962 = vpop.permute.xlu0 %2961
      %2963 = vrot.lane.b32.xlu0 %v2312, 126
      %v2964 = vpop.permute.xlu0 %2963
      %2965 = vrot.lane.b32.xlu0 %v2313, 126
      %v2966 = vpop.permute.xlu0 %2965
      %2967 = vrot.lane.b32.xlu0 %v2314, 126
      %v2968 = vpop.permute.xlu0 %2967
      %2969 = vrot.lane.b32.xlu0 %v2315, 126
      %v2970 = vpop.permute.xlu0 %2969
      %2971 = vrot.lane.b32.xlu0 %v2316, 126
      %v2972 = vpop.permute.xlu0 %2971
      %2973 = vrot.lane.b32.xlu0 %v2317, 126
      %v2974 = vpop.permute.xlu0 %2973
      %v2991 = vadd.f32 %v2911, %v2944
      %v2992 = vadd.f32 %v2912, %v2946
      %v2993 = vadd.f32 %v2913, %v2948
      %v2994 = vadd.f32 %v2914, %v2950
      %v2995 = vadd.f32 %v2915, %v2952
      %v2996 = vadd.f32 %v2916, %v2954
      %v2997 = vadd.f32 %v2917, %v2956
      %v2998 = vadd.f32 %v2918, %v2958
      %v2999 = vadd.f32 %v2919, %v2960
      %v3000 = vadd.f32 %v2920, %v2962
      %v3001 = vadd.f32 %v2921, %v2964
      %v3002 = vadd.f32 %v2922, %v2966
      %v3003 = vadd.f32 %v2923, %v2968
      %v3004 = vadd.f32 %v2924, %v2970
      %v3005 = vadd.f32 %v2925, %v2972
      %v3006 = vadd.f32 %v2926, %v2974
      %3007 = vrot.lane.b32.xlu0 %v2414, 125
      %v3008 = vpop.permute.xlu0 %3007
      %3009 = vrot.lane.b32.xlu0 %v2415, 125
      %v3010 = vpop.permute.xlu0 %3009
      %3011 = vrot.lane.b32.xlu0 %v2416, 125
      %v3012 = vpop.permute.xlu0 %3011
      %3013 = vrot.lane.b32.xlu0 %v2417, 125
      %v3014 = vpop.permute.xlu0 %3013
      %3015 = vrot.lane.b32.xlu0 %v2418, 125
      %v3016 = vpop.permute.xlu0 %3015
      %3017 = vrot.lane.b32.xlu0 %v2419, 125
      %v3018 = vpop.permute.xlu0 %3017
      %3019 = vrot.lane.b32.xlu0 %v2420, 125
      %v3020 = vpop.permute.xlu0 %3019
      %3021 = vrot.lane.b32.xlu0 %v2421, 125
      %v3022 = vpop.permute.xlu0 %3021
      %3023 = vrot.lane.b32.xlu0 %v2422, 125
      %v3024 = vpop.permute.xlu0 %3023
      %3025 = vrot.lane.b32.xlu0 %v2423, 125
      %v3026 = vpop.permute.xlu0 %3025
      %3027 = vrot.lane.b32.xlu0 %v2424, 125
      %v3028 = vpop.permute.xlu0 %3027
      %3029 = vrot.lane.b32.xlu0 %v2425, 125
      %v3030 = vpop.permute.xlu0 %3029
      %3031 = vrot.lane.b32.xlu0 %v2426, 125
      %v3032 = vpop.permute.xlu0 %3031
      %3033 = vrot.lane.b32.xlu0 %v2427, 125
      %v3034 = vpop.permute.xlu0 %3033
      %3035 = vrot.lane.b32.xlu0 %v2428, 125
      %v3036 = vpop.permute.xlu0 %3035
      %3037 = vrot.lane.b32.xlu0 %v2429, 125
      %v3038 = vpop.permute.xlu0 %3037
      %v3055 = vadd.f32 %v2991, %v3008
      %v3056 = vadd.f32 %v2992, %v3010
      %v3057 = vadd.f32 %v2993, %v3012
      %v3058 = vadd.f32 %v2994, %v3014
      %v3059 = vadd.f32 %v2995, %v3016
      %v3060 = vadd.f32 %v2996, %v3018
      %v3061 = vadd.f32 %v2997, %v3020
      %v3062 = vadd.f32 %v2998, %v3022
      %v3063 = vadd.f32 %v2999, %v3024
      %v3064 = vadd.f32 %v3000, %v3026
      %v3065 = vadd.f32 %v3001, %v3028
      %v3066 = vadd.f32 %v3002, %v3030
      %v3067 = vadd.f32 %v3003, %v3032
      %v3068 = vadd.f32 %v3004, %v3034
      %v3069 = vadd.f32 %v3005, %v3036
      %v3070 = vadd.f32 %v3006, %v3038
      %vm3071 = vcmp.lt.f32.partialorder %v3055, 2.0
      %vm3072 = vcmp.lt.f32.partialorder %v3056, 2.0
      %vm3073 = vcmp.lt.f32.partialorder %v3057, 2.0
      %vm3074 = vcmp.lt.f32.partialorder %v3058, 2.0
      %vm3075 = vcmp.lt.f32.partialorder %v3059, 2.0
      %vm3076 = vcmp.lt.f32.partialorder %v3060, 2.0
      %vm3077 = vcmp.lt.f32.partialorder %v3061, 2.0
      %vm3078 = vcmp.lt.f32.partialorder %v3062, 2.0
      %vm3079 = vcmp.lt.f32.partialorder %v3063, 2.0
      %vm3080 = vcmp.lt.f32.partialorder %v3064, 2.0
      %vm3081 = vcmp.lt.f32.partialorder %v3065, 2.0
      %vm3082 = vcmp.lt.f32.partialorder %v3066, 2.0
      %vm3083 = vcmp.lt.f32.partialorder %v3067, 2.0
      %vm3084 = vcmp.lt.f32.partialorder %v3068, 2.0
      %vm3085 = vcmp.lt.f32.partialorder %v3069, 2.0
      %vm3086 = vcmp.lt.f32.partialorder %v3070, 2.0
      %vm3087 = vcmp.eq.s32.totalorder %v2205, 1
      %v3088 = vsel %vm3071, 1, 0
      %v3089 = vsel %vm3072, 1, 0
      %v3090 = vsel %vm3073, 1, 0
      %v3091 = vsel %vm3074, 1, 0
      %v3092 = vsel %vm3075, 1, 0
      %v3093 = vsel %vm3076, 1, 0
      %v3094 = vsel %vm3077, 1, 0
      %v3095 = vsel %vm3078, 1, 0
      %v3096 = vsel %vm3079, 1, 0
      %v3097 = vsel %vm3080, 1, 0
      %v3098 = vsel %vm3081, 1, 0
      %v3099 = vsel %vm3082, 1, 0
      %v3100 = vsel %vm3083, 1, 0
      %v3101 = vsel %vm3084, 1, 0
      %v3102 = vsel %vm3085, 1, 0
      %v3103 = vsel %vm3086, 1, 0
      %3104 = vset.pattern.permute.xlu0 0
      %3105 = vperm.xlu0 %3104, %v3088
      %v3106 = vpop.permute.xlu0 %3105
      %3107 = vset.pattern.permute.xlu0 0
      %3108 = vperm.xlu0 %3107, %v3089
      %v3109 = vpop.permute.xlu0 %3108
      %3110 = vset.pattern.permute.xlu0 0
      %3111 = vperm.xlu0 %3110, %v3090
      %v3112 = vpop.permute.xlu0 %3111
      %3113 = vset.pattern.permute.xlu0 0
      %3114 = vperm.xlu0 %3113, %v3091
      %v3115 = vpop.permute.xlu0 %3114
      %3116 = vset.pattern.permute.xlu0 0
      %3117 = vperm.xlu0 %3116, %v3092
      %v3118 = vpop.permute.xlu0 %3117
      %3119 = vset.pattern.permute.xlu0 0
      %3120 = vperm.xlu0 %3119, %v3093
      %v3121 = vpop.permute.xlu0 %3120
      %3122 = vset.pattern.permute.xlu0 0
      %3123 = vperm.xlu0 %3122, %v3094
      %v3124 = vpop.permute.xlu0 %3123
      %3125 = vset.pattern.permute.xlu0 0
      %3126 = vperm.xlu0 %3125, %v3095
      %v3127 = vpop.permute.xlu0 %3126
      %3128 = vset.pattern.permute.xlu0 0
      %3129 = vperm.xlu0 %3128, %v3096
      %v3130 = vpop.permute.xlu0 %3129
      %3131 = vset.pattern.permute.xlu0 0
      %3132 = vperm.xlu0 %3131, %v3097
      %v3133 = vpop.permute.xlu0 %3132
      %3134 = vset.pattern.permute.xlu0 0
      %3135 = vperm.xlu0 %3134, %v3098
      %v3136 = vpop.permute.xlu0 %3135
      %3137 = vset.pattern.permute.xlu0 0
      %3138 = vperm.xlu0 %3137, %v3099
      %v3139 = vpop.permute.xlu0 %3138
      %3140 = vset.pattern.permute.xlu0 0
      %3141 = vperm.xlu0 %3140, %v3100
      %v3142 = vpop.permute.xlu0 %3141
      %3143 = vset.pattern.permute.xlu0 0
      %3144 = vperm.xlu0 %3143, %v3101
      %v3145 = vpop.permute.xlu0 %3144
      %3146 = vset.pattern.permute.xlu0 0
      %3147 = vperm.xlu0 %3146, %v3102
      %v3148 = vpop.permute.xlu0 %3147
      %3149 = vset.pattern.permute.xlu0 0
      %3150 = vperm.xlu0 %3149, %v3103
      %v3151 = vpop.permute.xlu0 %3150
      %vm3152 = vcmp.eq.s32.totalorder %v3106, 1
      %vm3153 = vcmp.eq.s32.totalorder %v3109, 1
      %vm3154 = vcmp.eq.s32.totalorder %v3112, 1
      %vm3155 = vcmp.eq.s32.totalorder %v3115, 1
      %vm3156 = vcmp.eq.s32.totalorder %v3118, 1
      %vm3157 = vcmp.eq.s32.totalorder %v3121, 1
      %vm3158 = vcmp.eq.s32.totalorder %v3124, 1
      %vm3159 = vcmp.eq.s32.totalorder %v3127, 1
      %vm3160 = vcmp.eq.s32.totalorder %v3130, 1
      %vm3161 = vcmp.eq.s32.totalorder %v3133, 1
      %vm3162 = vcmp.eq.s32.totalorder %v3136, 1
      %vm3163 = vcmp.eq.s32.totalorder %v3139, 1
      %vm3164 = vcmp.eq.s32.totalorder %v3142, 1
      %vm3165 = vcmp.eq.s32.totalorder %v3145, 1
      %vm3166 = vcmp.eq.s32.totalorder %v3148, 1
      %vm3167 = vcmp.eq.s32.totalorder %v3151, 1
      %vm3168 = vmand %vm3087, %vm3152
      %vm3169 = vmand %vm3087, %vm3153
      %vm3170 = vmand %vm3087, %vm3154
      %vm3171 = vmand %vm3087, %vm3155
      %vm3172 = vmand %vm3087, %vm3156
      %vm3173 = vmand %vm3087, %vm3157
      %vm3174 = vmand %vm3087, %vm3158
      %vm3175 = vmand %vm3087, %vm3159
      %vm3176 = vmand %vm3087, %vm3160
      %vm3177 = vmand %vm3087, %vm3161
      %vm3178 = vmand %vm3087, %vm3162
      %vm3179 = vmand %vm3087, %vm3163
      %vm3180 = vmand %vm3087, %vm3164
      %vm3181 = vmand %vm3087, %vm3165
      %vm3182 = vmand %vm3087, %vm3166
      %vm3183 = vmand %vm3087, %vm3167
      %v3184 = vsel %vm3168, %v2188, %v2799
      %v3185 = vsel %vm3169, %v2189, %v2800
      %v3186 = vsel %vm3170, %v2190, %v2801
      %v3187 = vsel %vm3171, %v2191, %v2802
      %v3188 = vsel %vm3172, %v2192, %v2803
      %v3189 = vsel %vm3173, %v2193, %v2804
      %v3190 = vsel %vm3174, %v2194, %v2805
      %v3191 = vsel %vm3175, %v2195, %v2806
      %v3192 = vsel %vm3176, %v2196, %v2807
      %v3193 = vsel %vm3177, %v2197, %v2808
      %v3194 = vsel %vm3178, %v2198, %v2809
      %v3195 = vsel %vm3179, %v2199, %v2810
      %v3196 = vsel %vm3180, %v2200, %v2811
      %v3197 = vsel %vm3181, %v2201, %v2812
      %v3198 = vsel %vm3182, %v2202, %v2813
      %v3199 = vsel %vm3183, %v2203, %v2814
      %3200 = vrot.lane.b32.xlu0 %v2188, 126
      %v3201 = vpop.permute.xlu0 %3200
      %3202 = vrot.lane.b32.xlu0 %v2189, 126
      %v3203 = vpop.permute.xlu0 %3202
      %3204 = vrot.lane.b32.xlu0 %v2190, 126
      %v3205 = vpop.permute.xlu0 %3204
      %3206 = vrot.lane.b32.xlu0 %v2191, 126
      %v3207 = vpop.permute.xlu0 %3206
      %3208 = vrot.lane.b32.xlu0 %v2192, 126
      %v3209 = vpop.permute.xlu0 %3208
      %3210 = vrot.lane.b32.xlu0 %v2193, 126
      %v3211 = vpop.permute.xlu0 %3210
      %3212 = vrot.lane.b32.xlu0 %v2194, 126
      %v3213 = vpop.permute.xlu0 %3212
      %3214 = vrot.lane.b32.xlu0 %v2195, 126
      %v3215 = vpop.permute.xlu0 %3214
      %3216 = vrot.lane.b32.xlu0 %v2196, 126
      %v3217 = vpop.permute.xlu0 %3216
      %3218 = vrot.lane.b32.xlu0 %v2197, 126
      %v3219 = vpop.permute.xlu0 %3218
      %3220 = vrot.lane.b32.xlu0 %v2198, 126
      %v3221 = vpop.permute.xlu0 %3220
      %3222 = vrot.lane.b32.xlu0 %v2199, 126
      %v3223 = vpop.permute.xlu0 %3222
      %3224 = vrot.lane.b32.xlu0 %v2200, 126
      %v3225 = vpop.permute.xlu0 %3224
      %3226 = vrot.lane.b32.xlu0 %v2201, 126
      %v3227 = vpop.permute.xlu0 %3226
      %3228 = vrot.lane.b32.xlu0 %v2202, 126
      %v3229 = vpop.permute.xlu0 %3228
      %3230 = vrot.lane.b32.xlu0 %v2203, 126
      %v3231 = vpop.permute.xlu0 %3230
      %vm3248 = vcmp.ge.f32.partialorder %v2188, %v3201
      %vm3249 = vcmp.ge.f32.partialorder %v2189, %v3203
      %vm3250 = vcmp.ge.f32.partialorder %v2190, %v3205
      %vm3251 = vcmp.ge.f32.partialorder %v2191, %v3207
      %vm3252 = vcmp.ge.f32.partialorder %v2192, %v3209
      %vm3253 = vcmp.ge.f32.partialorder %v2193, %v3211
      %vm3254 = vcmp.ge.f32.partialorder %v2194, %v3213
      %vm3255 = vcmp.ge.f32.partialorder %v2195, %v3215
      %vm3256 = vcmp.ge.f32.partialorder %v2196, %v3217
      %vm3257 = vcmp.ge.f32.partialorder %v2197, %v3219
      %vm3258 = vcmp.ge.f32.partialorder %v2198, %v3221
      %vm3259 = vcmp.ge.f32.partialorder %v2199, %v3223
      %vm3260 = vcmp.ge.f32.partialorder %v2200, %v3225
      %vm3261 = vcmp.ge.f32.partialorder %v2201, %v3227
      %vm3262 = vcmp.ge.f32.partialorder %v2202, %v3229
      %vm3263 = vcmp.ge.f32.partialorder %v2203, %v3231
      %v3264 = vsel %vm3248, 1, 0
      %v3265 = vsel %vm3249, 1, 0
      %v3266 = vsel %vm3250, 1, 0
      %v3267 = vsel %vm3251, 1, 0
      %v3268 = vsel %vm3252, 1, 0
      %v3269 = vsel %vm3253, 1, 0
      %v3270 = vsel %vm3254, 1, 0
      %v3271 = vsel %vm3255, 1, 0
      %v3272 = vsel %vm3256, 1, 0
      %v3273 = vsel %vm3257, 1, 0
      %v3274 = vsel %vm3258, 1, 0
      %v3275 = vsel %vm3259, 1, 0
      %v3276 = vsel %vm3260, 1, 0
      %v3277 = vsel %vm3261, 1, 0
      %v3278 = vsel %vm3262, 1, 0
      %v3279 = vsel %vm3263, 1, 0
      %v3280 = vcvt.s32.f32 %v3264
      %v3281 = vcvt.s32.f32 %v3265
      %v3282 = vcvt.s32.f32 %v3266
      %v3283 = vcvt.s32.f32 %v3267
      %v3284 = vcvt.s32.f32 %v3268
      %v3285 = vcvt.s32.f32 %v3269
      %v3286 = vcvt.s32.f32 %v3270
      %v3287 = vcvt.s32.f32 %v3271
      %v3288 = vcvt.s32.f32 %v3272
      %v3289 = vcvt.s32.f32 %v3273
      %v3290 = vcvt.s32.f32 %v3274
      %v3291 = vcvt.s32.f32 %v3275
      %v3292 = vcvt.s32.f32 %v3276
      %v3293 = vcvt.s32.f32 %v3277
      %v3294 = vcvt.s32.f32 %v3278
      %v3295 = vcvt.s32.f32 %v3279
      %v3296 = vadd.f32 %v3280, 0.0
      %v3297 = vadd.f32 %v3281, 0.0
      %v3298 = vadd.f32 %v3282, 0.0
      %v3299 = vadd.f32 %v3283, 0.0
      %v3300 = vadd.f32 %v3284, 0.0
      %v3301 = vadd.f32 %v3285, 0.0
      %v3302 = vadd.f32 %v3286, 0.0
      %v3303 = vadd.f32 %v3287, 0.0
      %v3304 = vadd.f32 %v3288, 0.0
      %v3305 = vadd.f32 %v3289, 0.0
      %v3306 = vadd.f32 %v3290, 0.0
      %v3307 = vadd.f32 %v3291, 0.0
      %v3308 = vadd.f32 %v3292, 0.0
      %v3309 = vadd.f32 %v3293, 0.0
      %v3310 = vadd.f32 %v3294, 0.0
      %v3311 = vadd.f32 %v3295, 0.0
      %3328 = vrot.lane.b32.xlu0 %v2895, 127
      %v3329 = vpop.permute.xlu0 %3328
      %3330 = vrot.lane.b32.xlu0 %v2896, 127
      %v3331 = vpop.permute.xlu0 %3330
      %3332 = vrot.lane.b32.xlu0 %v2897, 127
      %v3333 = vpop.permute.xlu0 %3332
      %3334 = vrot.lane.b32.xlu0 %v2898, 127
      %v3335 = vpop.permute.xlu0 %3334
      %3336 = vrot.lane.b32.xlu0 %v2899, 127
      %v3337 = vpop.permute.xlu0 %3336
      %3338 = vrot.lane.b32.xlu0 %v2900, 127
      %v3339 = vpop.permute.xlu0 %3338
      %3340 = vrot.lane.b32.xlu0 %v2901, 127
      %v3341 = vpop.permute.xlu0 %3340
      %3342 = vrot.lane.b32.xlu0 %v2902, 127
      %v3343 = vpop.permute.xlu0 %3342
      %3344 = vrot.lane.b32.xlu0 %v2903, 127
      %v3345 = vpop.permute.xlu0 %3344
      %3346 = vrot.lane.b32.xlu0 %v2904, 127
      %v3347 = vpop.permute.xlu0 %3346
      %3348 = vrot.lane.b32.xlu0 %v2905, 127
      %v3349 = vpop.permute.xlu0 %3348
      %3350 = vrot.lane.b32.xlu0 %v2906, 127
      %v3351 = vpop.permute.xlu0 %3350
      %3352 = vrot.lane.b32.xlu0 %v2907, 127
      %v3353 = vpop.permute.xlu0 %3352
      %3354 = vrot.lane.b32.xlu0 %v2908, 127
      %v3355 = vpop.permute.xlu0 %3354
      %3356 = vrot.lane.b32.xlu0 %v2909, 127
      %v3357 = vpop.permute.xlu0 %3356
      %3358 = vrot.lane.b32.xlu0 %v2910, 127
      %v3359 = vpop.permute.xlu0 %3358
      %v3376 = vadd.f32 %v3296, %v3329
      %v3377 = vadd.f32 %v3297, %v3331
      %v3378 = vadd.f32 %v3298, %v3333
      %v3379 = vadd.f32 %v3299, %v3335
      %v3380 = vadd.f32 %v3300, %v3337
      %v3381 = vadd.f32 %v3301, %v3339
      %v3382 = vadd.f32 %v3302, %v3341
      %v3383 = vadd.f32 %v3303, %v3343
      %v3384 = vadd.f32 %v3304, %v3345
      %v3385 = vadd.f32 %v3305, %v3347
      %v3386 = vadd.f32 %v3306, %v3349
      %v3387 = vadd.f32 %v3307, %v3351
      %v3388 = vadd.f32 %v3308, %v3353
      %v3389 = vadd.f32 %v3309, %v3355
      %v3390 = vadd.f32 %v3310, %v3357
      %v3391 = vadd.f32 %v3311, %v3359
      %3392 = vrot.lane.b32.xlu0 %v2302, 125
      %v3393 = vpop.permute.xlu0 %3392
      %3394 = vrot.lane.b32.xlu0 %v2303, 125
      %v3395 = vpop.permute.xlu0 %3394
      %3396 = vrot.lane.b32.xlu0 %v2304, 125
      %v3397 = vpop.permute.xlu0 %3396
      %3398 = vrot.lane.b32.xlu0 %v2305, 125
      %v3399 = vpop.permute.xlu0 %3398
      %3400 = vrot.lane.b32.xlu0 %v2306, 125
      %v3401 = vpop.permute.xlu0 %3400
      %3402 = vrot.lane.b32.xlu0 %v2307, 125
      %v3403 = vpop.permute.xlu0 %3402
      %3404 = vrot.lane.b32.xlu0 %v2308, 125
      %v3405 = vpop.permute.xlu0 %3404
      %3406 = vrot.lane.b32.xlu0 %v2309, 125
      %v3407 = vpop.permute.xlu0 %3406
      %3408 = vrot.lane.b32.xlu0 %v2310, 125
      %v3409 = vpop.permute.xlu0 %3408
      %3410 = vrot.lane.b32.xlu0 %v2311, 125
      %v3411 = vpop.permute.xlu0 %3410
      %3412 = vrot.lane.b32.xlu0 %v2312, 125
      %v3413 = vpop.permute.xlu0 %3412
      %3414 = vrot.lane.b32.xlu0 %v2313, 125
      %v3415 = vpop.permute.xlu0 %3414
      %3416 = vrot.lane.b32.xlu0 %v2314, 125
      %v3417 = vpop.permute.xlu0 %3416
      %3418 = vrot.lane.b32.xlu0 %v2315, 125
      %v3419 = vpop.permute.xlu0 %3418
      %3420 = vrot.lane.b32.xlu0 %v2316, 125
      %v3421 = vpop.permute.xlu0 %3420
      %3422 = vrot.lane.b32.xlu0 %v2317, 125
      %v3423 = vpop.permute.xlu0 %3422
      %v3440 = vadd.f32 %v3376, %v3393
      %v3441 = vadd.f32 %v3377, %v3395
      %v3442 = vadd.f32 %v3378, %v3397
      %v3443 = vadd.f32 %v3379, %v3399
      %v3444 = vadd.f32 %v3380, %v3401
      %v3445 = vadd.f32 %v3381, %v3403
      %v3446 = vadd.f32 %v3382, %v3405
      %v3447 = vadd.f32 %v3383, %v3407
      %v3448 = vadd.f32 %v3384, %v3409
      %v3449 = vadd.f32 %v3385, %v3411
      %v3450 = vadd.f32 %v3386, %v3413
      %v3451 = vadd.f32 %v3387, %v3415
      %v3452 = vadd.f32 %v3388, %v3417
      %v3453 = vadd.f32 %v3389, %v3419
      %v3454 = vadd.f32 %v3390, %v3421
      %v3455 = vadd.f32 %v3391, %v3423
      %vm3456 = vcmp.lt.f32.partialorder %v3440, 2.0
      %vm3457 = vcmp.lt.f32.partialorder %v3441, 2.0
      %vm3458 = vcmp.lt.f32.partialorder %v3442, 2.0
      %vm3459 = vcmp.lt.f32.partialorder %v3443, 2.0
      %vm3460 = vcmp.lt.f32.partialorder %v3444, 2.0
      %vm3461 = vcmp.lt.f32.partialorder %v3445, 2.0
      %vm3462 = vcmp.lt.f32.partialorder %v3446, 2.0
      %vm3463 = vcmp.lt.f32.partialorder %v3447, 2.0
      %vm3464 = vcmp.lt.f32.partialorder %v3448, 2.0
      %vm3465 = vcmp.lt.f32.partialorder %v3449, 2.0
      %vm3466 = vcmp.lt.f32.partialorder %v3450, 2.0
      %vm3467 = vcmp.lt.f32.partialorder %v3451, 2.0
      %vm3468 = vcmp.lt.f32.partialorder %v3452, 2.0
      %vm3469 = vcmp.lt.f32.partialorder %v3453, 2.0
      %vm3470 = vcmp.lt.f32.partialorder %v3454, 2.0
      %vm3471 = vcmp.lt.f32.partialorder %v3455, 2.0
      %vm3472 = vcmp.eq.s32.totalorder %v2205, 2
      %v3473 = vsel %vm3456, 1, 0
      %v3474 = vsel %vm3457, 1, 0
      %v3475 = vsel %vm3458, 1, 0
      %v3476 = vsel %vm3459, 1, 0
      %v3477 = vsel %vm3460, 1, 0
      %v3478 = vsel %vm3461, 1, 0
      %v3479 = vsel %vm3462, 1, 0
      %v3480 = vsel %vm3463, 1, 0
      %v3481 = vsel %vm3464, 1, 0
      %v3482 = vsel %vm3465, 1, 0
      %v3483 = vsel %vm3466, 1, 0
      %v3484 = vsel %vm3467, 1, 0
      %v3485 = vsel %vm3468, 1, 0
      %v3486 = vsel %vm3469, 1, 0
      %v3487 = vsel %vm3470, 1, 0
      %v3488 = vsel %vm3471, 1, 0
      %3489 = vset.pattern.permute.xlu0 0
      %3490 = vperm.xlu0 %3489, %v3473
      %v3491 = vpop.permute.xlu0 %3490
      %3492 = vset.pattern.permute.xlu0 0
      %3493 = vperm.xlu0 %3492, %v3474
      %v3494 = vpop.permute.xlu0 %3493
      %3495 = vset.pattern.permute.xlu0 0
      %3496 = vperm.xlu0 %3495, %v3475
      %v3497 = vpop.permute.xlu0 %3496
      %3498 = vset.pattern.permute.xlu0 0
      %3499 = vperm.xlu0 %3498, %v3476
      %v3500 = vpop.permute.xlu0 %3499
      %3501 = vset.pattern.permute.xlu0 0
      %3502 = vperm.xlu0 %3501, %v3477
      %v3503 = vpop.permute.xlu0 %3502
      %3504 = vset.pattern.permute.xlu0 0
      %3505 = vperm.xlu0 %3504, %v3478
      %v3506 = vpop.permute.xlu0 %3505
      %3507 = vset.pattern.permute.xlu0 0
      %3508 = vperm.xlu0 %3507, %v3479
      %v3509 = vpop.permute.xlu0 %3508
      %3510 = vset.pattern.permute.xlu0 0
      %3511 = vperm.xlu0 %3510, %v3480
      %v3512 = vpop.permute.xlu0 %3511
      %3513 = vset.pattern.permute.xlu0 0
      %3514 = vperm.xlu0 %3513, %v3481
      %v3515 = vpop.permute.xlu0 %3514
      %3516 = vset.pattern.permute.xlu0 0
      %3517 = vperm.xlu0 %3516, %v3482
      %v3518 = vpop.permute.xlu0 %3517
      %3519 = vset.pattern.permute.xlu0 0
      %3520 = vperm.xlu0 %3519, %v3483
      %v3521 = vpop.permute.xlu0 %3520
      %3522 = vset.pattern.permute.xlu0 0
      %3523 = vperm.xlu0 %3522, %v3484
      %v3524 = vpop.permute.xlu0 %3523
      %3525 = vset.pattern.permute.xlu0 0
      %3526 = vperm.xlu0 %3525, %v3485
      %v3527 = vpop.permute.xlu0 %3526
      %3528 = vset.pattern.permute.xlu0 0
      %3529 = vperm.xlu0 %3528, %v3486
      %v3530 = vpop.permute.xlu0 %3529
      %3531 = vset.pattern.permute.xlu0 0
      %3532 = vperm.xlu0 %3531, %v3487
      %v3533 = vpop.permute.xlu0 %3532
      %3534 = vset.pattern.permute.xlu0 0
      %3535 = vperm.xlu0 %3534, %v3488
      %v3536 = vpop.permute.xlu0 %3535
      %vm3537 = vcmp.eq.s32.totalorder %v3491, 1
      %vm3538 = vcmp.eq.s32.totalorder %v3494, 1
      %vm3539 = vcmp.eq.s32.totalorder %v3497, 1
      %vm3540 = vcmp.eq.s32.totalorder %v3500, 1
      %vm3541 = vcmp.eq.s32.totalorder %v3503, 1
      %vm3542 = vcmp.eq.s32.totalorder %v3506, 1
      %vm3543 = vcmp.eq.s32.totalorder %v3509, 1
      %vm3544 = vcmp.eq.s32.totalorder %v3512, 1
      %vm3545 = vcmp.eq.s32.totalorder %v3515, 1
      %vm3546 = vcmp.eq.s32.totalorder %v3518, 1
      %vm3547 = vcmp.eq.s32.totalorder %v3521, 1
      %vm3548 = vcmp.eq.s32.totalorder %v3524, 1
      %vm3549 = vcmp.eq.s32.totalorder %v3527, 1
      %vm3550 = vcmp.eq.s32.totalorder %v3530, 1
      %vm3551 = vcmp.eq.s32.totalorder %v3533, 1
      %vm3552 = vcmp.eq.s32.totalorder %v3536, 1
      %vm3553 = vmand %vm3472, %vm3537
      %vm3554 = vmand %vm3472, %vm3538
      %vm3555 = vmand %vm3472, %vm3539
      %vm3556 = vmand %vm3472, %vm3540
      %vm3557 = vmand %vm3472, %vm3541
      %vm3558 = vmand %vm3472, %vm3542
      %vm3559 = vmand %vm3472, %vm3543
      %vm3560 = vmand %vm3472, %vm3544
      %vm3561 = vmand %vm3472, %vm3545
      %vm3562 = vmand %vm3472, %vm3546
      %vm3563 = vmand %vm3472, %vm3547
      %vm3564 = vmand %vm3472, %vm3548
      %vm3565 = vmand %vm3472, %vm3549
      %vm3566 = vmand %vm3472, %vm3550
      %vm3567 = vmand %vm3472, %vm3551
      %vm3568 = vmand %vm3472, %vm3552
      %v3569 = vsel %vm3553, %v2188, %v3184
      %v3570 = vsel %vm3554, %v2189, %v3185
      %v3571 = vsel %vm3555, %v2190, %v3186
      %v3572 = vsel %vm3556, %v2191, %v3187
      %v3573 = vsel %vm3557, %v2192, %v3188
      %v3574 = vsel %vm3558, %v2193, %v3189
      %v3575 = vsel %vm3559, %v2194, %v3190
      %v3576 = vsel %vm3560, %v2195, %v3191
      %v3577 = vsel %vm3561, %v2196, %v3192
      %v3578 = vsel %vm3562, %v2197, %v3193
      %v3579 = vsel %vm3563, %v2198, %v3194
      %v3580 = vsel %vm3564, %v2199, %v3195
      %v3581 = vsel %vm3565, %v2200, %v3196
      %v3582 = vsel %vm3566, %v2201, %v3197
      %v3583 = vsel %vm3567, %v2202, %v3198
      %v3584 = vsel %vm3568, %v2203, %v3199
      %3585 = vrot.lane.b32.xlu0 %v2188, 125
      %v3586 = vpop.permute.xlu0 %3585
      %3587 = vrot.lane.b32.xlu0 %v2189, 125
      %v3588 = vpop.permute.xlu0 %3587
      %3589 = vrot.lane.b32.xlu0 %v2190, 125
      %v3590 = vpop.permute.xlu0 %3589
      %3591 = vrot.lane.b32.xlu0 %v2191, 125
      %v3592 = vpop.permute.xlu0 %3591
      %3593 = vrot.lane.b32.xlu0 %v2192, 125
      %v3594 = vpop.permute.xlu0 %3593
      %3595 = vrot.lane.b32.xlu0 %v2193, 125
      %v3596 = vpop.permute.xlu0 %3595
      %3597 = vrot.lane.b32.xlu0 %v2194, 125
      %v3598 = vpop.permute.xlu0 %3597
      %3599 = vrot.lane.b32.xlu0 %v2195, 125
      %v3600 = vpop.permute.xlu0 %3599
      %3601 = vrot.lane.b32.xlu0 %v2196, 125
      %v3602 = vpop.permute.xlu0 %3601
      %3603 = vrot.lane.b32.xlu0 %v2197, 125
      %v3604 = vpop.permute.xlu0 %3603
      %3605 = vrot.lane.b32.xlu0 %v2198, 125
      %v3606 = vpop.permute.xlu0 %3605
      %3607 = vrot.lane.b32.xlu0 %v2199, 125
      %v3608 = vpop.permute.xlu0 %3607
      %3609 = vrot.lane.b32.xlu0 %v2200, 125
      %v3610 = vpop.permute.xlu0 %3609
      %3611 = vrot.lane.b32.xlu0 %v2201, 125
      %v3612 = vpop.permute.xlu0 %3611
      %3613 = vrot.lane.b32.xlu0 %v2202, 125
      %v3614 = vpop.permute.xlu0 %3613
      %3615 = vrot.lane.b32.xlu0 %v2203, 125
      %v3616 = vpop.permute.xlu0 %3615
      %vm3633 = vcmp.ge.f32.partialorder %v2188, %v3586
      %vm3634 = vcmp.ge.f32.partialorder %v2189, %v3588
      %vm3635 = vcmp.ge.f32.partialorder %v2190, %v3590
      %vm3636 = vcmp.ge.f32.partialorder %v2191, %v3592
      %vm3637 = vcmp.ge.f32.partialorder %v2192, %v3594
      %vm3638 = vcmp.ge.f32.partialorder %v2193, %v3596
      %vm3639 = vcmp.ge.f32.partialorder %v2194, %v3598
      %vm3640 = vcmp.ge.f32.partialorder %v2195, %v3600
      %vm3641 = vcmp.ge.f32.partialorder %v2196, %v3602
      %vm3642 = vcmp.ge.f32.partialorder %v2197, %v3604
      %vm3643 = vcmp.ge.f32.partialorder %v2198, %v3606
      %vm3644 = vcmp.ge.f32.partialorder %v2199, %v3608
      %vm3645 = vcmp.ge.f32.partialorder %v2200, %v3610
      %vm3646 = vcmp.ge.f32.partialorder %v2201, %v3612
      %vm3647 = vcmp.ge.f32.partialorder %v2202, %v3614
      %vm3648 = vcmp.ge.f32.partialorder %v2203, %v3616
      %v3649 = vsel %vm3633, 1, 0
      %v3650 = vsel %vm3634, 1, 0
      %v3651 = vsel %vm3635, 1, 0
      %v3652 = vsel %vm3636, 1, 0
      %v3653 = vsel %vm3637, 1, 0
      %v3654 = vsel %vm3638, 1, 0
      %v3655 = vsel %vm3639, 1, 0
      %v3656 = vsel %vm3640, 1, 0
      %v3657 = vsel %vm3641, 1, 0
      %v3658 = vsel %vm3642, 1, 0
      %v3659 = vsel %vm3643, 1, 0
      %v3660 = vsel %vm3644, 1, 0
      %v3661 = vsel %vm3645, 1, 0
      %v3662 = vsel %vm3646, 1, 0
      %v3663 = vsel %vm3647, 1, 0
      %v3664 = vsel %vm3648, 1, 0
      %v3665 = vcvt.s32.f32 %v3649
      %v3666 = vcvt.s32.f32 %v3650
      %v3667 = vcvt.s32.f32 %v3651
      %v3668 = vcvt.s32.f32 %v3652
      %v3669 = vcvt.s32.f32 %v3653
      %v3670 = vcvt.s32.f32 %v3654
      %v3671 = vcvt.s32.f32 %v3655
      %v3672 = vcvt.s32.f32 %v3656
      %v3673 = vcvt.s32.f32 %v3657
      %v3674 = vcvt.s32.f32 %v3658
      %v3675 = vcvt.s32.f32 %v3659
      %v3676 = vcvt.s32.f32 %v3660
      %v3677 = vcvt.s32.f32 %v3661
      %v3678 = vcvt.s32.f32 %v3662
      %v3679 = vcvt.s32.f32 %v3663
      %v3680 = vcvt.s32.f32 %v3664
      %v3681 = vadd.f32 %v3665, 0.0
      %v3682 = vadd.f32 %v3666, 0.0
      %v3683 = vadd.f32 %v3667, 0.0
      %v3684 = vadd.f32 %v3668, 0.0
      %v3685 = vadd.f32 %v3669, 0.0
      %v3686 = vadd.f32 %v3670, 0.0
      %v3687 = vadd.f32 %v3671, 0.0
      %v3688 = vadd.f32 %v3672, 0.0
      %v3689 = vadd.f32 %v3673, 0.0
      %v3690 = vadd.f32 %v3674, 0.0
      %v3691 = vadd.f32 %v3675, 0.0
      %v3692 = vadd.f32 %v3676, 0.0
      %v3693 = vadd.f32 %v3677, 0.0
      %v3694 = vadd.f32 %v3678, 0.0
      %v3695 = vadd.f32 %v3679, 0.0
      %v3696 = vadd.f32 %v3680, 0.0
      %3713 = vrot.lane.b32.xlu0 %v3280, 127
      %v3714 = vpop.permute.xlu0 %3713
      %3715 = vrot.lane.b32.xlu0 %v3281, 127
      %v3716 = vpop.permute.xlu0 %3715
      %3717 = vrot.lane.b32.xlu0 %v3282, 127
      %v3718 = vpop.permute.xlu0 %3717
      %3719 = vrot.lane.b32.xlu0 %v3283, 127
      %v3720 = vpop.permute.xlu0 %3719
      %3721 = vrot.lane.b32.xlu0 %v3284, 127
      %v3722 = vpop.permute.xlu0 %3721
      %3723 = vrot.lane.b32.xlu0 %v3285, 127
      %v3724 = vpop.permute.xlu0 %3723
      %3725 = vrot.lane.b32.xlu0 %v3286, 127
      %v3726 = vpop.permute.xlu0 %3725
      %3727 = vrot.lane.b32.xlu0 %v3287, 127
      %v3728 = vpop.permute.xlu0 %3727
      %3729 = vrot.lane.b32.xlu0 %v3288, 127
      %v3730 = vpop.permute.xlu0 %3729
      %3731 = vrot.lane.b32.xlu0 %v3289, 127
      %v3732 = vpop.permute.xlu0 %3731
      %3733 = vrot.lane.b32.xlu0 %v3290, 127
      %v3734 = vpop.permute.xlu0 %3733
      %3735 = vrot.lane.b32.xlu0 %v3291, 127
      %v3736 = vpop.permute.xlu0 %3735
      %3737 = vrot.lane.b32.xlu0 %v3292, 127
      %v3738 = vpop.permute.xlu0 %3737
      %3739 = vrot.lane.b32.xlu0 %v3293, 127
      %v3740 = vpop.permute.xlu0 %3739
      %3741 = vrot.lane.b32.xlu0 %v3294, 127
      %v3742 = vpop.permute.xlu0 %3741
      %3743 = vrot.lane.b32.xlu0 %v3295, 127
      %v3744 = vpop.permute.xlu0 %3743
      %v3761 = vadd.f32 %v3681, %v3714
      %v3762 = vadd.f32 %v3682, %v3716
      %v3763 = vadd.f32 %v3683, %v3718
      %v3764 = vadd.f32 %v3684, %v3720
      %v3765 = vadd.f32 %v3685, %v3722
      %v3766 = vadd.f32 %v3686, %v3724
      %v3767 = vadd.f32 %v3687, %v3726
      %v3768 = vadd.f32 %v3688, %v3728
      %v3769 = vadd.f32 %v3689, %v3730
      %v3770 = vadd.f32 %v3690, %v3732
      %v3771 = vadd.f32 %v3691, %v3734
      %v3772 = vadd.f32 %v3692, %v3736
      %v3773 = vadd.f32 %v3693, %v3738
      %v3774 = vadd.f32 %v3694, %v3740
      %v3775 = vadd.f32 %v3695, %v3742
      %v3776 = vadd.f32 %v3696, %v3744
      %3777 = vrot.lane.b32.xlu0 %v2895, 126
      %v3778 = vpop.permute.xlu0 %3777
      %3779 = vrot.lane.b32.xlu0 %v2896, 126
      %v3780 = vpop.permute.xlu0 %3779
      %3781 = vrot.lane.b32.xlu0 %v2897, 126
      %v3782 = vpop.permute.xlu0 %3781
      %3783 = vrot.lane.b32.xlu0 %v2898, 126
      %v3784 = vpop.permute.xlu0 %3783
      %3785 = vrot.lane.b32.xlu0 %v2899, 126
      %v3786 = vpop.permute.xlu0 %3785
      %3787 = vrot.lane.b32.xlu0 %v2900, 126
      %v3788 = vpop.permute.xlu0 %3787
      %3789 = vrot.lane.b32.xlu0 %v2901, 126
      %v3790 = vpop.permute.xlu0 %3789
      %3791 = vrot.lane.b32.xlu0 %v2902, 126
      %v3792 = vpop.permute.xlu0 %3791
      %3793 = vrot.lane.b32.xlu0 %v2903, 126
      %v3794 = vpop.permute.xlu0 %3793
      %3795 = vrot.lane.b32.xlu0 %v2904, 126
      %v3796 = vpop.permute.xlu0 %3795
      %3797 = vrot.lane.b32.xlu0 %v2905, 126
      %v3798 = vpop.permute.xlu0 %3797
      %3799 = vrot.lane.b32.xlu0 %v2906, 126
      %v3800 = vpop.permute.xlu0 %3799
      %3801 = vrot.lane.b32.xlu0 %v2907, 126
      %v3802 = vpop.permute.xlu0 %3801
      %3803 = vrot.lane.b32.xlu0 %v2908, 126
      %v3804 = vpop.permute.xlu0 %3803
      %3805 = vrot.lane.b32.xlu0 %v2909, 126
      %v3806 = vpop.permute.xlu0 %3805
      %3807 = vrot.lane.b32.xlu0 %v2910, 126
      %v3808 = vpop.permute.xlu0 %3807
      %v3825 = vadd.f32 %v3761, %v3778
      %v3826 = vadd.f32 %v3762, %v3780
      %v3827 = vadd.f32 %v3763, %v3782
      %v3828 = vadd.f32 %v3764, %v3784
      %v3829 = vadd.f32 %v3765, %v3786
      %v3830 = vadd.f32 %v3766, %v3788
      %v3831 = vadd.f32 %v3767, %v3790
      %v3832 = vadd.f32 %v3768, %v3792
      %v3833 = vadd.f32 %v3769, %v3794
      %v3834 = vadd.f32 %v3770, %v3796
      %v3835 = vadd.f32 %v3771, %v3798
      %v3836 = vadd.f32 %v3772, %v3800
      %v3837 = vadd.f32 %v3773, %v3802
      %v3838 = vadd.f32 %v3774, %v3804
      %v3839 = vadd.f32 %v3775, %v3806
      %v3840 = vadd.f32 %v3776, %v3808
      %vm3841 = vcmp.lt.f32.partialorder %v3825, 2.0
      %vm3842 = vcmp.lt.f32.partialorder %v3826, 2.0
      %vm3843 = vcmp.lt.f32.partialorder %v3827, 2.0
      %vm3844 = vcmp.lt.f32.partialorder %v3828, 2.0
      %vm3845 = vcmp.lt.f32.partialorder %v3829, 2.0
      %vm3846 = vcmp.lt.f32.partialorder %v3830, 2.0
      %vm3847 = vcmp.lt.f32.partialorder %v3831, 2.0
      %vm3848 = vcmp.lt.f32.partialorder %v3832, 2.0
      %vm3849 = vcmp.lt.f32.partialorder %v3833, 2.0
      %vm3850 = vcmp.lt.f32.partialorder %v3834, 2.0
      %vm3851 = vcmp.lt.f32.partialorder %v3835, 2.0
      %vm3852 = vcmp.lt.f32.partialorder %v3836, 2.0
      %vm3853 = vcmp.lt.f32.partialorder %v3837, 2.0
      %vm3854 = vcmp.lt.f32.partialorder %v3838, 2.0
      %vm3855 = vcmp.lt.f32.partialorder %v3839, 2.0
      %vm3856 = vcmp.lt.f32.partialorder %v3840, 2.0
      %vm3857 = vcmp.eq.s32.totalorder %v2205, 3
      %v3858 = vsel %vm3841, 1, 0
      %v3859 = vsel %vm3842, 1, 0
      %v3860 = vsel %vm3843, 1, 0
      %v3861 = vsel %vm3844, 1, 0
      %v3862 = vsel %vm3845, 1, 0
      %v3863 = vsel %vm3846, 1, 0
      %v3864 = vsel %vm3847, 1, 0
      %v3865 = vsel %vm3848, 1, 0
      %v3866 = vsel %vm3849, 1, 0
      %v3867 = vsel %vm3850, 1, 0
      %v3868 = vsel %vm3851, 1, 0
      %v3869 = vsel %vm3852, 1, 0
      %v3870 = vsel %vm3853, 1, 0
      %v3871 = vsel %vm3854, 1, 0
      %v3872 = vsel %vm3855, 1, 0
      %v3873 = vsel %vm3856, 1, 0
      %3874 = vset.pattern.permute.xlu0 0
      %3875 = vperm.xlu0 %3874, %v3858
      %v3876 = vpop.permute.xlu0 %3875
      %3877 = vset.pattern.permute.xlu0 0
      %3878 = vperm.xlu0 %3877, %v3859
      %v3879 = vpop.permute.xlu0 %3878
      %3880 = vset.pattern.permute.xlu0 0
      %3881 = vperm.xlu0 %3880, %v3860
      %v3882 = vpop.permute.xlu0 %3881
      %3883 = vset.pattern.permute.xlu0 0
      %3884 = vperm.xlu0 %3883, %v3861
      %v3885 = vpop.permute.xlu0 %3884
      %3886 = vset.pattern.permute.xlu0 0
      %3887 = vperm.xlu0 %3886, %v3862
      %v3888 = vpop.permute.xlu0 %3887
      %3889 = vset.pattern.permute.xlu0 0
      %3890 = vperm.xlu0 %3889, %v3863
      %v3891 = vpop.permute.xlu0 %3890
      %3892 = vset.pattern.permute.xlu0 0
      %3893 = vperm.xlu0 %3892, %v3864
      %v3894 = vpop.permute.xlu0 %3893
      %3895 = vset.pattern.permute.xlu0 0
      %3896 = vperm.xlu0 %3895, %v3865
      %v3897 = vpop.permute.xlu0 %3896
      %3898 = vset.pattern.permute.xlu0 0
      %3899 = vperm.xlu0 %3898, %v3866
      %v3900 = vpop.permute.xlu0 %3899
      %3901 = vset.pattern.permute.xlu0 0
      %3902 = vperm.xlu0 %3901, %v3867
      %v3903 = vpop.permute.xlu0 %3902
      %3904 = vset.pattern.permute.xlu0 0
      %3905 = vperm.xlu0 %3904, %v3868
      %v3906 = vpop.permute.xlu0 %3905
      %3907 = vset.pattern.permute.xlu0 0
      %3908 = vperm.xlu0 %3907, %v3869
      %v3909 = vpop.permute.xlu0 %3908
      %3910 = vset.pattern.permute.xlu0 0
      %3911 = vperm.xlu0 %3910, %v3870
      %v3912 = vpop.permute.xlu0 %3911
      %3913 = vset.pattern.permute.xlu0 0
      %3914 = vperm.xlu0 %3913, %v3871
      %v3915 = vpop.permute.xlu0 %3914
      %3916 = vset.pattern.permute.xlu0 0
      %3917 = vperm.xlu0 %3916, %v3872
      %v3918 = vpop.permute.xlu0 %3917
      %3919 = vset.pattern.permute.xlu0 0
      %3920 = vperm.xlu0 %3919, %v3873
      %v3921 = vpop.permute.xlu0 %3920
      %vm3922 = vcmp.eq.s32.totalorder %v3876, 1
      %vm3923 = vcmp.eq.s32.totalorder %v3879, 1
      %vm3924 = vcmp.eq.s32.totalorder %v3882, 1
      %vm3925 = vcmp.eq.s32.totalorder %v3885, 1
      %vm3926 = vcmp.eq.s32.totalorder %v3888, 1
      %vm3927 = vcmp.eq.s32.totalorder %v3891, 1
      %vm3928 = vcmp.eq.s32.totalorder %v3894, 1
      %vm3929 = vcmp.eq.s32.totalorder %v3897, 1
      %vm3930 = vcmp.eq.s32.totalorder %v3900, 1
      %vm3931 = vcmp.eq.s32.totalorder %v3903, 1
      %vm3932 = vcmp.eq.s32.totalorder %v3906, 1
      %vm3933 = vcmp.eq.s32.totalorder %v3909, 1
      %vm3934 = vcmp.eq.s32.totalorder %v3912, 1
      %vm3935 = vcmp.eq.s32.totalorder %v3915, 1
      %vm3936 = vcmp.eq.s32.totalorder %v3918, 1
      %vm3937 = vcmp.eq.s32.totalorder %v3921, 1
      %vm3938 = vmand %vm3857, %vm3922
      %vm3939 = vmand %vm3857, %vm3923
      %vm3940 = vmand %vm3857, %vm3924
      %vm3941 = vmand %vm3857, %vm3925
      %vm3942 = vmand %vm3857, %vm3926
      %vm3943 = vmand %vm3857, %vm3927
      %vm3944 = vmand %vm3857, %vm3928
      %vm3945 = vmand %vm3857, %vm3929
      %vm3946 = vmand %vm3857, %vm3930
      %vm3947 = vmand %vm3857, %vm3931
      %vm3948 = vmand %vm3857, %vm3932
      %vm3949 = vmand %vm3857, %vm3933
      %vm3950 = vmand %vm3857, %vm3934
      %vm3951 = vmand %vm3857, %vm3935
      %vm3952 = vmand %vm3857, %vm3936
      %vm3953 = vmand %vm3857, %vm3937
      %v3954 = vsel %vm3938, %v2188, %v3569
      %v3955 = vsel %vm3939, %v2189, %v3570
      %v3956 = vsel %vm3940, %v2190, %v3571
      %v3957 = vsel %vm3941, %v2191, %v3572
      %v3958 = vsel %vm3942, %v2192, %v3573
      %v3959 = vsel %vm3943, %v2193, %v3574
      %v3960 = vsel %vm3944, %v2194, %v3575
      %v3961 = vsel %vm3945, %v2195, %v3576
      %v3962 = vsel %vm3946, %v2196, %v3577
      %v3963 = vsel %vm3947, %v2197, %v3578
      %v3964 = vsel %vm3948, %v2198, %v3579
      %v3965 = vsel %vm3949, %v2199, %v3580
      %v3966 = vsel %vm3950, %v2200, %v3581
      %v3967 = vsel %vm3951, %v2201, %v3582
      %v3968 = vsel %vm3952, %v2202, %v3583
      %v3969 = vsel %vm3953, %v2203, %v3584
      %3970 = vst.msk [vmem:[%s424] sm:$0xff] %vm2027, %v3954
      %3971 = vst.msk [vmem:[%s424 + $0x8] sm:$0xff] %vm2027, %v3955
      %3972 = vst.msk [vmem:[%s424 + $0x10] sm:$0xff] %vm2027, %v3956
      %3973 = vst.msk [vmem:[%s424 + $0x18] sm:$0xff] %vm2027, %v3957
      %3974 = vst.msk [vmem:[%s424 + $0x20] sm:$0xff] %vm2027, %v3958
      %3975 = vst.msk [vmem:[%s424 + $0x28] sm:$0xff] %vm2027, %v3959
      %3976 = vst.msk [vmem:[%s424 + $0x30] sm:$0xff] %vm2027, %v3960
      %3977 = vst.msk [vmem:[%s424 + $0x38] sm:$0xff] %vm2027, %v3961
      %3978 = vst.msk [vmem:[%s424 + $0x40] sm:$0xff] %vm2027, %v3962
      %3979 = vst.msk [vmem:[%s424 + $0x48] sm:$0xff] %vm2027, %v3963
      %3980 = vst.msk [vmem:[%s424 + $0x50] sm:$0xff] %vm2027, %v3964
      %3981 = vst.msk [vmem:[%s424 + $0x58] sm:$0xff] %vm2027, %v3965
      %3982 = vst.msk [vmem:[%s424 + $0x60] sm:$0xff] %vm2027, %v3966
      %3983 = vst.msk [vmem:[%s424 + $0x68] sm:$0xff] %vm2027, %v3967
      %3984 = vst.msk [vmem:[%s424 + $0x70] sm:$0xff] %vm2027, %v3968
      %3985 = vst.msk [vmem:[%s424 + $0x78] sm:$0xff] %vm2027, %v3969
      %s3986 = smul.u32 16, %s22
      %p3987 = scmp.lt.s32.totalorder %s3986, 31
      %s3988 = scalar_select %p3987, %s3986, 31
      %s3989 = smul.addr %s3988, 4
      %s3990 = smul.addr %s3989, 4
      %s3991 = scalar_lea.vmem %s9, %s3990
      %s3992 = smul.u32 16, %s22
      %p3993 = scmp.lt.s32.totalorder %s3992, 31
      %s3994 = scalar_select %p3993, %s3992, 31
      %s3995 = smul.addr %s3994, 8
      %s3996 = scalar_lea.vmem %s10, %s3995
      // Predicated region
      $region57: #{moe_forward.2} parent=55 // pred_check
        %p3997 = pneg %p244
      $region58: #{moe_forward.2} parent=55 // pred_check_branch
        %3999 = sbr.rel (%p3997) target = $region60
      $region59: #{moe_forward.2} parent=55 // pred_region
        %s4000 = smul.u32 16, %s22
      $region60: #{moe_forward.2} parent=55 // pred_fallthru
        _
      // Predicated region
      $region61: #{moe_forward.2} parent=55 // pred_check
        %p4001 = pneg %p270
      $region62: #{moe_forward.2} parent=55 // pred_check_branch
        %4003 = sbr.rel (%p4001) target = $region64
      $region63: #{moe_forward.2} parent=55 // pred_region
        %s4004 = smul.u32 16, %s22
      $region64: #{moe_forward.2} parent=55 // pred_fallthru
        _
    $region56: #{moe_forward.2} parent=5 // pred_fallthru
      _
    %p4005 = scmp.le.s32.totalorder 2, %s17
    // Predicated region
    $region65: #{moe_forward.2} parent=5 // pred_check
      %p4006 = pneg %p4005
    $region66: #{moe_forward.2} parent=5 // pred_check_branch
      %4008 = sbr.rel (%p4006) target = $region68
    $region67: #{moe_forward.2} parent=5 // pred_region
      %s4009 = ssub.s32 %s17, 2
      // Predicated region
      $region69: #{moe_forward.2} parent=67 // pred_check
        %p4010 = pneg %p250
      $region70: #{moe_forward.2} parent=67 // pred_check_branch
        %4012 = sbr.rel (%p4010) target = $region72
      $region71: #{moe_forward.2} parent=67 // pred_region
        %s4013 = smul.u32 16, %s23
        %p4014 = scmp.lt.s32.totalorder %s4013, 31
        %s4015 = scalar_select %p4014, %s4013, 31
        %s4016 = smul.addr %s4015, 4
        %s4017 = smul.addr %s4016, 4
        %s4018 = scalar_lea.vmem %s9, %s4017
      $region72: #{moe_forward.2} parent=67 // pred_fallthru
        _
      // Predicated region
      $region73: #{moe_forward.2} parent=67 // pred_check
        %p4019 = pneg %p276
      $region74: #{moe_forward.2} parent=67 // pred_check_branch
        %4021 = sbr.rel (%p4019) target = $region76
      $region75: #{moe_forward.2} parent=67 // pred_region
        %s4022 = smul.u32 16, %s23
        %p4023 = scmp.lt.s32.totalorder %s4022, 31
        %s4024 = scalar_select %p4023, %s4022, 31
        %s4025 = smul.addr %s4024, 8
        %s4026 = scalar_lea.vmem %s10, %s4025
      $region76: #{moe_forward.2} parent=67 // pred_fallthru
        _
    $region68: #{moe_forward.2} parent=5 // pred_fallthru
      _
  $region6: #{moe_forward.2} parent=0 // loop_footer
    %s21 = sadd.s32 1, %s17
  $region7: #{moe_forward.2} parent=0 // loop_footer_branch
    %16 = sbr.rel target = $region3
  $region8: #{moe_forward.2} parent=0 // loop_exit
    _

</llo_original>
